<compile_context>
chip_gen: v7x
topology: tpu7x:2x2x1
jax: 0.10.0
libtpu: 0.0.40
codegen_flags: <defaults>
</compile_context>

<pallas_src>
import functools

import numpy as np
import jax
import jax.numpy as jnp
from jax import lax
from jax.experimental import pallas as pl
from jax.experimental.pallas import tpu as pltpu

HW = 64                         # 8x8 board, flattened row-major
VMEM_LIMIT = 32 * 1024 * 1024   # explicit scoped-VMEM cap (safe on v5e/v6e/v7x)


def _batch_tile(B):
    """Boards per grid step: fill the MXU (M = TB*64) but keep >= 2 grid steps
    when possible so the 'parallel' batch axis can split across v7x's 2 TCs."""
    for tb in (16, 8, 4, 2, 1):
        if B % tb == 0 and B // tb >= 2:
            return tb
    for tb in (16, 8, 4, 2, 1):
        if B % tb == 0:
            return tb
    return 1


@functools.lru_cache(maxsize=None)
def _tap_mask_np(tb):
    """(9, tb*64, 1) 0/1 mask of valid board positions for each 3x3 tap after a
    circular roll of the flattened board axis by dy*8 + dx."""
    m = np.zeros((9, HW), np.float32)
    k = 0
    for dy in (-1, 0, 1):
        for dx in (-1, 0, 1):
            for h in range(8):
                for w in range(8):
                    if 0 <= h + dy < 8 and 0 <= w + dx < 8:
                        m[k, h * 8 + w] = 1.0
            k += 1
    return np.tile(m, (1, tb)).reshape(9, tb * HW, 1)


# --------------------------------------------------------------------------
# Kernel bodies
# --------------------------------------------------------------------------
def _conv_body(x2, mask_ref, w_ref, scale, bias, *, relu):
    """x2: (rows=TB*64, Cin) f32.  w_ref: (9, Cin, Cout) bf16 ref.
    Returns (rows, Cout) f32 = folded-BN(3x3 same conv)(x) [+ReLU]."""
    rows = x2.shape[0]
    cout = w_ref.shape[2]
    acc = jnp.zeros((rows, cout), jnp.float32)
    k = 0
    for dy in (-1, 0, 1):
        for dx in (-1, 0, 1):
            d = dy * 8 + dx
            if d == 0:
                shifted = x2                                     # centre tap
            else:
                shifted = pltpu.roll(x2, shift=(-d) % rows, axis=0)   # XLU rotate
                shifted = shifted * mask_ref[k]                       # zero wrapped rows
            acc = acc + jnp.dot(shifted.astype(jnp.bfloat16), w_ref[k],
                                preferred_element_type=jnp.float32)
            k += 1
    acc = acc * scale + bias
    if relu:
        acc = jnp.maximum(acc, 0.0)
    return acc


def _conv3x3_kernel(x_ref, mask_ref, w_ref, s_ref, b_ref, out_ref, *, relu):
    tb, hw, cin = x_ref.shape
    x2 = x_ref[...].reshape(tb * hw, cin)
    y = _conv_body(x2, mask_ref, w_ref, s_ref[...], b_ref[...], relu=relu)
    out_ref[...] = y.reshape(tb, hw, w_ref.shape[2])


def _policy_head_kernel(x_ref, mask_ref, w1_ref, s1_ref, b1_ref,
                        w2_ref, s2_ref, b2_ref, out_ref):
    """Fused policy head: conv3x3+BN+ReLU -> conv3x3+BN (lane-padded output)."""
    tb, hw, cin = x_ref.shape
    x2 = x_ref[...].reshape(tb * hw, cin)
    y = _conv_body(x2, mask_ref, w1_ref, s1_ref[...], b1_ref[...], relu=True)
    y = _conv_body(y, mask_ref, w2_ref, s2_ref[...], b2_ref[...], relu=False)
    out_ref[...] = y.reshape(tb, hw, w2_ref.shape[2])


def _residual_block_kernel(x_ref, mask_ref,
                           w1_ref, s1_ref, b1_ref,
                           w2_ref, s2_ref, b2_ref,
                           sw1_ref, sb1_ref, sw2g_ref, sb2g_ref, sw2b_ref, sb2b_ref,
                           out_ref):
    """Fused residual block on a VMEM-resident (TB, 64, F) tile:
       conv3x3+BN+ReLU -> conv3x3+BN -> SE(sigmoid-gamma, beta) -> +residual -> ReLU."""
    tb, hw, F = x_ref.shape
    x3 = x_ref[...]
    x2 = x3.reshape(tb * hw, F)
    y = _conv_body(x2, mask_ref, w1_ref, s1_ref[...], b1_ref[...], relu=True)
    y = _conv_body(y, mask_ref, w2_ref, s2_ref[...], b2_ref[...], relu=False)
    y3 = y.reshape(tb, hw, F)
    # Squeeze-Excitation, batched over the TB boards of this tile (M = TB).
    pooled = jnp.mean(y3, axis=1)                                         # (TB, F)
    h = jnp.maximum(
        jnp.dot(pooled, sw1_ref[...], preferred_element_type=jnp.float32)
        + sb1_ref[...], 0.0)
    g = jax.nn.sigmoid(
        jnp.dot(h, sw2g_ref[...], preferred_element_type=jnp.float32) + sb2g_ref[...])
    beta = jnp.dot(h, sw2b_ref[...], preferred_element_type=jnp.float32) + sb2b_ref[...]
    out_ref[...] = jnp.maximum(y3 * g[:, None, :] + beta[:, None, :] + x3, 0.0)


def _dense_kernel(x_ref, w_ref, b_ref, out_ref, *, relu):
    y = jnp.dot(x_ref[...].astype(jnp.bfloat16), w_ref[...],
                preferred_element_type=jnp.float32) + b_ref[...]
    if relu:
        y = jnp.maximum(y, 0.0)
    out_ref[...] = y


# --------------------------------------------------------------------------
# pallas_call wrappers
# --------------------------------------------------------------------------
def _cparams():
    return pltpu.CompilerParams(dimension_semantics=("parallel",),
                                vmem_limit_bytes=VMEM_LIMIT)


def conv3x3(x, w_taps, scale, bias, *, relu, tb, mask):
    B, hw, cin = x.shape
    cout = w_taps.shape[-1]
    tbhw = tb * hw
    return pl.pallas_call(
        functools.partial(_conv3x3_kernel, relu=relu),
        out_shape=jax.ShapeDtypeStruct((B, hw, cout), jnp.float32),
        grid=(B // tb,),
        in_specs=[
            pl.BlockSpec((tb, hw, cin), lambda i: (i, 0, 0)),
            pl.BlockSpec((9, tbhw, 1), lambda i: (0, 0, 0)),
            pl.BlockSpec((9, cin, cout), lambda i: (0, 0, 0)),
            pl.BlockSpec((1, cout), lambda i: (0, 0)),
            pl.BlockSpec((1, cout), lambda i: (0, 0)),
        ],
        out_specs=pl.BlockSpec((tb, hw, cout), lambda i: (i, 0, 0)),
        compiler_params=_cparams(),
    )(x, mask, w_taps, scale, bias)


def residual_block(flow, blk, *, tb, mask):
    B, hw, F = flow.shape
    tbhw = tb * hw
    c1, c2, se = blk["conv1"], blk["conv2"], blk["se"]
    hid = se["w1"].shape[1]
    return pl.pallas_call(
        _residual_block_kernel,
        out_shape=jax.ShapeDtypeStruct((B, hw, F), jnp.float32),
        grid=(B // tb,),
        in_specs=[
            pl.BlockSpec((tb, hw, F), lambda i: (i, 0, 0)),     # x (aliased to output)
            pl.BlockSpec((9, tbhw, 1), lambda i: (0, 0, 0)),    # tap mask
            pl.BlockSpec((9, F, F), lambda i: (0, 0, 0)),       # conv1 taps (bf16)
            pl.BlockSpec((1, F), lambda i: (0, 0)),
            pl.BlockSpec((1, F), lambda i: (0, 0)),
            pl.BlockSpec((9, F, F), lambda i: (0, 0, 0)),       # conv2 taps (bf16)
            pl.BlockSpec((1, F), lambda i: (0, 0)),
            pl.BlockSpec((1, F), lambda i: (0, 0)),
            pl.BlockSpec((F, hid), lambda i: (0, 0)),           # SE weights (f32)
            pl.BlockSpec((1, hid), lambda i: (0, 0)),
            pl.BlockSpec((hid, F), lambda i: (0, 0)),
            pl.BlockSpec((1, F), lambda i: (0, 0)),
            pl.BlockSpec((hid, F), lambda i: (0, 0)),
            pl.BlockSpec((1, F), lambda i: (0, 0)),
        ],
        out_specs=pl.BlockSpec((tb, hw, F), lambda i: (i, 0, 0)),
        input_output_aliases={0: 0},          # residual stream updated in place
        compiler_params=_cparams(),
    )(flow, mask, c1["w"], c1["scale"], c1["bias"],
      c2["w"], c2["scale"], c2["bias"],
      se["w1"], se["b1"], se["w2g"], se["b2g"], se["w2b"], se["b2b"])


def policy_head_convs(flow, conv1, w2, s2, b2, *, tb, mask):
    B, hw, F = flow.shape
    tbhw = tb * hw
    cout2 = w2.shape[-1]
    return pl.pallas_call(
        _policy_head_kernel,
        out_shape=jax.ShapeDtypeStruct((B, hw, cout2), jnp.float32),
        grid=(B // tb,),
        in_specs=[
            pl.BlockSpec((tb, hw, F), lambda i: (i, 0, 0)),
            pl.BlockSpec((9, tbhw, 1), lambda i: (0, 0, 0)),
            pl.BlockSpec((9, F, F), lambda i: (0, 0, 0)),
            pl.BlockSpec((1, F), lambda i: (0, 0)),
            pl.BlockSpec((1, F), lambda i: (0, 0)),
            pl.BlockSpec((9, F, cout2), lambda i: (0, 0, 0)),
            pl.BlockSpec((1, cout2), lambda i: (0, 0)),
            pl.BlockSpec((1, cout2), lambda i: (0, 0)),
        ],
        out_specs=pl.BlockSpec((tb, hw, cout2), lambda i: (i, 0, 0)),
        compiler_params=_cparams(),
    )(flow, mask, conv1["w"], conv1["scale"], conv1["bias"], w2, s2, b2)


def dense(x, w, b, *, relu, row_block=512):
    """y = x @ w + b with row tiling (used for 1x1 head convs and FC layers)."""
    rows, K = x.shape
    N = w.shape[1]
    rb = rows if rows <= row_block else row_block
    return pl.pallas_call(
        functools.partial(_dense_kernel, relu=relu),
        out_shape=jax.ShapeDtypeStruct((rows, N), jnp.float32),
        grid=(pl.cdiv(rows, rb),),
        in_specs=[
            pl.BlockSpec((rb, K), lambda i: (i, 0)),
            pl.BlockSpec((K, N), lambda i: (0, 0)),
            pl.BlockSpec((1, N), lambda i: (0, 0)),
        ],
        out_specs=pl.BlockSpec((rb, N), lambda i: (i, 0)),
        compiler_params=_cparams(),
    )(x, w, b)


# --------------------------------------------------------------------------
# Parameters (deterministic synthetic init; BN folded to scale/bias)
# --------------------------------------------------------------------------
def init_params(key, num_filters, num_blocks, se_ratio):
    def nxt():
        nonlocal key
        key, sub = jax.random.split(key)
        return sub

    def w(shape, s=0.05):
        return jax.random.normal(nxt(), shape, jnp.float32) * s

    def bf(shape, s=0.05):          # MXU operands stored in bf16
        return w(shape, s).astype(jnp.bfloat16)

    F = num_filters
    se_hidden = F // se_ratio
    p = {}
    p["input"] = dict(w=bf((9, 112, F)), scale=1.0 + w((1, F), 0.01), bias=w((1, F), 0.01))
    blocks = []
    for _ in range(num_blocks):
        blocks.append(dict(
            conv1=dict(w=bf((9, F, F)), scale=1.0 + w((1, F), 0.01), bias=w((1, F), 0.01)),
            conv2=dict(w=bf((9, F, F)), scale=1.0 + w((1, F), 0.01), bias=w((1, F), 0.01)),
            se=dict(w1=w((F, se_hidden)), b1=w((1, se_hidden), 0.01),
                    w2g=w((se_hidden, F)), b2g=w((1, F), 0.01),
                    w2b=w((se_hidden, F)), b2b=w((1, F), 0.01)),
        ))
    p["blocks"] = blocks
    p["policy"] = dict(
        conv1=dict(w=bf((9, F, F)), scale=1.0 + w((1, F), 0.01), bias=w((1, F), 0.01)),
        conv2=dict(w=bf((9, F, 80)), scale=jnp.ones((1, 80), jnp.float32),
                   bias=w((1, 80), 0.01)),
    )
    # NOTE: fc1 weight rows are stored in position-major (NHWC-flatten) order
    # (row index = p*nf + c).  Equivalent to torch's channel-major layout up to
    # a fixed row permutation of fc1.weight; removes the activation transpose
    # between the 1x1-conv kernel and the FC kernel.
    p["value"] = dict(
        conv=dict(w=bf((F, 32)), bias=w((1, 32), 0.01)),
        fc1=dict(w=bf((HW * 32, 128)), b=w((1, 128), 0.01)),
        fc2=dict(w=bf((128, 3)), b=w((1, 3), 0.01)),
    )
    p["moves"] = dict(
        conv=dict(w=bf((F, 8)), bias=w((1, 8), 0.01)),
        fc1=dict(w=bf((HW * 8, 128)), b=w((1, 128), 0.01)),
        fc2=dict(w=bf((128, 1)), b=w((1, 1), 0.01)),
    )
    return p


def _pad_lanes(a, n):
    pad = n - a.shape[-1]
    if pad <= 0:
        return a
    return jnp.pad(a, [(0, 0)] * (a.ndim - 1) + [(0, pad)])


# --------------------------------------------------------------------------
# Full forward pass (Pallas path)
# --------------------------------------------------------------------------
def leela_forward(params, input_planes):
    """input_planes: NCHW (B, 112, 8, 8), like the PyTorch module's .view(-1,112,8,8)."""
    B = input_planes.shape[0]
    x = input_planes.reshape(B, 112, 8, 8)
    x = jnp.transpose(x, (0, 2, 3, 1)).reshape(B, HW, 112)        # -> (B, 64, 112)

    tb = _batch_tile(B)
    mask = jnp.asarray(_tap_mask_np(tb))

    ib = params["input"]
    flow = conv3x3(x, ib["w"], ib["scale"], ib["bias"], relu=True, tb=tb, mask=mask)

    # Residual tower: one fused pallas_call per block (in-place residual stream).
    for blk in params["blocks"]:
        flow = residual_block(flow, blk, tb=tb, mask=mask)

    # ----- policy head (conv1 + conv2 fused; conv2 lane-padded 80 -> 128) -----
    ph = params["policy"]
    w2 = _pad_lanes(ph["conv2"]["w"], 128)
    s2 = _pad_lanes(ph["conv2"]["scale"], 128)
    b2 = _pad_lanes(ph["conv2"]["bias"], 128)
    p = policy_head_convs(flow, ph["conv1"], w2, s2, b2, tb=tb, mask=mask)
    policy_out = jnp.transpose(p[:, :, :80], (0, 2, 1)).reshape(B, 80 * HW)
    # TODO(synk): lc0's fixed policy-map gather (80*64 -> 1858 moves) needs an index
    # table that is not available in-script; flattened conv logits are returned.

    # ----- value / moves-left heads -----
    vh, mh = params["value"], params["moves"]
    # Fuse the two 1x1 head convs into one lane-dense (128-col) matmul, slice after.
    wcat = _pad_lanes(jnp.concatenate([vh["conv"]["w"], mh["conv"]["w"]], axis=1), 128)
    bcat = _pad_lanes(jnp.concatenate([vh["conv"]["bias"], mh["conv"]["bias"]], axis=1), 128)
    hcat = dense(flow.reshape(B * HW, -1), wcat, bcat, relu=True)         # (B*64, 128)
    hv = hcat[:, :32].reshape(B, HW * 32)      # position-major flatten (matches fc1 rows)
    hm = hcat[:, 32:40].reshape(B, HW * 8)

    value_out = dense(dense(hv, vh["fc1"]["w"], vh["fc1"]["b"], relu=True),
                      vh["fc2"]["w"], vh["fc2"]["b"], relu=False)
    moves_left_out = dense(dense(hm, mh["fc1"]["w"], mh["fc1"]["b"], relu=True),
                           mh["fc2"]["w"], mh["fc2"]["b"], relu=True)
    return policy_out, value_out, moves_left_out
    # TODO(synk): training losses (policy/value/moves_left + qmix target) are the
    # `policy_target is not None` branch; only the inference path is implemented.


# --------------------------------------------------------------------------
# Pure-JAX NCHW reference (f32 math on the same bf16-stored weights)
# --------------------------------------------------------------------------
def ref_forward(params, input_planes):
    B = input_planes.shape[0]
    x = input_planes.reshape(B, 112, 8, 8)

    def conv3x3_ref(x, w_taps, scale, bias, relu):
        w_taps = w_taps.astype(jnp.float32)
        cin, cout = w_taps.shape[1], w_taps.shape[2]
        w = jnp.transpose(w_taps.reshape(3, 3, cin, cout), (3, 2, 0, 1))  # OIHW
        y = lax.conv_general_dilated(x, w, (1, 1), "SAME",
                                     dimension_numbers=("NCHW", "OIHW", "NCHW"))
        y = y * scale.reshape(1, -1, 1, 1) + bias.reshape(1, -1, 1, 1)
        return jnp.maximum(y, 0.0) if relu else y

    def se_ref(x, res, se):
        pooled = jnp.mean(x, axis=(2, 3))
        h = jnp.maximum(pooled @ se["w1"] + se["b1"], 0.0)
        g = jax.nn.sigmoid(h @ se["w2g"] + se["b2g"])
        beta = h @ se["w2b"] + se["b2b"]
        return jnp.maximum(x * g[:, :, None, None] + beta[:, :, None, None] + res, 0.0)

    ib = params["input"]
    flow = conv3x3_ref(x, ib["w"], ib["scale"], ib["bias"], True)
    for blk in params["blocks"]:
        y = conv3x3_ref(flow, blk["conv1"]["w"], blk["conv1"]["scale"], blk["conv1"]["bias"], True)
        y = conv3x3_ref(y, blk["conv2"]["w"], blk["conv2"]["scale"], blk["conv2"]["bias"], False)
        flow = se_ref(y, flow, blk["se"])
    ph = params["policy"]
    p = conv3x3_ref(flow, ph["conv1"]["w"], ph["conv1"]["scale"], ph["conv1"]["bias"], True)
    p = conv3x3_ref(p, ph["conv2"]["w"], ph["conv2"]["scale"], ph["conv2"]["bias"], False)
    policy_out = p.reshape(B, -1)

    def head_ref(hp, relu_out):
        wc = hp["conv"]["w"].astype(jnp.float32)
        h = jnp.einsum("bchw,cf->bfhw", flow, wc) + hp["conv"]["bias"].reshape(1, -1, 1, 1)
        h = jnp.maximum(h, 0.0)
        h = jnp.transpose(h, (0, 2, 3, 1)).reshape(B, -1)   # position-major flatten
        h = jnp.maximum(h @ hp["fc1"]["w"].astype(jnp.float32) + hp["fc1"]["b"], 0.0)
        h = h @ hp["fc2"]["w"].astype(jnp.float32) + hp["fc2"]["b"]
        return jnp.maximum(h, 0.0) if relu_out else h

    return policy_out, head_ref(params["value"], False), head_ref(params["moves"], True)


# --------------------------------------------------------------------------
if __name__ == "__main__":
    key = jax.random.PRNGKey(0)
    pkey, xkey = jax.random.split(key)

    num_filters, num_residual_blocks, se_ratio = 32, 2, 4
    params = init_params(pkey, num_filters, num_residual_blocks, se_ratio)
    input_planes = jax.random.normal(xkey, (2, 112, 8, 8), jnp.float32)

    policy, value, moves_left = jax.block_until_ready(
        jax.jit(leela_forward)(params, input_planes))

    # correctness check against a pure-JAX NCHW reference (tolerance covers the
    # bf16 matmul-operand rounding used in the Pallas path)
    ref_p, ref_v, ref_m = ref_forward(params, input_planes)
    for got, ref in ((policy, ref_p), (value, ref_v), (moves_left, ref_m)):
        err = float(jnp.max(jnp.abs(got - ref)))
        tol = 3e-2 * (1.0 + float(jnp.max(jnp.abs(ref))))
        assert err < tol, f"mismatch: max abs err {err} (tol {tol})"

    assert policy.shape == (2, 80 * HW)
    assert value.shape == (2, 3)
    assert moves_left.shape == (2, 1)
    print("KERNEL_OK")
</pallas_src>

<mosaic_0001>
module attributes {stable_mosaic.version = 11 : i64} {
  func.func @_residual_block_kernel(%arg0: i32, %arg1: memref<1x64x32xf32, #tpu.memory_space<vmem>>, %arg2: memref<9x64x1xf32, #tpu.memory_space<vmem>>, %arg3: memref<9x32x32xbf16, #tpu.memory_space<vmem>>, %arg4: memref<1x32xf32, #tpu.memory_space<vmem>>, %arg5: memref<1x32xf32, #tpu.memory_space<vmem>>, %arg6: memref<9x32x32xbf16, #tpu.memory_space<vmem>>, %arg7: memref<1x32xf32, #tpu.memory_space<vmem>>, %arg8: memref<1x32xf32, #tpu.memory_space<vmem>>, %arg9: memref<32x8xf32, #tpu.memory_space<vmem>>, %arg10: memref<1x8xf32, #tpu.memory_space<vmem>>, %arg11: memref<8x32xf32, #tpu.memory_space<vmem>>, %arg12: memref<1x32xf32, #tpu.memory_space<vmem>>, %arg13: memref<8x32xf32, #tpu.memory_space<vmem>>, %arg14: memref<1x32xf32, #tpu.memory_space<vmem>>, %arg15: memref<1x64x32xf32, #tpu.memory_space<vmem>>) attributes {dimension_semantics = [#tpu.dimension_semantics<parallel>], iteration_bounds = array<i64: 2>, scalar_prefetch = 0 : i64, scratch_operands = 0 : i64, tpu.core_type = #tpu.core_type<tc>, window_params = [{transform_indices = @transform_0, window_bounds = array<i64: 1, 64, 32>}, {pipeline_mode = #tpu.pipeline_mode<synchronous>, transform_indices = @transform_1, window_bounds = array<i64: 9, 64, 1>}, {pipeline_mode = #tpu.pipeline_mode<synchronous>, transform_indices = @transform_2, window_bounds = array<i64: 9, 32, 32>}, {pipeline_mode = #tpu.pipeline_mode<synchronous>, transform_indices = @transform_3, window_bounds = array<i64: 1, 32>}, {pipeline_mode = #tpu.pipeline_mode<synchronous>, transform_indices = @transform_4, window_bounds = array<i64: 1, 32>}, {pipeline_mode = #tpu.pipeline_mode<synchronous>, transform_indices = @transform_5, window_bounds = array<i64: 9, 32, 32>}, {pipeline_mode = #tpu.pipeline_mode<synchronous>, transform_indices = @transform_6, window_bounds = array<i64: 1, 32>}, {pipeline_mode = #tpu.pipeline_mode<synchronous>, transform_indices = @transform_7, window_bounds = array<i64: 1, 32>}, {pipeline_mode = #tpu.pipeline_mode<synchronous>, transform_indices = @transform_8, window_bounds = array<i64: 32, 8>}, {pipeline_mode = #tpu.pipeline_mode<synchronous>, transform_indices = @transform_9, window_bounds = array<i64: 1, 8>}, {pipeline_mode = #tpu.pipeline_mode<synchronous>, transform_indices = @transform_10, window_bounds = array<i64: 8, 32>}, {pipeline_mode = #tpu.pipeline_mode<synchronous>, transform_indices = @transform_11, window_bounds = array<i64: 1, 32>}, {pipeline_mode = #tpu.pipeline_mode<synchronous>, transform_indices = @transform_12, window_bounds = array<i64: 8, 32>}, {pipeline_mode = #tpu.pipeline_mode<synchronous>, transform_indices = @transform_13, window_bounds = array<i64: 1, 32>}, {transform_indices = @transform_14, window_bounds = array<i64: 1, 64, 32>}]} {
    %c0 = arith.constant 0 : index
    %c0_0 = arith.constant 0 : index
    %c0_1 = arith.constant 0 : index
    %0 = vector.load %arg1[%c0, %c0_0, %c0_1] : memref<1x64x32xf32, #tpu.memory_space<vmem>>, vector<1x64x32xf32>
    %1 = vector.shape_cast %0 : vector<1x64x32xf32> to vector<64x32xf32>
    %c0_2 = arith.constant 0 : index
    %c0_3 = arith.constant 0 : index
    %2 = vector.load %arg4[%c0_2, %c0_3] : memref<1x32xf32, #tpu.memory_space<vmem>>, vector<1x32xf32>
    %c0_4 = arith.constant 0 : index
    %c0_5 = arith.constant 0 : index
    %3 = vector.load %arg5[%c0_4, %c0_5] : memref<1x32xf32, #tpu.memory_space<vmem>>, vector<1x32xf32>
    %cst = arith.constant 0.000000e+00 : f32
    %4 = vector.broadcast %cst : f32 to vector<64x32xf32>
    %c9_i32 = arith.constant 9 : i32
    %5 = tpu.dynamic_rotate %1 by %c9_i32 dim 0 : vector<64x32xf32>, i32 -> vector<64x32xf32>
    %c0_6 = arith.constant 0 : index
    %c0_7 = arith.constant 0 : index
    %c0_8 = arith.constant 0 : index
    %6 = vector.load %arg2[%c0_6, %c0_7, %c0_8] : memref<9x64x1xf32, #tpu.memory_space<vmem>>, vector<1x64x1xf32>
    %7 = vector.shape_cast %6 : vector<1x64x1xf32> to vector<64x1xf32>
    %8 = vector.broadcast %7 : vector<64x1xf32> to vector<64x32xf32>
    %9 = arith.mulf %5, %8 : vector<64x32xf32>
    %10 = arith.truncf %9 : vector<64x32xf32> to vector<64x32xbf16>
    %c0_9 = arith.constant 0 : index
    %c0_10 = arith.constant 0 : index
    %c0_11 = arith.constant 0 : index
    %11 = vector.load %arg3[%c0_9, %c0_10, %c0_11] : memref<9x32x32xbf16, #tpu.memory_space<vmem>>, vector<1x32x32xbf16>
    %12 = vector.shape_cast %11 : vector<1x32x32xbf16> to vector<32x32xbf16>
    %cst_12 = arith.constant dense<0.000000e+00> : vector<64x32xf32>
    %13 = tpu.matmul %10, %12, %cst_12 {dimension_numbers = #tpu.dot_dimension_numbers<[1], [0], [0], [1], [0, 0, 1, 1], [], []>} : vector<64x32xbf16>, vector<32x32xbf16>, vector<64x32xf32> -> vector<64x32xf32>
    %14 = arith.addf %4, %13 : vector<64x32xf32>
    %c8_i32 = arith.constant 8 : i32
    %15 = tpu.dynamic_rotate %1 by %c8_i32 dim 0 : vector<64x32xf32>, i32 -> vector<64x32xf32>
    %c1 = arith.constant 1 : index
    %c0_13 = arith.constant 0 : index
    %c0_14 = arith.constant 0 : index
    %16 = vector.load %arg2[%c1, %c0_13, %c0_14] : memref<9x64x1xf32, #tpu.memory_space<vmem>>, vector<1x64x1xf32>
    %17 = vector.shape_cast %16 : vector<1x64x1xf32> to vector<64x1xf32>
    %18 = vector.broadcast %17 : vector<64x1xf32> to vector<64x32xf32>
    %19 = arith.mulf %15, %18 : vector<64x32xf32>
    %20 = arith.truncf %19 : vector<64x32xf32> to vector<64x32xbf16>
    %c1_15 = arith.constant 1 : index
    %c0_16 = arith.constant 0 : index
    %c0_17 = arith.constant 0 : index
    %21 = vector.load %arg3[%c1_15, %c0_16, %c0_17] : memref<9x32x32xbf16, #tpu.memory_space<vmem>>, vector<1x32x32xbf16>
    %22 = vector.shape_cast %21 : vector<1x32x32xbf16> to vector<32x32xbf16>
    %cst_18 = arith.constant dense<0.000000e+00> : vector<64x32xf32>
    %23 = tpu.matmul %20, %22, %cst_18 {dimension_numbers = #tpu.dot_dimension_numbers<[1], [0], [0], [1], [0, 0, 1, 1], [], []>} : vector<64x32xbf16>, vector<32x32xbf16>, vector<64x32xf32> -> vector<64x32xf32>
    %24 = arith.addf %14, %23 : vector<64x32xf32>
    %c7_i32 = arith.constant 7 : i32
    %25 = tpu.dynamic_rotate %1 by %c7_i32 dim 0 : vector<64x32xf32>, i32 -> vector<64x32xf32>
    %c2 = arith.constant 2 : index
    %c0_19 = arith.constant 0 : index
    %c0_20 = arith.constant 0 : index
    %26 = vector.load %arg2[%c2, %c0_19, %c0_20] : memref<9x64x1xf32, #tpu.memory_space<vmem>>, vector<1x64x1xf32>
    %27 = vector.shape_cast %26 : vector<1x64x1xf32> to vector<64x1xf32>
    %28 = vector.broadcast %27 : vector<64x1xf32> to vector<64x32xf32>
    %29 = arith.mulf %25, %28 : vector<64x32xf32>
    %30 = arith.truncf %29 : vector<64x32xf32> to vector<64x32xbf16>
    %c2_21 = arith.constant 2 : index
    %c0_22 = arith.constant 0 : index
    %c0_23 = arith.constant 0 : index
    %31 = vector.load %arg3[%c2_21, %c0_22, %c0_23] : memref<9x32x32xbf16, #tpu.memory_space<vmem>>, vector<1x32x32xbf16>
    %32 = vector.shape_cast %31 : vector<1x32x32xbf16> to vector<32x32xbf16>
    %cst_24 = arith.constant dense<0.000000e+00> : vector<64x32xf32>
    %33 = tpu.matmul %30, %32, %cst_24 {dimension_numbers = #tpu.dot_dimension_numbers<[1], [0], [0], [1], [0, 0, 1, 1], [], []>} : vector<64x32xbf16>, vector<32x32xbf16>, vector<64x32xf32> -> vector<64x32xf32>
    %34 = arith.addf %24, %33 : vector<64x32xf32>
    %c1_i32 = arith.constant 1 : i32
    %35 = tpu.dynamic_rotate %1 by %c1_i32 dim 0 : vector<64x32xf32>, i32 -> vector<64x32xf32>
    %c3 = arith.constant 3 : index
    %c0_25 = arith.constant 0 : index
    %c0_26 = arith.constant 0 : index
    %36 = vector.load %arg2[%c3, %c0_25, %c0_26] : memref<9x64x1xf32, #tpu.memory_space<vmem>>, vector<1x64x1xf32>
    %37 = vector.shape_cast %36 : vector<1x64x1xf32> to vector<64x1xf32>
    %38 = vector.broadcast %37 : vector<64x1xf32> to vector<64x32xf32>
    %39 = arith.mulf %35, %38 : vector<64x32xf32>
    %40 = arith.truncf %39 : vector<64x32xf32> to vector<64x32xbf16>
    %c3_27 = arith.constant 3 : index
    %c0_28 = arith.constant 0 : index
    %c0_29 = arith.constant 0 : index
    %41 = vector.load %arg3[%c3_27, %c0_28, %c0_29] : memref<9x32x32xbf16, #tpu.memory_space<vmem>>, vector<1x32x32xbf16>
    %42 = vector.shape_cast %41 : vector<1x32x32xbf16> to vector<32x32xbf16>
    %cst_30 = arith.constant dense<0.000000e+00> : vector<64x32xf32>
    %43 = tpu.matmul %40, %42, %cst_30 {dimension_numbers = #tpu.dot_dimension_numbers<[1], [0], [0], [1], [0, 0, 1, 1], [], []>} : vector<64x32xbf16>, vector<32x32xbf16>, vector<64x32xf32> -> vector<64x32xf32>
    %44 = arith.addf %34, %43 : vector<64x32xf32>
    %45 = arith.truncf %1 : vector<64x32xf32> to vector<64x32xbf16>
    %c4 = arith.constant 4 : index
    %c0_31 = arith.constant 0 : index
    %c0_32 = arith.constant 0 : index
    %46 = vector.load %arg3[%c4, %c0_31, %c0_32] : memref<9x32x32xbf16, #tpu.memory_space<vmem>>, vector<1x32x32xbf16>
    %47 = vector.shape_cast %46 : vector<1x32x32xbf16> to vector<32x32xbf16>
    %cst_33 = arith.constant dense<0.000000e+00> : vector<64x32xf32>
    %48 = tpu.matmul %45, %47, %cst_33 {dimension_numbers = #tpu.dot_dimension_numbers<[1], [0], [0], [1], [0, 0, 1, 1], [], []>} : vector<64x32xbf16>, vector<32x32xbf16>, vector<64x32xf32> -> vector<64x32xf32>
    %49 = arith.addf %44, %48 : vector<64x32xf32>
    %c63_i32 = arith.constant 63 : i32
    %50 = tpu.dynamic_rotate %1 by %c63_i32 dim 0 : vector<64x32xf32>, i32 -> vector<64x32xf32>
    %c5 = arith.constant 5 : index
    %c0_34 = arith.constant 0 : index
    %c0_35 = arith.constant 0 : index
    %51 = vector.load %arg2[%c5, %c0_34, %c0_35] : memref<9x64x1xf32, #tpu.memory_space<vmem>>, vector<1x64x1xf32>
    %52 = vector.shape_cast %51 : vector<1x64x1xf32> to vector<64x1xf32>
    %53 = vector.broadcast %52 : vector<64x1xf32> to vector<64x32xf32>
    %54 = arith.mulf %50, %53 : vector<64x32xf32>
    %55 = arith.truncf %54 : vector<64x32xf32> to vector<64x32xbf16>
    %c5_36 = arith.constant 5 : index
    %c0_37 = arith.constant 0 : index
    %c0_38 = arith.constant 0 : index
    %56 = vector.load %arg3[%c5_36, %c0_37, %c0_38] : memref<9x32x32xbf16, #tpu.memory_space<vmem>>, vector<1x32x32xbf16>
    %57 = vector.shape_cast %56 : vector<1x32x32xbf16> to vector<32x32xbf16>
    %cst_39 = arith.constant dense<0.000000e+00> : vector<64x32xf32>
    %58 = tpu.matmul %55, %57, %cst_39 {dimension_numbers = #tpu.dot_dimension_numbers<[1], [0], [0], [1], [0, 0, 1, 1], [], []>} : vector<64x32xbf16>, vector<32x32xbf16>, vector<64x32xf32> -> vector<64x32xf32>
    %59 = arith.addf %49, %58 : vector<64x32xf32>
    %c57_i32 = arith.constant 57 : i32
    %60 = tpu.dynamic_rotate %1 by %c57_i32 dim 0 : vector<64x32xf32>, i32 -> vector<64x32xf32>
    %c6 = arith.constant 6 : index
    %c0_40 = arith.constant 0 : index
    %c0_41 = arith.constant 0 : index
    %61 = vector.load %arg2[%c6, %c0_40, %c0_41] : memref<9x64x1xf32, #tpu.memory_space<vmem>>, vector<1x64x1xf32>
    %62 = vector.shape_cast %61 : vector<1x64x1xf32> to vector<64x1xf32>
    %63 = vector.broadcast %62 : vector<64x1xf32> to vector<64x32xf32>
    %64 = arith.mulf %60, %63 : vector<64x32xf32>
    %65 = arith.truncf %64 : vector<64x32xf32> to vector<64x32xbf16>
    %c6_42 = arith.constant 6 : index
    %c0_43 = arith.constant 0 : index
    %c0_44 = arith.constant 0 : index
    %66 = vector.load %arg3[%c6_42, %c0_43, %c0_44] : memref<9x32x32xbf16, #tpu.memory_space<vmem>>, vector<1x32x32xbf16>
    %67 = vector.shape_cast %66 : vector<1x32x32xbf16> to vector<32x32xbf16>
    %cst_45 = arith.constant dense<0.000000e+00> : vector<64x32xf32>
    %68 = tpu.matmul %65, %67, %cst_45 {dimension_numbers = #tpu.dot_dimension_numbers<[1], [0], [0], [1], [0, 0, 1, 1], [], []>} : vector<64x32xbf16>, vector<32x32xbf16>, vector<64x32xf32> -> vector<64x32xf32>
    %69 = arith.addf %59, %68 : vector<64x32xf32>
    %c56_i32 = arith.constant 56 : i32
    %70 = tpu.dynamic_rotate %1 by %c56_i32 dim 0 : vector<64x32xf32>, i32 -> vector<64x32xf32>
    %c7 = arith.constant 7 : index
    %c0_46 = arith.constant 0 : index
    %c0_47 = arith.constant 0 : index
    %71 = vector.load %arg2[%c7, %c0_46, %c0_47] : memref<9x64x1xf32, #tpu.memory_space<vmem>>, vector<1x64x1xf32>
    %72 = vector.shape_cast %71 : vector<1x64x1xf32> to vector<64x1xf32>
    %73 = vector.broadcast %72 : vector<64x1xf32> to vector<64x32xf32>
    %74 = arith.mulf %70, %73 : vector<64x32xf32>
    %75 = arith.truncf %74 : vector<64x32xf32> to vector<64x32xbf16>
    %c7_48 = arith.constant 7 : index
    %c0_49 = arith.constant 0 : index
    %c0_50 = arith.constant 0 : index
    %76 = vector.load %arg3[%c7_48, %c0_49, %c0_50] : memref<9x32x32xbf16, #tpu.memory_space<vmem>>, vector<1x32x32xbf16>
    %77 = vector.shape_cast %76 : vector<1x32x32xbf16> to vector<32x32xbf16>
    %cst_51 = arith.constant dense<0.000000e+00> : vector<64x32xf32>
    %78 = tpu.matmul %75, %77, %cst_51 {dimension_numbers = #tpu.dot_dimension_numbers<[1], [0], [0], [1], [0, 0, 1, 1], [], []>} : vector<64x32xbf16>, vector<32x32xbf16>, vector<64x32xf32> -> vector<64x32xf32>
    %79 = arith.addf %69, %78 : vector<64x32xf32>
    %c55_i32 = arith.constant 55 : i32
    %80 = tpu.dynamic_rotate %1 by %c55_i32 dim 0 : vector<64x32xf32>, i32 -> vector<64x32xf32>
    %c8 = arith.constant 8 : index
    %c0_52 = arith.constant 0 : index
    %c0_53 = arith.constant 0 : index
    %81 = vector.load %arg2[%c8, %c0_52, %c0_53] : memref<9x64x1xf32, #tpu.memory_space<vmem>>, vector<1x64x1xf32>
    %82 = vector.shape_cast %81 : vector<1x64x1xf32> to vector<64x1xf32>
    %83 = vector.broadcast %82 : vector<64x1xf32> to vector<64x32xf32>
    %84 = arith.mulf %80, %83 : vector<64x32xf32>
    %85 = arith.truncf %84 : vector<64x32xf32> to vector<64x32xbf16>
    %c8_54 = arith.constant 8 : index
    %c0_55 = arith.constant 0 : index
    %c0_56 = arith.constant 0 : index
    %86 = vector.load %arg3[%c8_54, %c0_55, %c0_56] : memref<9x32x32xbf16, #tpu.memory_space<vmem>>, vector<1x32x32xbf16>
    %87 = vector.shape_cast %86 : vector<1x32x32xbf16> to vector<32x32xbf16>
    %cst_57 = arith.constant dense<0.000000e+00> : vector<64x32xf32>
    %88 = tpu.matmul %85, %87, %cst_57 {dimension_numbers = #tpu.dot_dimension_numbers<[1], [0], [0], [1], [0, 0, 1, 1], [], []>} : vector<64x32xbf16>, vector<32x32xbf16>, vector<64x32xf32> -> vector<64x32xf32>
    %89 = arith.addf %79, %88 : vector<64x32xf32>
    %90 = vector.broadcast %2 : vector<1x32xf32> to vector<64x32xf32>
    %91 = arith.mulf %89, %90 : vector<64x32xf32>
    %92 = vector.broadcast %3 : vector<1x32xf32> to vector<64x32xf32>
    %93 = arith.addf %91, %92 : vector<64x32xf32>
    %cst_58 = arith.constant 0.000000e+00 : f32
    %94 = vector.broadcast %cst_58 : f32 to vector<64x32xf32>
    %95 = arith.maximumf %93, %94 : vector<64x32xf32>
    %c0_59 = arith.constant 0 : index
    %c0_60 = arith.constant 0 : index
    %96 = vector.load %arg7[%c0_59, %c0_60] : memref<1x32xf32, #tpu.memory_space<vmem>>, vector<1x32xf32>
    %c0_61 = arith.constant 0 : index
    %c0_62 = arith.constant 0 : index
    %97 = vector.load %arg8[%c0_61, %c0_62] : memref<1x32xf32, #tpu.memory_space<vmem>>, vector<1x32xf32>
    %cst_63 = arith.constant 0.000000e+00 : f32
    %98 = vector.broadcast %cst_63 : f32 to vector<64x32xf32>
    %c9_i32_64 = arith.constant 9 : i32
    %99 = tpu.dynamic_rotate %95 by %c9_i32_64 dim 0 : vector<64x32xf32>, i32 -> vector<64x32xf32>
    %c0_65 = arith.constant 0 : index
    %c0_66 = arith.constant 0 : index
    %c0_67 = arith.constant 0 : index
    %100 = vector.load %arg2[%c0_65, %c0_66, %c0_67] : memref<9x64x1xf32, #tpu.memory_space<vmem>>, vector<1x64x1xf32>
    %101 = vector.shape_cast %100 : vector<1x64x1xf32> to vector<64x1xf32>
    %102 = vector.broadcast %101 : vector<64x1xf32> to vector<64x32xf32>
    %103 = arith.mulf %99, %102 : vector<64x32xf32>
    %104 = arith.truncf %103 : vector<64x32xf32> to vector<64x32xbf16>
    %c0_68 = arith.constant 0 : index
    %c0_69 = arith.constant 0 : index
    %c0_70 = arith.constant 0 : index
    %105 = vector.load %arg6[%c0_68, %c0_69, %c0_70] : memref<9x32x32xbf16, #tpu.memory_space<vmem>>, vector<1x32x32xbf16>
    %106 = vector.shape_cast %105 : vector<1x32x32xbf16> to vector<32x32xbf16>
    %cst_71 = arith.constant dense<0.000000e+00> : vector<64x32xf32>
    %107 = tpu.matmul %104, %106, %cst_71 {dimension_numbers = #tpu.dot_dimension_numbers<[1], [0], [0], [1], [0, 0, 1, 1], [], []>} : vector<64x32xbf16>, vector<32x32xbf16>, vector<64x32xf32> -> vector<64x32xf32>
    %108 = arith.addf %98, %107 : vector<64x32xf32>
    %c8_i32_72 = arith.constant 8 : i32
    %109 = tpu.dynamic_rotate %95 by %c8_i32_72 dim 0 : vector<64x32xf32>, i32 -> vector<64x32xf32>
    %c1_73 = arith.constant 1 : index
    %c0_74 = arith.constant 0 : index
    %c0_75 = arith.constant 0 : index
    %110 = vector.load %arg2[%c1_73, %c0_74, %c0_75] : memref<9x64x1xf32, #tpu.memory_space<vmem>>, vector<1x64x1xf32>
    %111 = vector.shape_cast %110 : vector<1x64x1xf32> to vector<64x1xf32>
    %112 = vector.broadcast %111 : vector<64x1xf32> to vector<64x32xf32>
    %113 = arith.mulf %109, %112 : vector<64x32xf32>
    %114 = arith.truncf %113 : vector<64x32xf32> to vector<64x32xbf16>
    %c1_76 = arith.constant 1 : index
    %c0_77 = arith.constant 0 : index
    %c0_78 = arith.constant 0 : index
    %115 = vector.load %arg6[%c1_76, %c0_77, %c0_78] : memref<9x32x32xbf16, #tpu.memory_space<vmem>>, vector<1x32x32xbf16>
    %116 = vector.shape_cast %115 : vector<1x32x32xbf16> to vector<32x32xbf16>
    %cst_79 = arith.constant dense<0.000000e+00> : vector<64x32xf32>
    %117 = tpu.matmul %114, %116, %cst_79 {dimension_numbers = #tpu.dot_dimension_numbers<[1], [0], [0], [1], [0, 0, 1, 1], [], []>} : vector<64x32xbf16>, vector<32x32xbf16>, vector<64x32xf32> -> vector<64x32xf32>
    %118 = arith.addf %108, %117 : vector<64x32xf32>
    %c7_i32_80 = arith.constant 7 : i32
    %119 = tpu.dynamic_rotate %95 by %c7_i32_80 dim 0 : vector<64x32xf32>, i32 -> vector<64x32xf32>
    %c2_81 = arith.constant 2 : index
    %c0_82 = arith.constant 0 : index
    %c0_83 = arith.constant 0 : index
    %120 = vector.load %arg2[%c2_81, %c0_82, %c0_83] : memref<9x64x1xf32, #tpu.memory_space<vmem>>, vector<1x64x1xf32>
    %121 = vector.shape_cast %120 : vector<1x64x1xf32> to vector<64x1xf32>
    %122 = vector.broadcast %121 : vector<64x1xf32> to vector<64x32xf32>
    %123 = arith.mulf %119, %122 : vector<64x32xf32>
    %124 = arith.truncf %123 : vector<64x32xf32> to vector<64x32xbf16>
    %c2_84 = arith.constant 2 : index
    %c0_85 = arith.constant 0 : index
    %c0_86 = arith.constant 0 : index
    %125 = vector.load %arg6[%c2_84, %c0_85, %c0_86] : memref<9x32x32xbf16, #tpu.memory_space<vmem>>, vector<1x32x32xbf16>
    %126 = vector.shape_cast %125 : vector<1x32x32xbf16> to vector<32x32xbf16>
    %cst_87 = arith.constant dense<0.000000e+00> : vector<64x32xf32>
    %127 = tpu.matmul %124, %126, %cst_87 {dimension_numbers = #tpu.dot_dimension_numbers<[1], [0], [0], [1], [0, 0, 1, 1], [], []>} : vector<64x32xbf16>, vector<32x32xbf16>, vector<64x32xf32> -> vector<64x32xf32>
    %128 = arith.addf %118, %127 : vector<64x32xf32>
    %c1_i32_88 = arith.constant 1 : i32
    %129 = tpu.dynamic_rotate %95 by %c1_i32_88 dim 0 : vector<64x32xf32>, i32 -> vector<64x32xf32>
    %c3_89 = arith.constant 3 : index
    %c0_90 = arith.constant 0 : index
    %c0_91 = arith.constant 0 : index
    %130 = vector.load %arg2[%c3_89, %c0_90, %c0_91] : memref<9x64x1xf32, #tpu.memory_space<vmem>>, vector<1x64x1xf32>
    %131 = vector.shape_cast %130 : vector<1x64x1xf32> to vector<64x1xf32>
    %132 = vector.broadcast %131 : vector<64x1xf32> to vector<64x32xf32>
    %133 = arith.mulf %129, %132 : vector<64x32xf32>
    %134 = arith.truncf %133 : vector<64x32xf32> to vector<64x32xbf16>
    %c3_92 = arith.constant 3 : index
    %c0_93 = arith.constant 0 : index
    %c0_94 = arith.constant 0 : index
    %135 = vector.load %arg6[%c3_92, %c0_93, %c0_94] : memref<9x32x32xbf16, #tpu.memory_space<vmem>>, vector<1x32x32xbf16>
    %136 = vector.shape_cast %135 : vector<1x32x32xbf16> to vector<32x32xbf16>
    %cst_95 = arith.constant dense<0.000000e+00> : vector<64x32xf32>
    %137 = tpu.matmul %134, %136, %cst_95 {dimension_numbers = #tpu.dot_dimension_numbers<[1], [0], [0], [1], [0, 0, 1, 1], [], []>} : vector<64x32xbf16>, vector<32x32xbf16>, vector<64x32xf32> -> vector<64x32xf32>
    %138 = arith.addf %128, %137 : vector<64x32xf32>
    %139 = arith.truncf %95 : vector<64x32xf32> to vector<64x32xbf16>
    %c4_96 = arith.constant 4 : index
    %c0_97 = arith.constant 0 : index
    %c0_98 = arith.constant 0 : index
    %140 = vector.load %arg6[%c4_96, %c0_97, %c0_98] : memref<9x32x32xbf16, #tpu.memory_space<vmem>>, vector<1x32x32xbf16>
    %141 = vector.shape_cast %140 : vector<1x32x32xbf16> to vector<32x32xbf16>
    %cst_99 = arith.constant dense<0.000000e+00> : vector<64x32xf32>
    %142 = tpu.matmul %139, %141, %cst_99 {dimension_numbers = #tpu.dot_dimension_numbers<[1], [0], [0], [1], [0, 0, 1, 1], [], []>} : vector<64x32xbf16>, vector<32x32xbf16>, vector<64x32xf32> -> vector<64x32xf32>
    %143 = arith.addf %138, %142 : vector<64x32xf32>
    %c63_i32_100 = arith.constant 63 : i32
    %144 = tpu.dynamic_rotate %95 by %c63_i32_100 dim 0 : vector<64x32xf32>, i32 -> vector<64x32xf32>
    %c5_101 = arith.constant 5 : index
    %c0_102 = arith.constant 0 : index
    %c0_103 = arith.constant 0 : index
    %145 = vector.load %arg2[%c5_101, %c0_102, %c0_103] : memref<9x64x1xf32, #tpu.memory_space<vmem>>, vector<1x64x1xf32>
    %146 = vector.shape_cast %145 : vector<1x64x1xf32> to vector<64x1xf32>
    %147 = vector.broadcast %146 : vector<64x1xf32> to vector<64x32xf32>
    %148 = arith.mulf %144, %147 : vector<64x32xf32>
    %149 = arith.truncf %148 : vector<64x32xf32> to vector<64x32xbf16>
    %c5_104 = arith.constant 5 : index
    %c0_105 = arith.constant 0 : index
    %c0_106 = arith.constant 0 : index
    %150 = vector.load %arg6[%c5_104, %c0_105, %c0_106] : memref<9x32x32xbf16, #tpu.memory_space<vmem>>, vector<1x32x32xbf16>
    %151 = vector.shape_cast %150 : vector<1x32x32xbf16> to vector<32x32xbf16>
    %cst_107 = arith.constant dense<0.000000e+00> : vector<64x32xf32>
    %152 = tpu.matmul %149, %151, %cst_107 {dimension_numbers = #tpu.dot_dimension_numbers<[1], [0], [0], [1], [0, 0, 1, 1], [], []>} : vector<64x32xbf16>, vector<32x32xbf16>, vector<64x32xf32> -> vector<64x32xf32>
    %153 = arith.addf %143, %152 : vector<64x32xf32>
    %c57_i32_108 = arith.constant 57 : i32
    %154 = tpu.dynamic_rotate %95 by %c57_i32_108 dim 0 : vector<64x32xf32>, i32 -> vector<64x32xf32>
    %c6_109 = arith.constant 6 : index
    %c0_110 = arith.constant 0 : index
    %c0_111 = arith.constant 0 : index
    %155 = vector.load %arg2[%c6_109, %c0_110, %c0_111] : memref<9x64x1xf32, #tpu.memory_space<vmem>>, vector<1x64x1xf32>
    %156 = vector.shape_cast %155 : vector<1x64x1xf32> to vector<64x1xf32>
    %157 = vector.broadcast %156 : vector<64x1xf32> to vector<64x32xf32>
    %158 = arith.mulf %154, %157 : vector<64x32xf32>
    %159 = arith.truncf %158 : vector<64x32xf32> to vector<64x32xbf16>
    %c6_112 = arith.constant 6 : index
    %c0_113 = arith.constant 0 : index
    %c0_114 = arith.constant 0 : index
    %160 = vector.load %arg6[%c6_112, %c0_113, %c0_114] : memref<9x32x32xbf16, #tpu.memory_space<vmem>>, vector<1x32x32xbf16>
    %161 = vector.shape_cast %160 : vector<1x32x32xbf16> to vector<32x32xbf16>
    %cst_115 = arith.constant dense<0.000000e+00> : vector<64x32xf32>
    %162 = tpu.matmul %159, %161, %cst_115 {dimension_numbers = #tpu.dot_dimension_numbers<[1], [0], [0], [1], [0, 0, 1, 1], [], []>} : vector<64x32xbf16>, vector<32x32xbf16>, vector<64x32xf32> -> vector<64x32xf32>
    %163 = arith.addf %153, %162 : vector<64x32xf32>
    %c56_i32_116 = arith.constant 56 : i32
    %164 = tpu.dynamic_rotate %95 by %c56_i32_116 dim 0 : vector<64x32xf32>, i32 -> vector<64x32xf32>
    %c7_117 = arith.constant 7 : index
    %c0_118 = arith.constant 0 : index
    %c0_119 = arith.constant 0 : index
    %165 = vector.load %arg2[%c7_117, %c0_118, %c0_119] : memref<9x64x1xf32, #tpu.memory_space<vmem>>, vector<1x64x1xf32>
    %166 = vector.shape_cast %165 : vector<1x64x1xf32> to vector<64x1xf32>
    %167 = vector.broadcast %166 : vector<64x1xf32> to vector<64x32xf32>
    %168 = arith.mulf %164, %167 : vector<64x32xf32>
    %169 = arith.truncf %168 : vector<64x32xf32> to vector<64x32xbf16>
    %c7_120 = arith.constant 7 : index
    %c0_121 = arith.constant 0 : index
    %c0_122 = arith.constant 0 : index
    %170 = vector.load %arg6[%c7_120, %c0_121, %c0_122] : memref<9x32x32xbf16, #tpu.memory_space<vmem>>, vector<1x32x32xbf16>
    %171 = vector.shape_cast %170 : vector<1x32x32xbf16> to vector<32x32xbf16>
    %cst_123 = arith.constant dense<0.000000e+00> : vector<64x32xf32>
    %172 = tpu.matmul %169, %171, %cst_123 {dimension_numbers = #tpu.dot_dimension_numbers<[1], [0], [0], [1], [0, 0, 1, 1], [], []>} : vector<64x32xbf16>, vector<32x32xbf16>, vector<64x32xf32> -> vector<64x32xf32>
    %173 = arith.addf %163, %172 : vector<64x32xf32>
    %c55_i32_124 = arith.constant 55 : i32
    %174 = tpu.dynamic_rotate %95 by %c55_i32_124 dim 0 : vector<64x32xf32>, i32 -> vector<64x32xf32>
    %c8_125 = arith.constant 8 : index
    %c0_126 = arith.constant 0 : index
    %c0_127 = arith.constant 0 : index
    %175 = vector.load %arg2[%c8_125, %c0_126, %c0_127] : memref<9x64x1xf32, #tpu.memory_space<vmem>>, vector<1x64x1xf32>
    %176 = vector.shape_cast %175 : vector<1x64x1xf32> to vector<64x1xf32>
    %177 = vector.broadcast %176 : vector<64x1xf32> to vector<64x32xf32>
    %178 = arith.mulf %174, %177 : vector<64x32xf32>
    %179 = arith.truncf %178 : vector<64x32xf32> to vector<64x32xbf16>
    %c8_128 = arith.constant 8 : index
    %c0_129 = arith.constant 0 : index
    %c0_130 = arith.constant 0 : index
    %180 = vector.load %arg6[%c8_128, %c0_129, %c0_130] : memref<9x32x32xbf16, #tpu.memory_space<vmem>>, vector<1x32x32xbf16>
    %181 = vector.shape_cast %180 : vector<1x32x32xbf16> to vector<32x32xbf16>
    %cst_131 = arith.constant dense<0.000000e+00> : vector<64x32xf32>
    %182 = tpu.matmul %179, %181, %cst_131 {dimension_numbers = #tpu.dot_dimension_numbers<[1], [0], [0], [1], [0, 0, 1, 1], [], []>} : vector<64x32xbf16>, vector<32x32xbf16>, vector<64x32xf32> -> vector<64x32xf32>
    %183 = arith.addf %173, %182 : vector<64x32xf32>
    %184 = vector.broadcast %96 : vector<1x32xf32> to vector<64x32xf32>
    %185 = arith.mulf %183, %184 : vector<64x32xf32>
    %186 = vector.broadcast %97 : vector<1x32xf32> to vector<64x32xf32>
    %187 = arith.addf %185, %186 : vector<64x32xf32>
    %188 = vector.shape_cast %187 : vector<64x32xf32> to vector<1x64x32xf32>
    %cst_132 = arith.constant dense<0.000000e+00> : vector<1x32xf32>
    %189 = vector.multi_reduction <add>, %188, %cst_132 [1] : vector<1x64x32xf32> to vector<1x32xf32>
    %cst_133 = arith.constant 6.400000e+01 : f32
    %190 = vector.broadcast %cst_133 : f32 to vector<1x32xf32>
    %191 = arith.divf %189, %190 : vector<1x32xf32>
    %c0_134 = arith.constant 0 : index
    %c0_135 = arith.constant 0 : index
    %192 = vector.load %arg9[%c0_134, %c0_135] : memref<32x8xf32, #tpu.memory_space<vmem>>, vector<32x8xf32>
    %cst_136 = arith.constant dense<0.000000e+00> : vector<1x8xf32>
    %193 = tpu.matmul %191, %192, %cst_136 {dimension_numbers = #tpu.dot_dimension_numbers<[1], [0], [0], [1], [0, 0, 1, 1], [], []>} : vector<1x32xf32>, vector<32x8xf32>, vector<1x8xf32> -> vector<1x8xf32>
    %c0_137 = arith.constant 0 : index
    %c0_138 = arith.constant 0 : index
    %194 = vector.load %arg10[%c0_137, %c0_138] : memref<1x8xf32, #tpu.memory_space<vmem>>, vector<1x8xf32>
    %195 = arith.addf %193, %194 : vector<1x8xf32>
    %cst_139 = arith.constant 0.000000e+00 : f32
    %196 = vector.broadcast %cst_139 : f32 to vector<1x8xf32>
    %197 = arith.maximumf %195, %196 : vector<1x8xf32>
    %c0_140 = arith.constant 0 : index
    %c0_141 = arith.constant 0 : index
    %198 = vector.load %arg11[%c0_140, %c0_141] : memref<8x32xf32, #tpu.memory_space<vmem>>, vector<8x32xf32>
    %cst_142 = arith.constant dense<0.000000e+00> : vector<1x32xf32>
    %199 = tpu.matmul %197, %198, %cst_142 {dimension_numbers = #tpu.dot_dimension_numbers<[1], [0], [0], [1], [0, 0, 1, 1], [], []>} : vector<1x8xf32>, vector<8x32xf32>, vector<1x32xf32> -> vector<1x32xf32>
    %c0_143 = arith.constant 0 : index
    %c0_144 = arith.constant 0 : index
    %200 = vector.load %arg12[%c0_143, %c0_144] : memref<1x32xf32, #tpu.memory_space<vmem>>, vector<1x32xf32>
    %201 = arith.addf %199, %200 : vector<1x32xf32>
    %202 = arith.negf %201 : vector<1x32xf32>
    %203 = math.exp %202 : vector<1x32xf32>
    %cst_145 = arith.constant 1.000000e+00 : f32
    %204 = vector.broadcast %cst_145 : f32 to vector<1x32xf32>
    %205 = arith.addf %204, %203 : vector<1x32xf32>
    %206 = arith.divf %204, %205 : vector<1x32xf32>
    %c0_146 = arith.constant 0 : index
    %c0_147 = arith.constant 0 : index
    %207 = vector.load %arg13[%c0_146, %c0_147] : memref<8x32xf32, #tpu.memory_space<vmem>>, vector<8x32xf32>
    %cst_148 = arith.constant dense<0.000000e+00> : vector<1x32xf32>
    %208 = tpu.matmul %197, %207, %cst_148 {dimension_numbers = #tpu.dot_dimension_numbers<[1], [0], [0], [1], [0, 0, 1, 1], [], []>} : vector<1x8xf32>, vector<8x32xf32>, vector<1x32xf32> -> vector<1x32xf32>
    %c0_149 = arith.constant 0 : index
    %c0_150 = arith.constant 0 : index
    %209 = vector.load %arg14[%c0_149, %c0_150] : memref<1x32xf32, #tpu.memory_space<vmem>>, vector<1x32xf32>
    %210 = arith.addf %208, %209 : vector<1x32xf32>
    %211 = vector.shape_cast %206 : vector<1x32xf32> to vector<1x1x32xf32>
    %212 = vector.broadcast %211 : vector<1x1x32xf32> to vector<1x64x32xf32>
    %213 = arith.mulf %188, %212 : vector<1x64x32xf32>
    %214 = vector.shape_cast %210 : vector<1x32xf32> to vector<1x1x32xf32>
    %215 = vector.broadcast %214 : vector<1x1x32xf32> to vector<1x64x32xf32>
    %216 = arith.addf %213, %215 : vector<1x64x32xf32>
    %217 = arith.addf %216, %0 : vector<1x64x32xf32>
    %cst_151 = arith.constant 0.000000e+00 : f32
    %218 = vector.broadcast %cst_151 : f32 to vector<1x64x32xf32>
    %219 = arith.maximumf %217, %218 : vector<1x64x32xf32>
    %c0_152 = arith.constant 0 : index
    %c0_153 = arith.constant 0 : index
    %c0_154 = arith.constant 0 : index
    %220 = vector.load %arg15[%c0_152, %c0_153, %c0_154] : memref<1x64x32xf32, #tpu.memory_space<vmem>>, vector<1x64x32xf32>
    tpu.vector_store %arg15[%c0_152, %c0_153, %c0_154], %219 {strides = array<i32>} : memref<1x64x32xf32, #tpu.memory_space<vmem>>, vector<1x64x32xf32>,
    return
  }
  func.func @transform_0(%arg0: i32) -> (i32, i32, i32) {
    %c0_i32 = arith.constant 0 : i32
    %c0_i32_0 = arith.constant 0 : i32
    %c0_i32_1 = arith.constant 0 : i32
    return %arg0, %c0_i32, %c0_i32_0 : i32, i32, i32
  }
  func.func @transform_1(%arg0: i32) -> (i32, i32, i32) {
    %c0_i32 = arith.constant 0 : i32
    %c0_i32_0 = arith.constant 0 : i32
    %c0_i32_1 = arith.constant 0 : i32
    %c0_i32_2 = arith.constant 0 : i32
    return %c0_i32, %c0_i32_0, %c0_i32_1 : i32, i32, i32
  }
  func.func @transform_2(%arg0: i32) -> (i32, i32, i32) {
    %c0_i32 = arith.constant 0 : i32
    %c0_i32_0 = arith.constant 0 : i32
    %c0_i32_1 = arith.constant 0 : i32
    %c0_i32_2 = arith.constant 0 : i32
    return %c0_i32, %c0_i32_0, %c0_i32_1 : i32, i32, i32
  }
  func.func @transform_3(%arg0: i32) -> (i32, i32) {
    %c0_i32 = arith.constant 0 : i32
    %c0_i32_0 = arith.constant 0 : i32
    %c0_i32_1 = arith.constant 0 : i32
    return %c0_i32, %c0_i32_0 : i32, i32
  }
  func.func @transform_4(%arg0: i32) -> (i32, i32) {
    %c0_i32 = arith.constant 0 : i32
    %c0_i32_0 = arith.constant 0 : i32
    %c0_i32_1 = arith.constant 0 : i32
    return %c0_i32, %c0_i32_0 : i32, i32
  }
  func.func @transform_5(%arg0: i32) -> (i32, i32, i32) {
    %c0_i32 = arith.constant 0 : i32
    %c0_i32_0 = arith.constant 0 : i32
    %c0_i32_1 = arith.constant 0 : i32
    %c0_i32_2 = arith.constant 0 : i32
    return %c0_i32, %c0_i32_0, %c0_i32_1 : i32, i32, i32
  }
  func.func @transform_6(%arg0: i32) -> (i32, i32) {
    %c0_i32 = arith.constant 0 : i32
    %c0_i32_0 = arith.constant 0 : i32
    %c0_i32_1 = arith.constant 0 : i32
    return %c0_i32, %c0_i32_0 : i32, i32
  }
  func.func @transform_7(%arg0: i32) -> (i32, i32) {
    %c0_i32 = arith.constant 0 : i32
    %c0_i32_0 = arith.constant 0 : i32
    %c0_i32_1 = arith.constant 0 : i32
    return %c0_i32, %c0_i32_0 : i32, i32
  }
  func.func @transform_8(%arg0: i32) -> (i32, i32) {
    %c0_i32 = arith.constant 0 : i32
    %c0_i32_0 = arith.constant 0 : i32
    %c0_i32_1 = arith.constant 0 : i32
    return %c0_i32, %c0_i32_0 : i32, i32
  }
  func.func @transform_9(%arg0: i32) -> (i32, i32) {
    %c0_i32 = arith.constant 0 : i32
    %c0_i32_0 = arith.constant 0 : i32
    %c0_i32_1 = arith.constant 0 : i32
    return %c0_i32, %c0_i32_0 : i32, i32
  }
  func.func @transform_10(%arg0: i32) -> (i32, i32) {
    %c0_i32 = arith.constant 0 : i32
    %c0_i32_0 = arith.constant 0 : i32
    %c0_i32_1 = arith.constant 0 : i32
    return %c0_i32, %c0_i32_0 : i32, i32
  }
  func.func @transform_11(%arg0: i32) -> (i32, i32) {
    %c0_i32 = arith.constant 0 : i32
    %c0_i32_0 = arith.constant 0 : i32
    %c0_i32_1 = arith.constant 0 : i32
    return %c0_i32, %c0_i32_0 : i32, i32
  }
  func.func @transform_12(%arg0: i32) -> (i32, i32) {
    %c0_i32 = arith.constant 0 : i32
    %c0_i32_0 = arith.constant 0 : i32
    %c0_i32_1 = arith.constant 0 : i32
    return %c0_i32, %c0_i32_0 : i32, i32
  }
  func.func @transform_13(%arg0: i32) -> (i32, i32) {
    %c0_i32 = arith.constant 0 : i32
    %c0_i32_0 = arith.constant 0 : i32
    %c0_i32_1 = arith.constant 0 : i32
    return %c0_i32, %c0_i32_0 : i32, i32
  }
  func.func @transform_14(%arg0: i32) -> (i32, i32, i32) {
    %c0_i32 = arith.constant 0 : i32
    %c0_i32_0 = arith.constant 0 : i32
    %c0_i32_1 = arith.constant 0 : i32
    return %arg0, %c0_i32, %c0_i32_0 : i32, i32, i32
  }
}

module attributes {stable_mosaic.version = 11 : i64} {
  func.func @_conv3x3_kernel(%arg0: i32, %arg1: memref<1x64x112xf32, #tpu.memory_space<vmem>>, %arg2: memref<9x64x1xf32, #tpu.memory_space<vmem>>, %arg3: memref<9x112x32xbf16, #tpu.memory_space<vmem>>, %arg4: memref<1x32xf32, #tpu.memory_space<vmem>>, %arg5: memref<1x32xf32, #tpu.memory_space<vmem>>, %arg6: memref<1x64x32xf32, #tpu.memory_space<vmem>>) attributes {dimension_semantics = [#tpu.dimension_semantics<parallel>], iteration_bounds = array<i64: 2>, scalar_prefetch = 0 : i64, scratch_operands = 0 : i64, tpu.core_type = #tpu.core_type<tc>, window_params = [{transform_indices = @transform_0, window_bounds = array<i64: 1, 64, 112>}, {pipeline_mode = #tpu.pipeline_mode<synchronous>, transform_indices = @transform_1, window_bounds = array<i64: 9, 64, 1>}, {pipeline_mode = #tpu.pipeline_mode<synchronous>, transform_indices = @transform_2, window_bounds = array<i64: 9, 112, 32>}, {pipeline_mode = #tpu.pipeline_mode<synchronous>, transform_indices = @transform_3, window_bounds = array<i64: 1, 32>}, {pipeline_mode = #tpu.pipeline_mode<synchronous>, transform_indices = @transform_4, window_bounds = array<i64: 1, 32>}, {transform_indices = @transform_5, window_bounds = array<i64: 1, 64, 32>}]} {
    %c0 = arith.constant 0 : index
    %c0_0 = arith.constant 0 : index
    %c0_1 = arith.constant 0 : index
    %0 = vector.load %arg1[%c0, %c0_0, %c0_1] : memref<1x64x112xf32, #tpu.memory_space<vmem>>, vector<1x64x112xf32>
    %1 = vector.shape_cast %0 : vector<1x64x112xf32> to vector<64x112xf32>
    %c0_2 = arith.constant 0 : index
    %c0_3 = arith.constant 0 : index
    %2 = vector.load %arg4[%c0_2, %c0_3] : memref<1x32xf32, #tpu.memory_space<vmem>>, vector<1x32xf32>
    %c0_4 = arith.constant 0 : index
    %c0_5 = arith.constant 0 : index
    %3 = vector.load %arg5[%c0_4, %c0_5] : memref<1x32xf32, #tpu.memory_space<vmem>>, vector<1x32xf32>
    %cst = arith.constant 0.000000e+00 : f32
    %4 = vector.broadcast %cst : f32 to vector<64x32xf32>
    %c9_i32 = arith.constant 9 : i32
    %5 = tpu.dynamic_rotate %1 by %c9_i32 dim 0 : vector<64x112xf32>, i32 -> vector<64x112xf32>
    %c0_6 = arith.constant 0 : index
    %c0_7 = arith.constant 0 : index
    %c0_8 = arith.constant 0 : index
    %6 = vector.load %arg2[%c0_6, %c0_7, %c0_8] : memref<9x64x1xf32, #tpu.memory_space<vmem>>, vector<1x64x1xf32>
    %7 = vector.shape_cast %6 : vector<1x64x1xf32> to vector<64x1xf32>
    %8 = vector.broadcast %7 : vector<64x1xf32> to vector<64x112xf32>
    %9 = arith.mulf %5, %8 : vector<64x112xf32>
    %10 = arith.truncf %9 : vector<64x112xf32> to vector<64x112xbf16>
    %c0_9 = arith.constant 0 : index
    %c0_10 = arith.constant 0 : index
    %c0_11 = arith.constant 0 : index
    %11 = vector.load %arg3[%c0_9, %c0_10, %c0_11] : memref<9x112x32xbf16, #tpu.memory_space<vmem>>, vector<1x112x32xbf16>
    %12 = vector.shape_cast %11 : vector<1x112x32xbf16> to vector<112x32xbf16>
    %cst_12 = arith.constant dense<0.000000e+00> : vector<64x32xf32>
    %13 = tpu.matmul %10, %12, %cst_12 {dimension_numbers = #tpu.dot_dimension_numbers<[1], [0], [0], [1], [0, 0, 1, 1], [], []>} : vector<64x112xbf16>, vector<112x32xbf16>, vector<64x32xf32> -> vector<64x32xf32>
    %14 = arith.addf %4, %13 : vector<64x32xf32>
    %c8_i32 = arith.constant 8 : i32
    %15 = tpu.dynamic_rotate %1 by %c8_i32 dim 0 : vector<64x112xf32>, i32 -> vector<64x112xf32>
    %c1 = arith.constant 1 : index
    %c0_13 = arith.constant 0 : index
    %c0_14 = arith.constant 0 : index
    %16 = vector.load %arg2[%c1, %c0_13, %c0_14] : memref<9x64x1xf32, #tpu.memory_space<vmem>>, vector<1x64x1xf32>
    %17 = vector.shape_cast %16 : vector<1x64x1xf32> to vector<64x1xf32>
    %18 = vector.broadcast %17 : vector<64x1xf32> to vector<64x112xf32>
    %19 = arith.mulf %15, %18 : vector<64x112xf32>
    %20 = arith.truncf %19 : vector<64x112xf32> to vector<64x112xbf16>
    %c1_15 = arith.constant 1 : index
    %c0_16 = arith.constant 0 : index
    %c0_17 = arith.constant 0 : index
    %21 = vector.load %arg3[%c1_15, %c0_16, %c0_17] : memref<9x112x32xbf16, #tpu.memory_space<vmem>>, vector<1x112x32xbf16>
    %22 = vector.shape_cast %21 : vector<1x112x32xbf16> to vector<112x32xbf16>
    %cst_18 = arith.constant dense<0.000000e+00> : vector<64x32xf32>
    %23 = tpu.matmul %20, %22, %cst_18 {dimension_numbers = #tpu.dot_dimension_numbers<[1], [0], [0], [1], [0, 0, 1, 1], [], []>} : vector<64x112xbf16>, vector<112x32xbf16>, vector<64x32xf32> -> vector<64x32xf32>
    %24 = arith.addf %14, %23 : vector<64x32xf32>
    %c7_i32 = arith.constant 7 : i32
    %25 = tpu.dynamic_rotate %1 by %c7_i32 dim 0 : vector<64x112xf32>, i32 -> vector<64x112xf32>
    %c2 = arith.constant 2 : index
    %c0_19 = arith.constant 0 : index
    %c0_20 = arith.constant 0 : index
    %26 = vector.load %arg2[%c2, %c0_19, %c0_20] : memref<9x64x1xf32, #tpu.memory_space<vmem>>, vector<1x64x1xf32>
    %27 = vector.shape_cast %26 : vector<1x64x1xf32> to vector<64x1xf32>
    %28 = vector.broadcast %27 : vector<64x1xf32> to vector<64x112xf32>
    %29 = arith.mulf %25, %28 : vector<64x112xf32>
    %30 = arith.truncf %29 : vector<64x112xf32> to vector<64x112xbf16>
    %c2_21 = arith.constant 2 : index
    %c0_22 = arith.constant 0 : index
    %c0_23 = arith.constant 0 : index
    %31 = vector.load %arg3[%c2_21, %c0_22, %c0_23] : memref<9x112x32xbf16, #tpu.memory_space<vmem>>, vector<1x112x32xbf16>
    %32 = vector.shape_cast %31 : vector<1x112x32xbf16> to vector<112x32xbf16>
    %cst_24 = arith.constant dense<0.000000e+00> : vector<64x32xf32>
    %33 = tpu.matmul %30, %32, %cst_24 {dimension_numbers = #tpu.dot_dimension_numbers<[1], [0], [0], [1], [0, 0, 1, 1], [], []>} : vector<64x112xbf16>, vector<112x32xbf16>, vector<64x32xf32> -> vector<64x32xf32>
    %34 = arith.addf %24, %33 : vector<64x32xf32>
    %c1_i32 = arith.constant 1 : i32
    %35 = tpu.dynamic_rotate %1 by %c1_i32 dim 0 : vector<64x112xf32>, i32 -> vector<64x112xf32>
    %c3 = arith.constant 3 : index
    %c0_25 = arith.constant 0 : index
    %c0_26 = arith.constant 0 : index
    %36 = vector.load %arg2[%c3, %c0_25, %c0_26] : memref<9x64x1xf32, #tpu.memory_space<vmem>>, vector<1x64x1xf32>
    %37 = vector.shape_cast %36 : vector<1x64x1xf32> to vector<64x1xf32>
    %38 = vector.broadcast %37 : vector<64x1xf32> to vector<64x112xf32>
    %39 = arith.mulf %35, %38 : vector<64x112xf32>
    %40 = arith.truncf %39 : vector<64x112xf32> to vector<64x112xbf16>
    %c3_27 = arith.constant 3 : index
    %c0_28 = arith.constant 0 : index
    %c0_29 = arith.constant 0 : index
    %41 = vector.load %arg3[%c3_27, %c0_28, %c0_29] : memref<9x112x32xbf16, #tpu.memory_space<vmem>>, vector<1x112x32xbf16>
    %42 = vector.shape_cast %41 : vector<1x112x32xbf16> to vector<112x32xbf16>
    %cst_30 = arith.constant dense<0.000000e+00> : vector<64x32xf32>
    %43 = tpu.matmul %40, %42, %cst_30 {dimension_numbers = #tpu.dot_dimension_numbers<[1], [0], [0], [1], [0, 0, 1, 1], [], []>} : vector<64x112xbf16>, vector<112x32xbf16>, vector<64x32xf32> -> vector<64x32xf32>
    %44 = arith.addf %34, %43 : vector<64x32xf32>
    %45 = arith.truncf %1 : vector<64x112xf32> to vector<64x112xbf16>
    %c4 = arith.constant 4 : index
    %c0_31 = arith.constant 0 : index
    %c0_32 = arith.constant 0 : index
    %46 = vector.load %arg3[%c4, %c0_31, %c0_32] : memref<9x112x32xbf16, #tpu.memory_space<vmem>>, vector<1x112x32xbf16>
    %47 = vector.shape_cast %46 : vector<1x112x32xbf16> to vector<112x32xbf16>
    %cst_33 = arith.constant dense<0.000000e+00> : vector<64x32xf32>
    %48 = tpu.matmul %45, %47, %cst_33 {dimension_numbers = #tpu.dot_dimension_numbers<[1], [0], [0], [1], [0, 0, 1, 1], [], []>} : vector<64x112xbf16>, vector<112x32xbf16>, vector<64x32xf32> -> vector<64x32xf32>
    %49 = arith.addf %44, %48 : vector<64x32xf32>
    %c63_i32 = arith.constant 63 : i32
    %50 = tpu.dynamic_rotate %1 by %c63_i32 dim 0 : vector<64x112xf32>, i32 -> vector<64x112xf32>
    %c5 = arith.constant 5 : index
    %c0_34 = arith.constant 0 : index
    %c0_35 = arith.constant 0 : index
    %51 = vector.load %arg2[%c5, %c0_34, %c0_35] : memref<9x64x1xf32, #tpu.memory_space<vmem>>, vector<1x64x1xf32>
    %52 = vector.shape_cast %51 : vector<1x64x1xf32> to vector<64x1xf32>
    %53 = vector.broadcast %52 : vector<64x1xf32> to vector<64x112xf32>
    %54 = arith.mulf %50, %53 : vector<64x112xf32>
    %55 = arith.truncf %54 : vector<64x112xf32> to vector<64x112xbf16>
    %c5_36 = arith.constant 5 : index
    %c0_37 = arith.constant 0 : index
    %c0_38 = arith.constant 0 : index
    %56 = vector.load %arg3[%c5_36, %c0_37, %c0_38] : memref<9x112x32xbf16, #tpu.memory_space<vmem>>, vector<1x112x32xbf16>
    %57 = vector.shape_cast %56 : vector<1x112x32xbf16> to vector<112x32xbf16>
    %cst_39 = arith.constant dense<0.000000e+00> : vector<64x32xf32>
    %58 = tpu.matmul %55, %57, %cst_39 {dimension_numbers = #tpu.dot_dimension_numbers<[1], [0], [0], [1], [0, 0, 1, 1], [], []>} : vector<64x112xbf16>, vector<112x32xbf16>, vector<64x32xf32> -> vector<64x32xf32>
    %59 = arith.addf %49, %58 : vector<64x32xf32>
    %c57_i32 = arith.constant 57 : i32
    %60 = tpu.dynamic_rotate %1 by %c57_i32 dim 0 : vector<64x112xf32>, i32 -> vector<64x112xf32>
    %c6 = arith.constant 6 : index
    %c0_40 = arith.constant 0 : index
    %c0_41 = arith.constant 0 : index
    %61 = vector.load %arg2[%c6, %c0_40, %c0_41] : memref<9x64x1xf32, #tpu.memory_space<vmem>>, vector<1x64x1xf32>
    %62 = vector.shape_cast %61 : vector<1x64x1xf32> to vector<64x1xf32>
    %63 = vector.broadcast %62 : vector<64x1xf32> to vector<64x112xf32>
    %64 = arith.mulf %60, %63 : vector<64x112xf32>
    %65 = arith.truncf %64 : vector<64x112xf32> to vector<64x112xbf16>
    %c6_42 = arith.constant 6 : index
    %c0_43 = arith.constant 0 : index
    %c0_44 = arith.constant 0 : index
    %66 = vector.load %arg3[%c6_42, %c0_43, %c0_44] : memref<9x112x32xbf16, #tpu.memory_space<vmem>>, vector<1x112x32xbf16>
    %67 = vector.shape_cast %66 : vector<1x112x32xbf16> to vector<112x32xbf16>
    %cst_45 = arith.constant dense<0.000000e+00> : vector<64x32xf32>
    %68 = tpu.matmul %65, %67, %cst_45 {dimension_numbers = #tpu.dot_dimension_numbers<[1], [0], [0], [1], [0, 0, 1, 1], [], []>} : vector<64x112xbf16>, vector<112x32xbf16>, vector<64x32xf32> -> vector<64x32xf32>
    %69 = arith.addf %59, %68 : vector<64x32xf32>
    %c56_i32 = arith.constant 56 : i32
    %70 = tpu.dynamic_rotate %1 by %c56_i32 dim 0 : vector<64x112xf32>, i32 -> vector<64x112xf32>
    %c7 = arith.constant 7 : index
    %c0_46 = arith.constant 0 : index
    %c0_47 = arith.constant 0 : index
    %71 = vector.load %arg2[%c7, %c0_46, %c0_47] : memref<9x64x1xf32, #tpu.memory_space<vmem>>, vector<1x64x1xf32>
    %72 = vector.shape_cast %71 : vector<1x64x1xf32> to vector<64x1xf32>
    %73 = vector.broadcast %72 : vector<64x1xf32> to vector<64x112xf32>
    %74 = arith.mulf %70, %73 : vector<64x112xf32>
    %75 = arith.truncf %74 : vector<64x112xf32> to vector<64x112xbf16>
    %c7_48 = arith.constant 7 : index
    %c0_49 = arith.constant 0 : index
    %c0_50 = arith.constant 0 : index
    %76 = vector.load %arg3[%c7_48, %c0_49, %c0_50] : memref<9x112x32xbf16, #tpu.memory_space<vmem>>, vector<1x112x32xbf16>
    %77 = vector.shape_cast %76 : vector<1x112x32xbf16> to vector<112x32xbf16>
    %cst_51 = arith.constant dense<0.000000e+00> : vector<64x32xf32>
    %78 = tpu.matmul %75, %77, %cst_51 {dimension_numbers = #tpu.dot_dimension_numbers<[1], [0], [0], [1], [0, 0, 1, 1], [], []>} : vector<64x112xbf16>, vector<112x32xbf16>, vector<64x32xf32> -> vector<64x32xf32>
    %79 = arith.addf %69, %78 : vector<64x32xf32>
    %c55_i32 = arith.constant 55 : i32
    %80 = tpu.dynamic_rotate %1 by %c55_i32 dim 0 : vector<64x112xf32>, i32 -> vector<64x112xf32>
    %c8 = arith.constant 8 : index
    %c0_52 = arith.constant 0 : index
    %c0_53 = arith.constant 0 : index
    %81 = vector.load %arg2[%c8, %c0_52, %c0_53] : memref<9x64x1xf32, #tpu.memory_space<vmem>>, vector<1x64x1xf32>
    %82 = vector.shape_cast %81 : vector<1x64x1xf32> to vector<64x1xf32>
    %83 = vector.broadcast %82 : vector<64x1xf32> to vector<64x112xf32>
    %84 = arith.mulf %80, %83 : vector<64x112xf32>
    %85 = arith.truncf %84 : vector<64x112xf32> to vector<64x112xbf16>
    %c8_54 = arith.constant 8 : index
    %c0_55 = arith.constant 0 : index
    %c0_56 = arith.constant 0 : index
    %86 = vector.load %arg3[%c8_54, %c0_55, %c0_56] : memref<9x112x32xbf16, #tpu.memory_space<vmem>>, vector<1x112x32xbf16>
    %87 = vector.shape_cast %86 : vector<1x112x32xbf16> to vector<112x32xbf16>
    %cst_57 = arith.constant dense<0.000000e+00> : vector<64x32xf32>
    %88 = tpu.matmul %85, %87, %cst_57 {dimension_numbers = #tpu.dot_dimension_numbers<[1], [0], [0], [1], [0, 0, 1, 1], [], []>} : vector<64x112xbf16>, vector<112x32xbf16>, vector<64x32xf32> -> vector<64x32xf32>
    %89 = arith.addf %79, %88 : vector<64x32xf32>
    %90 = vector.broadcast %2 : vector<1x32xf32> to vector<64x32xf32>
    %91 = arith.mulf %89, %90 : vector<64x32xf32>
    %92 = vector.broadcast %3 : vector<1x32xf32> to vector<64x32xf32>
    %93 = arith.addf %91, %92 : vector<64x32xf32>
    %cst_58 = arith.constant 0.000000e+00 : f32
    %94 = vector.broadcast %cst_58 : f32 to vector<64x32xf32>
    %95 = arith.maximumf %93, %94 : vector<64x32xf32>
    %96 = vector.shape_cast %95 : vector<64x32xf32> to vector<1x64x32xf32>
    %c0_59 = arith.constant 0 : index
    %c0_60 = arith.constant 0 : index
    %c0_61 = arith.constant 0 : index
    %97 = vector.load %arg6[%c0_59, %c0_60, %c0_61] : memref<1x64x32xf32, #tpu.memory_space<vmem>>, vector<1x64x32xf32>
    tpu.vector_store %arg6[%c0_59, %c0_60, %c0_61], %96 {strides = array<i32>} : memref<1x64x32xf32, #tpu.memory_space<vmem>>, vector<1x64x32xf32>,
    return
  }
  func.func @transform_0(%arg0: i32) -> (i32, i32, i32) {
    %c0_i32 = arith.constant 0 : i32
    %c0_i32_0 = arith.constant 0 : i32
    %c0_i32_1 = arith.constant 0 : i32
    return %arg0, %c0_i32, %c0_i32_0 : i32, i32, i32
  }
  func.func @transform_1(%arg0: i32) -> (i32, i32, i32) {
    %c0_i32 = arith.constant 0 : i32
    %c0_i32_0 = arith.constant 0 : i32
    %c0_i32_1 = arith.constant 0 : i32
    %c0_i32_2 = arith.constant 0 : i32
    return %c0_i32, %c0_i32_0, %c0_i32_1 : i32, i32, i32
  }
  func.func @transform_2(%arg0: i32) -> (i32, i32, i32) {
    %c0_i32 = arith.constant 0 : i32
    %c0_i32_0 = arith.constant 0 : i32
    %c0_i32_1 = arith.constant 0 : i32
    %c0_i32_2 = arith.constant 0 : i32
    return %c0_i32, %c0_i32_0, %c0_i32_1 : i32, i32, i32
  }
  func.func @transform_3(%arg0: i32) -> (i32, i32) {
    %c0_i32 = arith.constant 0 : i32
    %c0_i32_0 = arith.constant 0 : i32
    %c0_i32_1 = arith.constant 0 : i32
    return %c0_i32, %c0_i32_0 : i32, i32
  }
  func.func @transform_4(%arg0: i32) -> (i32, i32) {
    %c0_i32 = arith.constant 0 : i32
    %c0_i32_0 = arith.constant 0 : i32
    %c0_i32_1 = arith.constant 0 : i32
    return %c0_i32, %c0_i32_0 : i32, i32
  }
  func.func @transform_5(%arg0: i32) -> (i32, i32, i32) {
    %c0_i32 = arith.constant 0 : i32
    %c0_i32_0 = arith.constant 0 : i32
    %c0_i32_1 = arith.constant 0 : i32
    return %arg0, %c0_i32, %c0_i32_0 : i32, i32, i32
  }
}

module attributes {stable_mosaic.version = 11 : i64} {
  func.func @_dense_kernel(%arg0: i32, %arg1: memref<128x32xf32, #tpu.memory_space<vmem>>, %arg2: memref<32x128xbf16, #tpu.memory_space<vmem>>, %arg3: memref<1x128xf32, #tpu.memory_space<vmem>>, %arg4: memref<128x128xf32, #tpu.memory_space<vmem>>) attributes {dimension_semantics = [#tpu.dimension_semantics<parallel>], iteration_bounds = array<i64: 1>, scalar_prefetch = 0 : i64, scratch_operands = 0 : i64, tpu.core_type = #tpu.core_type<tc>, window_params = [{transform_indices = @transform_0, window_bounds = array<i64: 128, 32>}, {pipeline_mode = #tpu.pipeline_mode<synchronous>, transform_indices = @transform_1, window_bounds = array<i64: 32, 128>}, {pipeline_mode = #tpu.pipeline_mode<synchronous>, transform_indices = @transform_2, window_bounds = array<i64: 1, 128>}, {transform_indices = @transform_3, window_bounds = array<i64: 128, 128>}]} {
    %c0 = arith.constant 0 : index
    %c0_0 = arith.constant 0 : index
    %0 = vector.load %arg1[%c0, %c0_0] : memref<128x32xf32, #tpu.memory_space<vmem>>, vector<128x32xf32>
    %1 = arith.truncf %0 : vector<128x32xf32> to vector<128x32xbf16>
    %c0_1 = arith.constant 0 : index
    %c0_2 = arith.constant 0 : index
    %2 = vector.load %arg2[%c0_1, %c0_2] : memref<32x128xbf16, #tpu.memory_space<vmem>>, vector<32x128xbf16>
    %cst = arith.constant dense<0.000000e+00> : vector<128x128xf32>
    %3 = tpu.matmul %1, %2, %cst {dimension_numbers = #tpu.dot_dimension_numbers<[1], [0], [0], [1], [0, 0, 1, 1], [], []>} : vector<128x32xbf16>, vector<32x128xbf16>, vector<128x128xf32> -> vector<128x128xf32>
    %c0_3 = arith.constant 0 : index
    %c0_4 = arith.constant 0 : index
    %4 = vector.load %arg3[%c0_3, %c0_4] : memref<1x128xf32, #tpu.memory_space<vmem>>, vector<1x128xf32>
    %5 = vector.broadcast %4 : vector<1x128xf32> to vector<128x128xf32>
    %6 = arith.addf %3, %5 : vector<128x128xf32>
    %cst_5 = arith.constant 0.000000e+00 : f32
    %7 = vector.broadcast %cst_5 : f32 to vector<128x128xf32>
    %8 = arith.maximumf %6, %7 : vector<128x128xf32>
    %c0_6 = arith.constant 0 : index
    %c0_7 = arith.constant 0 : index
    %9 = vector.load %arg4[%c0_6, %c0_7] : memref<128x128xf32, #tpu.memory_space<vmem>>, vector<128x128xf32>
    tpu.vector_store %arg4[%c0_6, %c0_7], %8 {strides = array<i32>} : memref<128x128xf32, #tpu.memory_space<vmem>>, vector<128x128xf32>,
    return
  }
  func.func @transform_0(%arg0: i32) -> (i32, i32) {
    %c0_i32 = arith.constant 0 : i32
    %c0_i32_0 = arith.constant 0 : i32
    return %arg0, %c0_i32 : i32, i32
  }
  func.func @transform_1(%arg0: i32) -> (i32, i32) {
    %c0_i32 = arith.constant 0 : i32
    %c0_i32_0 = arith.constant 0 : i32
    %c0_i32_1 = arith.constant 0 : i32
    return %c0_i32, %c0_i32_0 : i32, i32
  }
  func.func @transform_2(%arg0: i32) -> (i32, i32) {
    %c0_i32 = arith.constant 0 : i32
    %c0_i32_0 = arith.constant 0 : i32
    %c0_i32_1 = arith.constant 0 : i32
    return %c0_i32, %c0_i32_0 : i32, i32
  }
  func.func @transform_3(%arg0: i32) -> (i32, i32) {
    %c0_i32 = arith.constant 0 : i32
    %c0_i32_0 = arith.constant 0 : i32
    return %arg0, %c0_i32 : i32, i32
  }
}

module attributes {stable_mosaic.version = 11 : i64} {
  func.func @_dense_kernel(%arg0: i32, %arg1: memref<2x512xf32, #tpu.memory_space<vmem>>, %arg2: memref<512x128xbf16, #tpu.memory_space<vmem>>, %arg3: memref<1x128xf32, #tpu.memory_space<vmem>>, %arg4: memref<2x128xf32, #tpu.memory_space<vmem>>) attributes {dimension_semantics = [#tpu.dimension_semantics<parallel>], iteration_bounds = array<i64: 1>, scalar_prefetch = 0 : i64, scratch_operands = 0 : i64, tpu.core_type = #tpu.core_type<tc>, window_params = [{transform_indices = @transform_0, window_bounds = array<i64: 2, 512>}, {pipeline_mode = #tpu.pipeline_mode<synchronous>, transform_indices = @transform_1, window_bounds = array<i64: 512, 128>}, {pipeline_mode = #tpu.pipeline_mode<synchronous>, transform_indices = @transform_2, window_bounds = array<i64: 1, 128>}, {transform_indices = @transform_3, window_bounds = array<i64: 2, 128>}]} {
    %c0 = arith.constant 0 : index
    %c0_0 = arith.constant 0 : index
    %0 = vector.load %arg1[%c0, %c0_0] : memref<2x512xf32, #tpu.memory_space<vmem>>, vector<2x512xf32>
    %1 = arith.truncf %0 : vector<2x512xf32> to vector<2x512xbf16>
    %c0_1 = arith.constant 0 : index
    %c0_2 = arith.constant 0 : index
    %2 = vector.load %arg2[%c0_1, %c0_2] : memref<512x128xbf16, #tpu.memory_space<vmem>>, vector<512x128xbf16>
    %cst = arith.constant dense<0.000000e+00> : vector<2x128xf32>
    %3 = tpu.matmul %1, %2, %cst {dimension_numbers = #tpu.dot_dimension_numbers<[1], [0], [0], [1], [0, 0, 1, 1], [], []>} : vector<2x512xbf16>, vector<512x128xbf16>, vector<2x128xf32> -> vector<2x128xf32>
    %c0_3 = arith.constant 0 : index
    %c0_4 = arith.constant 0 : index
    %4 = vector.load %arg3[%c0_3, %c0_4] : memref<1x128xf32, #tpu.memory_space<vmem>>, vector<1x128xf32>
    %5 = vector.broadcast %4 : vector<1x128xf32> to vector<2x128xf32>
    %6 = arith.addf %3, %5 : vector<2x128xf32>
    %cst_5 = arith.constant 0.000000e+00 : f32
    %7 = vector.broadcast %cst_5 : f32 to vector<2x128xf32>
    %8 = arith.maximumf %6, %7 : vector<2x128xf32>
    %c0_6 = arith.constant 0 : index
    %c0_7 = arith.constant 0 : index
    %9 = vector.load %arg4[%c0_6, %c0_7] : memref<2x128xf32, #tpu.memory_space<vmem>>, vector<2x128xf32>
    tpu.vector_store %arg4[%c0_6, %c0_7], %8 {strides = array<i32>} : memref<2x128xf32, #tpu.memory_space<vmem>>, vector<2x128xf32>,
    return
  }
  func.func @transform_0(%arg0: i32) -> (i32, i32) {
    %c0_i32 = arith.constant 0 : i32
    %c0_i32_0 = arith.constant 0 : i32
    return %arg0, %c0_i32 : i32, i32
  }
  func.func @transform_1(%arg0: i32) -> (i32, i32) {
    %c0_i32 = arith.constant 0 : i32
    %c0_i32_0 = arith.constant 0 : i32
    %c0_i32_1 = arith.constant 0 : i32
    return %c0_i32, %c0_i32_0 : i32, i32
  }
  func.func @transform_2(%arg0: i32) -> (i32, i32) {
    %c0_i32 = arith.constant 0 : i32
    %c0_i32_0 = arith.constant 0 : i32
    %c0_i32_1 = arith.constant 0 : i32
    return %c0_i32, %c0_i32_0 : i32, i32
  }
  func.func @transform_3(%arg0: i32) -> (i32, i32) {
    %c0_i32 = arith.constant 0 : i32
    %c0_i32_0 = arith.constant 0 : i32
    return %arg0, %c0_i32 : i32, i32
  }
}

module attributes {stable_mosaic.version = 11 : i64} {
  func.func @_dense_kernel(%arg0: i32, %arg1: memref<2x128xf32, #tpu.memory_space<vmem>>, %arg2: memref<128x1xbf16, #tpu.memory_space<vmem>>, %arg3: memref<1x1xf32, #tpu.memory_space<vmem>>, %arg4: memref<2x1xf32, #tpu.memory_space<vmem>>) attributes {dimension_semantics = [#tpu.dimension_semantics<parallel>], iteration_bounds = array<i64: 1>, scalar_prefetch = 0 : i64, scratch_operands = 0 : i64, tpu.core_type = #tpu.core_type<tc>, window_params = [{transform_indices = @transform_0, window_bounds = array<i64: 2, 128>}, {pipeline_mode = #tpu.pipeline_mode<synchronous>, transform_indices = @transform_1, window_bounds = array<i64: 128, 1>}, {pipeline_mode = #tpu.pipeline_mode<synchronous>, transform_indices = @transform_2, window_bounds = array<i64: 1, 1>}, {transform_indices = @transform_3, window_bounds = array<i64: 2, 1>}]} {
    %c0 = arith.constant 0 : index
    %c0_0 = arith.constant 0 : index
    %0 = vector.load %arg1[%c0, %c0_0] : memref<2x128xf32, #tpu.memory_space<vmem>>, vector<2x128xf32>
    %1 = arith.truncf %0 : vector<2x128xf32> to vector<2x128xbf16>
    %c0_1 = arith.constant 0 : index
    %c0_2 = arith.constant 0 : index
    %2 = vector.load %arg2[%c0_1, %c0_2] : memref<128x1xbf16, #tpu.memory_space<vmem>>, vector<128x1xbf16>
    %cst = arith.constant dense<0.000000e+00> : vector<2x1xf32>
    %3 = tpu.matmul %1, %2, %cst {dimension_numbers = #tpu.dot_dimension_numbers<[1], [0], [0], [1], [0, 0, 1, 1], [], []>} : vector<2x128xbf16>, vector<128x1xbf16>, vector<2x1xf32> -> vector<2x1xf32>
    %c0_3 = arith.constant 0 : index
    %c0_4 = arith.constant 0 : index
    %4 = vector.load %arg3[%c0_3, %c0_4] : memref<1x1xf32, #tpu.memory_space<vmem>>, vector<1x1xf32>
    %5 = vector.broadcast %4 : vector<1x1xf32> to vector<2x1xf32>
    %6 = arith.addf %3, %5 : vector<2x1xf32>
    %cst_5 = arith.constant 0.000000e+00 : f32
    %7 = vector.broadcast %cst_5 : f32 to vector<2x1xf32>
    %8 = arith.maximumf %6, %7 : vector<2x1xf32>
    %c0_6 = arith.constant 0 : index
    %c0_7 = arith.constant 0 : index
    %9 = vector.load %arg4[%c0_6, %c0_7] : memref<2x1xf32, #tpu.memory_space<vmem>>, vector<2x1xf32>
    tpu.vector_store %arg4[%c0_6, %c0_7], %8 {strides = array<i32>} : memref<2x1xf32, #tpu.memory_space<vmem>>, vector<2x1xf32>,
    return
  }
  func.func @transform_0(%arg0: i32) -> (i32, i32) {
    %c0_i32 = arith.constant 0 : i32
    %c0_i32_0 = arith.constant 0 : i32
    return %arg0, %c0_i32 : i32, i32
  }
  func.func @transform_1(%arg0: i32) -> (i32, i32) {
    %c0_i32 = arith.constant 0 : i32
    %c0_i32_0 = arith.constant 0 : i32
    %c0_i32_1 = arith.constant 0 : i32
    return %c0_i32, %c0_i32_0 : i32, i32
  }
  func.func @transform_2(%arg0: i32) -> (i32, i32) {
    %c0_i32 = arith.constant 0 : i32
    %c0_i32_0 = arith.constant 0 : i32
    %c0_i32_1 = arith.constant 0 : i32
    return %c0_i32, %c0_i32_0 : i32, i32
  }
  func.func @transform_3(%arg0: i32) -> (i32, i32) {
    %c0_i32 = arith.constant 0 : i32
    %c0_i32_0 = arith.constant 0 : i32
    return %arg0, %c0_i32 : i32, i32
  }
}

module attributes {stable_mosaic.version = 11 : i64} {
  func.func @_dense_kernel(%arg0: i32, %arg1: memref<2x2048xf32, #tpu.memory_space<vmem>>, %arg2: memref<2048x128xbf16, #tpu.memory_space<vmem>>, %arg3: memref<1x128xf32, #tpu.memory_space<vmem>>, %arg4: memref<2x128xf32, #tpu.memory_space<vmem>>) attributes {dimension_semantics = [#tpu.dimension_semantics<parallel>], iteration_bounds = array<i64: 1>, scalar_prefetch = 0 : i64, scratch_operands = 0 : i64, tpu.core_type = #tpu.core_type<tc>, window_params = [{transform_indices = @transform_0, window_bounds = array<i64: 2, 2048>}, {pipeline_mode = #tpu.pipeline_mode<synchronous>, transform_indices = @transform_1, window_bounds = array<i64: 2048, 128>}, {pipeline_mode = #tpu.pipeline_mode<synchronous>, transform_indices = @transform_2, window_bounds = array<i64: 1, 128>}, {transform_indices = @transform_3, window_bounds = array<i64: 2, 128>}]} {
    %c0 = arith.constant 0 : index
    %c0_0 = arith.constant 0 : index
    %0 = vector.load %arg1[%c0, %c0_0] : memref<2x2048xf32, #tpu.memory_space<vmem>>, vector<2x2048xf32>
    %1 = arith.truncf %0 : vector<2x2048xf32> to vector<2x2048xbf16>
    %c0_1 = arith.constant 0 : index
    %c0_2 = arith.constant 0 : index
    %2 = vector.load %arg2[%c0_1, %c0_2] : memref<2048x128xbf16, #tpu.memory_space<vmem>>, vector<2048x128xbf16>
    %cst = arith.constant dense<0.000000e+00> : vector<2x128xf32>
    %3 = tpu.matmul %1, %2, %cst {dimension_numbers = #tpu.dot_dimension_numbers<[1], [0], [0], [1], [0, 0, 1, 1], [], []>} : vector<2x2048xbf16>, vector<2048x128xbf16>, vector<2x128xf32> -> vector<2x128xf32>
    %c0_3 = arith.constant 0 : index
    %c0_4 = arith.constant 0 : index
    %4 = vector.load %arg3[%c0_3, %c0_4] : memref<1x128xf32, #tpu.memory_space<vmem>>, vector<1x128xf32>
    %5 = vector.broadcast %4 : vector<1x128xf32> to vector<2x128xf32>
    %6 = arith.addf %3, %5 : vector<2x128xf32>
    %cst_5 = arith.constant 0.000000e+00 : f32
    %7 = vector.broadcast %cst_5 : f32 to vector<2x128xf32>
    %8 = arith.maximumf %6, %7 : vector<2x128xf32>
    %c0_6 = arith.constant 0 : index
    %c0_7 = arith.constant 0 : index
    %9 = vector.load %arg4[%c0_6, %c0_7] : memref<2x128xf32, #tpu.memory_space<vmem>>, vector<2x128xf32>
    tpu.vector_store %arg4[%c0_6, %c0_7], %8 {strides = array<i32>} : memref<2x128xf32, #tpu.memory_space<vmem>>, vector<2x128xf32>,
    return
  }
  func.func @transform_0(%arg0: i32) -> (i32, i32) {
    %c0_i32 = arith.constant 0 : i32
    %c0_i32_0 = arith.constant 0 : i32
    return %arg0, %c0_i32 : i32, i32
  }
  func.func @transform_1(%arg0: i32) -> (i32, i32) {
    %c0_i32 = arith.constant 0 : i32
    %c0_i32_0 = arith.constant 0 : i32
    %c0_i32_1 = arith.constant 0 : i32
    return %c0_i32, %c0_i32_0 : i32, i32
  }
  func.func @transform_2(%arg0: i32) -> (i32, i32) {
    %c0_i32 = arith.constant 0 : i32
    %c0_i32_0 = arith.constant 0 : i32
    %c0_i32_1 = arith.constant 0 : i32
    return %c0_i32, %c0_i32_0 : i32, i32
  }
  func.func @transform_3(%arg0: i32) -> (i32, i32) {
    %c0_i32 = arith.constant 0 : i32
    %c0_i32_0 = arith.constant 0 : i32
    return %arg0, %c0_i32 : i32, i32
  }
}

module attributes {stable_mosaic.version = 11 : i64} {
  func.func @_dense_kernel(%arg0: i32, %arg1: memref<2x128xf32, #tpu.memory_space<vmem>>, %arg2: memref<128x3xbf16, #tpu.memory_space<vmem>>, %arg3: memref<1x3xf32, #tpu.memory_space<vmem>>, %arg4: memref<2x3xf32, #tpu.memory_space<vmem>>) attributes {dimension_semantics = [#tpu.dimension_semantics<parallel>], iteration_bounds = array<i64: 1>, scalar_prefetch = 0 : i64, scratch_operands = 0 : i64, tpu.core_type = #tpu.core_type<tc>, window_params = [{transform_indices = @transform_0, window_bounds = array<i64: 2, 128>}, {pipeline_mode = #tpu.pipeline_mode<synchronous>, transform_indices = @transform_1, window_bounds = array<i64: 128, 3>}, {pipeline_mode = #tpu.pipeline_mode<synchronous>, transform_indices = @transform_2, window_bounds = array<i64: 1, 3>}, {transform_indices = @transform_3, window_bounds = array<i64: 2, 3>}]} {
    %c0 = arith.constant 0 : index
    %c0_0 = arith.constant 0 : index
    %0 = vector.load %arg1[%c0, %c0_0] : memref<2x128xf32, #tpu.memory_space<vmem>>, vector<2x128xf32>
    %1 = arith.truncf %0 : vector<2x128xf32> to vector<2x128xbf16>
    %c0_1 = arith.constant 0 : index
    %c0_2 = arith.constant 0 : index
    %2 = vector.load %arg2[%c0_1, %c0_2] : memref<128x3xbf16, #tpu.memory_space<vmem>>, vector<128x3xbf16>
    %cst = arith.constant dense<0.000000e+00> : vector<2x3xf32>
    %3 = tpu.matmul %1, %2, %cst {dimension_numbers = #tpu.dot_dimension_numbers<[1], [0], [0], [1], [0, 0, 1, 1], [], []>} : vector<2x128xbf16>, vector<128x3xbf16>, vector<2x3xf32> -> vector<2x3xf32>
    %c0_3 = arith.constant 0 : index
    %c0_4 = arith.constant 0 : index
    %4 = vector.load %arg3[%c0_3, %c0_4] : memref<1x3xf32, #tpu.memory_space<vmem>>, vector<1x3xf32>
    %5 = vector.broadcast %4 : vector<1x3xf32> to vector<2x3xf32>
    %6 = arith.addf %3, %5 : vector<2x3xf32>
    %c0_5 = arith.constant 0 : index
    %c0_6 = arith.constant 0 : index
    %7 = vector.load %arg4[%c0_5, %c0_6] : memref<2x3xf32, #tpu.memory_space<vmem>>, vector<2x3xf32>
    tpu.vector_store %arg4[%c0_5, %c0_6], %6 {strides = array<i32>} : memref<2x3xf32, #tpu.memory_space<vmem>>, vector<2x3xf32>,
    return
  }
  func.func @transform_0(%arg0: i32) -> (i32, i32) {
    %c0_i32 = arith.constant 0 : i32
    %c0_i32_0 = arith.constant 0 : i32
    return %arg0, %c0_i32 : i32, i32
  }
  func.func @transform_1(%arg0: i32) -> (i32, i32) {
    %c0_i32 = arith.constant 0 : i32
    %c0_i32_0 = arith.constant 0 : i32
    %c0_i32_1 = arith.constant 0 : i32
    return %c0_i32, %c0_i32_0 : i32, i32
  }
  func.func @transform_2(%arg0: i32) -> (i32, i32) {
    %c0_i32 = arith.constant 0 : i32
    %c0_i32_0 = arith.constant 0 : i32
    %c0_i32_1 = arith.constant 0 : i32
    return %c0_i32, %c0_i32_0 : i32, i32
  }
  func.func @transform_3(%arg0: i32) -> (i32, i32) {
    %c0_i32 = arith.constant 0 : i32
    %c0_i32_0 = arith.constant 0 : i32
    return %arg0, %c0_i32 : i32, i32
  }
}

module attributes {stable_mosaic.version = 11 : i64} {
  func.func @_policy_head_kernel(%arg0: i32, %arg1: memref<1x64x32xf32, #tpu.memory_space<vmem>>, %arg2: memref<9x64x1xf32, #tpu.memory_space<vmem>>, %arg3: memref<9x32x32xbf16, #tpu.memory_space<vmem>>, %arg4: memref<1x32xf32, #tpu.memory_space<vmem>>, %arg5: memref<1x32xf32, #tpu.memory_space<vmem>>, %arg6: memref<9x32x128xbf16, #tpu.memory_space<vmem>>, %arg7: memref<1x128xf32, #tpu.memory_space<vmem>>, %arg8: memref<1x128xf32, #tpu.memory_space<vmem>>, %arg9: memref<1x64x128xf32, #tpu.memory_space<vmem>>) attributes {dimension_semantics = [#tpu.dimension_semantics<parallel>], iteration_bounds = array<i64: 2>, scalar_prefetch = 0 : i64, scratch_operands = 0 : i64, tpu.core_type = #tpu.core_type<tc>, window_params = [{transform_indices = @transform_0, window_bounds = array<i64: 1, 64, 32>}, {pipeline_mode = #tpu.pipeline_mode<synchronous>, transform_indices = @transform_1, window_bounds = array<i64: 9, 64, 1>}, {pipeline_mode = #tpu.pipeline_mode<synchronous>, transform_indices = @transform_2, window_bounds = array<i64: 9, 32, 32>}, {pipeline_mode = #tpu.pipeline_mode<synchronous>, transform_indices = @transform_3, window_bounds = array<i64: 1, 32>}, {pipeline_mode = #tpu.pipeline_mode<synchronous>, transform_indices = @transform_4, window_bounds = array<i64: 1, 32>}, {pipeline_mode = #tpu.pipeline_mode<synchronous>, transform_indices = @transform_5, window_bounds = array<i64: 9, 32, 128>}, {pipeline_mode = #tpu.pipeline_mode<synchronous>, transform_indices = @transform_6, window_bounds = array<i64: 1, 128>}, {pipeline_mode = #tpu.pipeline_mode<synchronous>, transform_indices = @transform_7, window_bounds = array<i64: 1, 128>}, {transform_indices = @transform_8, window_bounds = array<i64: 1, 64, 128>}]} {
    %c0 = arith.constant 0 : index
    %c0_0 = arith.constant 0 : index
    %c0_1 = arith.constant 0 : index
    %0 = vector.load %arg1[%c0, %c0_0, %c0_1] : memref<1x64x32xf32, #tpu.memory_space<vmem>>, vector<1x64x32xf32>
    %1 = vector.shape_cast %0 : vector<1x64x32xf32> to vector<64x32xf32>
    %c0_2 = arith.constant 0 : index
    %c0_3 = arith.constant 0 : index
    %2 = vector.load %arg4[%c0_2, %c0_3] : memref<1x32xf32, #tpu.memory_space<vmem>>, vector<1x32xf32>
    %c0_4 = arith.constant 0 : index
    %c0_5 = arith.constant 0 : index
    %3 = vector.load %arg5[%c0_4, %c0_5] : memref<1x32xf32, #tpu.memory_space<vmem>>, vector<1x32xf32>
    %cst = arith.constant 0.000000e+00 : f32
    %4 = vector.broadcast %cst : f32 to vector<64x32xf32>
    %c9_i32 = arith.constant 9 : i32
    %5 = tpu.dynamic_rotate %1 by %c9_i32 dim 0 : vector<64x32xf32>, i32 -> vector<64x32xf32>
    %c0_6 = arith.constant 0 : index
    %c0_7 = arith.constant 0 : index
    %c0_8 = arith.constant 0 : index
    %6 = vector.load %arg2[%c0_6, %c0_7, %c0_8] : memref<9x64x1xf32, #tpu.memory_space<vmem>>, vector<1x64x1xf32>
    %7 = vector.shape_cast %6 : vector<1x64x1xf32> to vector<64x1xf32>
    %8 = vector.broadcast %7 : vector<64x1xf32> to vector<64x32xf32>
    %9 = arith.mulf %5, %8 : vector<64x32xf32>
    %10 = arith.truncf %9 : vector<64x32xf32> to vector<64x32xbf16>
    %c0_9 = arith.constant 0 : index
    %c0_10 = arith.constant 0 : index
    %c0_11 = arith.constant 0 : index
    %11 = vector.load %arg3[%c0_9, %c0_10, %c0_11] : memref<9x32x32xbf16, #tpu.memory_space<vmem>>, vector<1x32x32xbf16>
    %12 = vector.shape_cast %11 : vector<1x32x32xbf16> to vector<32x32xbf16>
    %cst_12 = arith.constant dense<0.000000e+00> : vector<64x32xf32>
    %13 = tpu.matmul %10, %12, %cst_12 {dimension_numbers = #tpu.dot_dimension_numbers<[1], [0], [0], [1], [0, 0, 1, 1], [], []>} : vector<64x32xbf16>, vector<32x32xbf16>, vector<64x32xf32> -> vector<64x32xf32>
    %14 = arith.addf %4, %13 : vector<64x32xf32>
    %c8_i32 = arith.constant 8 : i32
    %15 = tpu.dynamic_rotate %1 by %c8_i32 dim 0 : vector<64x32xf32>, i32 -> vector<64x32xf32>
    %c1 = arith.constant 1 : index
    %c0_13 = arith.constant 0 : index
    %c0_14 = arith.constant 0 : index
    %16 = vector.load %arg2[%c1, %c0_13, %c0_14] : memref<9x64x1xf32, #tpu.memory_space<vmem>>, vector<1x64x1xf32>
    %17 = vector.shape_cast %16 : vector<1x64x1xf32> to vector<64x1xf32>
    %18 = vector.broadcast %17 : vector<64x1xf32> to vector<64x32xf32>
    %19 = arith.mulf %15, %18 : vector<64x32xf32>
    %20 = arith.truncf %19 : vector<64x32xf32> to vector<64x32xbf16>
    %c1_15 = arith.constant 1 : index
    %c0_16 = arith.constant 0 : index
    %c0_17 = arith.constant 0 : index
    %21 = vector.load %arg3[%c1_15, %c0_16, %c0_17] : memref<9x32x32xbf16, #tpu.memory_space<vmem>>, vector<1x32x32xbf16>
    %22 = vector.shape_cast %21 : vector<1x32x32xbf16> to vector<32x32xbf16>
    %cst_18 = arith.constant dense<0.000000e+00> : vector<64x32xf32>
    %23 = tpu.matmul %20, %22, %cst_18 {dimension_numbers = #tpu.dot_dimension_numbers<[1], [0], [0], [1], [0, 0, 1, 1], [], []>} : vector<64x32xbf16>, vector<32x32xbf16>, vector<64x32xf32> -> vector<64x32xf32>
    %24 = arith.addf %14, %23 : vector<64x32xf32>
    %c7_i32 = arith.constant 7 : i32
    %25 = tpu.dynamic_rotate %1 by %c7_i32 dim 0 : vector<64x32xf32>, i32 -> vector<64x32xf32>
    %c2 = arith.constant 2 : index
    %c0_19 = arith.constant 0 : index
    %c0_20 = arith.constant 0 : index
    %26 = vector.load %arg2[%c2, %c0_19, %c0_20] : memref<9x64x1xf32, #tpu.memory_space<vmem>>, vector<1x64x1xf32>
    %27 = vector.shape_cast %26 : vector<1x64x1xf32> to vector<64x1xf32>
    %28 = vector.broadcast %27 : vector<64x1xf32> to vector<64x32xf32>
    %29 = arith.mulf %25, %28 : vector<64x32xf32>
    %30 = arith.truncf %29 : vector<64x32xf32> to vector<64x32xbf16>
    %c2_21 = arith.constant 2 : index
    %c0_22 = arith.constant 0 : index
    %c0_23 = arith.constant 0 : index
    %31 = vector.load %arg3[%c2_21, %c0_22, %c0_23] : memref<9x32x32xbf16, #tpu.memory_space<vmem>>, vector<1x32x32xbf16>
    %32 = vector.shape_cast %31 : vector<1x32x32xbf16> to vector<32x32xbf16>
    %cst_24 = arith.constant dense<0.000000e+00> : vector<64x32xf32>
    %33 = tpu.matmul %30, %32, %cst_24 {dimension_numbers = #tpu.dot_dimension_numbers<[1], [0], [0], [1], [0, 0, 1, 1], [], []>} : vector<64x32xbf16>, vector<32x32xbf16>, vector<64x32xf32> -> vector<64x32xf32>
    %34 = arith.addf %24, %33 : vector<64x32xf32>
    %c1_i32 = arith.constant 1 : i32
    %35 = tpu.dynamic_rotate %1 by %c1_i32 dim 0 : vector<64x32xf32>, i32 -> vector<64x32xf32>
    %c3 = arith.constant 3 : index
    %c0_25 = arith.constant 0 : index
    %c0_26 = arith.constant 0 : index
    %36 = vector.load %arg2[%c3, %c0_25, %c0_26] : memref<9x64x1xf32, #tpu.memory_space<vmem>>, vector<1x64x1xf32>
    %37 = vector.shape_cast %36 : vector<1x64x1xf32> to vector<64x1xf32>
    %38 = vector.broadcast %37 : vector<64x1xf32> to vector<64x32xf32>
    %39 = arith.mulf %35, %38 : vector<64x32xf32>
    %40 = arith.truncf %39 : vector<64x32xf32> to vector<64x32xbf16>
    %c3_27 = arith.constant 3 : index
    %c0_28 = arith.constant 0 : index
    %c0_29 = arith.constant 0 : index
    %41 = vector.load %arg3[%c3_27, %c0_28, %c0_29] : memref<9x32x32xbf16, #tpu.memory_space<vmem>>, vector<1x32x32xbf16>
    %42 = vector.shape_cast %41 : vector<1x32x32xbf16> to vector<32x32xbf16>
    %cst_30 = arith.constant dense<0.000000e+00> : vector<64x32xf32>
    %43 = tpu.matmul %40, %42, %cst_30 {dimension_numbers = #tpu.dot_dimension_numbers<[1], [0], [0], [1], [0, 0, 1, 1], [], []>} : vector<64x32xbf16>, vector<32x32xbf16>, vector<64x32xf32> -> vector<64x32xf32>
    %44 = arith.addf %34, %43 : vector<64x32xf32>
    %45 = arith.truncf %1 : vector<64x32xf32> to vector<64x32xbf16>
    %c4 = arith.constant 4 : index
    %c0_31 = arith.constant 0 : index
    %c0_32 = arith.constant 0 : index
    %46 = vector.load %arg3[%c4, %c0_31, %c0_32] : memref<9x32x32xbf16, #tpu.memory_space<vmem>>, vector<1x32x32xbf16>
    %47 = vector.shape_cast %46 : vector<1x32x32xbf16> to vector<32x32xbf16>
    %cst_33 = arith.constant dense<0.000000e+00> : vector<64x32xf32>
    %48 = tpu.matmul %45, %47, %cst_33 {dimension_numbers = #tpu.dot_dimension_numbers<[1], [0], [0], [1], [0, 0, 1, 1], [], []>} : vector<64x32xbf16>, vector<32x32xbf16>, vector<64x32xf32> -> vector<64x32xf32>
    %49 = arith.addf %44, %48 : vector<64x32xf32>
    %c63_i32 = arith.constant 63 : i32
    %50 = tpu.dynamic_rotate %1 by %c63_i32 dim 0 : vector<64x32xf32>, i32 -> vector<64x32xf32>
    %c5 = arith.constant 5 : index
    %c0_34 = arith.constant 0 : index
    %c0_35 = arith.constant 0 : index
    %51 = vector.load %arg2[%c5, %c0_34, %c0_35] : memref<9x64x1xf32, #tpu.memory_space<vmem>>, vector<1x64x1xf32>
    %52 = vector.shape_cast %51 : vector<1x64x1xf32> to vector<64x1xf32>
    %53 = vector.broadcast %52 : vector<64x1xf32> to vector<64x32xf32>
    %54 = arith.mulf %50, %53 : vector<64x32xf32>
    %55 = arith.truncf %54 : vector<64x32xf32> to vector<64x32xbf16>
    %c5_36 = arith.constant 5 : index
    %c0_37 = arith.constant 0 : index
    %c0_38 = arith.constant 0 : index
    %56 = vector.load %arg3[%c5_36, %c0_37, %c0_38] : memref<9x32x32xbf16, #tpu.memory_space<vmem>>, vector<1x32x32xbf16>
    %57 = vector.shape_cast %56 : vector<1x32x32xbf16> to vector<32x32xbf16>
    %cst_39 = arith.constant dense<0.000000e+00> : vector<64x32xf32>
    %58 = tpu.matmul %55, %57, %cst_39 {dimension_numbers = #tpu.dot_dimension_numbers<[1], [0], [0], [1], [0, 0, 1, 1], [], []>} : vector<64x32xbf16>, vector<32x32xbf16>, vector<64x32xf32> -> vector<64x32xf32>
    %59 = arith.addf %49, %58 : vector<64x32xf32>
    %c57_i32 = arith.constant 57 : i32
    %60 = tpu.dynamic_rotate %1 by %c57_i32 dim 0 : vector<64x32xf32>, i32 -> vector<64x32xf32>
    %c6 = arith.constant 6 : index
    %c0_40 = arith.constant 0 : index
    %c0_41 = arith.constant 0 : index
    %61 = vector.load %arg2[%c6, %c0_40, %c0_41] : memref<9x64x1xf32, #tpu.memory_space<vmem>>, vector<1x64x1xf32>
    %62 = vector.shape_cast %61 : vector<1x64x1xf32> to vector<64x1xf32>
    %63 = vector.broadcast %62 : vector<64x1xf32> to vector<64x32xf32>
    %64 = arith.mulf %60, %63 : vector<64x32xf32>
    %65 = arith.truncf %64 : vector<64x32xf32> to vector<64x32xbf16>
    %c6_42 = arith.constant 6 : index
    %c0_43 = arith.constant 0 : index
    %c0_44 = arith.constant 0 : index
    %66 = vector.load %arg3[%c6_42, %c0_43, %c0_44] : memref<9x32x32xbf16, #tpu.memory_space<vmem>>, vector<1x32x32xbf16>
    %67 = vector.shape_cast %66 : vector<1x32x32xbf16> to vector<32x32xbf16>
    %cst_45 = arith.constant dense<0.000000e+00> : vector<64x32xf32>
    %68 = tpu.matmul %65, %67, %cst_45 {dimension_numbers = #tpu.dot_dimension_numbers<[1], [0], [0], [1], [0, 0, 1, 1], [], []>} : vector<64x32xbf16>, vector<32x32xbf16>, vector<64x32xf32> -> vector<64x32xf32>
    %69 = arith.addf %59, %68 : vector<64x32xf32>
    %c56_i32 = arith.constant 56 : i32
    %70 = tpu.dynamic_rotate %1 by %c56_i32 dim 0 : vector<64x32xf32>, i32 -> vector<64x32xf32>
    %c7 = arith.constant 7 : index
    %c0_46 = arith.constant 0 : index
    %c0_47 = arith.constant 0 : index
    %71 = vector.load %arg2[%c7, %c0_46, %c0_47] : memref<9x64x1xf32, #tpu.memory_space<vmem>>, vector<1x64x1xf32>
    %72 = vector.shape_cast %71 : vector<1x64x1xf32> to vector<64x1xf32>
    %73 = vector.broadcast %72 : vector<64x1xf32> to vector<64x32xf32>
    %74 = arith.mulf %70, %73 : vector<64x32xf32>
    %75 = arith.truncf %74 : vector<64x32xf32> to vector<64x32xbf16>
    %c7_48 = arith.constant 7 : index
    %c0_49 = arith.constant 0 : index
    %c0_50 = arith.constant 0 : index
    %76 = vector.load %arg3[%c7_48, %c0_49, %c0_50] : memref<9x32x32xbf16, #tpu.memory_space<vmem>>, vector<1x32x32xbf16>
    %77 = vector.shape_cast %76 : vector<1x32x32xbf16> to vector<32x32xbf16>
    %cst_51 = arith.constant dense<0.000000e+00> : vector<64x32xf32>
    %78 = tpu.matmul %75, %77, %cst_51 {dimension_numbers = #tpu.dot_dimension_numbers<[1], [0], [0], [1], [0, 0, 1, 1], [], []>} : vector<64x32xbf16>, vector<32x32xbf16>, vector<64x32xf32> -> vector<64x32xf32>
    %79 = arith.addf %69, %78 : vector<64x32xf32>
    %c55_i32 = arith.constant 55 : i32
    %80 = tpu.dynamic_rotate %1 by %c55_i32 dim 0 : vector<64x32xf32>, i32 -> vector<64x32xf32>
    %c8 = arith.constant 8 : index
    %c0_52 = arith.constant 0 : index
    %c0_53 = arith.constant 0 : index
    %81 = vector.load %arg2[%c8, %c0_52, %c0_53] : memref<9x64x1xf32, #tpu.memory_space<vmem>>, vector<1x64x1xf32>
    %82 = vector.shape_cast %81 : vector<1x64x1xf32> to vector<64x1xf32>
    %83 = vector.broadcast %82 : vector<64x1xf32> to vector<64x32xf32>
    %84 = arith.mulf %80, %83 : vector<64x32xf32>
    %85 = arith.truncf %84 : vector<64x32xf32> to vector<64x32xbf16>
    %c8_54 = arith.constant 8 : index
    %c0_55 = arith.constant 0 : index
    %c0_56 = arith.constant 0 : index
    %86 = vector.load %arg3[%c8_54, %c0_55, %c0_56] : memref<9x32x32xbf16, #tpu.memory_space<vmem>>, vector<1x32x32xbf16>
    %87 = vector.shape_cast %86 : vector<1x32x32xbf16> to vector<32x32xbf16>
    %cst_57 = arith.constant dense<0.000000e+00> : vector<64x32xf32>
    %88 = tpu.matmul %85, %87, %cst_57 {dimension_numbers = #tpu.dot_dimension_numbers<[1], [0], [0], [1], [0, 0, 1, 1], [], []>} : vector<64x32xbf16>, vector<32x32xbf16>, vector<64x32xf32> -> vector<64x32xf32>
    %89 = arith.addf %79, %88 : vector<64x32xf32>
    %90 = vector.broadcast %2 : vector<1x32xf32> to vector<64x32xf32>
    %91 = arith.mulf %89, %90 : vector<64x32xf32>
    %92 = vector.broadcast %3 : vector<1x32xf32> to vector<64x32xf32>
    %93 = arith.addf %91, %92 : vector<64x32xf32>
    %cst_58 = arith.constant 0.000000e+00 : f32
    %94 = vector.broadcast %cst_58 : f32 to vector<64x32xf32>
    %95 = arith.maximumf %93, %94 : vector<64x32xf32>
    %c0_59 = arith.constant 0 : index
    %c0_60 = arith.constant 0 : index
    %96 = vector.load %arg7[%c0_59, %c0_60] : memref<1x128xf32, #tpu.memory_space<vmem>>, vector<1x128xf32>
    %c0_61 = arith.constant 0 : index
    %c0_62 = arith.constant 0 : index
    %97 = vector.load %arg8[%c0_61, %c0_62] : memref<1x128xf32, #tpu.memory_space<vmem>>, vector<1x128xf32>
    %cst_63 = arith.constant 0.000000e+00 : f32
    %98 = vector.broadcast %cst_63 : f32 to vector<64x128xf32>
    %c9_i32_64 = arith.constant 9 : i32
    %99 = tpu.dynamic_rotate %95 by %c9_i32_64 dim 0 : vector<64x32xf32>, i32 -> vector<64x32xf32>
    %c0_65 = arith.constant 0 : index
    %c0_66 = arith.constant 0 : index
    %c0_67 = arith.constant 0 : index
    %100 = vector.load %arg2[%c0_65, %c0_66, %c0_67] : memref<9x64x1xf32, #tpu.memory_space<vmem>>, vector<1x64x1xf32>
    %101 = vector.shape_cast %100 : vector<1x64x1xf32> to vector<64x1xf32>
    %102 = vector.broadcast %101 : vector<64x1xf32> to vector<64x32xf32>
    %103 = arith.mulf %99, %102 : vector<64x32xf32>
    %104 = arith.truncf %103 : vector<64x32xf32> to vector<64x32xbf16>
    %c0_68 = arith.constant 0 : index
    %c0_69 = arith.constant 0 : index
    %c0_70 = arith.constant 0 : index
    %105 = vector.load %arg6[%c0_68, %c0_69, %c0_70] : memref<9x32x128xbf16, #tpu.memory_space<vmem>>, vector<1x32x128xbf16>
    %106 = vector.shape_cast %105 : vector<1x32x128xbf16> to vector<32x128xbf16>
    %cst_71 = arith.constant dense<0.000000e+00> : vector<64x128xf32>
    %107 = tpu.matmul %104, %106, %cst_71 {dimension_numbers = #tpu.dot_dimension_numbers<[1], [0], [0], [1], [0, 0, 1, 1], [], []>} : vector<64x32xbf16>, vector<32x128xbf16>, vector<64x128xf32> -> vector<64x128xf32>
    %108 = arith.addf %98, %107 : vector<64x128xf32>
    %c8_i32_72 = arith.constant 8 : i32
    %109 = tpu.dynamic_rotate %95 by %c8_i32_72 dim 0 : vector<64x32xf32>, i32 -> vector<64x32xf32>
    %c1_73 = arith.constant 1 : index
    %c0_74 = arith.constant 0 : index
    %c0_75 = arith.constant 0 : index
    %110 = vector.load %arg2[%c1_73, %c0_74, %c0_75] : memref<9x64x1xf32, #tpu.memory_space<vmem>>, vector<1x64x1xf32>
    %111 = vector.shape_cast %110 : vector<1x64x1xf32> to vector<64x1xf32>
    %112 = vector.broadcast %111 : vector<64x1xf32> to vector<64x32xf32>
    %113 = arith.mulf %109, %112 : vector<64x32xf32>
    %114 = arith.truncf %113 : vector<64x32xf32> to vector<64x32xbf16>
    %c1_76 = arith.constant 1 : index
    %c0_77 = arith.constant 0 : index
    %c0_78 = arith.constant 0 : index
    %115 = vector.load %arg6[%c1_76, %c0_77, %c0_78] : memref<9x32x128xbf16, #tpu.memory_space<vmem>>, vector<1x32x128xbf16>
    %116 = vector.shape_cast %115 : vector<1x32x128xbf16> to vector<32x128xbf16>
    %cst_79 = arith.constant dense<0.000000e+00> : vector<64x128xf32>
    %117 = tpu.matmul %114, %116, %cst_79 {dimension_numbers = #tpu.dot_dimension_numbers<[1], [0], [0], [1], [0, 0, 1, 1], [], []>} : vector<64x32xbf16>, vector<32x128xbf16>, vector<64x128xf32> -> vector<64x128xf32>
    %118 = arith.addf %108, %117 : vector<64x128xf32>
    %c7_i32_80 = arith.constant 7 : i32
    %119 = tpu.dynamic_rotate %95 by %c7_i32_80 dim 0 : vector<64x32xf32>, i32 -> vector<64x32xf32>
    %c2_81 = arith.constant 2 : index
    %c0_82 = arith.constant 0 : index
    %c0_83 = arith.constant 0 : index
    %120 = vector.load %arg2[%c2_81, %c0_82, %c0_83] : memref<9x64x1xf32, #tpu.memory_space<vmem>>, vector<1x64x1xf32>
    %121 = vector.shape_cast %120 : vector<1x64x1xf32> to vector<64x1xf32>
    %122 = vector.broadcast %121 : vector<64x1xf32> to vector<64x32xf32>
    %123 = arith.mulf %119, %122 : vector<64x32xf32>
    %124 = arith.truncf %123 : vector<64x32xf32> to vector<64x32xbf16>
    %c2_84 = arith.constant 2 : index
    %c0_85 = arith.constant 0 : index
    %c0_86 = arith.constant 0 : index
    %125 = vector.load %arg6[%c2_84, %c0_85, %c0_86] : memref<9x32x128xbf16, #tpu.memory_space<vmem>>, vector<1x32x128xbf16>
    %126 = vector.shape_cast %125 : vector<1x32x128xbf16> to vector<32x128xbf16>
    %cst_87 = arith.constant dense<0.000000e+00> : vector<64x128xf32>
    %127 = tpu.matmul %124, %126, %cst_87 {dimension_numbers = #tpu.dot_dimension_numbers<[1], [0], [0], [1], [0, 0, 1, 1], [], []>} : vector<64x32xbf16>, vector<32x128xbf16>, vector<64x128xf32> -> vector<64x128xf32>
    %128 = arith.addf %118, %127 : vector<64x128xf32>
    %c1_i32_88 = arith.constant 1 : i32
    %129 = tpu.dynamic_rotate %95 by %c1_i32_88 dim 0 : vector<64x32xf32>, i32 -> vector<64x32xf32>
    %c3_89 = arith.constant 3 : index
    %c0_90 = arith.constant 0 : index
    %c0_91 = arith.constant 0 : index
    %130 = vector.load %arg2[%c3_89, %c0_90, %c0_91] : memref<9x64x1xf32, #tpu.memory_space<vmem>>, vector<1x64x1xf32>
    %131 = vector.shape_cast %130 : vector<1x64x1xf32> to vector<64x1xf32>
    %132 = vector.broadcast %131 : vector<64x1xf32> to vector<64x32xf32>
    %133 = arith.mulf %129, %132 : vector<64x32xf32>
    %134 = arith.truncf %133 : vector<64x32xf32> to vector<64x32xbf16>
    %c3_92 = arith.constant 3 : index
    %c0_93 = arith.constant 0 : index
    %c0_94 = arith.constant 0 : index
    %135 = vector.load %arg6[%c3_92, %c0_93, %c0_94] : memref<9x32x128xbf16, #tpu.memory_space<vmem>>, vector<1x32x128xbf16>
    %136 = vector.shape_cast %135 : vector<1x32x128xbf16> to vector<32x128xbf16>
    %cst_95 = arith.constant dense<0.000000e+00> : vector<64x128xf32>
    %137 = tpu.matmul %134, %136, %cst_95 {dimension_numbers = #tpu.dot_dimension_numbers<[1], [0], [0], [1], [0, 0, 1, 1], [], []>} : vector<64x32xbf16>, vector<32x128xbf16>, vector<64x128xf32> -> vector<64x128xf32>
    %138 = arith.addf %128, %137 : vector<64x128xf32>
    %139 = arith.truncf %95 : vector<64x32xf32> to vector<64x32xbf16>
    %c4_96 = arith.constant 4 : index
    %c0_97 = arith.constant 0 : index
    %c0_98 = arith.constant 0 : index
    %140 = vector.load %arg6[%c4_96, %c0_97, %c0_98] : memref<9x32x128xbf16, #tpu.memory_space<vmem>>, vector<1x32x128xbf16>
    %141 = vector.shape_cast %140 : vector<1x32x128xbf16> to vector<32x128xbf16>
    %cst_99 = arith.constant dense<0.000000e+00> : vector<64x128xf32>
    %142 = tpu.matmul %139, %141, %cst_99 {dimension_numbers = #tpu.dot_dimension_numbers<[1], [0], [0], [1], [0, 0, 1, 1], [], []>} : vector<64x32xbf16>, vector<32x128xbf16>, vector<64x128xf32> -> vector<64x128xf32>
    %143 = arith.addf %138, %142 : vector<64x128xf32>
    %c63_i32_100 = arith.constant 63 : i32
    %144 = tpu.dynamic_rotate %95 by %c63_i32_100 dim 0 : vector<64x32xf32>, i32 -> vector<64x32xf32>
    %c5_101 = arith.constant 5 : index
    %c0_102 = arith.constant 0 : index
    %c0_103 = arith.constant 0 : index
    %145 = vector.load %arg2[%c5_101, %c0_102, %c0_103] : memref<9x64x1xf32, #tpu.memory_space<vmem>>, vector<1x64x1xf32>
    %146 = vector.shape_cast %145 : vector<1x64x1xf32> to vector<64x1xf32>
    %147 = vector.broadcast %146 : vector<64x1xf32> to vector<64x32xf32>
    %148 = arith.mulf %144, %147 : vector<64x32xf32>
    %149 = arith.truncf %148 : vector<64x32xf32> to vector<64x32xbf16>
    %c5_104 = arith.constant 5 : index
    %c0_105 = arith.constant 0 : index
    %c0_106 = arith.constant 0 : index
    %150 = vector.load %arg6[%c5_104, %c0_105, %c0_106] : memref<9x32x128xbf16, #tpu.memory_space<vmem>>, vector<1x32x128xbf16>
    %151 = vector.shape_cast %150 : vector<1x32x128xbf16> to vector<32x128xbf16>
    %cst_107 = arith.constant dense<0.000000e+00> : vector<64x128xf32>
    %152 = tpu.matmul %149, %151, %cst_107 {dimension_numbers = #tpu.dot_dimension_numbers<[1], [0], [0], [1], [0, 0, 1, 1], [], []>} : vector<64x32xbf16>, vector<32x128xbf16>, vector<64x128xf32> -> vector<64x128xf32>
    %153 = arith.addf %143, %152 : vector<64x128xf32>
    %c57_i32_108 = arith.constant 57 : i32
    %154 = tpu.dynamic_rotate %95 by %c57_i32_108 dim 0 : vector<64x32xf32>, i32 -> vector<64x32xf32>
    %c6_109 = arith.constant 6 : index
    %c0_110 = arith.constant 0 : index
    %c0_111 = arith.constant 0 : index
    %155 = vector.load %arg2[%c6_109, %c0_110, %c0_111] : memref<9x64x1xf32, #tpu.memory_space<vmem>>, vector<1x64x1xf32>
    %156 = vector.shape_cast %155 : vector<1x64x1xf32> to vector<64x1xf32>
    %157 = vector.broadcast %156 : vector<64x1xf32> to vector<64x32xf32>
    %158 = arith.mulf %154, %157 : vector<64x32xf32>
    %159 = arith.truncf %158 : vector<64x32xf32> to vector<64x32xbf16>
    %c6_112 = arith.constant 6 : index
    %c0_113 = arith.constant 0 : index
    %c0_114 = arith.constant 0 : index
    %160 = vector.load %arg6[%c6_112, %c0_113, %c0_114] : memref<9x32x128xbf16, #tpu.memory_space<vmem>>, vector<1x32x128xbf16>
    %161 = vector.shape_cast %160 : vector<1x32x128xbf16> to vector<32x128xbf16>
    %cst_115 = arith.constant dense<0.000000e+00> : vector<64x128xf32>
    %162 = tpu.matmul %159, %161, %cst_115 {dimension_numbers = #tpu.dot_dimension_numbers<[1], [0], [0], [1], [0, 0, 1, 1], [], []>} : vector<64x32xbf16>, vector<32x128xbf16>, vector<64x128xf32> -> vector<64x128xf32>
    %163 = arith.addf %153, %162 : vector<64x128xf32>
    %c56_i32_116 = arith.constant 56 : i32
    %164 = tpu.dynamic_rotate %95 by %c56_i32_116 dim 0 : vector<64x32xf32>, i32 -> vector<64x32xf32>
    %c7_117 = arith.constant 7 : index
    %c0_118 = arith.constant 0 : index
    %c0_119 = arith.constant 0 : index
    %165 = vector.load %arg2[%c7_117, %c0_118, %c0_119] : memref<9x64x1xf32, #tpu.memory_space<vmem>>, vector<1x64x1xf32>
    %166 = vector.shape_cast %165 : vector<1x64x1xf32> to vector<64x1xf32>
    %167 = vector.broadcast %166 : vector<64x1xf32> to vector<64x32xf32>
    %168 = arith.mulf %164, %167 : vector<64x32xf32>
    %169 = arith.truncf %168 : vector<64x32xf32> to vector<64x32xbf16>
    %c7_120 = arith.constant 7 : index
    %c0_121 = arith.constant 0 : index
    %c0_122 = arith.constant 0 : index
    %170 = vector.load %arg6[%c7_120, %c0_121, %c0_122] : memref<9x32x128xbf16, #tpu.memory_space<vmem>>, vector<1x32x128xbf16>
    %171 = vector.shape_cast %170 : vector<1x32x128xbf16> to vector<32x128xbf16>
    %cst_123 = arith.constant dense<0.000000e+00> : vector<64x128xf32>
    %172 = tpu.matmul %169, %171, %cst_123 {dimension_numbers = #tpu.dot_dimension_numbers<[1], [0], [0], [1], [0, 0, 1, 1], [], []>} : vector<64x32xbf16>, vector<32x128xbf16>, vector<64x128xf32> -> vector<64x128xf32>
    %173 = arith.addf %163, %172 : vector<64x128xf32>
    %c55_i32_124 = arith.constant 55 : i32
    %174 = tpu.dynamic_rotate %95 by %c55_i32_124 dim 0 : vector<64x32xf32>, i32 -> vector<64x32xf32>
    %c8_125 = arith.constant 8 : index
    %c0_126 = arith.constant 0 : index
    %c0_127 = arith.constant 0 : index
    %175 = vector.load %arg2[%c8_125, %c0_126, %c0_127] : memref<9x64x1xf32, #tpu.memory_space<vmem>>, vector<1x64x1xf32>
    %176 = vector.shape_cast %175 : vector<1x64x1xf32> to vector<64x1xf32>
    %177 = vector.broadcast %176 : vector<64x1xf32> to vector<64x32xf32>
    %178 = arith.mulf %174, %177 : vector<64x32xf32>
    %179 = arith.truncf %178 : vector<64x32xf32> to vector<64x32xbf16>
    %c8_128 = arith.constant 8 : index
    %c0_129 = arith.constant 0 : index
    %c0_130 = arith.constant 0 : index
    %180 = vector.load %arg6[%c8_128, %c0_129, %c0_130] : memref<9x32x128xbf16, #tpu.memory_space<vmem>>, vector<1x32x128xbf16>
    %181 = vector.shape_cast %180 : vector<1x32x128xbf16> to vector<32x128xbf16>
    %cst_131 = arith.constant dense<0.000000e+00> : vector<64x128xf32>
    %182 = tpu.matmul %179, %181, %cst_131 {dimension_numbers = #tpu.dot_dimension_numbers<[1], [0], [0], [1], [0, 0, 1, 1], [], []>} : vector<64x32xbf16>, vector<32x128xbf16>, vector<64x128xf32> -> vector<64x128xf32>
    %183 = arith.addf %173, %182 : vector<64x128xf32>
    %184 = vector.broadcast %96 : vector<1x128xf32> to vector<64x128xf32>
    %185 = arith.mulf %183, %184 : vector<64x128xf32>
    %186 = vector.broadcast %97 : vector<1x128xf32> to vector<64x128xf32>
    %187 = arith.addf %185, %186 : vector<64x128xf32>
    %188 = vector.shape_cast %187 : vector<64x128xf32> to vector<1x64x128xf32>
    %c0_132 = arith.constant 0 : index
    %c0_133 = arith.constant 0 : index
    %c0_134 = arith.constant 0 : index
    %189 = vector.load %arg9[%c0_132, %c0_133, %c0_134] : memref<1x64x128xf32, #tpu.memory_space<vmem>>, vector<1x64x128xf32>
    tpu.vector_store %arg9[%c0_132, %c0_133, %c0_134], %188 {strides = array<i32>} : memref<1x64x128xf32, #tpu.memory_space<vmem>>, vector<1x64x128xf32>,
    return
  }
  func.func @transform_0(%arg0: i32) -> (i32, i32, i32) {
    %c0_i32 = arith.constant 0 : i32
    %c0_i32_0 = arith.constant 0 : i32
    %c0_i32_1 = arith.constant 0 : i32
    return %arg0, %c0_i32, %c0_i32_0 : i32, i32, i32
  }
  func.func @transform_1(%arg0: i32) -> (i32, i32, i32) {
    %c0_i32 = arith.constant 0 : i32
    %c0_i32_0 = arith.constant 0 : i32
    %c0_i32_1 = arith.constant 0 : i32
    %c0_i32_2 = arith.constant 0 : i32
    return %c0_i32, %c0_i32_0, %c0_i32_1 : i32, i32, i32
  }
  func.func @transform_2(%arg0: i32) -> (i32, i32, i32) {
    %c0_i32 = arith.constant 0 : i32
    %c0_i32_0 = arith.constant 0 : i32
    %c0_i32_1 = arith.constant 0 : i32
    %c0_i32_2 = arith.constant 0 : i32
    return %c0_i32, %c0_i32_0, %c0_i32_1 : i32, i32, i32
  }
  func.func @transform_3(%arg0: i32) -> (i32, i32) {
    %c0_i32 = arith.constant 0 : i32
    %c0_i32_0 = arith.constant 0 : i32
    %c0_i32_1 = arith.constant 0 : i32
    return %c0_i32, %c0_i32_0 : i32, i32
  }
  func.func @transform_4(%arg0: i32) -> (i32, i32) {
    %c0_i32 = arith.constant 0 : i32
    %c0_i32_0 = arith.constant 0 : i32
    %c0_i32_1 = arith.constant 0 : i32
    return %c0_i32, %c0_i32_0 : i32, i32
  }
  func.func @transform_5(%arg0: i32) -> (i32, i32, i32) {
    %c0_i32 = arith.constant 0 : i32
    %c0_i32_0 = arith.constant 0 : i32
    %c0_i32_1 = arith.constant 0 : i32
    %c0_i32_2 = arith.constant 0 : i32
    return %c0_i32, %c0_i32_0, %c0_i32_1 : i32, i32, i32
  }
  func.func @transform_6(%arg0: i32) -> (i32, i32) {
    %c0_i32 = arith.constant 0 : i32
    %c0_i32_0 = arith.constant 0 : i32
    %c0_i32_1 = arith.constant 0 : i32
    return %c0_i32, %c0_i32_0 : i32, i32
  }
  func.func @transform_7(%arg0: i32) -> (i32, i32) {
    %c0_i32 = arith.constant 0 : i32
    %c0_i32_0 = arith.constant 0 : i32
    %c0_i32_1 = arith.constant 0 : i32
    return %c0_i32, %c0_i32_0 : i32, i32
  }
  func.func @transform_8(%arg0: i32) -> (i32, i32, i32) {
    %c0_i32 = arith.constant 0 : i32
    %c0_i32_0 = arith.constant 0 : i32
    %c0_i32_1 = arith.constant 0 : i32
    return %arg0, %c0_i32, %c0_i32_0 : i32, i32, i32
  }
}

</mosaic_0001>

<llo_original>
// kernel: leela_forward.13
$region0: #{leela_forward.13}
  #allocation0 [shape = 'u32[]', space=smem, size = 0x4, offset = 0x4, fixed_abs, tag = 'smem constant byte address 0x4 - core index']
  #allocation1 [shape = 'u32[144,128]{1,0:T(1,128)}', space=vmem, size = 0x12000, scoped, tag = 'internal scratch']
  %s0 = inlined_call_operand.vmem [shape: f32[128,32], index: 0, kind: input, shape index: {}]
  %s1 = inlined_call_operand.vmem [shape: bf16[32,128], index: 1, kind: input, shape index: {}]
  %s2 = inlined_call_operand.vmem [shape: f32[1,128], index: 2, kind: input, shape index: {}]
  %s3 = inlined_call_operand.vmem [shape: f32[128,128], index: 3, kind: output, shape index: {}]
  %s4 = sld [smem:[#allocation0]]
  $region22: #{leela_forward.13} parent=0
    _
  %s6 = ssub.s32 1, %s4
  %s7 = scalar_select 0, %s6, %s4
  // Predicated region
  $region2: #{leela_forward.13} parent=0 // pred_check
    _
  $region3: #{leela_forward.13} parent=0 // pred_check_branch
    %9 = sbr.rel (0) target = $region5
  $region4: #{leela_forward.13} parent=0 // pred_region
    _
  $region5: #{leela_forward.13} parent=0 // pred_fallthru
    _
  // Predicated region
  $region6: #{leela_forward.13} parent=0 // pred_check
    _
  $region7: #{leela_forward.13} parent=0 // pred_check_branch
    %11 = sbr.rel (0) target = $region9
  $region8: #{leela_forward.13} parent=0 // pred_region
    _
  $region9: #{leela_forward.13} parent=0 // pred_fallthru
    _
  // Predicated region
  $region10: #{leela_forward.13} parent=0 // pred_check
    _
  $region11: #{leela_forward.13} parent=0 // pred_check_branch
    %13 = sbr.rel (0) target = $region13
  $region12: #{leela_forward.13} parent=0 // pred_region
    _
  $region13: #{leela_forward.13} parent=0 // pred_fallthru
    _
  %v15 = vld [vmem:[%s0] sm:$0xff]
  %v16 = vld [vmem:[%s0 + $0x8] sm:$0xff]
  %v17 = vld [vmem:[%s0 + $0x10] sm:$0xff]
  %v18 = vld [vmem:[%s0 + $0x18] sm:$0xff]
  %v19 = vld [vmem:[%s0 + $0x20] sm:$0xff]
  %v20 = vld [vmem:[%s0 + $0x28] sm:$0xff]
  %v21 = vld [vmem:[%s0 + $0x30] sm:$0xff]
  %v22 = vld [vmem:[%s0 + $0x38] sm:$0xff]
  %v23 = vld [vmem:[%s0 + $0x40] sm:$0xff]
  %v24 = vld [vmem:[%s0 + $0x48] sm:$0xff]
  %v25 = vld [vmem:[%s0 + $0x50] sm:$0xff]
  %v26 = vld [vmem:[%s0 + $0x58] sm:$0xff]
  %v27 = vld [vmem:[%s0 + $0x60] sm:$0xff]
  %v28 = vld [vmem:[%s0 + $0x68] sm:$0xff]
  %v29 = vld [vmem:[%s0 + $0x70] sm:$0xff]
  %v30 = vld [vmem:[%s0 + $0x78] sm:$0xff]
  %v31 = vpack.c.bf16 %v16, %v15
  %v32 = vpack.c.bf16 %v18, %v17
  %v33 = vpack.c.bf16 %v20, %v19
  %v34 = vpack.c.bf16 %v22, %v21
  %v35 = vpack.c.bf16 %v24, %v23
  %v36 = vpack.c.bf16 %v26, %v25
  %v37 = vpack.c.bf16 %v28, %v27
  %v38 = vpack.c.bf16 %v30, %v29
  %v39 = vld [vmem:[%s1] sm:$0xf]
  %v40 = vld [vmem:[%s1 + $0x4] sm:$0xf]
  %v41 = vld [vmem:[%s1 + $0x8] sm:$0xf]
  %v42 = vld [vmem:[%s1 + $0xc] sm:$0xf]
  %v43 = vld [vmem:[%s2] sm:$0x1]
  %v45 = vlaneseq
  %v46 = vshrl.u32 %v45, 7
  %v47 = vsub.s32 0, %v46
  %v48 = vrot.slane %v43, %v47
  %v54 = vunpack.c.l.b16 %v39
  %v55 = vunpack.c.l.b16 %v40
  %v56 = vunpack.c.l.b16 %v41
  %v57 = vunpack.c.l.b16 %v42
  %v58 = vpack.c.b16 %v55, %v54
  %v59 = vpack.c.b16 %v57, %v56
  %vm62 = vcmask 261120
  %v64 = vsel %vm62, %v31, 0
  %v67 = vsel %vm62, %v32, 0
  %v70 = vsel %vm62, %v33, 0
  %v73 = vsel %vm62, %v34, 0
  %v76 = vsel %vm62, %v35, 0
  %v79 = vsel %vm62, %v36, 0
  %v82 = vsel %vm62, %v37, 0
  %v85 = vsel %vm62, %v38, 0
  %87 = vmatprep.subr.bf16.mxu0 0
  %88 = vmatpush1.bf16.msra.mxu0 %v58
  %89 = vmatprep.subr.bf16.mxu0 0
  %90 = vmatpush1.bf16.msra.mxu0 %v59
  %91 = vmatprep.subr.bf16.mxu0 0
  %92 = vmatpush1.bf16.msra.mxu0 0
  %93 = vmatprep.subr.bf16.mxu0 0
  %94 = vmatpush1.bf16.msra.mxu0 0
  %95 = vmatprep.subr.bf16.mxu0 0
  %96 = vmatpush1.bf16.msra.mxu0 0
  %97 = vmatprep.subr.bf16.mxu0 0
  %98 = vmatpush1.bf16.msra.mxu0 0
  %99 = vmatprep.subr.bf16.mxu0 0
  %100 = vmatpush1.bf16.msra.mxu0 0
  %101 = vmatprep.subr.bf16.mxu0 0
  %102 = vmatpush1.bf16.msra.mxu0 0
  %103 = vmatprep.subr.bf16.mxu0 0
  %104 = vmatpush1.bf16.msra.mxu0 0
  %105 = vmatprep.subr.bf16.mxu0 0
  %106 = vmatpush1.bf16.msra.mxu0 0
  %107 = vmatprep.subr.bf16.mxu0 0
  %108 = vmatpush1.bf16.msra.mxu0 0
  %109 = vmatprep.subr.bf16.mxu0 0
  %110 = vmatpush1.bf16.msra.mxu0 0
  %111 = vmatprep.subr.bf16.mxu0 0
  %112 = vmatpush1.bf16.msra.mxu0 0
  %113 = vmatprep.subr.bf16.mxu0 0
  %114 = vmatpush1.bf16.msra.mxu0 0
  %115 = vmatprep.subr.bf16.mxu0 0
  %116 = vmatpush1.bf16.msra.mxu0 0
  %117 = vmatprep.subr.bf16.mxu0 0
  %118 = vmatpush1.bf16.msra.mxu0 0
  %119 = vmatprep.mubr.bf16.mxu0 0
  %120 = vmatmul.mubr.bf16.gmra.mrb[0].mxu0 %v64
  %v121 = vpop.f32.mrb[0].mxu0
  %v122 = vadd.f32 %v48, %v121
  %v123 = vpop.f32.mrb[0].mxu0
  %v124 = vpop.f32.mrb[0].mxu0
  %v125 = vadd.f32 %v48, %v124
  %v126 = vpop.f32.mrb[0].mxu0
  %127 = vmatprep.mubr.bf16.mxu0 0
  %128 = vmatmul.mubr.bf16.gmra.mrb[0].mxu0 %v67
  %v129 = vpop.f32.mrb[0].mxu0
  %v130 = vadd.f32 %v48, %v129
  %v131 = vpop.f32.mrb[0].mxu0
  %v132 = vpop.f32.mrb[0].mxu0
  %v133 = vadd.f32 %v48, %v132
  %v134 = vpop.f32.mrb[0].mxu0
  %135 = vmatprep.mubr.bf16.mxu0 0
  %136 = vmatmul.mubr.bf16.gmra.mrb[0].mxu0 %v70
  %v137 = vpop.f32.mrb[0].mxu0
  %v138 = vadd.f32 %v48, %v137
  %v139 = vpop.f32.mrb[0].mxu0
  %v140 = vpop.f32.mrb[0].mxu0
  %v141 = vadd.f32 %v48, %v140
  %v142 = vpop.f32.mrb[0].mxu0
  %143 = vmatprep.mubr.bf16.mxu0 0
  %144 = vmatmul.mubr.bf16.gmra.mrb[0].mxu0 %v73
  %v145 = vpop.f32.mrb[0].mxu0
  %v146 = vadd.f32 %v48, %v145
  %v147 = vpop.f32.mrb[0].mxu0
  %v148 = vpop.f32.mrb[0].mxu0
  %v149 = vadd.f32 %v48, %v148
  %v150 = vpop.f32.mrb[0].mxu0
  %151 = vmatprep.mubr.bf16.mxu0 0
  %152 = vmatmul.mubr.bf16.gmra.mrb[0].mxu0 %v76
  %v153 = vpop.f32.mrb[0].mxu0
  %v154 = vadd.f32 %v48, %v153
  %v155 = vpop.f32.mrb[0].mxu0
  %v156 = vpop.f32.mrb[0].mxu0
  %v157 = vadd.f32 %v48, %v156
  %v158 = vpop.f32.mrb[0].mxu0
  %159 = vmatprep.mubr.bf16.mxu0 0
  %160 = vmatmul.mubr.bf16.gmra.mrb[0].mxu0 %v79
  %v161 = vpop.f32.mrb[0].mxu0
  %v162 = vadd.f32 %v48, %v161
  %v163 = vpop.f32.mrb[0].mxu0
  %v164 = vpop.f32.mrb[0].mxu0
  %v165 = vadd.f32 %v48, %v164
  %v166 = vpop.f32.mrb[0].mxu0
  %167 = vmatprep.mubr.bf16.mxu0 0
  %168 = vmatmul.mubr.bf16.gmra.mrb[0].mxu0 %v82
  %v169 = vpop.f32.mrb[0].mxu0
  %v170 = vadd.f32 %v48, %v169
  %v171 = vpop.f32.mrb[0].mxu0
  %v172 = vpop.f32.mrb[0].mxu0
  %v173 = vadd.f32 %v48, %v172
  %v174 = vpop.f32.mrb[0].mxu0
  %175 = vmatprep.mubr.bf16.mxu0 0
  %176 = vmatmul.mubr.bf16.gmra.mrb[0].mxu0 %v85
  %v177 = vpop.f32.mrb[0].mxu0
  %v178 = vadd.f32 %v48, %v177
  %v179 = vpop.f32.mrb[0].mxu0
  %v180 = vpop.f32.mrb[0].mxu0
  %v181 = vadd.f32 %v48, %v180
  %v182 = vpop.f32.mrb[0].mxu0
  %183 = vdwg.mxu0
  %v184 = vmax.f32 %v122, 0.0
  %v185 = vmax.f32 %v125, 0.0
  %v186 = vmax.f32 %v130, 0.0
  %v187 = vmax.f32 %v133, 0.0
  %v188 = vmax.f32 %v138, 0.0
  %v189 = vmax.f32 %v141, 0.0
  %v190 = vmax.f32 %v146, 0.0
  %v191 = vmax.f32 %v149, 0.0
  %v192 = vmax.f32 %v154, 0.0
  %v193 = vmax.f32 %v157, 0.0
  %v194 = vmax.f32 %v162, 0.0
  %v195 = vmax.f32 %v165, 0.0
  %v196 = vmax.f32 %v170, 0.0
  %v197 = vmax.f32 %v173, 0.0
  %v198 = vmax.f32 %v178, 0.0
  %v199 = vmax.f32 %v181, 0.0
  %200 = vst [vmem:[%s3] sm:$0xff] %v184
  %201 = vst [vmem:[%s3 + $0x8] sm:$0xff] %v185
  %202 = vst [vmem:[%s3 + $0x10] sm:$0xff] %v186
  %203 = vst [vmem:[%s3 + $0x18] sm:$0xff] %v187
  %204 = vst [vmem:[%s3 + $0x20] sm:$0xff] %v188
  %205 = vst [vmem:[%s3 + $0x28] sm:$0xff] %v189
  %206 = vst [vmem:[%s3 + $0x30] sm:$0xff] %v190
  %207 = vst [vmem:[%s3 + $0x38] sm:$0xff] %v191
  %208 = vst [vmem:[%s3 + $0x40] sm:$0xff] %v192
  %209 = vst [vmem:[%s3 + $0x48] sm:$0xff] %v193
  %210 = vst [vmem:[%s3 + $0x50] sm:$0xff] %v194
  %211 = vst [vmem:[%s3 + $0x58] sm:$0xff] %v195
  %212 = vst [vmem:[%s3 + $0x60] sm:$0xff] %v196
  %213 = vst [vmem:[%s3 + $0x68] sm:$0xff] %v197
  %214 = vst [vmem:[%s3 + $0x70] sm:$0xff] %v198
  %215 = vst [vmem:[%s3 + $0x78] sm:$0xff] %v199
  // Predicated region
  $region14: #{leela_forward.13} parent=0 // pred_check
    _
  $region15: #{leela_forward.13} parent=0 // pred_check_branch
    %217 = sbr.rel (0) target = $region17
  $region16: #{leela_forward.13} parent=0 // pred_region
    _
  $region17: #{leela_forward.13} parent=0 // pred_fallthru
    _
  // Predicated region
  $region18: #{leela_forward.13} parent=0 // pred_check
    _
  $region19: #{leela_forward.13} parent=0 // pred_check_branch
    %219 = sbr.rel (0) target = $region21
  $region20: #{leela_forward.13} parent=0 // pred_region
    _
  $region21: #{leela_forward.13} parent=0 // pred_fallthru
    _

// kernel: leela_forward.16
$region0: #{leela_forward.16}
  #allocation0 [shape = 'u32[]', space=smem, size = 0x4, offset = 0x4, fixed_abs, tag = 'smem constant byte address 0x4 - core index']
  #allocation1 [shape = 'u32[144,128]{1,0:T(1,128)}', space=vmem, size = 0x12000, scoped, tag = 'internal scratch']
  %s0 = inlined_call_operand.vmem [shape: f32[2,512], index: 0, kind: input, shape index: {}]
  %s1 = inlined_call_operand.vmem [shape: bf16[512,128], index: 1, kind: input, shape index: {}]
  %s2 = inlined_call_operand.vmem [shape: f32[1,128], index: 2, kind: input, shape index: {}]
  %s3 = inlined_call_operand.vmem [shape: f32[2,128], index: 3, kind: output, shape index: {}]
  %s4 = sld [smem:[#allocation0]]
  $region22: #{leela_forward.16} parent=0
    _
  %s6 = ssub.s32 1, %s4
  %s7 = scalar_select 0, %s6, %s4
  // Predicated region
  $region2: #{leela_forward.16} parent=0 // pred_check
    _
  $region3: #{leela_forward.16} parent=0 // pred_check_branch
    %9 = sbr.rel (0) target = $region5
  $region4: #{leela_forward.16} parent=0 // pred_region
    _
  $region5: #{leela_forward.16} parent=0 // pred_fallthru
    _
  // Predicated region
  $region6: #{leela_forward.16} parent=0 // pred_check
    _
  $region7: #{leela_forward.16} parent=0 // pred_check_branch
    %11 = sbr.rel (0) target = $region9
  $region8: #{leela_forward.16} parent=0 // pred_region
    _
  $region9: #{leela_forward.16} parent=0 // pred_fallthru
    _
  // Predicated region
  $region10: #{leela_forward.16} parent=0 // pred_check
    _
  $region11: #{leela_forward.16} parent=0 // pred_check_branch
    %13 = sbr.rel (0) target = $region13
  $region12: #{leela_forward.16} parent=0 // pred_region
    _
  $region13: #{leela_forward.16} parent=0 // pred_fallthru
    _
  %v15 = vld [vmem:[%s0] sm:$0xff]
  %v17 = vcombine.high %v15, %v15
  %v19 = vunpack.c.l.s4 1983009808
  %v20 = vunpack.c.0.s8 %v19
  %v21 = vlaneseq
  %v22 = vshrl.u32 %v21, 7
  %v23 = vsub.s32 %v20, %v22
  %v24 = vrot.slane %v15, %v23
  %v26 = vunpack.c.l.s4 1983009808
  %v27 = vunpack.c.0.s8 %v26
  %v28 = vlaneseq
  %v29 = vshrl.u32 %v28, 7
  %v30 = vsub.s32 %v27, %v29
  %v31 = vrot.slane %v17, %v30
  %v32 = vcombine.high %v24, %v24
  %v33 = vcombine.high %v31, %v31
  %v38 = vpack.c.bf16 %v24, %v24
  %v39 = vpack.c.bf16 %v32, %v32
  %v40 = vpack.c.bf16 %v31, %v31
  %v41 = vpack.c.bf16 %v33, %v33
  %v42 = vld [vmem:[%s1] sm:$0xf]
  %v43 = vld [vmem:[%s1 + $0x4] sm:$0xf]
  %v44 = vld [vmem:[%s1 + $0x8] sm:$0xf]
  %v45 = vld [vmem:[%s1 + $0xc] sm:$0xf]
  %v46 = vld [vmem:[%s1 + $0x10] sm:$0xf]
  %v47 = vld [vmem:[%s1 + $0x14] sm:$0xf]
  %v48 = vld [vmem:[%s1 + $0x18] sm:$0xf]
  %v49 = vld [vmem:[%s1 + $0x1c] sm:$0xf]
  %v50 = vld [vmem:[%s1 + $0x20] sm:$0xf]
  %v51 = vld [vmem:[%s1 + $0x24] sm:$0xf]
  %v52 = vld [vmem:[%s1 + $0x28] sm:$0xf]
  %v53 = vld [vmem:[%s1 + $0x2c] sm:$0xf]
  %v54 = vld [vmem:[%s1 + $0x30] sm:$0xf]
  %v55 = vld [vmem:[%s1 + $0x34] sm:$0xf]
  %v56 = vld [vmem:[%s1 + $0x38] sm:$0xf]
  %v57 = vld [vmem:[%s1 + $0x3c] sm:$0xf]
  %v58 = vld [vmem:[%s1 + $0x40] sm:$0xf]
  %v59 = vld [vmem:[%s1 + $0x44] sm:$0xf]
  %v60 = vld [vmem:[%s1 + $0x48] sm:$0xf]
  %v61 = vld [vmem:[%s1 + $0x4c] sm:$0xf]
  %v62 = vld [vmem:[%s1 + $0x50] sm:$0xf]
  %v63 = vld [vmem:[%s1 + $0x54] sm:$0xf]
  %v64 = vld [vmem:[%s1 + $0x58] sm:$0xf]
  %v65 = vld [vmem:[%s1 + $0x5c] sm:$0xf]
  %v66 = vld [vmem:[%s1 + $0x60] sm:$0xf]
  %v67 = vld [vmem:[%s1 + $0x64] sm:$0xf]
  %v68 = vld [vmem:[%s1 + $0x68] sm:$0xf]
  %v69 = vld [vmem:[%s1 + $0x6c] sm:$0xf]
  %v70 = vld [vmem:[%s1 + $0x70] sm:$0xf]
  %v71 = vld [vmem:[%s1 + $0x74] sm:$0xf]
  %v72 = vld [vmem:[%s1 + $0x78] sm:$0xf]
  %v73 = vld [vmem:[%s1 + $0x7c] sm:$0xf]
  %v74 = vld [vmem:[%s1 + $0x80] sm:$0xf]
  %v75 = vld [vmem:[%s1 + $0x84] sm:$0xf]
  %v76 = vld [vmem:[%s1 + $0x88] sm:$0xf]
  %v77 = vld [vmem:[%s1 + $0x8c] sm:$0xf]
  %v78 = vld [vmem:[%s1 + $0x90] sm:$0xf]
  %v79 = vld [vmem:[%s1 + $0x94] sm:$0xf]
  %v80 = vld [vmem:[%s1 + $0x98] sm:$0xf]
  %v81 = vld [vmem:[%s1 + $0x9c] sm:$0xf]
  %v82 = vld [vmem:[%s1 + $0xa0] sm:$0xf]
  %v83 = vld [vmem:[%s1 + $0xa4] sm:$0xf]
  %v84 = vld [vmem:[%s1 + $0xa8] sm:$0xf]
  %v85 = vld [vmem:[%s1 + $0xac] sm:$0xf]
  %v86 = vld [vmem:[%s1 + $0xb0] sm:$0xf]
  %v87 = vld [vmem:[%s1 + $0xb4] sm:$0xf]
  %v88 = vld [vmem:[%s1 + $0xb8] sm:$0xf]
  %v89 = vld [vmem:[%s1 + $0xbc] sm:$0xf]
  %v90 = vld [vmem:[%s1 + $0xc0] sm:$0xf]
  %v91 = vld [vmem:[%s1 + $0xc4] sm:$0xf]
  %v92 = vld [vmem:[%s1 + $0xc8] sm:$0xf]
  %v93 = vld [vmem:[%s1 + $0xcc] sm:$0xf]
  %v94 = vld [vmem:[%s1 + $0xd0] sm:$0xf]
  %v95 = vld [vmem:[%s1 + $0xd4] sm:$0xf]
  %v96 = vld [vmem:[%s1 + $0xd8] sm:$0xf]
  %v97 = vld [vmem:[%s1 + $0xdc] sm:$0xf]
  %v98 = vld [vmem:[%s1 + $0xe0] sm:$0xf]
  %v99 = vld [vmem:[%s1 + $0xe4] sm:$0xf]
  %v100 = vld [vmem:[%s1 + $0xe8] sm:$0xf]
  %v101 = vld [vmem:[%s1 + $0xec] sm:$0xf]
  %v102 = vld [vmem:[%s1 + $0xf0] sm:$0xf]
  %v103 = vld [vmem:[%s1 + $0xf4] sm:$0xf]
  %v104 = vld [vmem:[%s1 + $0xf8] sm:$0xf]
  %v105 = vld [vmem:[%s1 + $0xfc] sm:$0xf]
  %v106 = vld [vmem:[%s2] sm:$0x1]
  %v108 = vlaneseq
  %v109 = vshrl.u32 %v108, 7
  %v110 = vsub.s32 0, %v109
  %v111 = vrot.slane %v106, %v110
  %v177 = vunpack.c.l.b16 %v42
  %v178 = vunpack.c.l.b16 %v43
  %v179 = vunpack.c.l.b16 %v44
  %v180 = vunpack.c.l.b16 %v45
  %v181 = vunpack.c.l.b16 %v46
  %v182 = vunpack.c.l.b16 %v47
  %v183 = vunpack.c.l.b16 %v48
  %v184 = vunpack.c.l.b16 %v49
  %v185 = vunpack.c.l.b16 %v50
  %v186 = vunpack.c.l.b16 %v51
  %v187 = vunpack.c.l.b16 %v52
  %v188 = vunpack.c.l.b16 %v53
  %v189 = vunpack.c.l.b16 %v54
  %v190 = vunpack.c.l.b16 %v55
  %v191 = vunpack.c.l.b16 %v56
  %v192 = vunpack.c.l.b16 %v57
  %v193 = vunpack.c.l.b16 %v58
  %v194 = vunpack.c.l.b16 %v59
  %v195 = vunpack.c.l.b16 %v60
  %v196 = vunpack.c.l.b16 %v61
  %v197 = vunpack.c.l.b16 %v62
  %v198 = vunpack.c.l.b16 %v63
  %v199 = vunpack.c.l.b16 %v64
  %v200 = vunpack.c.l.b16 %v65
  %v201 = vunpack.c.l.b16 %v66
  %v202 = vunpack.c.l.b16 %v67
  %v203 = vunpack.c.l.b16 %v68
  %v204 = vunpack.c.l.b16 %v69
  %v205 = vunpack.c.l.b16 %v70
  %v206 = vunpack.c.l.b16 %v71
  %v207 = vunpack.c.l.b16 %v72
  %v208 = vunpack.c.l.b16 %v73
  %v209 = vunpack.c.l.b16 %v74
  %v210 = vunpack.c.l.b16 %v75
  %v211 = vunpack.c.l.b16 %v76
  %v212 = vunpack.c.l.b16 %v77
  %v213 = vunpack.c.l.b16 %v78
  %v214 = vunpack.c.l.b16 %v79
  %v215 = vunpack.c.l.b16 %v80
  %v216 = vunpack.c.l.b16 %v81
  %v217 = vunpack.c.l.b16 %v82
  %v218 = vunpack.c.l.b16 %v83
  %v219 = vunpack.c.l.b16 %v84
  %v220 = vunpack.c.l.b16 %v85
  %v221 = vunpack.c.l.b16 %v86
  %v222 = vunpack.c.l.b16 %v87
  %v223 = vunpack.c.l.b16 %v88
  %v224 = vunpack.c.l.b16 %v89
  %v225 = vunpack.c.l.b16 %v90
  %v226 = vunpack.c.l.b16 %v91
  %v227 = vunpack.c.l.b16 %v92
  %v228 = vunpack.c.l.b16 %v93
  %v229 = vunpack.c.l.b16 %v94
  %v230 = vunpack.c.l.b16 %v95
  %v231 = vunpack.c.l.b16 %v96
  %v232 = vunpack.c.l.b16 %v97
  %v233 = vunpack.c.l.b16 %v98
  %v234 = vunpack.c.l.b16 %v99
  %v235 = vunpack.c.l.b16 %v100
  %v236 = vunpack.c.l.b16 %v101
  %v237 = vunpack.c.l.b16 %v102
  %v238 = vunpack.c.l.b16 %v103
  %v239 = vunpack.c.l.b16 %v104
  %v240 = vunpack.c.l.b16 %v105
  %v241 = vpack.c.b16 %v178, %v177
  %v242 = vpack.c.b16 %v180, %v179
  %v243 = vpack.c.b16 %v182, %v181
  %v244 = vpack.c.b16 %v184, %v183
  %v245 = vpack.c.b16 %v186, %v185
  %v246 = vpack.c.b16 %v188, %v187
  %v247 = vpack.c.b16 %v190, %v189
  %v248 = vpack.c.b16 %v192, %v191
  %v249 = vpack.c.b16 %v194, %v193
  %v250 = vpack.c.b16 %v196, %v195
  %v251 = vpack.c.b16 %v198, %v197
  %v252 = vpack.c.b16 %v200, %v199
  %v253 = vpack.c.b16 %v202, %v201
  %v254 = vpack.c.b16 %v204, %v203
  %v255 = vpack.c.b16 %v206, %v205
  %v256 = vpack.c.b16 %v208, %v207
  %v257 = vpack.c.b16 %v210, %v209
  %v258 = vpack.c.b16 %v212, %v211
  %v259 = vpack.c.b16 %v214, %v213
  %v260 = vpack.c.b16 %v216, %v215
  %v261 = vpack.c.b16 %v218, %v217
  %v262 = vpack.c.b16 %v220, %v219
  %v263 = vpack.c.b16 %v222, %v221
  %v264 = vpack.c.b16 %v224, %v223
  %v265 = vpack.c.b16 %v226, %v225
  %v266 = vpack.c.b16 %v228, %v227
  %v267 = vpack.c.b16 %v230, %v229
  %v268 = vpack.c.b16 %v232, %v231
  %v269 = vpack.c.b16 %v234, %v233
  %v270 = vpack.c.b16 %v236, %v235
  %v271 = vpack.c.b16 %v238, %v237
  %v272 = vpack.c.b16 %v240, %v239
  %305 = vmatprep.subr.bf16.mxu0 0
  %306 = vmatpush1.bf16.msra.mxu0 %v241
  %307 = vmatprep.subr.bf16.mxu0 0
  %308 = vmatpush1.bf16.msra.mxu0 %v242
  %309 = vmatprep.subr.bf16.mxu0 0
  %310 = vmatpush1.bf16.msra.mxu0 %v243
  %311 = vmatprep.subr.bf16.mxu0 0
  %312 = vmatpush1.bf16.msra.mxu0 %v244
  %313 = vmatprep.subr.bf16.mxu0 0
  %314 = vmatpush1.bf16.msra.mxu0 %v245
  %315 = vmatprep.subr.bf16.mxu0 0
  %316 = vmatpush1.bf16.msra.mxu0 %v246
  %317 = vmatprep.subr.bf16.mxu0 0
  %318 = vmatpush1.bf16.msra.mxu0 %v247
  %319 = vmatprep.subr.bf16.mxu0 0
  %320 = vmatpush1.bf16.msra.mxu0 %v248
  %321 = vmatprep.subr.bf16.mxu0 0
  %322 = vmatpush1.bf16.msra.mxu0 %v249
  %323 = vmatprep.subr.bf16.mxu0 0
  %324 = vmatpush1.bf16.msra.mxu0 %v250
  %325 = vmatprep.subr.bf16.mxu0 0
  %326 = vmatpush1.bf16.msra.mxu0 %v251
  %327 = vmatprep.subr.bf16.mxu0 0
  %328 = vmatpush1.bf16.msra.mxu0 %v252
  %329 = vmatprep.subr.bf16.mxu0 0
  %330 = vmatpush1.bf16.msra.mxu0 %v253
  %331 = vmatprep.subr.bf16.mxu0 0
  %332 = vmatpush1.bf16.msra.mxu0 %v254
  %333 = vmatprep.subr.bf16.mxu0 0
  %334 = vmatpush1.bf16.msra.mxu0 %v255
  %335 = vmatprep.subr.bf16.mxu0 0
  %336 = vmatpush1.bf16.msra.mxu0 %v256
  %337 = vmatprep.mubr.bf16.mxu0 %v39
  %338 = vmatmul.mubr.bf16.gmra.mrb[0].mxu0 %v38
  %v339 = vpop.f32.mrb[0].mxu0
  %v340 = vadd.f32 %v111, %v339
  %v341 = vpop.f32.mrb[0].mxu0
  %v342 = vpop.f32.mrb[0].mxu0
  %v343 = vpop.f32.mrb[0].mxu0
  %344 = vdwg.mxu0
  %345 = vmatprep.subr.bf16.mxu0 0
  %346 = vmatpush1.bf16.msra.mxu0 %v257
  %347 = vmatprep.subr.bf16.mxu0 0
  %348 = vmatpush1.bf16.msra.mxu0 %v258
  %349 = vmatprep.subr.bf16.mxu0 0
  %350 = vmatpush1.bf16.msra.mxu0 %v259
  %351 = vmatprep.subr.bf16.mxu0 0
  %352 = vmatpush1.bf16.msra.mxu0 %v260
  %353 = vmatprep.subr.bf16.mxu0 0
  %354 = vmatpush1.bf16.msra.mxu0 %v261
  %355 = vmatprep.subr.bf16.mxu0 0
  %356 = vmatpush1.bf16.msra.mxu0 %v262
  %357 = vmatprep.subr.bf16.mxu0 0
  %358 = vmatpush1.bf16.msra.mxu0 %v263
  %359 = vmatprep.subr.bf16.mxu0 0
  %360 = vmatpush1.bf16.msra.mxu0 %v264
  %361 = vmatprep.subr.bf16.mxu0 0
  %362 = vmatpush1.bf16.msra.mxu0 %v265
  %363 = vmatprep.subr.bf16.mxu0 0
  %364 = vmatpush1.bf16.msra.mxu0 %v266
  %365 = vmatprep.subr.bf16.mxu0 0
  %366 = vmatpush1.bf16.msra.mxu0 %v267
  %367 = vmatprep.subr.bf16.mxu0 0
  %368 = vmatpush1.bf16.msra.mxu0 %v268
  %369 = vmatprep.subr.bf16.mxu0 0
  %370 = vmatpush1.bf16.msra.mxu0 %v269
  %371 = vmatprep.subr.bf16.mxu0 0
  %372 = vmatpush1.bf16.msra.mxu0 %v270
  %373 = vmatprep.subr.bf16.mxu0 0
  %374 = vmatpush1.bf16.msra.mxu0 %v271
  %375 = vmatprep.subr.bf16.mxu0 0
  %376 = vmatpush1.bf16.msra.mxu0 %v272
  %377 = vmatprep.mubr.bf16.mxu0 %v41
  %378 = vmatmul.mubr.bf16.gmra.mrb[0].mxu0 %v40
  %v379 = vpop.f32.mrb[0].mxu0
  %v380 = vadd.f32 %v340, %v379
  %v381 = vpop.f32.mrb[0].mxu0
  %v382 = vpop.f32.mrb[0].mxu0
  %v383 = vpop.f32.mrb[0].mxu0
  %384 = vdwg.mxu0
  %v385 = vmax.f32 %v380, 0.0
  %386 = vst [vmem:[%s3] sm:$0x3] %v385
  // Predicated region
  $region14: #{leela_forward.16} parent=0 // pred_check
    _
  $region15: #{leela_forward.16} parent=0 // pred_check_branch
    %388 = sbr.rel (0) target = $region17
  $region16: #{leela_forward.16} parent=0 // pred_region
    _
  $region17: #{leela_forward.16} parent=0 // pred_fallthru
    _
  // Predicated region
  $region18: #{leela_forward.16} parent=0 // pred_check
    _
  $region19: #{leela_forward.16} parent=0 // pred_check_branch
    %390 = sbr.rel (0) target = $region21
  $region20: #{leela_forward.16} parent=0 // pred_region
    _
  $region21: #{leela_forward.16} parent=0 // pred_fallthru
    _

// kernel: leela_forward.10
$region0: #{leela_forward.10}
  #allocation0 [shape = 'u32[]', space=smem, size = 0x4, offset = 0x4, fixed_abs, tag = 'smem constant byte address 0x4 - core index']
  #allocation1 [shape = 'u32[144,128]{1,0:T(1,128)}', space=vmem, size = 0x12000, scoped, tag = 'internal scratch']
  %s0 = inlined_call_operand.vmem [shape: f32[2,64,32], index: 0, kind: input, shape index: {}, may-alias: {0,14}]
  %s1 = inlined_call_operand.vmem [shape: f32[9,64,1], index: 1, kind: input, shape index: {}]
  %s2 = inlined_call_operand.vmem [shape: bf16[9,32,32], index: 2, kind: input, shape index: {}]
  %s3 = inlined_call_operand.vmem [shape: f32[1,32], index: 3, kind: input, shape index: {}]
  %s4 = inlined_call_operand.vmem [shape: f32[1,32], index: 4, kind: input, shape index: {}]
  %s5 = inlined_call_operand.vmem [shape: bf16[9,32,32], index: 5, kind: input, shape index: {}]
  %s6 = inlined_call_operand.vmem [shape: f32[1,32], index: 6, kind: input, shape index: {}]
  %s7 = inlined_call_operand.vmem [shape: f32[1,32], index: 7, kind: input, shape index: {}]
  %s8 = inlined_call_operand.vmem [shape: f32[32,8], index: 8, kind: input, shape index: {}]
  %s9 = inlined_call_operand.vmem [shape: f32[1,8], index: 9, kind: input, shape index: {}]
  %s10 = inlined_call_operand.vmem [shape: f32[8,32], index: 10, kind: input, shape index: {}]
  %s11 = inlined_call_operand.vmem [shape: f32[1,32], index: 11, kind: input, shape index: {}]
  %s12 = inlined_call_operand.vmem [shape: f32[8,32], index: 12, kind: input, shape index: {}]
  %s13 = inlined_call_operand.vmem [shape: f32[1,32], index: 13, kind: input, shape index: {}]
  %s14 = inlined_call_operand.vmem [shape: f32[2,64,32], index: 14, kind: output, shape index: {}, may-alias: {0,14}]
  %s15 = sld [smem:[#allocation0]]
  $region89: #{leela_forward.10} parent=0
    _
  %s17 = ssub.s32 1, %s15
  %s18 = scalar_select 0, %s17, %s15
  loop: start=0, step=1, limit=4
  $region2: #{leela_forward.10} parent=0 // loop_pre_header
    _
  $region3: #{leela_forward.10} parent=0 // loop_header
    %s20 = sphi 0, %s24
    %p21 = scmp.ge.s32.totalorder %s20, 4
    %s30 = sphi 0, %s32
    %s33 = sphi 0, %s30
    %s34 = sphi 0, %s33
    %s50 = sphi 0, %s34
    %s54 = sphi 0, %s54
    %s56 = sphi 0, %s54
    %s57 = sphi 0, %s56
    %s71 = sphi 0, %s57
    %s75 = sphi 0, %s75
    %s77 = sphi 0, %s75
    %s78 = sphi 0, %s77
    %s92 = sphi 0, %s78
    %s96 = sphi 0, %s96
    %s98 = sphi 0, %s96
    %s99 = sphi 0, %s98
    %s113 = sphi 0, %s99
    %s117 = sphi 0, %s117
    %s119 = sphi 0, %s117
    %s120 = sphi 0, %s119
    %s134 = sphi 0, %s120
    %s138 = sphi 0, %s138
    %s140 = sphi 0, %s138
    %s141 = sphi 0, %s140
    %s155 = sphi 0, %s141
    %s159 = sphi 0, %s159
    %s161 = sphi 0, %s159
    %s162 = sphi 0, %s161
    %s176 = sphi 0, %s162
    %s180 = sphi 0, %s180
    %s182 = sphi 0, %s180
    %s183 = sphi 0, %s182
    %s197 = sphi 0, %s183
    %s201 = sphi 0, %s201
    %s203 = sphi 0, %s201
    %s204 = sphi 0, %s203
    %s218 = sphi 0, %s204
    %s222 = sphi 0, %s222
    %s224 = sphi 0, %s222
    %s225 = sphi 0, %s224
    %s239 = sphi 0, %s225
    %s243 = sphi 0, %s243
    %s245 = sphi 0, %s243
    %s246 = sphi 0, %s245
    %s260 = sphi 0, %s246
    %s264 = sphi 0, %s264
    %s266 = sphi 0, %s264
    %s267 = sphi 0, %s266
    %s281 = sphi 0, %s267
    %s285 = sphi 0, %s285
    %s287 = sphi 0, %s285
    %s288 = sphi 0, %s287
    %s302 = sphi 0, %s288
    %s306 = sphi 0, %s306
    %s308 = sphi 0, %s306
    %s309 = sphi 0, %s308
    %s323 = sphi 0, %s309
    %s329 = sphi 0, %s331
    %s332 = sphi 0, %s329
    %s333 = sphi 0, %s332
    %s349 = sphi 0, %s333
  $region4: #{leela_forward.10} parent=0 // loop_header_branch
    %23 = sbr.rel (%p21) target = $region8
  $region5: #{leela_forward.10} parent=0 // loop_body
    %s25 = ssub.s32 %s20, 1
    %s26 = ssub.s32 %s20, 2
    %s27 = sadd.s32 %s20, 1
    %s28 = ssub.s32 %s20, %s27
    %p29 = scmp.eq.s32.totalorder %s28, 0
    %s31 = sadd.s32 %s30, 1
    %s32 = scalar_select %p29, %s30, %s31
    %p35 = pneg %p29
    %p36 = scmp.eq.s32.totalorder %s20, 1
    %p37 = por %p35, %p36
    %p38 = scmp.ne.s32.totalorder %s30, %s33
    %p39 = scmp.eq.s32.totalorder %s20, 0
    %p40 = por %p38, %p39
    %p41 = scmp.ne.s32.totalorder %s30, %s33
    %p42 = scmp.eq.s32.totalorder %s25, 1
    %p43 = por %p41, %p42
    %p44 = scmp.ne.s32.totalorder %s33, %s34
    %p45 = scmp.eq.s32.totalorder %s25, 0
    %p46 = por %p44, %p45
    %p47 = scmp.ne.s32.totalorder %s33, %s34
    %p48 = scmp.eq.s32.totalorder %s26, 1
    %p49 = por %p47, %p48
    %p51 = scmp.ne.s32.totalorder %s34, %s50
    %p52 = scmp.eq.s32.totalorder %s26, 0
    %p53 = por %p51, %p52
    %s55 = sadd.s32 %s54, 1
    %p58 = scmp.eq.s32.totalorder %s20, 1
    %p59 = scmp.ne.s32.totalorder %s54, %s56
    %p60 = scmp.eq.s32.totalorder %s20, 0
    %p61 = por %p59, %p60
    %p62 = scmp.ne.s32.totalorder %s54, %s56
    %p63 = scmp.eq.s32.totalorder %s25, 1
    %p64 = por %p62, %p63
    %p65 = scmp.ne.s32.totalorder %s56, %s57
    %p66 = scmp.eq.s32.totalorder %s25, 0
    %p67 = por %p65, %p66
    %p68 = scmp.ne.s32.totalorder %s56, %s57
    %p69 = scmp.eq.s32.totalorder %s26, 1
    %p70 = por %p68, %p69
    %p72 = scmp.ne.s32.totalorder %s57, %s71
    %p73 = scmp.eq.s32.totalorder %s26, 0
    %p74 = por %p72, %p73
    %s76 = sadd.s32 %s75, 1
    %p79 = scmp.eq.s32.totalorder %s20, 1
    %p80 = scmp.ne.s32.totalorder %s75, %s77
    %p81 = scmp.eq.s32.totalorder %s20, 0
    %p82 = por %p80, %p81
    %p83 = scmp.ne.s32.totalorder %s75, %s77
    %p84 = scmp.eq.s32.totalorder %s25, 1
    %p85 = por %p83, %p84
    %p86 = scmp.ne.s32.totalorder %s77, %s78
    %p87 = scmp.eq.s32.totalorder %s25, 0
    %p88 = por %p86, %p87
    %p89 = scmp.ne.s32.totalorder %s77, %s78
    %p90 = scmp.eq.s32.totalorder %s26, 1
    %p91 = por %p89, %p90
    %p93 = scmp.ne.s32.totalorder %s78, %s92
    %p94 = scmp.eq.s32.totalorder %s26, 0
    %p95 = por %p93, %p94
    %s97 = sadd.s32 %s96, 1
    %p100 = scmp.eq.s32.totalorder %s20, 1
    %p101 = scmp.ne.s32.totalorder %s96, %s98
    %p102 = scmp.eq.s32.totalorder %s20, 0
    %p103 = por %p101, %p102
    %p104 = scmp.ne.s32.totalorder %s96, %s98
    %p105 = scmp.eq.s32.totalorder %s25, 1
    %p106 = por %p104, %p105
    %p107 = scmp.ne.s32.totalorder %s98, %s99
    %p108 = scmp.eq.s32.totalorder %s25, 0
    %p109 = por %p107, %p108
    %p110 = scmp.ne.s32.totalorder %s98, %s99
    %p111 = scmp.eq.s32.totalorder %s26, 1
    %p112 = por %p110, %p111
    %p114 = scmp.ne.s32.totalorder %s99, %s113
    %p115 = scmp.eq.s32.totalorder %s26, 0
    %p116 = por %p114, %p115
    %s118 = sadd.s32 %s117, 1
    %p121 = scmp.eq.s32.totalorder %s20, 1
    %p122 = scmp.ne.s32.totalorder %s117, %s119
    %p123 = scmp.eq.s32.totalorder %s20, 0
    %p124 = por %p122, %p123
    %p125 = scmp.ne.s32.totalorder %s117, %s119
    %p126 = scmp.eq.s32.totalorder %s25, 1
    %p127 = por %p125, %p126
    %p128 = scmp.ne.s32.totalorder %s119, %s120
    %p129 = scmp.eq.s32.totalorder %s25, 0
    %p130 = por %p128, %p129
    %p131 = scmp.ne.s32.totalorder %s119, %s120
    %p132 = scmp.eq.s32.totalorder %s26, 1
    %p133 = por %p131, %p132
    %p135 = scmp.ne.s32.totalorder %s120, %s134
    %p136 = scmp.eq.s32.totalorder %s26, 0
    %p137 = por %p135, %p136
    %s139 = sadd.s32 %s138, 1
    %p142 = scmp.eq.s32.totalorder %s20, 1
    %p143 = scmp.ne.s32.totalorder %s138, %s140
    %p144 = scmp.eq.s32.totalorder %s20, 0
    %p145 = por %p143, %p144
    %p146 = scmp.ne.s32.totalorder %s138, %s140
    %p147 = scmp.eq.s32.totalorder %s25, 1
    %p148 = por %p146, %p147
    %p149 = scmp.ne.s32.totalorder %s140, %s141
    %p150 = scmp.eq.s32.totalorder %s25, 0
    %p151 = por %p149, %p150
    %p152 = scmp.ne.s32.totalorder %s140, %s141
    %p153 = scmp.eq.s32.totalorder %s26, 1
    %p154 = por %p152, %p153
    %p156 = scmp.ne.s32.totalorder %s141, %s155
    %p157 = scmp.eq.s32.totalorder %s26, 0
    %p158 = por %p156, %p157
    %s160 = sadd.s32 %s159, 1
    %p163 = scmp.eq.s32.totalorder %s20, 1
    %p164 = scmp.ne.s32.totalorder %s159, %s161
    %p165 = scmp.eq.s32.totalorder %s20, 0
    %p166 = por %p164, %p165
    %p167 = scmp.ne.s32.totalorder %s159, %s161
    %p168 = scmp.eq.s32.totalorder %s25, 1
    %p169 = por %p167, %p168
    %p170 = scmp.ne.s32.totalorder %s161, %s162
    %p171 = scmp.eq.s32.totalorder %s25, 0
    %p172 = por %p170, %p171
    %p173 = scmp.ne.s32.totalorder %s161, %s162
    %p174 = scmp.eq.s32.totalorder %s26, 1
    %p175 = por %p173, %p174
    %p177 = scmp.ne.s32.totalorder %s162, %s176
    %p178 = scmp.eq.s32.totalorder %s26, 0
    %p179 = por %p177, %p178
    %s181 = sadd.s32 %s180, 1
    %p184 = scmp.eq.s32.totalorder %s20, 1
    %p185 = scmp.ne.s32.totalorder %s180, %s182
    %p186 = scmp.eq.s32.totalorder %s20, 0
    %p187 = por %p185, %p186
    %p188 = scmp.ne.s32.totalorder %s180, %s182
    %p189 = scmp.eq.s32.totalorder %s25, 1
    %p190 = por %p188, %p189
    %p191 = scmp.ne.s32.totalorder %s182, %s183
    %p192 = scmp.eq.s32.totalorder %s25, 0
    %p193 = por %p191, %p192
    %p194 = scmp.ne.s32.totalorder %s182, %s183
    %p195 = scmp.eq.s32.totalorder %s26, 1
    %p196 = por %p194, %p195
    %p198 = scmp.ne.s32.totalorder %s183, %s197
    %p199 = scmp.eq.s32.totalorder %s26, 0
    %p200 = por %p198, %p199
    %s202 = sadd.s32 %s201, 1
    %p205 = scmp.eq.s32.totalorder %s20, 1
    %p206 = scmp.ne.s32.totalorder %s201, %s203
    %p207 = scmp.eq.s32.totalorder %s20, 0
    %p208 = por %p206, %p207
    %p209 = scmp.ne.s32.totalorder %s201, %s203
    %p210 = scmp.eq.s32.totalorder %s25, 1
    %p211 = por %p209, %p210
    %p212 = scmp.ne.s32.totalorder %s203, %s204
    %p213 = scmp.eq.s32.totalorder %s25, 0
    %p214 = por %p212, %p213
    %p215 = scmp.ne.s32.totalorder %s203, %s204
    %p216 = scmp.eq.s32.totalorder %s26, 1
    %p217 = por %p215, %p216
    %p219 = scmp.ne.s32.totalorder %s204, %s218
    %p220 = scmp.eq.s32.totalorder %s26, 0
    %p221 = por %p219, %p220
    %s223 = sadd.s32 %s222, 1
    %p226 = scmp.eq.s32.totalorder %s20, 1
    %p227 = scmp.ne.s32.totalorder %s222, %s224
    %p228 = scmp.eq.s32.totalorder %s20, 0
    %p229 = por %p227, %p228
    %p230 = scmp.ne.s32.totalorder %s222, %s224
    %p231 = scmp.eq.s32.totalorder %s25, 1
    %p232 = por %p230, %p231
    %p233 = scmp.ne.s32.totalorder %s224, %s225
    %p234 = scmp.eq.s32.totalorder %s25, 0
    %p235 = por %p233, %p234
    %p236 = scmp.ne.s32.totalorder %s224, %s225
    %p237 = scmp.eq.s32.totalorder %s26, 1
    %p238 = por %p236, %p237
    %p240 = scmp.ne.s32.totalorder %s225, %s239
    %p241 = scmp.eq.s32.totalorder %s26, 0
    %p242 = por %p240, %p241
    %s244 = sadd.s32 %s243, 1
    %p247 = scmp.eq.s32.totalorder %s20, 1
    %p248 = scmp.ne.s32.totalorder %s243, %s245
    %p249 = scmp.eq.s32.totalorder %s20, 0
    %p250 = por %p248, %p249
    %p251 = scmp.ne.s32.totalorder %s243, %s245
    %p252 = scmp.eq.s32.totalorder %s25, 1
    %p253 = por %p251, %p252
    %p254 = scmp.ne.s32.totalorder %s245, %s246
    %p255 = scmp.eq.s32.totalorder %s25, 0
    %p256 = por %p254, %p255
    %p257 = scmp.ne.s32.totalorder %s245, %s246
    %p258 = scmp.eq.s32.totalorder %s26, 1
    %p259 = por %p257, %p258
    %p261 = scmp.ne.s32.totalorder %s246, %s260
    %p262 = scmp.eq.s32.totalorder %s26, 0
    %p263 = por %p261, %p262
    %s265 = sadd.s32 %s264, 1
    %p268 = scmp.eq.s32.totalorder %s20, 1
    %p269 = scmp.ne.s32.totalorder %s264, %s266
    %p270 = scmp.eq.s32.totalorder %s20, 0
    %p271 = por %p269, %p270
    %p272 = scmp.ne.s32.totalorder %s264, %s266
    %p273 = scmp.eq.s32.totalorder %s25, 1
    %p274 = por %p272, %p273
    %p275 = scmp.ne.s32.totalorder %s266, %s267
    %p276 = scmp.eq.s32.totalorder %s25, 0
    %p277 = por %p275, %p276
    %p278 = scmp.ne.s32.totalorder %s266, %s267
    %p279 = scmp.eq.s32.totalorder %s26, 1
    %p280 = por %p278, %p279
    %p282 = scmp.ne.s32.totalorder %s267, %s281
    %p283 = scmp.eq.s32.totalorder %s26, 0
    %p284 = por %p282, %p283
    %s286 = sadd.s32 %s285, 1
    %p289 = scmp.eq.s32.totalorder %s20, 1
    %p290 = scmp.ne.s32.totalorder %s285, %s287
    %p291 = scmp.eq.s32.totalorder %s20, 0
    %p292 = por %p290, %p291
    %p293 = scmp.ne.s32.totalorder %s285, %s287
    %p294 = scmp.eq.s32.totalorder %s25, 1
    %p295 = por %p293, %p294
    %p296 = scmp.ne.s32.totalorder %s287, %s288
    %p297 = scmp.eq.s32.totalorder %s25, 0
    %p298 = por %p296, %p297
    %p299 = scmp.ne.s32.totalorder %s287, %s288
    %p300 = scmp.eq.s32.totalorder %s26, 1
    %p301 = por %p299, %p300
    %p303 = scmp.ne.s32.totalorder %s288, %s302
    %p304 = scmp.eq.s32.totalorder %s26, 0
    %p305 = por %p303, %p304
    %s307 = sadd.s32 %s306, 1
    %p310 = scmp.eq.s32.totalorder %s20, 1
    %p311 = scmp.ne.s32.totalorder %s306, %s308
    %p312 = scmp.eq.s32.totalorder %s20, 0
    %p313 = por %p311, %p312
    %p314 = scmp.ne.s32.totalorder %s306, %s308
    %p315 = scmp.eq.s32.totalorder %s25, 1
    %p316 = por %p314, %p315
    %p317 = scmp.ne.s32.totalorder %s308, %s309
    %p318 = scmp.eq.s32.totalorder %s25, 0
    %p319 = por %p317, %p318
    %p320 = scmp.ne.s32.totalorder %s308, %s309
    %p321 = scmp.eq.s32.totalorder %s26, 1
    %p322 = por %p320, %p321
    %p324 = scmp.ne.s32.totalorder %s309, %s323
    %p325 = scmp.eq.s32.totalorder %s26, 0
    %p326 = por %p324, %p325
    %s327 = ssub.s32 %s20, %s27
    %p328 = scmp.eq.s32.totalorder %s327, 0
    %s330 = sadd.s32 %s329, 1
    %s331 = scalar_select %p328, %s329, %s330
    %p334 = pneg %p328
    %p335 = scmp.eq.s32.totalorder %s20, 1
    %p336 = por %p334, %p335
    %p337 = scmp.ne.s32.totalorder %s329, %s332
    %p338 = scmp.eq.s32.totalorder %s20, 0
    %p339 = por %p337, %p338
    %p340 = scmp.ne.s32.totalorder %s329, %s332
    %p341 = scmp.eq.s32.totalorder %s25, 1
    %p342 = por %p340, %p341
    %p343 = scmp.ne.s32.totalorder %s332, %s333
    %p344 = scmp.eq.s32.totalorder %s25, 0
    %p345 = por %p343, %p344
    %p346 = scmp.ne.s32.totalorder %s332, %s333
    %p347 = scmp.eq.s32.totalorder %s26, 1
    %p348 = por %p346, %p347
    %p350 = scmp.ne.s32.totalorder %s333, %s349
    %p351 = scmp.eq.s32.totalorder %s26, 0
    %p352 = por %p350, %p351
    %p353 = scmp.le.s32.totalorder 1, %s20
    %p354 = scmp.lt.s32.totalorder %s20, 3
    %p355 = pnand %p353, %p354
    %p356 = pneg %p355
    // Predicated region
    $region9: #{leela_forward.10} parent=5 // pred_check
      _
    $region10: #{leela_forward.10} parent=5 // pred_check_branch
      %358 = sbr.rel (%p355) target = $region12
    $region11: #{leela_forward.10} parent=5 // pred_region
      %s359 = ssub.s32 %s20, 1
      // Predicated region
      $region13: #{leela_forward.10} parent=11 // pred_check
        %p360 = pneg %p67
      $region14: #{leela_forward.10} parent=11 // pred_check_branch
        %362 = sbr.rel (%p360) target = $region16
      $region15: #{leela_forward.10} parent=11 // pred_region
        _
      $region16: #{leela_forward.10} parent=11 // pred_fallthru
        _
      // Predicated region
      $region17: #{leela_forward.10} parent=11 // pred_check
        %p363 = pneg %p88
      $region18: #{leela_forward.10} parent=11 // pred_check_branch
        %365 = sbr.rel (%p363) target = $region20
      $region19: #{leela_forward.10} parent=11 // pred_region
        _
      $region20: #{leela_forward.10} parent=11 // pred_fallthru
        _
      // Predicated region
      $region21: #{leela_forward.10} parent=11 // pred_check
        %p366 = pneg %p109
      $region22: #{leela_forward.10} parent=11 // pred_check_branch
        %368 = sbr.rel (%p366) target = $region24
      $region23: #{leela_forward.10} parent=11 // pred_region
        _
      $region24: #{leela_forward.10} parent=11 // pred_fallthru
        _
      // Predicated region
      $region25: #{leela_forward.10} parent=11 // pred_check
        %p369 = pneg %p130
      $region26: #{leela_forward.10} parent=11 // pred_check_branch
        %371 = sbr.rel (%p369) target = $region28
      $region27: #{leela_forward.10} parent=11 // pred_region
        _
      $region28: #{leela_forward.10} parent=11 // pred_fallthru
        _
      // Predicated region
      $region29: #{leela_forward.10} parent=11 // pred_check
        %p372 = pneg %p151
      $region30: #{leela_forward.10} parent=11 // pred_check_branch
        %374 = sbr.rel (%p372) target = $region32
      $region31: #{leela_forward.10} parent=11 // pred_region
        _
      $region32: #{leela_forward.10} parent=11 // pred_fallthru
        _
      // Predicated region
      $region33: #{leela_forward.10} parent=11 // pred_check
        %p375 = pneg %p172
      $region34: #{leela_forward.10} parent=11 // pred_check_branch
        %377 = sbr.rel (%p375) target = $region36
      $region35: #{leela_forward.10} parent=11 // pred_region
        _
      $region36: #{leela_forward.10} parent=11 // pred_fallthru
        _
      // Predicated region
      $region37: #{leela_forward.10} parent=11 // pred_check
        %p378 = pneg %p193
      $region38: #{leela_forward.10} parent=11 // pred_check_branch
        %380 = sbr.rel (%p378) target = $region40
      $region39: #{leela_forward.10} parent=11 // pred_region
        _
      $region40: #{leela_forward.10} parent=11 // pred_fallthru
        _
      // Predicated region
      $region41: #{leela_forward.10} parent=11 // pred_check
        %p381 = pneg %p214
      $region42: #{leela_forward.10} parent=11 // pred_check_branch
        %383 = sbr.rel (%p381) target = $region44
      $region43: #{leela_forward.10} parent=11 // pred_region
        _
      $region44: #{leela_forward.10} parent=11 // pred_fallthru
        _
      // Predicated region
      $region45: #{leela_forward.10} parent=11 // pred_check
        %p384 = pneg %p235
      $region46: #{leela_forward.10} parent=11 // pred_check_branch
        %386 = sbr.rel (%p384) target = $region48
      $region47: #{leela_forward.10} parent=11 // pred_region
        _
      $region48: #{leela_forward.10} parent=11 // pred_fallthru
        _
      // Predicated region
      $region49: #{leela_forward.10} parent=11 // pred_check
        %p387 = pneg %p256
      $region50: #{leela_forward.10} parent=11 // pred_check_branch
        %389 = sbr.rel (%p387) target = $region52
      $region51: #{leela_forward.10} parent=11 // pred_region
        _
      $region52: #{leela_forward.10} parent=11 // pred_fallthru
        _
      // Predicated region
      $region53: #{leela_forward.10} parent=11 // pred_check
        %p390 = pneg %p277
      $region54: #{leela_forward.10} parent=11 // pred_check_branch
        %392 = sbr.rel (%p390) target = $region56
      $region55: #{leela_forward.10} parent=11 // pred_region
        _
      $region56: #{leela_forward.10} parent=11 // pred_fallthru
        _
      // Predicated region
      $region57: #{leela_forward.10} parent=11 // pred_check
        %p393 = pneg %p298
      $region58: #{leela_forward.10} parent=11 // pred_check_branch
        %395 = sbr.rel (%p393) target = $region60
      $region59: #{leela_forward.10} parent=11 // pred_region
        _
      $region60: #{leela_forward.10} parent=11 // pred_fallthru
        _
      // Predicated region
      $region61: #{leela_forward.10} parent=11 // pred_check
        %p396 = pneg %p319
      $region62: #{leela_forward.10} parent=11 // pred_check_branch
        %398 = sbr.rel (%p396) target = $region64
      $region63: #{leela_forward.10} parent=11 // pred_region
        _
      $region64: #{leela_forward.10} parent=11 // pred_fallthru
        _
    $region12: #{leela_forward.10} parent=5 // pred_fallthru
      _
    %p399 = scmp.lt.s32.totalorder %s20, 2
    // Predicated region
    $region65: #{leela_forward.10} parent=5 // pred_check
      %p400 = pneg %p399
    $region66: #{leela_forward.10} parent=5 // pred_check_branch
      %402 = sbr.rel (%p400) target = $region68
    $region67: #{leela_forward.10} parent=5 // pred_region
      // Predicated region
      $region69: #{leela_forward.10} parent=67 // pred_check
        %p403 = pneg %p40
      $region70: #{leela_forward.10} parent=67 // pred_check_branch
        %405 = sbr.rel (%p403) target = $region72
      $region71: #{leela_forward.10} parent=67 // pred_region
        %p406 = scmp.lt.s32.totalorder %s20, 1
        %s407 = scalar_select %p406, %s20, 1
        %s408 = smul.addr %s407, 8
        %s409 = smul.addr %s408, 8
        %s410 = scalar_lea.vmem %s0, %s409
      $region72: #{leela_forward.10} parent=67 // pred_fallthru
        _
    $region68: #{leela_forward.10} parent=5 // pred_fallthru
      _
    %p411 = scmp.le.s32.totalorder 1, %s20
    %p412 = scmp.lt.s32.totalorder %s20, 3
    %p413 = pnand %p411, %p412
    %p414 = pneg %p413
    // Predicated region
    $region73: #{leela_forward.10} parent=5 // pred_check
      _
    $region74: #{leela_forward.10} parent=5 // pred_check_branch
      %416 = sbr.rel (%p413) target = $region76
    $region75: #{leela_forward.10} parent=5 // pred_region
      %s417 = ssub.s32 %s20, 1
      %p418 = scmp.lt.s32.totalorder %s25, 1
      %s419 = scalar_select %p418, %s25, 1
      %s420 = smul.addr %s419, 8
      %s421 = smul.addr %s420, 8
      %s422 = scalar_lea.vmem %s0, %s421
      %p423 = pneg %p46
      %p424 = pneg %p43
      %p425 = pneg %p67
      %p426 = pneg %p64
      %p427 = pneg %p88
      %p428 = pneg %p85
      %p429 = pneg %p109
      %p430 = pneg %p106
      %p431 = pneg %p130
      %p432 = pneg %p127
      %p433 = pneg %p151
      %p434 = pneg %p148
      %p435 = pneg %p172
      %p436 = pneg %p169
      %p437 = pneg %p193
      %p438 = pneg %p190
      %p439 = pneg %p214
      %p440 = pneg %p211
      %p441 = pneg %p235
      %p442 = pneg %p232
      %p443 = pneg %p256
      %p444 = pneg %p253
      %p445 = pneg %p277
      %p446 = pneg %p274
      %p447 = pneg %p298
      %p448 = pneg %p295
      %p449 = pneg %p319
      %p450 = pneg %p316
      %p451 = pneg %p345
      %p452 = pneg %p342
      %p453 = scmp.lt.s32.totalorder %s25, 1
      %s454 = scalar_select %p453, %s25, 1
      %s455 = smul.addr %s454, 8
      %s456 = smul.addr %s455, 8
      %s457 = scalar_lea.vmem %s14, %s456
      %p458 = scmp.lt.s32.totalorder %s25, 1
      %s459 = scalar_select %p458, %s25, 1
      %s460 = smul.addr %s459, 8
      %s461 = smul.addr %s460, 8
      %s462 = scalar_lea.vmem %s0, %s461
      %p463 = scmp.lt.s32.totalorder %s25, 1
      %s464 = scalar_select %p463, %s25, 1
      %s465 = smul.addr %s464, 8
      %s466 = smul.addr %s465, 8
      %s467 = scalar_lea.vmem %s14, %s466
      %v469 = vld [vmem:[%s462] sm:$0xff]
      %v470 = vld [vmem:[%s462 + $0x8] sm:$0xff]
      %v471 = vld [vmem:[%s462 + $0x10] sm:$0xff]
      %v472 = vld [vmem:[%s462 + $0x18] sm:$0xff]
      %v473 = vld [vmem:[%s462 + $0x20] sm:$0xff]
      %v474 = vld [vmem:[%s462 + $0x28] sm:$0xff]
      %v475 = vld [vmem:[%s462 + $0x30] sm:$0xff]
      %v476 = vld [vmem:[%s462 + $0x38] sm:$0xff]
      %v477 = vld [vmem:[%s3] sm:$0x1]
      %v478 = vld [vmem:[%s4] sm:$0x1]
      %v479 = vrot.slane %v469, 7
      %v480 = vrot.slane %v470, 7
      %v481 = vrot.slane %v471, 7
      %v482 = vrot.slane %v472, 7
      %v483 = vrot.slane %v473, 7
      %v484 = vrot.slane %v474, 7
      %v485 = vrot.slane %v475, 7
      %v486 = vrot.slane %v476, 7
      %v487 = vlaneseq
      %v488 = vshrl.u32 %v487, 7
      %vm489 = vcmp.lt.s32.totalorder %v488, 1
      %v490 = vsel %vm489, %v485, %v486
      %v491 = vsel %vm489, %v484, %v485
      %v492 = vsel %vm489, %v483, %v484
      %v493 = vsel %vm489, %v482, %v483
      %v494 = vsel %vm489, %v481, %v482
      %v495 = vsel %vm489, %v480, %v481
      %v496 = vsel %vm489, %v479, %v480
      %v497 = vsel %vm489, %v486, %v479
      %v498 = vld [vmem:[%s1] sm:$0xff]
      %v499 = vld [vmem:[%s1 + $0x8] sm:$0xff]
      %v500 = vld [vmem:[%s1 + $0x10] sm:$0xff]
      %v501 = vld [vmem:[%s1 + $0x18] sm:$0xff]
      %v502 = vld [vmem:[%s1 + $0x20] sm:$0xff]
      %v503 = vld [vmem:[%s1 + $0x28] sm:$0xff]
      %v504 = vld [vmem:[%s1 + $0x30] sm:$0xff]
      %v505 = vld [vmem:[%s1 + $0x38] sm:$0xff]
      %507 = vset.pattern.permute.xlu0 0
      %508 = vperm.xlu0 %507, %v498
      %v509 = vpop.permute.xlu0 %508
      %512 = vset.pattern.permute.xlu0 0
      %513 = vperm.xlu0 %512, %v499
      %v514 = vpop.permute.xlu0 %513
      %517 = vset.pattern.permute.xlu0 0
      %518 = vperm.xlu0 %517, %v500
      %v519 = vpop.permute.xlu0 %518
      %522 = vset.pattern.permute.xlu0 0
      %523 = vperm.xlu0 %522, %v501
      %v524 = vpop.permute.xlu0 %523
      %527 = vset.pattern.permute.xlu0 0
      %528 = vperm.xlu0 %527, %v502
      %v529 = vpop.permute.xlu0 %528
      %532 = vset.pattern.permute.xlu0 0
      %533 = vperm.xlu0 %532, %v503
      %v534 = vpop.permute.xlu0 %533
      %537 = vset.pattern.permute.xlu0 0
      %538 = vperm.xlu0 %537, %v504
      %v539 = vpop.permute.xlu0 %538
      %542 = vset.pattern.permute.xlu0 0
      %543 = vperm.xlu0 %542, %v505
      %v544 = vpop.permute.xlu0 %543
      %v546 = vmul.f32 %v490, %v509
      %v547 = vmul.f32 %v497, %v514
      %v548 = vmul.f32 %v496, %v519
      %v549 = vmul.f32 %v495, %v524
      %v550 = vmul.f32 %v494, %v529
      %v551 = vmul.f32 %v493, %v534
      %v552 = vmul.f32 %v492, %v539
      %v553 = vmul.f32 %v491, %v544
      %v554 = vpack.c.bf16 %v547, %v546
      %v555 = vpack.c.bf16 %v549, %v548
      %v556 = vpack.c.bf16 %v551, %v550
      %v557 = vpack.c.bf16 %v553, %v552
      %v558 = vld [vmem:[%s2] sm:$0xf]
      %v559 = vld [vmem:[%s2 + $0x4] sm:$0xf]
      %v560 = vld [vmem:[%s2 + $0x8] sm:$0xf]
      %v561 = vld [vmem:[%s2 + $0xc] sm:$0xf]
      %s562 = scalar_lea.vmem %s1, 64
      %v563 = vld [vmem:[%s562] sm:$0xff]
      %v564 = vld [vmem:[%s562 + $0x8] sm:$0xff]
      %v565 = vld [vmem:[%s562 + $0x10] sm:$0xff]
      %v566 = vld [vmem:[%s562 + $0x18] sm:$0xff]
      %v567 = vld [vmem:[%s562 + $0x20] sm:$0xff]
      %v568 = vld [vmem:[%s562 + $0x28] sm:$0xff]
      %v569 = vld [vmem:[%s562 + $0x30] sm:$0xff]
      %v570 = vld [vmem:[%s562 + $0x38] sm:$0xff]
      %572 = vset.pattern.permute.xlu0 0
      %573 = vperm.xlu0 %572, %v563
      %v574 = vpop.permute.xlu0 %573
      %577 = vset.pattern.permute.xlu0 0
      %578 = vperm.xlu0 %577, %v564
      %v579 = vpop.permute.xlu0 %578
      %582 = vset.pattern.permute.xlu0 0
      %583 = vperm.xlu0 %582, %v565
      %v584 = vpop.permute.xlu0 %583
      %587 = vset.pattern.permute.xlu0 0
      %588 = vperm.xlu0 %587, %v566
      %v589 = vpop.permute.xlu0 %588
      %592 = vset.pattern.permute.xlu0 0
      %593 = vperm.xlu0 %592, %v567
      %v594 = vpop.permute.xlu0 %593
      %597 = vset.pattern.permute.xlu0 0
      %598 = vperm.xlu0 %597, %v568
      %v599 = vpop.permute.xlu0 %598
      %602 = vset.pattern.permute.xlu0 0
      %603 = vperm.xlu0 %602, %v569
      %v604 = vpop.permute.xlu0 %603
      %607 = vset.pattern.permute.xlu0 0
      %608 = vperm.xlu0 %607, %v570
      %v609 = vpop.permute.xlu0 %608
      %v611 = vmul.f32 %v476, %v574
      %v612 = vmul.f32 %v469, %v579
      %v613 = vmul.f32 %v470, %v584
      %v614 = vmul.f32 %v471, %v589
      %v615 = vmul.f32 %v472, %v594
      %v616 = vmul.f32 %v473, %v599
      %v617 = vmul.f32 %v474, %v604
      %v618 = vmul.f32 %v475, %v609
      %v619 = vpack.c.bf16 %v612, %v611
      %v620 = vpack.c.bf16 %v614, %v613
      %v621 = vpack.c.bf16 %v616, %v615
      %v622 = vpack.c.bf16 %v618, %v617
      %s623 = scalar_lea.vmem %s2, 16
      %v624 = vld [vmem:[%s623] sm:$0xf]
      %v625 = vld [vmem:[%s623 + $0x4] sm:$0xf]
      %v626 = vld [vmem:[%s623 + $0x8] sm:$0xf]
      %v627 = vld [vmem:[%s623 + $0xc] sm:$0xf]
      %v632 = vunpack.c.l.b16 %v624
      %v633 = vunpack.c.l.b16 %v625
      %v634 = vunpack.c.l.b16 %v626
      %v635 = vunpack.c.l.b16 %v627
      %v636 = vpack.c.b16 %v633, %v632
      %v637 = vpack.c.b16 %v635, %v634
      %vm640 = vcmask 261120
      %v642 = vsel %vm640, %v619, 0
      %v645 = vsel %vm640, %v620, 0
      %v648 = vsel %vm640, %v621, 0
      %v651 = vsel %vm640, %v622, 0
      %653 = vmatprep.subr.bf16.mxu0 0
      %654 = vmatpush1.bf16.msra.mxu0 %v636
      %655 = vmatprep.subr.bf16.mxu0 0
      %656 = vmatpush1.bf16.msra.mxu0 %v637
      %657 = vmatprep.subr.bf16.mxu0 0
      %658 = vmatpush1.bf16.msra.mxu0 0
      %659 = vmatprep.subr.bf16.mxu0 0
      %660 = vmatpush1.bf16.msra.mxu0 0
      %661 = vmatprep.subr.bf16.mxu0 0
      %662 = vmatpush1.bf16.msra.mxu0 0
      %663 = vmatprep.subr.bf16.mxu0 0
      %664 = vmatpush1.bf16.msra.mxu0 0
      %665 = vmatprep.subr.bf16.mxu0 0
      %666 = vmatpush1.bf16.msra.mxu0 0
      %667 = vmatprep.subr.bf16.mxu0 0
      %668 = vmatpush1.bf16.msra.mxu0 0
      %669 = vmatprep.subr.bf16.mxu0 0
      %670 = vmatpush1.bf16.msra.mxu0 0
      %671 = vmatprep.subr.bf16.mxu0 0
      %672 = vmatpush1.bf16.msra.mxu0 0
      %673 = vmatprep.subr.bf16.mxu0 0
      %674 = vmatpush1.bf16.msra.mxu0 0
      %675 = vmatprep.subr.bf16.mxu0 0
      %676 = vmatpush1.bf16.msra.mxu0 0
      %677 = vmatprep.subr.bf16.mxu0 0
      %678 = vmatpush1.bf16.msra.mxu0 0
      %679 = vmatprep.subr.bf16.mxu0 0
      %680 = vmatpush1.bf16.msra.mxu0 0
      %681 = vmatprep.subr.bf16.mxu0 0
      %682 = vmatpush1.bf16.msra.mxu0 0
      %683 = vmatprep.subr.bf16.mxu0 0
      %684 = vmatpush1.bf16.msra.mxu0 0
      %685 = vmatprep.mubr.bf16.mxu0 0
      %686 = vmatmul.mubr.bf16.gmra.mrb[0].mxu0 %v642
      %v687 = vpop.f32.mrb[0].mxu0
      %v688 = vadd.f32 0.0, %v687
      %v689 = vpop.f32.mrb[0].mxu0
      %v690 = vpop.f32.mrb[0].mxu0
      %v691 = vadd.f32 0.0, %v690
      %v692 = vpop.f32.mrb[0].mxu0
      %693 = vmatprep.mubr.bf16.mxu0 0
      %694 = vmatmul.mubr.bf16.gmra.mrb[0].mxu0 %v645
      %v695 = vpop.f32.mrb[0].mxu0
      %v696 = vadd.f32 0.0, %v695
      %v697 = vpop.f32.mrb[0].mxu0
      %v698 = vpop.f32.mrb[0].mxu0
      %v699 = vadd.f32 0.0, %v698
      %v700 = vpop.f32.mrb[0].mxu0
      %701 = vmatprep.mubr.bf16.mxu0 0
      %702 = vmatmul.mubr.bf16.gmra.mrb[0].mxu0 %v648
      %v703 = vpop.f32.mrb[0].mxu0
      %v704 = vadd.f32 0.0, %v703
      %v705 = vpop.f32.mrb[0].mxu0
      %v706 = vpop.f32.mrb[0].mxu0
      %v707 = vadd.f32 0.0, %v706
      %v708 = vpop.f32.mrb[0].mxu0
      %709 = vmatprep.mubr.bf16.mxu0 0
      %710 = vmatmul.mubr.bf16.gmra.mrb[0].mxu0 %v651
      %v711 = vpop.f32.mrb[0].mxu0
      %v712 = vadd.f32 0.0, %v711
      %v713 = vpop.f32.mrb[0].mxu0
      %v714 = vpop.f32.mrb[0].mxu0
      %v715 = vadd.f32 0.0, %v714
      %v716 = vpop.f32.mrb[0].mxu0
      %717 = vdwg.mxu0
      %v722 = vunpack.c.l.b16 %v558
      %v723 = vunpack.c.l.b16 %v559
      %v724 = vunpack.c.l.b16 %v560
      %v725 = vunpack.c.l.b16 %v561
      %v726 = vpack.c.b16 %v723, %v722
      %v727 = vpack.c.b16 %v725, %v724
      %v731 = vsel %vm640, %v554, 0
      %v734 = vsel %vm640, %v555, 0
      %v737 = vsel %vm640, %v556, 0
      %v740 = vsel %vm640, %v557, 0
      %742 = vmatprep.subr.bf16.mxu0 0
      %743 = vmatpush1.bf16.msra.mxu0 %v726
      %744 = vmatprep.subr.bf16.mxu0 0
      %745 = vmatpush1.bf16.msra.mxu0 %v727
      %746 = vmatprep.subr.bf16.mxu0 0
      %747 = vmatpush1.bf16.msra.mxu0 0
      %748 = vmatprep.subr.bf16.mxu0 0
      %749 = vmatpush1.bf16.msra.mxu0 0
      %750 = vmatprep.subr.bf16.mxu0 0
      %751 = vmatpush1.bf16.msra.mxu0 0
      %752 = vmatprep.subr.bf16.mxu0 0
      %753 = vmatpush1.bf16.msra.mxu0 0
      %754 = vmatprep.subr.bf16.mxu0 0
      %755 = vmatpush1.bf16.msra.mxu0 0
      %756 = vmatprep.subr.bf16.mxu0 0
      %757 = vmatpush1.bf16.msra.mxu0 0
      %758 = vmatprep.subr.bf16.mxu0 0
      %759 = vmatpush1.bf16.msra.mxu0 0
      %760 = vmatprep.subr.bf16.mxu0 0
      %761 = vmatpush1.bf16.msra.mxu0 0
      %762 = vmatprep.subr.bf16.mxu0 0
      %763 = vmatpush1.bf16.msra.mxu0 0
      %764 = vmatprep.subr.bf16.mxu0 0
      %765 = vmatpush1.bf16.msra.mxu0 0
      %766 = vmatprep.subr.bf16.mxu0 0
      %767 = vmatpush1.bf16.msra.mxu0 0
      %768 = vmatprep.subr.bf16.mxu0 0
      %769 = vmatpush1.bf16.msra.mxu0 0
      %770 = vmatprep.subr.bf16.mxu0 0
      %771 = vmatpush1.bf16.msra.mxu0 0
      %772 = vmatprep.subr.bf16.mxu0 0
      %773 = vmatpush1.bf16.msra.mxu0 0
      %774 = vmatprep.mubr.bf16.mxu0 0
      %775 = vmatmul.mubr.bf16.gmra.mrb[0].mxu0 %v731
      %v776 = vpop.f32.mrb[0].mxu0
      %v777 = vadd.f32 %v688, %v776
      %v778 = vpop.f32.mrb[0].mxu0
      %v779 = vpop.f32.mrb[0].mxu0
      %v780 = vadd.f32 %v691, %v779
      %v781 = vpop.f32.mrb[0].mxu0
      %782 = vmatprep.mubr.bf16.mxu0 0
      %783 = vmatmul.mubr.bf16.gmra.mrb[0].mxu0 %v734
      %v784 = vpop.f32.mrb[0].mxu0
      %v785 = vadd.f32 %v696, %v784
      %v786 = vpop.f32.mrb[0].mxu0
      %v787 = vpop.f32.mrb[0].mxu0
      %v788 = vadd.f32 %v699, %v787
      %v789 = vpop.f32.mrb[0].mxu0
      %790 = vmatprep.mubr.bf16.mxu0 0
      %791 = vmatmul.mubr.bf16.gmra.mrb[0].mxu0 %v737
      %v792 = vpop.f32.mrb[0].mxu0
      %v793 = vadd.f32 %v704, %v792
      %v794 = vpop.f32.mrb[0].mxu0
      %v795 = vpop.f32.mrb[0].mxu0
      %v796 = vadd.f32 %v707, %v795
      %v797 = vpop.f32.mrb[0].mxu0
      %798 = vmatprep.mubr.bf16.mxu0 0
      %799 = vmatmul.mubr.bf16.gmra.mrb[0].mxu0 %v740
      %v800 = vpop.f32.mrb[0].mxu0
      %v801 = vadd.f32 %v712, %v800
      %v802 = vpop.f32.mrb[0].mxu0
      %v803 = vpop.f32.mrb[0].mxu0
      %v804 = vadd.f32 %v715, %v803
      %v805 = vpop.f32.mrb[0].mxu0
      %806 = vdwg.mxu0
      %v807 = vrot.slane %v469, 1
      %v808 = vrot.slane %v470, 1
      %v809 = vrot.slane %v471, 1
      %v810 = vrot.slane %v472, 1
      %v811 = vrot.slane %v473, 1
      %v812 = vrot.slane %v474, 1
      %v813 = vrot.slane %v475, 1
      %v814 = vrot.slane %v476, 1
      %vm815 = vcmp.lt.s32.totalorder %v488, 7
      %v816 = vsel %vm815, %v813, %v814
      %v817 = vsel %vm815, %v812, %v813
      %v818 = vsel %vm815, %v811, %v812
      %v819 = vsel %vm815, %v810, %v811
      %v820 = vsel %vm815, %v809, %v810
      %v821 = vsel %vm815, %v808, %v809
      %v822 = vsel %vm815, %v807, %v808
      %v823 = vsel %vm815, %v814, %v807
      %s824 = scalar_lea.vmem %s1, 128
      %v825 = vld [vmem:[%s824] sm:$0xff]
      %v826 = vld [vmem:[%s824 + $0x8] sm:$0xff]
      %v827 = vld [vmem:[%s824 + $0x10] sm:$0xff]
      %v828 = vld [vmem:[%s824 + $0x18] sm:$0xff]
      %v829 = vld [vmem:[%s824 + $0x20] sm:$0xff]
      %v830 = vld [vmem:[%s824 + $0x28] sm:$0xff]
      %v831 = vld [vmem:[%s824 + $0x30] sm:$0xff]
      %v832 = vld [vmem:[%s824 + $0x38] sm:$0xff]
      %834 = vset.pattern.permute.xlu0 0
      %835 = vperm.xlu0 %834, %v825
      %v836 = vpop.permute.xlu0 %835
      %839 = vset.pattern.permute.xlu0 0
      %840 = vperm.xlu0 %839, %v826
      %v841 = vpop.permute.xlu0 %840
      %844 = vset.pattern.permute.xlu0 0
      %845 = vperm.xlu0 %844, %v827
      %v846 = vpop.permute.xlu0 %845
      %849 = vset.pattern.permute.xlu0 0
      %850 = vperm.xlu0 %849, %v828
      %v851 = vpop.permute.xlu0 %850
      %854 = vset.pattern.permute.xlu0 0
      %855 = vperm.xlu0 %854, %v829
      %v856 = vpop.permute.xlu0 %855
      %859 = vset.pattern.permute.xlu0 0
      %860 = vperm.xlu0 %859, %v830
      %v861 = vpop.permute.xlu0 %860
      %864 = vset.pattern.permute.xlu0 0
      %865 = vperm.xlu0 %864, %v831
      %v866 = vpop.permute.xlu0 %865
      %869 = vset.pattern.permute.xlu0 0
      %870 = vperm.xlu0 %869, %v832
      %v871 = vpop.permute.xlu0 %870
      %v873 = vmul.f32 %v823, %v836
      %v874 = vmul.f32 %v822, %v841
      %v875 = vmul.f32 %v821, %v846
      %v876 = vmul.f32 %v820, %v851
      %v877 = vmul.f32 %v819, %v856
      %v878 = vmul.f32 %v818, %v861
      %v879 = vmul.f32 %v817, %v866
      %v880 = vmul.f32 %v816, %v871
      %v881 = vpack.c.bf16 %v874, %v873
      %v882 = vpack.c.bf16 %v876, %v875
      %v883 = vpack.c.bf16 %v878, %v877
      %v884 = vpack.c.bf16 %v880, %v879
      %s885 = scalar_lea.vmem %s2, 32
      %v886 = vld [vmem:[%s885] sm:$0xf]
      %v887 = vld [vmem:[%s885 + $0x4] sm:$0xf]
      %v888 = vld [vmem:[%s885 + $0x8] sm:$0xf]
      %v889 = vld [vmem:[%s885 + $0xc] sm:$0xf]
      %v894 = vunpack.c.l.b16 %v886
      %v895 = vunpack.c.l.b16 %v887
      %v896 = vunpack.c.l.b16 %v888
      %v897 = vunpack.c.l.b16 %v889
      %v898 = vpack.c.b16 %v895, %v894
      %v899 = vpack.c.b16 %v897, %v896
      %v903 = vsel %vm640, %v881, 0
      %v906 = vsel %vm640, %v882, 0
      %v909 = vsel %vm640, %v883, 0
      %v912 = vsel %vm640, %v884, 0
      %914 = vmatprep.subr.bf16.mxu0 0
      %915 = vmatpush1.bf16.msra.mxu0 %v898
      %916 = vmatprep.subr.bf16.mxu0 0
      %917 = vmatpush1.bf16.msra.mxu0 %v899
      %918 = vmatprep.subr.bf16.mxu0 0
      %919 = vmatpush1.bf16.msra.mxu0 0
      %920 = vmatprep.subr.bf16.mxu0 0
      %921 = vmatpush1.bf16.msra.mxu0 0
      %922 = vmatprep.subr.bf16.mxu0 0
      %923 = vmatpush1.bf16.msra.mxu0 0
      %924 = vmatprep.subr.bf16.mxu0 0
      %925 = vmatpush1.bf16.msra.mxu0 0
      %926 = vmatprep.subr.bf16.mxu0 0
      %927 = vmatpush1.bf16.msra.mxu0 0
      %928 = vmatprep.subr.bf16.mxu0 0
      %929 = vmatpush1.bf16.msra.mxu0 0
      %930 = vmatprep.subr.bf16.mxu0 0
      %931 = vmatpush1.bf16.msra.mxu0 0
      %932 = vmatprep.subr.bf16.mxu0 0
      %933 = vmatpush1.bf16.msra.mxu0 0
      %934 = vmatprep.subr.bf16.mxu0 0
      %935 = vmatpush1.bf16.msra.mxu0 0
      %936 = vmatprep.subr.bf16.mxu0 0
      %937 = vmatpush1.bf16.msra.mxu0 0
      %938 = vmatprep.subr.bf16.mxu0 0
      %939 = vmatpush1.bf16.msra.mxu0 0
      %940 = vmatprep.subr.bf16.mxu0 0
      %941 = vmatpush1.bf16.msra.mxu0 0
      %942 = vmatprep.subr.bf16.mxu0 0
      %943 = vmatpush1.bf16.msra.mxu0 0
      %944 = vmatprep.subr.bf16.mxu0 0
      %945 = vmatpush1.bf16.msra.mxu0 0
      %946 = vmatprep.mubr.bf16.mxu0 0
      %947 = vmatmul.mubr.bf16.gmra.mrb[0].mxu0 %v903
      %v948 = vpop.f32.mrb[0].mxu0
      %v949 = vadd.f32 0.0, %v948
      %v950 = vpop.f32.mrb[0].mxu0
      %v951 = vpop.f32.mrb[0].mxu0
      %v952 = vadd.f32 0.0, %v951
      %v953 = vpop.f32.mrb[0].mxu0
      %954 = vmatprep.mubr.bf16.mxu0 0
      %955 = vmatmul.mubr.bf16.gmra.mrb[0].mxu0 %v906
      %v956 = vpop.f32.mrb[0].mxu0
      %v957 = vadd.f32 0.0, %v956
      %v958 = vpop.f32.mrb[0].mxu0
      %v959 = vpop.f32.mrb[0].mxu0
      %v960 = vadd.f32 0.0, %v959
      %v961 = vpop.f32.mrb[0].mxu0
      %962 = vmatprep.mubr.bf16.mxu0 0
      %963 = vmatmul.mubr.bf16.gmra.mrb[0].mxu0 %v909
      %v964 = vpop.f32.mrb[0].mxu0
      %v965 = vadd.f32 0.0, %v964
      %v966 = vpop.f32.mrb[0].mxu0
      %v967 = vpop.f32.mrb[0].mxu0
      %v968 = vadd.f32 0.0, %v967
      %v969 = vpop.f32.mrb[0].mxu0
      %970 = vmatprep.mubr.bf16.mxu0 0
      %971 = vmatmul.mubr.bf16.gmra.mrb[0].mxu0 %v912
      %v972 = vpop.f32.mrb[0].mxu0
      %v973 = vadd.f32 0.0, %v972
      %v974 = vpop.f32.mrb[0].mxu0
      %v975 = vpop.f32.mrb[0].mxu0
      %v976 = vadd.f32 0.0, %v975
      %v977 = vpop.f32.mrb[0].mxu0
      %978 = vdwg.mxu0
      %v979 = vadd.f32 %v777, %v949
      %v980 = vadd.f32 %v780, %v952
      %v981 = vadd.f32 %v785, %v957
      %v982 = vadd.f32 %v788, %v960
      %v983 = vadd.f32 %v793, %v965
      %v984 = vadd.f32 %v796, %v968
      %v985 = vadd.f32 %v801, %v973
      %v986 = vadd.f32 %v804, %v976
      %s987 = scalar_lea.vmem %s1, 192
      %v988 = vld [vmem:[%s987] sm:$0xff]
      %v989 = vld [vmem:[%s987 + $0x8] sm:$0xff]
      %v990 = vld [vmem:[%s987 + $0x10] sm:$0xff]
      %v991 = vld [vmem:[%s987 + $0x18] sm:$0xff]
      %v992 = vld [vmem:[%s987 + $0x20] sm:$0xff]
      %v993 = vld [vmem:[%s987 + $0x28] sm:$0xff]
      %v994 = vld [vmem:[%s987 + $0x30] sm:$0xff]
      %v995 = vld [vmem:[%s987 + $0x38] sm:$0xff]
      %997 = vset.pattern.permute.xlu0 0
      %998 = vperm.xlu0 %997, %v988
      %v999 = vpop.permute.xlu0 %998
      %1002 = vset.pattern.permute.xlu0 0
      %1003 = vperm.xlu0 %1002, %v989
      %v1004 = vpop.permute.xlu0 %1003
      %1007 = vset.pattern.permute.xlu0 0
      %1008 = vperm.xlu0 %1007, %v990
      %v1009 = vpop.permute.xlu0 %1008
      %1012 = vset.pattern.permute.xlu0 0
      %1013 = vperm.xlu0 %1012, %v991
      %v1014 = vpop.permute.xlu0 %1013
      %1017 = vset.pattern.permute.xlu0 0
      %1018 = vperm.xlu0 %1017, %v992
      %v1019 = vpop.permute.xlu0 %1018
      %1022 = vset.pattern.permute.xlu0 0
      %1023 = vperm.xlu0 %1022, %v993
      %v1024 = vpop.permute.xlu0 %1023
      %1027 = vset.pattern.permute.xlu0 0
      %1028 = vperm.xlu0 %1027, %v994
      %v1029 = vpop.permute.xlu0 %1028
      %1032 = vset.pattern.permute.xlu0 0
      %1033 = vperm.xlu0 %1032, %v995
      %v1034 = vpop.permute.xlu0 %1033
      %v1036 = vmul.f32 %v497, %v999
      %v1037 = vmul.f32 %v496, %v1004
      %v1038 = vmul.f32 %v495, %v1009
      %v1039 = vmul.f32 %v494, %v1014
      %v1040 = vmul.f32 %v493, %v1019
      %v1041 = vmul.f32 %v492, %v1024
      %v1042 = vmul.f32 %v491, %v1029
      %v1043 = vmul.f32 %v490, %v1034
      %v1044 = vpack.c.bf16 %v1037, %v1036
      %v1045 = vpack.c.bf16 %v1039, %v1038
      %v1046 = vpack.c.bf16 %v1041, %v1040
      %v1047 = vpack.c.bf16 %v1043, %v1042
      %s1048 = scalar_lea.vmem %s2, 48
      %v1049 = vld [vmem:[%s1048] sm:$0xf]
      %v1050 = vld [vmem:[%s1048 + $0x4] sm:$0xf]
      %v1051 = vld [vmem:[%s1048 + $0x8] sm:$0xf]
      %v1052 = vld [vmem:[%s1048 + $0xc] sm:$0xf]
      %v1057 = vunpack.c.l.b16 %v1049
      %v1058 = vunpack.c.l.b16 %v1050
      %v1059 = vunpack.c.l.b16 %v1051
      %v1060 = vunpack.c.l.b16 %v1052
      %v1061 = vpack.c.b16 %v1058, %v1057
      %v1062 = vpack.c.b16 %v1060, %v1059
      %v1066 = vsel %vm640, %v1044, 0
      %v1069 = vsel %vm640, %v1045, 0
      %v1072 = vsel %vm640, %v1046, 0
      %v1075 = vsel %vm640, %v1047, 0
      %1077 = vmatprep.subr.bf16.mxu0 0
      %1078 = vmatpush1.bf16.msra.mxu0 %v1061
      %1079 = vmatprep.subr.bf16.mxu0 0
      %1080 = vmatpush1.bf16.msra.mxu0 %v1062
      %1081 = vmatprep.subr.bf16.mxu0 0
      %1082 = vmatpush1.bf16.msra.mxu0 0
      %1083 = vmatprep.subr.bf16.mxu0 0
      %1084 = vmatpush1.bf16.msra.mxu0 0
      %1085 = vmatprep.subr.bf16.mxu0 0
      %1086 = vmatpush1.bf16.msra.mxu0 0
      %1087 = vmatprep.subr.bf16.mxu0 0
      %1088 = vmatpush1.bf16.msra.mxu0 0
      %1089 = vmatprep.subr.bf16.mxu0 0
      %1090 = vmatpush1.bf16.msra.mxu0 0
      %1091 = vmatprep.subr.bf16.mxu0 0
      %1092 = vmatpush1.bf16.msra.mxu0 0
      %1093 = vmatprep.subr.bf16.mxu0 0
      %1094 = vmatpush1.bf16.msra.mxu0 0
      %1095 = vmatprep.subr.bf16.mxu0 0
      %1096 = vmatpush1.bf16.msra.mxu0 0
      %1097 = vmatprep.subr.bf16.mxu0 0
      %1098 = vmatpush1.bf16.msra.mxu0 0
      %1099 = vmatprep.subr.bf16.mxu0 0
      %1100 = vmatpush1.bf16.msra.mxu0 0
      %1101 = vmatprep.subr.bf16.mxu0 0
      %1102 = vmatpush1.bf16.msra.mxu0 0
      %1103 = vmatprep.subr.bf16.mxu0 0
      %1104 = vmatpush1.bf16.msra.mxu0 0
      %1105 = vmatprep.subr.bf16.mxu0 0
      %1106 = vmatpush1.bf16.msra.mxu0 0
      %1107 = vmatprep.subr.bf16.mxu0 0
      %1108 = vmatpush1.bf16.msra.mxu0 0
      %1109 = vmatprep.mubr.bf16.mxu0 0
      %1110 = vmatmul.mubr.bf16.gmra.mrb[0].mxu0 %v1066
      %v1111 = vpop.f32.mrb[0].mxu0
      %v1112 = vadd.f32 0.0, %v1111
      %v1113 = vpop.f32.mrb[0].mxu0
      %v1114 = vpop.f32.mrb[0].mxu0
      %v1115 = vadd.f32 0.0, %v1114
      %v1116 = vpop.f32.mrb[0].mxu0
      %1117 = vmatprep.mubr.bf16.mxu0 0
      %1118 = vmatmul.mubr.bf16.gmra.mrb[0].mxu0 %v1069
      %v1119 = vpop.f32.mrb[0].mxu0
      %v1120 = vadd.f32 0.0, %v1119
      %v1121 = vpop.f32.mrb[0].mxu0
      %v1122 = vpop.f32.mrb[0].mxu0
      %v1123 = vadd.f32 0.0, %v1122
      %v1124 = vpop.f32.mrb[0].mxu0
      %1125 = vmatprep.mubr.bf16.mxu0 0
      %1126 = vmatmul.mubr.bf16.gmra.mrb[0].mxu0 %v1072
      %v1127 = vpop.f32.mrb[0].mxu0
      %v1128 = vadd.f32 0.0, %v1127
      %v1129 = vpop.f32.mrb[0].mxu0
      %v1130 = vpop.f32.mrb[0].mxu0
      %v1131 = vadd.f32 0.0, %v1130
      %v1132 = vpop.f32.mrb[0].mxu0
      %1133 = vmatprep.mubr.bf16.mxu0 0
      %1134 = vmatmul.mubr.bf16.gmra.mrb[0].mxu0 %v1075
      %v1135 = vpop.f32.mrb[0].mxu0
      %v1136 = vadd.f32 0.0, %v1135
      %v1137 = vpop.f32.mrb[0].mxu0
      %v1138 = vpop.f32.mrb[0].mxu0
      %v1139 = vadd.f32 0.0, %v1138
      %v1140 = vpop.f32.mrb[0].mxu0
      %1141 = vdwg.mxu0
      %v1142 = vadd.f32 %v979, %v1112
      %v1143 = vadd.f32 %v980, %v1115
      %v1144 = vadd.f32 %v981, %v1120
      %v1145 = vadd.f32 %v982, %v1123
      %v1146 = vadd.f32 %v983, %v1128
      %v1147 = vadd.f32 %v984, %v1131
      %v1148 = vadd.f32 %v985, %v1136
      %v1149 = vadd.f32 %v986, %v1139
      %v1150 = vpack.c.bf16 %v470, %v469
      %v1151 = vpack.c.bf16 %v472, %v471
      %v1152 = vpack.c.bf16 %v474, %v473
      %v1153 = vpack.c.bf16 %v476, %v475
      %s1154 = scalar_lea.vmem %s2, 64
      %v1155 = vld [vmem:[%s1154] sm:$0xf]
      %v1156 = vld [vmem:[%s1154 + $0x4] sm:$0xf]
      %v1157 = vld [vmem:[%s1154 + $0x8] sm:$0xf]
      %v1158 = vld [vmem:[%s1154 + $0xc] sm:$0xf]
      %v1163 = vunpack.c.l.b16 %v1155
      %v1164 = vunpack.c.l.b16 %v1156
      %v1165 = vunpack.c.l.b16 %v1157
      %v1166 = vunpack.c.l.b16 %v1158
      %v1167 = vpack.c.b16 %v1164, %v1163
      %v1168 = vpack.c.b16 %v1166, %v1165
      %v1172 = vsel %vm640, %v1150, 0
      %v1175 = vsel %vm640, %v1151, 0
      %v1178 = vsel %vm640, %v1152, 0
      %v1181 = vsel %vm640, %v1153, 0
      %1183 = vmatprep.subr.bf16.mxu0 0
      %1184 = vmatpush1.bf16.msra.mxu0 %v1167
      %1185 = vmatprep.subr.bf16.mxu0 0
      %1186 = vmatpush1.bf16.msra.mxu0 %v1168
      %1187 = vmatprep.subr.bf16.mxu0 0
      %1188 = vmatpush1.bf16.msra.mxu0 0
      %1189 = vmatprep.subr.bf16.mxu0 0
      %1190 = vmatpush1.bf16.msra.mxu0 0
      %1191 = vmatprep.subr.bf16.mxu0 0
      %1192 = vmatpush1.bf16.msra.mxu0 0
      %1193 = vmatprep.subr.bf16.mxu0 0
      %1194 = vmatpush1.bf16.msra.mxu0 0
      %1195 = vmatprep.subr.bf16.mxu0 0
      %1196 = vmatpush1.bf16.msra.mxu0 0
      %1197 = vmatprep.subr.bf16.mxu0 0
      %1198 = vmatpush1.bf16.msra.mxu0 0
      %1199 = vmatprep.subr.bf16.mxu0 0
      %1200 = vmatpush1.bf16.msra.mxu0 0
      %1201 = vmatprep.subr.bf16.mxu0 0
      %1202 = vmatpush1.bf16.msra.mxu0 0
      %1203 = vmatprep.subr.bf16.mxu0 0
      %1204 = vmatpush1.bf16.msra.mxu0 0
      %1205 = vmatprep.subr.bf16.mxu0 0
      %1206 = vmatpush1.bf16.msra.mxu0 0
      %1207 = vmatprep.subr.bf16.mxu0 0
      %1208 = vmatpush1.bf16.msra.mxu0 0
      %1209 = vmatprep.subr.bf16.mxu0 0
      %1210 = vmatpush1.bf16.msra.mxu0 0
      %1211 = vmatprep.subr.bf16.mxu0 0
      %1212 = vmatpush1.bf16.msra.mxu0 0
      %1213 = vmatprep.subr.bf16.mxu0 0
      %1214 = vmatpush1.bf16.msra.mxu0 0
      %1215 = vmatprep.mubr.bf16.mxu0 0
      %1216 = vmatmul.mubr.bf16.gmra.mrb[0].mxu0 %v1172
      %v1217 = vpop.f32.mrb[0].mxu0
      %v1218 = vadd.f32 0.0, %v1217
      %v1219 = vpop.f32.mrb[0].mxu0
      %v1220 = vpop.f32.mrb[0].mxu0
      %v1221 = vadd.f32 0.0, %v1220
      %v1222 = vpop.f32.mrb[0].mxu0
      %1223 = vmatprep.mubr.bf16.mxu0 0
      %1224 = vmatmul.mubr.bf16.gmra.mrb[0].mxu0 %v1175
      %v1225 = vpop.f32.mrb[0].mxu0
      %v1226 = vadd.f32 0.0, %v1225
      %v1227 = vpop.f32.mrb[0].mxu0
      %v1228 = vpop.f32.mrb[0].mxu0
      %v1229 = vadd.f32 0.0, %v1228
      %v1230 = vpop.f32.mrb[0].mxu0
      %1231 = vmatprep.mubr.bf16.mxu0 0
      %1232 = vmatmul.mubr.bf16.gmra.mrb[0].mxu0 %v1178
      %v1233 = vpop.f32.mrb[0].mxu0
      %v1234 = vadd.f32 0.0, %v1233
      %v1235 = vpop.f32.mrb[0].mxu0
      %v1236 = vpop.f32.mrb[0].mxu0
      %v1237 = vadd.f32 0.0, %v1236
      %v1238 = vpop.f32.mrb[0].mxu0
      %1239 = vmatprep.mubr.bf16.mxu0 0
      %1240 = vmatmul.mubr.bf16.gmra.mrb[0].mxu0 %v1181
      %v1241 = vpop.f32.mrb[0].mxu0
      %v1242 = vadd.f32 0.0, %v1241
      %v1243 = vpop.f32.mrb[0].mxu0
      %v1244 = vpop.f32.mrb[0].mxu0
      %v1245 = vadd.f32 0.0, %v1244
      %v1246 = vpop.f32.mrb[0].mxu0
      %1247 = vdwg.mxu0
      %v1248 = vadd.f32 %v1142, %v1218
      %v1249 = vadd.f32 %v1143, %v1221
      %v1250 = vadd.f32 %v1144, %v1226
      %v1251 = vadd.f32 %v1145, %v1229
      %v1252 = vadd.f32 %v1146, %v1234
      %v1253 = vadd.f32 %v1147, %v1237
      %v1254 = vadd.f32 %v1148, %v1242
      %v1255 = vadd.f32 %v1149, %v1245
      %s1256 = scalar_lea.vmem %s1, 320
      %v1257 = vld [vmem:[%s1256] sm:$0xff]
      %v1258 = vld [vmem:[%s1256 + $0x8] sm:$0xff]
      %v1259 = vld [vmem:[%s1256 + $0x10] sm:$0xff]
      %v1260 = vld [vmem:[%s1256 + $0x18] sm:$0xff]
      %v1261 = vld [vmem:[%s1256 + $0x20] sm:$0xff]
      %v1262 = vld [vmem:[%s1256 + $0x28] sm:$0xff]
      %v1263 = vld [vmem:[%s1256 + $0x30] sm:$0xff]
      %v1264 = vld [vmem:[%s1256 + $0x38] sm:$0xff]
      %1266 = vset.pattern.permute.xlu0 0
      %1267 = vperm.xlu0 %1266, %v1257
      %v1268 = vpop.permute.xlu0 %1267
      %1271 = vset.pattern.permute.xlu0 0
      %1272 = vperm.xlu0 %1271, %v1258
      %v1273 = vpop.permute.xlu0 %1272
      %1276 = vset.pattern.permute.xlu0 0
      %1277 = vperm.xlu0 %1276, %v1259
      %v1278 = vpop.permute.xlu0 %1277
      %1281 = vset.pattern.permute.xlu0 0
      %1282 = vperm.xlu0 %1281, %v1260
      %v1283 = vpop.permute.xlu0 %1282
      %1286 = vset.pattern.permute.xlu0 0
      %1287 = vperm.xlu0 %1286, %v1261
      %v1288 = vpop.permute.xlu0 %1287
      %1291 = vset.pattern.permute.xlu0 0
      %1292 = vperm.xlu0 %1291, %v1262
      %v1293 = vpop.permute.xlu0 %1292
      %1296 = vset.pattern.permute.xlu0 0
      %1297 = vperm.xlu0 %1296, %v1263
      %v1298 = vpop.permute.xlu0 %1297
      %1301 = vset.pattern.permute.xlu0 0
      %1302 = vperm.xlu0 %1301, %v1264
      %v1303 = vpop.permute.xlu0 %1302
      %v1305 = vmul.f32 %v822, %v1268
      %v1306 = vmul.f32 %v821, %v1273
      %v1307 = vmul.f32 %v820, %v1278
      %v1308 = vmul.f32 %v819, %v1283
      %v1309 = vmul.f32 %v818, %v1288
      %v1310 = vmul.f32 %v817, %v1293
      %v1311 = vmul.f32 %v816, %v1298
      %v1312 = vmul.f32 %v823, %v1303
      %v1313 = vpack.c.bf16 %v1306, %v1305
      %v1314 = vpack.c.bf16 %v1308, %v1307
      %v1315 = vpack.c.bf16 %v1310, %v1309
      %v1316 = vpack.c.bf16 %v1312, %v1311
      %s1317 = scalar_lea.vmem %s2, 80
      %v1318 = vld [vmem:[%s1317] sm:$0xf]
      %v1319 = vld [vmem:[%s1317 + $0x4] sm:$0xf]
      %v1320 = vld [vmem:[%s1317 + $0x8] sm:$0xf]
      %v1321 = vld [vmem:[%s1317 + $0xc] sm:$0xf]
      %v1326 = vunpack.c.l.b16 %v1318
      %v1327 = vunpack.c.l.b16 %v1319
      %v1328 = vunpack.c.l.b16 %v1320
      %v1329 = vunpack.c.l.b16 %v1321
      %v1330 = vpack.c.b16 %v1327, %v1326
      %v1331 = vpack.c.b16 %v1329, %v1328
      %v1335 = vsel %vm640, %v1313, 0
      %v1338 = vsel %vm640, %v1314, 0
      %v1341 = vsel %vm640, %v1315, 0
      %v1344 = vsel %vm640, %v1316, 0
      %1346 = vmatprep.subr.bf16.mxu0 0
      %1347 = vmatpush1.bf16.msra.mxu0 %v1330
      %1348 = vmatprep.subr.bf16.mxu0 0
      %1349 = vmatpush1.bf16.msra.mxu0 %v1331
      %1350 = vmatprep.subr.bf16.mxu0 0
      %1351 = vmatpush1.bf16.msra.mxu0 0
      %1352 = vmatprep.subr.bf16.mxu0 0
      %1353 = vmatpush1.bf16.msra.mxu0 0
      %1354 = vmatprep.subr.bf16.mxu0 0
      %1355 = vmatpush1.bf16.msra.mxu0 0
      %1356 = vmatprep.subr.bf16.mxu0 0
      %1357 = vmatpush1.bf16.msra.mxu0 0
      %1358 = vmatprep.subr.bf16.mxu0 0
      %1359 = vmatpush1.bf16.msra.mxu0 0
      %1360 = vmatprep.subr.bf16.mxu0 0
      %1361 = vmatpush1.bf16.msra.mxu0 0
      %1362 = vmatprep.subr.bf16.mxu0 0
      %1363 = vmatpush1.bf16.msra.mxu0 0
      %1364 = vmatprep.subr.bf16.mxu0 0
      %1365 = vmatpush1.bf16.msra.mxu0 0
      %1366 = vmatprep.subr.bf16.mxu0 0
      %1367 = vmatpush1.bf16.msra.mxu0 0
      %1368 = vmatprep.subr.bf16.mxu0 0
      %1369 = vmatpush1.bf16.msra.mxu0 0
      %1370 = vmatprep.subr.bf16.mxu0 0
      %1371 = vmatpush1.bf16.msra.mxu0 0
      %1372 = vmatprep.subr.bf16.mxu0 0
      %1373 = vmatpush1.bf16.msra.mxu0 0
      %1374 = vmatprep.subr.bf16.mxu0 0
      %1375 = vmatpush1.bf16.msra.mxu0 0
      %1376 = vmatprep.subr.bf16.mxu0 0
      %1377 = vmatpush1.bf16.msra.mxu0 0
      %1378 = vmatprep.mubr.bf16.mxu0 0
      %1379 = vmatmul.mubr.bf16.gmra.mrb[0].mxu0 %v1335
      %v1380 = vpop.f32.mrb[0].mxu0
      %v1381 = vadd.f32 0.0, %v1380
      %v1382 = vpop.f32.mrb[0].mxu0
      %v1383 = vpop.f32.mrb[0].mxu0
      %v1384 = vadd.f32 0.0, %v1383
      %v1385 = vpop.f32.mrb[0].mxu0
      %1386 = vmatprep.mubr.bf16.mxu0 0
      %1387 = vmatmul.mubr.bf16.gmra.mrb[0].mxu0 %v1338
      %v1388 = vpop.f32.mrb[0].mxu0
      %v1389 = vadd.f32 0.0, %v1388
      %v1390 = vpop.f32.mrb[0].mxu0
      %v1391 = vpop.f32.mrb[0].mxu0
      %v1392 = vadd.f32 0.0, %v1391
      %v1393 = vpop.f32.mrb[0].mxu0
      %1394 = vmatprep.mubr.bf16.mxu0 0
      %1395 = vmatmul.mubr.bf16.gmra.mrb[0].mxu0 %v1341
      %v1396 = vpop.f32.mrb[0].mxu0
      %v1397 = vadd.f32 0.0, %v1396
      %v1398 = vpop.f32.mrb[0].mxu0
      %v1399 = vpop.f32.mrb[0].mxu0
      %v1400 = vadd.f32 0.0, %v1399
      %v1401 = vpop.f32.mrb[0].mxu0
      %1402 = vmatprep.mubr.bf16.mxu0 0
      %1403 = vmatmul.mubr.bf16.gmra.mrb[0].mxu0 %v1344
      %v1404 = vpop.f32.mrb[0].mxu0
      %v1405 = vadd.f32 0.0, %v1404
      %v1406 = vpop.f32.mrb[0].mxu0
      %v1407 = vpop.f32.mrb[0].mxu0
      %v1408 = vadd.f32 0.0, %v1407
      %v1409 = vpop.f32.mrb[0].mxu0
      %1410 = vdwg.mxu0
      %v1411 = vadd.f32 %v1248, %v1381
      %v1412 = vadd.f32 %v1249, %v1384
      %v1413 = vadd.f32 %v1250, %v1389
      %v1414 = vadd.f32 %v1251, %v1392
      %v1415 = vadd.f32 %v1252, %v1397
      %v1416 = vadd.f32 %v1253, %v1400
      %v1417 = vadd.f32 %v1254, %v1405
      %v1418 = vadd.f32 %v1255, %v1408
      %s1419 = scalar_lea.vmem %s1, 384
      %v1420 = vld [vmem:[%s1419] sm:$0xff]
      %v1421 = vld [vmem:[%s1419 + $0x8] sm:$0xff]
      %v1422 = vld [vmem:[%s1419 + $0x10] sm:$0xff]
      %v1423 = vld [vmem:[%s1419 + $0x18] sm:$0xff]
      %v1424 = vld [vmem:[%s1419 + $0x20] sm:$0xff]
      %v1425 = vld [vmem:[%s1419 + $0x28] sm:$0xff]
      %v1426 = vld [vmem:[%s1419 + $0x30] sm:$0xff]
      %v1427 = vld [vmem:[%s1419 + $0x38] sm:$0xff]
      %1429 = vset.pattern.permute.xlu0 0
      %1430 = vperm.xlu0 %1429, %v1420
      %v1431 = vpop.permute.xlu0 %1430
      %1434 = vset.pattern.permute.xlu0 0
      %1435 = vperm.xlu0 %1434, %v1421
      %v1436 = vpop.permute.xlu0 %1435
      %1439 = vset.pattern.permute.xlu0 0
      %1440 = vperm.xlu0 %1439, %v1422
      %v1441 = vpop.permute.xlu0 %1440
      %1444 = vset.pattern.permute.xlu0 0
      %1445 = vperm.xlu0 %1444, %v1423
      %v1446 = vpop.permute.xlu0 %1445
      %1449 = vset.pattern.permute.xlu0 0
      %1450 = vperm.xlu0 %1449, %v1424
      %v1451 = vpop.permute.xlu0 %1450
      %1454 = vset.pattern.permute.xlu0 0
      %1455 = vperm.xlu0 %1454, %v1425
      %v1456 = vpop.permute.xlu0 %1455
      %1459 = vset.pattern.permute.xlu0 0
      %1460 = vperm.xlu0 %1459, %v1426
      %v1461 = vpop.permute.xlu0 %1460
      %1464 = vset.pattern.permute.xlu0 0
      %1465 = vperm.xlu0 %1464, %v1427
      %v1466 = vpop.permute.xlu0 %1465
      %v1468 = vmul.f32 %v496, %v1431
      %v1469 = vmul.f32 %v495, %v1436
      %v1470 = vmul.f32 %v494, %v1441
      %v1471 = vmul.f32 %v493, %v1446
      %v1472 = vmul.f32 %v492, %v1451
      %v1473 = vmul.f32 %v491, %v1456
      %v1474 = vmul.f32 %v490, %v1461
      %v1475 = vmul.f32 %v497, %v1466
      %v1476 = vpack.c.bf16 %v1469, %v1468
      %v1477 = vpack.c.bf16 %v1471, %v1470
      %v1478 = vpack.c.bf16 %v1473, %v1472
      %v1479 = vpack.c.bf16 %v1475, %v1474
      %s1480 = scalar_lea.vmem %s2, 96
      %v1481 = vld [vmem:[%s1480] sm:$0xf]
      %v1482 = vld [vmem:[%s1480 + $0x4] sm:$0xf]
      %v1483 = vld [vmem:[%s1480 + $0x8] sm:$0xf]
      %v1484 = vld [vmem:[%s1480 + $0xc] sm:$0xf]
      %v1489 = vunpack.c.l.b16 %v1481
      %v1490 = vunpack.c.l.b16 %v1482
      %v1491 = vunpack.c.l.b16 %v1483
      %v1492 = vunpack.c.l.b16 %v1484
      %v1493 = vpack.c.b16 %v1490, %v1489
      %v1494 = vpack.c.b16 %v1492, %v1491
      %v1498 = vsel %vm640, %v1476, 0
      %v1501 = vsel %vm640, %v1477, 0
      %v1504 = vsel %vm640, %v1478, 0
      %v1507 = vsel %vm640, %v1479, 0
      %1509 = vmatprep.subr.bf16.mxu0 0
      %1510 = vmatpush1.bf16.msra.mxu0 %v1493
      %1511 = vmatprep.subr.bf16.mxu0 0
      %1512 = vmatpush1.bf16.msra.mxu0 %v1494
      %1513 = vmatprep.subr.bf16.mxu0 0
      %1514 = vmatpush1.bf16.msra.mxu0 0
      %1515 = vmatprep.subr.bf16.mxu0 0
      %1516 = vmatpush1.bf16.msra.mxu0 0
      %1517 = vmatprep.subr.bf16.mxu0 0
      %1518 = vmatpush1.bf16.msra.mxu0 0
      %1519 = vmatprep.subr.bf16.mxu0 0
      %1520 = vmatpush1.bf16.msra.mxu0 0
      %1521 = vmatprep.subr.bf16.mxu0 0
      %1522 = vmatpush1.bf16.msra.mxu0 0
      %1523 = vmatprep.subr.bf16.mxu0 0
      %1524 = vmatpush1.bf16.msra.mxu0 0
      %1525 = vmatprep.subr.bf16.mxu0 0
      %1526 = vmatpush1.bf16.msra.mxu0 0
      %1527 = vmatprep.subr.bf16.mxu0 0
      %1528 = vmatpush1.bf16.msra.mxu0 0
      %1529 = vmatprep.subr.bf16.mxu0 0
      %1530 = vmatpush1.bf16.msra.mxu0 0
      %1531 = vmatprep.subr.bf16.mxu0 0
      %1532 = vmatpush1.bf16.msra.mxu0 0
      %1533 = vmatprep.subr.bf16.mxu0 0
      %1534 = vmatpush1.bf16.msra.mxu0 0
      %1535 = vmatprep.subr.bf16.mxu0 0
      %1536 = vmatpush1.bf16.msra.mxu0 0
      %1537 = vmatprep.subr.bf16.mxu0 0
      %1538 = vmatpush1.bf16.msra.mxu0 0
      %1539 = vmatprep.subr.bf16.mxu0 0
      %1540 = vmatpush1.bf16.msra.mxu0 0
      %1541 = vmatprep.mubr.bf16.mxu0 0
      %1542 = vmatmul.mubr.bf16.gmra.mrb[0].mxu0 %v1498
      %v1543 = vpop.f32.mrb[0].mxu0
      %v1544 = vadd.f32 0.0, %v1543
      %v1545 = vpop.f32.mrb[0].mxu0
      %v1546 = vpop.f32.mrb[0].mxu0
      %v1547 = vadd.f32 0.0, %v1546
      %v1548 = vpop.f32.mrb[0].mxu0
      %1549 = vmatprep.mubr.bf16.mxu0 0
      %1550 = vmatmul.mubr.bf16.gmra.mrb[0].mxu0 %v1501
      %v1551 = vpop.f32.mrb[0].mxu0
      %v1552 = vadd.f32 0.0, %v1551
      %v1553 = vpop.f32.mrb[0].mxu0
      %v1554 = vpop.f32.mrb[0].mxu0
      %v1555 = vadd.f32 0.0, %v1554
      %v1556 = vpop.f32.mrb[0].mxu0
      %1557 = vmatprep.mubr.bf16.mxu0 0
      %1558 = vmatmul.mubr.bf16.gmra.mrb[0].mxu0 %v1504
      %v1559 = vpop.f32.mrb[0].mxu0
      %v1560 = vadd.f32 0.0, %v1559
      %v1561 = vpop.f32.mrb[0].mxu0
      %v1562 = vpop.f32.mrb[0].mxu0
      %v1563 = vadd.f32 0.0, %v1562
      %v1564 = vpop.f32.mrb[0].mxu0
      %1565 = vmatprep.mubr.bf16.mxu0 0
      %1566 = vmatmul.mubr.bf16.gmra.mrb[0].mxu0 %v1507
      %v1567 = vpop.f32.mrb[0].mxu0
      %v1568 = vadd.f32 0.0, %v1567
      %v1569 = vpop.f32.mrb[0].mxu0
      %v1570 = vpop.f32.mrb[0].mxu0
      %v1571 = vadd.f32 0.0, %v1570
      %v1572 = vpop.f32.mrb[0].mxu0
      %1573 = vdwg.mxu0
      %v1574 = vadd.f32 %v1411, %v1544
      %v1575 = vadd.f32 %v1412, %v1547
      %v1576 = vadd.f32 %v1413, %v1552
      %v1577 = vadd.f32 %v1414, %v1555
      %v1578 = vadd.f32 %v1415, %v1560
      %v1579 = vadd.f32 %v1416, %v1563
      %v1580 = vadd.f32 %v1417, %v1568
      %v1581 = vadd.f32 %v1418, %v1571
      %s1582 = scalar_lea.vmem %s1, 448
      %v1583 = vld [vmem:[%s1582] sm:$0xff]
      %v1584 = vld [vmem:[%s1582 + $0x8] sm:$0xff]
      %v1585 = vld [vmem:[%s1582 + $0x10] sm:$0xff]
      %v1586 = vld [vmem:[%s1582 + $0x18] sm:$0xff]
      %v1587 = vld [vmem:[%s1582 + $0x20] sm:$0xff]
      %v1588 = vld [vmem:[%s1582 + $0x28] sm:$0xff]
      %v1589 = vld [vmem:[%s1582 + $0x30] sm:$0xff]
      %v1590 = vld [vmem:[%s1582 + $0x38] sm:$0xff]
      %1592 = vset.pattern.permute.xlu0 0
      %1593 = vperm.xlu0 %1592, %v1583
      %v1594 = vpop.permute.xlu0 %1593
      %1597 = vset.pattern.permute.xlu0 0
      %1598 = vperm.xlu0 %1597, %v1584
      %v1599 = vpop.permute.xlu0 %1598
      %1602 = vset.pattern.permute.xlu0 0
      %1603 = vperm.xlu0 %1602, %v1585
      %v1604 = vpop.permute.xlu0 %1603
      %1607 = vset.pattern.permute.xlu0 0
      %1608 = vperm.xlu0 %1607, %v1586
      %v1609 = vpop.permute.xlu0 %1608
      %1612 = vset.pattern.permute.xlu0 0
      %1613 = vperm.xlu0 %1612, %v1587
      %v1614 = vpop.permute.xlu0 %1613
      %1617 = vset.pattern.permute.xlu0 0
      %1618 = vperm.xlu0 %1617, %v1588
      %v1619 = vpop.permute.xlu0 %1618
      %1622 = vset.pattern.permute.xlu0 0
      %1623 = vperm.xlu0 %1622, %v1589
      %v1624 = vpop.permute.xlu0 %1623
      %1627 = vset.pattern.permute.xlu0 0
      %1628 = vperm.xlu0 %1627, %v1590
      %v1629 = vpop.permute.xlu0 %1628
      %v1631 = vmul.f32 %v470, %v1594
      %v1632 = vmul.f32 %v471, %v1599
      %v1633 = vmul.f32 %v472, %v1604
      %v1634 = vmul.f32 %v473, %v1609
      %v1635 = vmul.f32 %v474, %v1614
      %v1636 = vmul.f32 %v475, %v1619
      %v1637 = vmul.f32 %v476, %v1624
      %v1638 = vmul.f32 %v469, %v1629
      %v1639 = vpack.c.bf16 %v1632, %v1631
      %v1640 = vpack.c.bf16 %v1634, %v1633
      %v1641 = vpack.c.bf16 %v1636, %v1635
      %v1642 = vpack.c.bf16 %v1638, %v1637
      %s1643 = scalar_lea.vmem %s2, 112
      %v1644 = vld [vmem:[%s1643] sm:$0xf]
      %v1645 = vld [vmem:[%s1643 + $0x4] sm:$0xf]
      %v1646 = vld [vmem:[%s1643 + $0x8] sm:$0xf]
      %v1647 = vld [vmem:[%s1643 + $0xc] sm:$0xf]
      %v1652 = vunpack.c.l.b16 %v1644
      %v1653 = vunpack.c.l.b16 %v1645
      %v1654 = vunpack.c.l.b16 %v1646
      %v1655 = vunpack.c.l.b16 %v1647
      %v1656 = vpack.c.b16 %v1653, %v1652
      %v1657 = vpack.c.b16 %v1655, %v1654
      %v1661 = vsel %vm640, %v1639, 0
      %v1664 = vsel %vm640, %v1640, 0
      %v1667 = vsel %vm640, %v1641, 0
      %v1670 = vsel %vm640, %v1642, 0
      %1672 = vmatprep.subr.bf16.mxu0 0
      %1673 = vmatpush1.bf16.msra.mxu0 %v1656
      %1674 = vmatprep.subr.bf16.mxu0 0
      %1675 = vmatpush1.bf16.msra.mxu0 %v1657
      %1676 = vmatprep.subr.bf16.mxu0 0
      %1677 = vmatpush1.bf16.msra.mxu0 0
      %1678 = vmatprep.subr.bf16.mxu0 0
      %1679 = vmatpush1.bf16.msra.mxu0 0
      %1680 = vmatprep.subr.bf16.mxu0 0
      %1681 = vmatpush1.bf16.msra.mxu0 0
      %1682 = vmatprep.subr.bf16.mxu0 0
      %1683 = vmatpush1.bf16.msra.mxu0 0
      %1684 = vmatprep.subr.bf16.mxu0 0
      %1685 = vmatpush1.bf16.msra.mxu0 0
      %1686 = vmatprep.subr.bf16.mxu0 0
      %1687 = vmatpush1.bf16.msra.mxu0 0
      %1688 = vmatprep.subr.bf16.mxu0 0
      %1689 = vmatpush1.bf16.msra.mxu0 0
      %1690 = vmatprep.subr.bf16.mxu0 0
      %1691 = vmatpush1.bf16.msra.mxu0 0
      %1692 = vmatprep.subr.bf16.mxu0 0
      %1693 = vmatpush1.bf16.msra.mxu0 0
      %1694 = vmatprep.subr.bf16.mxu0 0
      %1695 = vmatpush1.bf16.msra.mxu0 0
      %1696 = vmatprep.subr.bf16.mxu0 0
      %1697 = vmatpush1.bf16.msra.mxu0 0
      %1698 = vmatprep.subr.bf16.mxu0 0
      %1699 = vmatpush1.bf16.msra.mxu0 0
      %1700 = vmatprep.subr.bf16.mxu0 0
      %1701 = vmatpush1.bf16.msra.mxu0 0
      %1702 = vmatprep.subr.bf16.mxu0 0
      %1703 = vmatpush1.bf16.msra.mxu0 0
      %1704 = vmatprep.mubr.bf16.mxu0 0
      %1705 = vmatmul.mubr.bf16.gmra.mrb[0].mxu0 %v1661
      %v1706 = vpop.f32.mrb[0].mxu0
      %v1707 = vadd.f32 0.0, %v1706
      %v1708 = vpop.f32.mrb[0].mxu0
      %v1709 = vpop.f32.mrb[0].mxu0
      %v1710 = vadd.f32 0.0, %v1709
      %v1711 = vpop.f32.mrb[0].mxu0
      %1712 = vmatprep.mubr.bf16.mxu0 0
      %1713 = vmatmul.mubr.bf16.gmra.mrb[0].mxu0 %v1664
      %v1714 = vpop.f32.mrb[0].mxu0
      %v1715 = vadd.f32 0.0, %v1714
      %v1716 = vpop.f32.mrb[0].mxu0
      %v1717 = vpop.f32.mrb[0].mxu0
      %v1718 = vadd.f32 0.0, %v1717
      %v1719 = vpop.f32.mrb[0].mxu0
      %1720 = vmatprep.mubr.bf16.mxu0 0
      %1721 = vmatmul.mubr.bf16.gmra.mrb[0].mxu0 %v1667
      %v1722 = vpop.f32.mrb[0].mxu0
      %v1723 = vadd.f32 0.0, %v1722
      %v1724 = vpop.f32.mrb[0].mxu0
      %v1725 = vpop.f32.mrb[0].mxu0
      %v1726 = vadd.f32 0.0, %v1725
      %v1727 = vpop.f32.mrb[0].mxu0
      %1728 = vmatprep.mubr.bf16.mxu0 0
      %1729 = vmatmul.mubr.bf16.gmra.mrb[0].mxu0 %v1670
      %v1730 = vpop.f32.mrb[0].mxu0
      %v1731 = vadd.f32 0.0, %v1730
      %v1732 = vpop.f32.mrb[0].mxu0
      %v1733 = vpop.f32.mrb[0].mxu0
      %v1734 = vadd.f32 0.0, %v1733
      %v1735 = vpop.f32.mrb[0].mxu0
      %1736 = vdwg.mxu0
      %v1737 = vadd.f32 %v1574, %v1707
      %v1738 = vadd.f32 %v1575, %v1710
      %v1739 = vadd.f32 %v1576, %v1715
      %v1740 = vadd.f32 %v1577, %v1718
      %v1741 = vadd.f32 %v1578, %v1723
      %v1742 = vadd.f32 %v1579, %v1726
      %v1743 = vadd.f32 %v1580, %v1731
      %v1744 = vadd.f32 %v1581, %v1734
      %s1745 = scalar_lea.vmem %s1, 512
      %v1746 = vld [vmem:[%s1745] sm:$0xff]
      %v1747 = vld [vmem:[%s1745 + $0x8] sm:$0xff]
      %v1748 = vld [vmem:[%s1745 + $0x10] sm:$0xff]
      %v1749 = vld [vmem:[%s1745 + $0x18] sm:$0xff]
      %v1750 = vld [vmem:[%s1745 + $0x20] sm:$0xff]
      %v1751 = vld [vmem:[%s1745 + $0x28] sm:$0xff]
      %v1752 = vld [vmem:[%s1745 + $0x30] sm:$0xff]
      %v1753 = vld [vmem:[%s1745 + $0x38] sm:$0xff]
      %1755 = vset.pattern.permute.xlu0 0
      %1756 = vperm.xlu0 %1755, %v1746
      %v1757 = vpop.permute.xlu0 %1756
      %1760 = vset.pattern.permute.xlu0 0
      %1761 = vperm.xlu0 %1760, %v1747
      %v1762 = vpop.permute.xlu0 %1761
      %1765 = vset.pattern.permute.xlu0 0
      %1766 = vperm.xlu0 %1765, %v1748
      %v1767 = vpop.permute.xlu0 %1766
      %1770 = vset.pattern.permute.xlu0 0
      %1771 = vperm.xlu0 %1770, %v1749
      %v1772 = vpop.permute.xlu0 %1771
      %1775 = vset.pattern.permute.xlu0 0
      %1776 = vperm.xlu0 %1775, %v1750
      %v1777 = vpop.permute.xlu0 %1776
      %1780 = vset.pattern.permute.xlu0 0
      %1781 = vperm.xlu0 %1780, %v1751
      %v1782 = vpop.permute.xlu0 %1781
      %1785 = vset.pattern.permute.xlu0 0
      %1786 = vperm.xlu0 %1785, %v1752
      %v1787 = vpop.permute.xlu0 %1786
      %1790 = vset.pattern.permute.xlu0 0
      %1791 = vperm.xlu0 %1790, %v1753
      %v1792 = vpop.permute.xlu0 %1791
      %v1794 = vmul.f32 %v821, %v1757
      %v1795 = vmul.f32 %v820, %v1762
      %v1796 = vmul.f32 %v819, %v1767
      %v1797 = vmul.f32 %v818, %v1772
      %v1798 = vmul.f32 %v817, %v1777
      %v1799 = vmul.f32 %v816, %v1782
      %v1800 = vmul.f32 %v823, %v1787
      %v1801 = vmul.f32 %v822, %v1792
      %v1802 = vpack.c.bf16 %v1795, %v1794
      %v1803 = vpack.c.bf16 %v1797, %v1796
      %v1804 = vpack.c.bf16 %v1799, %v1798
      %v1805 = vpack.c.bf16 %v1801, %v1800
      %s1806 = scalar_lea.vmem %s2, 128
      %v1807 = vld [vmem:[%s1806] sm:$0xf]
      %v1808 = vld [vmem:[%s1806 + $0x4] sm:$0xf]
      %v1809 = vld [vmem:[%s1806 + $0x8] sm:$0xf]
      %v1810 = vld [vmem:[%s1806 + $0xc] sm:$0xf]
      %v1815 = vunpack.c.l.b16 %v1807
      %v1816 = vunpack.c.l.b16 %v1808
      %v1817 = vunpack.c.l.b16 %v1809
      %v1818 = vunpack.c.l.b16 %v1810
      %v1819 = vpack.c.b16 %v1816, %v1815
      %v1820 = vpack.c.b16 %v1818, %v1817
      %v1824 = vsel %vm640, %v1802, 0
      %v1827 = vsel %vm640, %v1803, 0
      %v1830 = vsel %vm640, %v1804, 0
      %v1833 = vsel %vm640, %v1805, 0
      %1835 = vmatprep.subr.bf16.mxu0 0
      %1836 = vmatpush1.bf16.msra.mxu0 %v1819
      %1837 = vmatprep.subr.bf16.mxu0 0
      %1838 = vmatpush1.bf16.msra.mxu0 %v1820
      %1839 = vmatprep.subr.bf16.mxu0 0
      %1840 = vmatpush1.bf16.msra.mxu0 0
      %1841 = vmatprep.subr.bf16.mxu0 0
      %1842 = vmatpush1.bf16.msra.mxu0 0
      %1843 = vmatprep.subr.bf16.mxu0 0
      %1844 = vmatpush1.bf16.msra.mxu0 0
      %1845 = vmatprep.subr.bf16.mxu0 0
      %1846 = vmatpush1.bf16.msra.mxu0 0
      %1847 = vmatprep.subr.bf16.mxu0 0
      %1848 = vmatpush1.bf16.msra.mxu0 0
      %1849 = vmatprep.subr.bf16.mxu0 0
      %1850 = vmatpush1.bf16.msra.mxu0 0
      %1851 = vmatprep.subr.bf16.mxu0 0
      %1852 = vmatpush1.bf16.msra.mxu0 0
      %1853 = vmatprep.subr.bf16.mxu0 0
      %1854 = vmatpush1.bf16.msra.mxu0 0
      %1855 = vmatprep.subr.bf16.mxu0 0
      %1856 = vmatpush1.bf16.msra.mxu0 0
      %1857 = vmatprep.subr.bf16.mxu0 0
      %1858 = vmatpush1.bf16.msra.mxu0 0
      %1859 = vmatprep.subr.bf16.mxu0 0
      %1860 = vmatpush1.bf16.msra.mxu0 0
      %1861 = vmatprep.subr.bf16.mxu0 0
      %1862 = vmatpush1.bf16.msra.mxu0 0
      %1863 = vmatprep.subr.bf16.mxu0 0
      %1864 = vmatpush1.bf16.msra.mxu0 0
      %1865 = vmatprep.subr.bf16.mxu0 0
      %1866 = vmatpush1.bf16.msra.mxu0 0
      %1867 = vmatprep.mubr.bf16.mxu0 0
      %1868 = vmatmul.mubr.bf16.gmra.mrb[0].mxu0 %v1824
      %v1869 = vpop.f32.mrb[0].mxu0
      %v1870 = vadd.f32 0.0, %v1869
      %v1871 = vpop.f32.mrb[0].mxu0
      %v1872 = vpop.f32.mrb[0].mxu0
      %v1873 = vadd.f32 0.0, %v1872
      %v1874 = vpop.f32.mrb[0].mxu0
      %1875 = vmatprep.mubr.bf16.mxu0 0
      %1876 = vmatmul.mubr.bf16.gmra.mrb[0].mxu0 %v1827
      %v1877 = vpop.f32.mrb[0].mxu0
      %v1878 = vadd.f32 0.0, %v1877
      %v1879 = vpop.f32.mrb[0].mxu0
      %v1880 = vpop.f32.mrb[0].mxu0
      %v1881 = vadd.f32 0.0, %v1880
      %v1882 = vpop.f32.mrb[0].mxu0
      %1883 = vmatprep.mubr.bf16.mxu0 0
      %1884 = vmatmul.mubr.bf16.gmra.mrb[0].mxu0 %v1830
      %v1885 = vpop.f32.mrb[0].mxu0
      %v1886 = vadd.f32 0.0, %v1885
      %v1887 = vpop.f32.mrb[0].mxu0
      %v1888 = vpop.f32.mrb[0].mxu0
      %v1889 = vadd.f32 0.0, %v1888
      %v1890 = vpop.f32.mrb[0].mxu0
      %1891 = vmatprep.mubr.bf16.mxu0 0
      %1892 = vmatmul.mubr.bf16.gmra.mrb[0].mxu0 %v1833
      %v1893 = vpop.f32.mrb[0].mxu0
      %v1894 = vadd.f32 0.0, %v1893
      %v1895 = vpop.f32.mrb[0].mxu0
      %v1896 = vpop.f32.mrb[0].mxu0
      %v1897 = vadd.f32 0.0, %v1896
      %v1898 = vpop.f32.mrb[0].mxu0
      %1899 = vdwg.mxu0
      %v1900 = vadd.f32 %v1737, %v1870
      %v1901 = vadd.f32 %v1738, %v1873
      %v1902 = vadd.f32 %v1739, %v1878
      %v1903 = vadd.f32 %v1740, %v1881
      %v1904 = vadd.f32 %v1741, %v1886
      %v1905 = vadd.f32 %v1742, %v1889
      %v1906 = vadd.f32 %v1743, %v1894
      %v1907 = vadd.f32 %v1744, %v1897
      %v1909 = vlaneseq
      %v1910 = vshrl.u32 %v1909, 7
      %v1911 = vsub.s32 0, %v1910
      %v1912 = vrot.slane %v477, %v1911
      %v1914 = vmul.f32 %v1900, %v1912
      %v1915 = vmul.f32 %v1901, %v1912
      %v1916 = vmul.f32 %v1902, %v1912
      %v1917 = vmul.f32 %v1903, %v1912
      %v1918 = vmul.f32 %v1904, %v1912
      %v1919 = vmul.f32 %v1905, %v1912
      %v1920 = vmul.f32 %v1906, %v1912
      %v1921 = vmul.f32 %v1907, %v1912
      %v1923 = vlaneseq
      %v1924 = vshrl.u32 %v1923, 7
      %v1925 = vsub.s32 0, %v1924
      %v1926 = vrot.slane %v478, %v1925
      %v1928 = vadd.f32 %v1914, %v1926
      %v1929 = vadd.f32 %v1915, %v1926
      %v1930 = vadd.f32 %v1916, %v1926
      %v1931 = vadd.f32 %v1917, %v1926
      %v1932 = vadd.f32 %v1918, %v1926
      %v1933 = vadd.f32 %v1919, %v1926
      %v1934 = vadd.f32 %v1920, %v1926
      %v1935 = vadd.f32 %v1921, %v1926
      %v1936 = vmax.f32 %v1928, 0.0
      %v1937 = vmax.f32 %v1929, 0.0
      %v1938 = vmax.f32 %v1930, 0.0
      %v1939 = vmax.f32 %v1931, 0.0
      %v1940 = vmax.f32 %v1932, 0.0
      %v1941 = vmax.f32 %v1933, 0.0
      %v1942 = vmax.f32 %v1934, 0.0
      %v1943 = vmax.f32 %v1935, 0.0
      %v1944 = vld [vmem:[%s6] sm:$0x1]
      %v1945 = vld [vmem:[%s7] sm:$0x1]
      %v1946 = vrot.slane %v1936, 7
      %v1947 = vrot.slane %v1937, 7
      %v1948 = vrot.slane %v1938, 7
      %v1949 = vrot.slane %v1939, 7
      %v1950 = vrot.slane %v1940, 7
      %v1951 = vrot.slane %v1941, 7
      %v1952 = vrot.slane %v1942, 7
      %v1953 = vrot.slane %v1943, 7
      %v1954 = vsel %vm489, %v1952, %v1953
      %v1955 = vsel %vm489, %v1951, %v1952
      %v1956 = vsel %vm489, %v1950, %v1951
      %v1957 = vsel %vm489, %v1949, %v1950
      %v1958 = vsel %vm489, %v1948, %v1949
      %v1959 = vsel %vm489, %v1947, %v1948
      %v1960 = vsel %vm489, %v1946, %v1947
      %v1961 = vsel %vm489, %v1953, %v1946
      %v1962 = vmul.f32 %v1954, %v509
      %v1963 = vmul.f32 %v1961, %v514
      %v1964 = vmul.f32 %v1960, %v519
      %v1965 = vmul.f32 %v1959, %v524
      %v1966 = vmul.f32 %v1958, %v529
      %v1967 = vmul.f32 %v1957, %v534
      %v1968 = vmul.f32 %v1956, %v539
      %v1969 = vmul.f32 %v1955, %v544
      %v1970 = vpack.c.bf16 %v1963, %v1962
      %v1971 = vpack.c.bf16 %v1965, %v1964
      %v1972 = vpack.c.bf16 %v1967, %v1966
      %v1973 = vpack.c.bf16 %v1969, %v1968
      %v1974 = vld [vmem:[%s5] sm:$0xf]
      %v1975 = vld [vmem:[%s5 + $0x4] sm:$0xf]
      %v1976 = vld [vmem:[%s5 + $0x8] sm:$0xf]
      %v1977 = vld [vmem:[%s5 + $0xc] sm:$0xf]
      %v1978 = vmul.f32 %v1943, %v574
      %v1979 = vmul.f32 %v1936, %v579
      %v1980 = vmul.f32 %v1937, %v584
      %v1981 = vmul.f32 %v1938, %v589
      %v1982 = vmul.f32 %v1939, %v594
      %v1983 = vmul.f32 %v1940, %v599
      %v1984 = vmul.f32 %v1941, %v604
      %v1985 = vmul.f32 %v1942, %v609
      %v1986 = vpack.c.bf16 %v1979, %v1978
      %v1987 = vpack.c.bf16 %v1981, %v1980
      %v1988 = vpack.c.bf16 %v1983, %v1982
      %v1989 = vpack.c.bf16 %v1985, %v1984
      %s1990 = scalar_lea.vmem %s5, 16
      %v1991 = vld [vmem:[%s1990] sm:$0xf]
      %v1992 = vld [vmem:[%s1990 + $0x4] sm:$0xf]
      %v1993 = vld [vmem:[%s1990 + $0x8] sm:$0xf]
      %v1994 = vld [vmem:[%s1990 + $0xc] sm:$0xf]
      %v1999 = vunpack.c.l.b16 %v1991
      %v2000 = vunpack.c.l.b16 %v1992
      %v2001 = vunpack.c.l.b16 %v1993
      %v2002 = vunpack.c.l.b16 %v1994
      %v2003 = vpack.c.b16 %v2000, %v1999
      %v2004 = vpack.c.b16 %v2002, %v2001
      %v2008 = vsel %vm640, %v1986, 0
      %v2011 = vsel %vm640, %v1987, 0
      %v2014 = vsel %vm640, %v1988, 0
      %v2017 = vsel %vm640, %v1989, 0
      %2019 = vmatprep.subr.bf16.mxu0 0
      %2020 = vmatpush1.bf16.msra.mxu0 %v2003
      %2021 = vmatprep.subr.bf16.mxu0 0
      %2022 = vmatpush1.bf16.msra.mxu0 %v2004
      %2023 = vmatprep.subr.bf16.mxu0 0
      %2024 = vmatpush1.bf16.msra.mxu0 0
      %2025 = vmatprep.subr.bf16.mxu0 0
      %2026 = vmatpush1.bf16.msra.mxu0 0
      %2027 = vmatprep.subr.bf16.mxu0 0
      %2028 = vmatpush1.bf16.msra.mxu0 0
      %2029 = vmatprep.subr.bf16.mxu0 0
      %2030 = vmatpush1.bf16.msra.mxu0 0
      %2031 = vmatprep.subr.bf16.mxu0 0
      %2032 = vmatpush1.bf16.msra.mxu0 0
      %2033 = vmatprep.subr.bf16.mxu0 0
      %2034 = vmatpush1.bf16.msra.mxu0 0
      %2035 = vmatprep.subr.bf16.mxu0 0
      %2036 = vmatpush1.bf16.msra.mxu0 0
      %2037 = vmatprep.subr.bf16.mxu0 0
      %2038 = vmatpush1.bf16.msra.mxu0 0
      %2039 = vmatprep.subr.bf16.mxu0 0
      %2040 = vmatpush1.bf16.msra.mxu0 0
      %2041 = vmatprep.subr.bf16.mxu0 0
      %2042 = vmatpush1.bf16.msra.mxu0 0
      %2043 = vmatprep.subr.bf16.mxu0 0
      %2044 = vmatpush1.bf16.msra.mxu0 0
      %2045 = vmatprep.subr.bf16.mxu0 0
      %2046 = vmatpush1.bf16.msra.mxu0 0
      %2047 = vmatprep.subr.bf16.mxu0 0
      %2048 = vmatpush1.bf16.msra.mxu0 0
      %2049 = vmatprep.subr.bf16.mxu0 0
      %2050 = vmatpush1.bf16.msra.mxu0 0
      %2051 = vmatprep.mubr.bf16.mxu0 0
      %2052 = vmatmul.mubr.bf16.gmra.mrb[0].mxu0 %v2008
      %v2053 = vpop.f32.mrb[0].mxu0
      %v2054 = vadd.f32 0.0, %v2053
      %v2055 = vpop.f32.mrb[0].mxu0
      %v2056 = vpop.f32.mrb[0].mxu0
      %v2057 = vadd.f32 0.0, %v2056
      %v2058 = vpop.f32.mrb[0].mxu0
      %2059 = vmatprep.mubr.bf16.mxu0 0
      %2060 = vmatmul.mubr.bf16.gmra.mrb[0].mxu0 %v2011
      %v2061 = vpop.f32.mrb[0].mxu0
      %v2062 = vadd.f32 0.0, %v2061
      %v2063 = vpop.f32.mrb[0].mxu0
      %v2064 = vpop.f32.mrb[0].mxu0
      %v2065 = vadd.f32 0.0, %v2064
      %v2066 = vpop.f32.mrb[0].mxu0
      %2067 = vmatprep.mubr.bf16.mxu0 0
      %2068 = vmatmul.mubr.bf16.gmra.mrb[0].mxu0 %v2014
      %v2069 = vpop.f32.mrb[0].mxu0
      %v2070 = vadd.f32 0.0, %v2069
      %v2071 = vpop.f32.mrb[0].mxu0
      %v2072 = vpop.f32.mrb[0].mxu0
      %v2073 = vadd.f32 0.0, %v2072
      %v2074 = vpop.f32.mrb[0].mxu0
      %2075 = vmatprep.mubr.bf16.mxu0 0
      %2076 = vmatmul.mubr.bf16.gmra.mrb[0].mxu0 %v2017
      %v2077 = vpop.f32.mrb[0].mxu0
      %v2078 = vadd.f32 0.0, %v2077
      %v2079 = vpop.f32.mrb[0].mxu0
      %v2080 = vpop.f32.mrb[0].mxu0
      %v2081 = vadd.f32 0.0, %v2080
      %v2082 = vpop.f32.mrb[0].mxu0
      %2083 = vdwg.mxu0
      %v2088 = vunpack.c.l.b16 %v1974
      %v2089 = vunpack.c.l.b16 %v1975
      %v2090 = vunpack.c.l.b16 %v1976
      %v2091 = vunpack.c.l.b16 %v1977
      %v2092 = vpack.c.b16 %v2089, %v2088
      %v2093 = vpack.c.b16 %v2091, %v2090
      %v2097 = vsel %vm640, %v1970, 0
      %v2100 = vsel %vm640, %v1971, 0
      %v2103 = vsel %vm640, %v1972, 0
      %v2106 = vsel %vm640, %v1973, 0
      %2108 = vmatprep.subr.bf16.mxu0 0
      %2109 = vmatpush1.bf16.msra.mxu0 %v2092
      %2110 = vmatprep.subr.bf16.mxu0 0
      %2111 = vmatpush1.bf16.msra.mxu0 %v2093
      %2112 = vmatprep.subr.bf16.mxu0 0
      %2113 = vmatpush1.bf16.msra.mxu0 0
      %2114 = vmatprep.subr.bf16.mxu0 0
      %2115 = vmatpush1.bf16.msra.mxu0 0
      %2116 = vmatprep.subr.bf16.mxu0 0
      %2117 = vmatpush1.bf16.msra.mxu0 0
      %2118 = vmatprep.subr.bf16.mxu0 0
      %2119 = vmatpush1.bf16.msra.mxu0 0
      %2120 = vmatprep.subr.bf16.mxu0 0
      %2121 = vmatpush1.bf16.msra.mxu0 0
      %2122 = vmatprep.subr.bf16.mxu0 0
      %2123 = vmatpush1.bf16.msra.mxu0 0
      %2124 = vmatprep.subr.bf16.mxu0 0
      %2125 = vmatpush1.bf16.msra.mxu0 0
      %2126 = vmatprep.subr.bf16.mxu0 0
      %2127 = vmatpush1.bf16.msra.mxu0 0
      %2128 = vmatprep.subr.bf16.mxu0 0
      %2129 = vmatpush1.bf16.msra.mxu0 0
      %2130 = vmatprep.subr.bf16.mxu0 0
      %2131 = vmatpush1.bf16.msra.mxu0 0
      %2132 = vmatprep.subr.bf16.mxu0 0
      %2133 = vmatpush1.bf16.msra.mxu0 0
      %2134 = vmatprep.subr.bf16.mxu0 0
      %2135 = vmatpush1.bf16.msra.mxu0 0
      %2136 = vmatprep.subr.bf16.mxu0 0
      %2137 = vmatpush1.bf16.msra.mxu0 0
      %2138 = vmatprep.subr.bf16.mxu0 0
      %2139 = vmatpush1.bf16.msra.mxu0 0
      %2140 = vmatprep.mubr.bf16.mxu0 0
      %2141 = vmatmul.mubr.bf16.gmra.mrb[0].mxu0 %v2097
      %v2142 = vpop.f32.mrb[0].mxu0
      %v2143 = vadd.f32 %v2054, %v2142
      %v2144 = vpop.f32.mrb[0].mxu0
      %v2145 = vpop.f32.mrb[0].mxu0
      %v2146 = vadd.f32 %v2057, %v2145
      %v2147 = vpop.f32.mrb[0].mxu0
      %2148 = vmatprep.mubr.bf16.mxu0 0
      %2149 = vmatmul.mubr.bf16.gmra.mrb[0].mxu0 %v2100
      %v2150 = vpop.f32.mrb[0].mxu0
      %v2151 = vadd.f32 %v2062, %v2150
      %v2152 = vpop.f32.mrb[0].mxu0
      %v2153 = vpop.f32.mrb[0].mxu0
      %v2154 = vadd.f32 %v2065, %v2153
      %v2155 = vpop.f32.mrb[0].mxu0
      %2156 = vmatprep.mubr.bf16.mxu0 0
      %2157 = vmatmul.mubr.bf16.gmra.mrb[0].mxu0 %v2103
      %v2158 = vpop.f32.mrb[0].mxu0
      %v2159 = vadd.f32 %v2070, %v2158
      %v2160 = vpop.f32.mrb[0].mxu0
      %v2161 = vpop.f32.mrb[0].mxu0
      %v2162 = vadd.f32 %v2073, %v2161
      %v2163 = vpop.f32.mrb[0].mxu0
      %2164 = vmatprep.mubr.bf16.mxu0 0
      %2165 = vmatmul.mubr.bf16.gmra.mrb[0].mxu0 %v2106
      %v2166 = vpop.f32.mrb[0].mxu0
      %v2167 = vadd.f32 %v2078, %v2166
      %v2168 = vpop.f32.mrb[0].mxu0
      %v2169 = vpop.f32.mrb[0].mxu0
      %v2170 = vadd.f32 %v2081, %v2169
      %v2171 = vpop.f32.mrb[0].mxu0
      %2172 = vdwg.mxu0
      %v2173 = vrot.slane %v1936, 1
      %v2174 = vrot.slane %v1937, 1
      %v2175 = vrot.slane %v1938, 1
      %v2176 = vrot.slane %v1939, 1
      %v2177 = vrot.slane %v1940, 1
      %v2178 = vrot.slane %v1941, 1
      %v2179 = vrot.slane %v1942, 1
      %v2180 = vrot.slane %v1943, 1
      %v2181 = vsel %vm815, %v2179, %v2180
      %v2182 = vsel %vm815, %v2178, %v2179
      %v2183 = vsel %vm815, %v2177, %v2178
      %v2184 = vsel %vm815, %v2176, %v2177
      %v2185 = vsel %vm815, %v2175, %v2176
      %v2186 = vsel %vm815, %v2174, %v2175
      %v2187 = vsel %vm815, %v2173, %v2174
      %v2188 = vsel %vm815, %v2180, %v2173
      %v2189 = vmul.f32 %v2188, %v836
      %v2190 = vmul.f32 %v2187, %v841
      %v2191 = vmul.f32 %v2186, %v846
      %v2192 = vmul.f32 %v2185, %v851
      %v2193 = vmul.f32 %v2184, %v856
      %v2194 = vmul.f32 %v2183, %v861
      %v2195 = vmul.f32 %v2182, %v866
      %v2196 = vmul.f32 %v2181, %v871
      %v2197 = vpack.c.bf16 %v2190, %v2189
      %v2198 = vpack.c.bf16 %v2192, %v2191
      %v2199 = vpack.c.bf16 %v2194, %v2193
      %v2200 = vpack.c.bf16 %v2196, %v2195
      %s2201 = scalar_lea.vmem %s5, 32
      %v2202 = vld [vmem:[%s2201] sm:$0xf]
      %v2203 = vld [vmem:[%s2201 + $0x4] sm:$0xf]
      %v2204 = vld [vmem:[%s2201 + $0x8] sm:$0xf]
      %v2205 = vld [vmem:[%s2201 + $0xc] sm:$0xf]
      %v2210 = vunpack.c.l.b16 %v2202
      %v2211 = vunpack.c.l.b16 %v2203
      %v2212 = vunpack.c.l.b16 %v2204
      %v2213 = vunpack.c.l.b16 %v2205
      %v2214 = vpack.c.b16 %v2211, %v2210
      %v2215 = vpack.c.b16 %v2213, %v2212
      %v2219 = vsel %vm640, %v2197, 0
      %v2222 = vsel %vm640, %v2198, 0
      %v2225 = vsel %vm640, %v2199, 0
      %v2228 = vsel %vm640, %v2200, 0
      %2230 = vmatprep.subr.bf16.mxu0 0
      %2231 = vmatpush1.bf16.msra.mxu0 %v2214
      %2232 = vmatprep.subr.bf16.mxu0 0
      %2233 = vmatpush1.bf16.msra.mxu0 %v2215
      %2234 = vmatprep.subr.bf16.mxu0 0
      %2235 = vmatpush1.bf16.msra.mxu0 0
      %2236 = vmatprep.subr.bf16.mxu0 0
      %2237 = vmatpush1.bf16.msra.mxu0 0
      %2238 = vmatprep.subr.bf16.mxu0 0
      %2239 = vmatpush1.bf16.msra.mxu0 0
      %2240 = vmatprep.subr.bf16.mxu0 0
      %2241 = vmatpush1.bf16.msra.mxu0 0
      %2242 = vmatprep.subr.bf16.mxu0 0
      %2243 = vmatpush1.bf16.msra.mxu0 0
      %2244 = vmatprep.subr.bf16.mxu0 0
      %2245 = vmatpush1.bf16.msra.mxu0 0
      %2246 = vmatprep.subr.bf16.mxu0 0
      %2247 = vmatpush1.bf16.msra.mxu0 0
      %2248 = vmatprep.subr.bf16.mxu0 0
      %2249 = vmatpush1.bf16.msra.mxu0 0
      %2250 = vmatprep.subr.bf16.mxu0 0
      %2251 = vmatpush1.bf16.msra.mxu0 0
      %2252 = vmatprep.subr.bf16.mxu0 0
      %2253 = vmatpush1.bf16.msra.mxu0 0
      %2254 = vmatprep.subr.bf16.mxu0 0
      %2255 = vmatpush1.bf16.msra.mxu0 0
      %2256 = vmatprep.subr.bf16.mxu0 0
      %2257 = vmatpush1.bf16.msra.mxu0 0
      %2258 = vmatprep.subr.bf16.mxu0 0
      %2259 = vmatpush1.bf16.msra.mxu0 0
      %2260 = vmatprep.subr.bf16.mxu0 0
      %2261 = vmatpush1.bf16.msra.mxu0 0
      %2262 = vmatprep.mubr.bf16.mxu0 0
      %2263 = vmatmul.mubr.bf16.gmra.mrb[0].mxu0 %v2219
      %v2264 = vpop.f32.mrb[0].mxu0
      %v2265 = vadd.f32 0.0, %v2264
      %v2266 = vpop.f32.mrb[0].mxu0
      %v2267 = vpop.f32.mrb[0].mxu0
      %v2268 = vadd.f32 0.0, %v2267
      %v2269 = vpop.f32.mrb[0].mxu0
      %2270 = vmatprep.mubr.bf16.mxu0 0
      %2271 = vmatmul.mubr.bf16.gmra.mrb[0].mxu0 %v2222
      %v2272 = vpop.f32.mrb[0].mxu0
      %v2273 = vadd.f32 0.0, %v2272
      %v2274 = vpop.f32.mrb[0].mxu0
      %v2275 = vpop.f32.mrb[0].mxu0
      %v2276 = vadd.f32 0.0, %v2275
      %v2277 = vpop.f32.mrb[0].mxu0
      %2278 = vmatprep.mubr.bf16.mxu0 0
      %2279 = vmatmul.mubr.bf16.gmra.mrb[0].mxu0 %v2225
      %v2280 = vpop.f32.mrb[0].mxu0
      %v2281 = vadd.f32 0.0, %v2280
      %v2282 = vpop.f32.mrb[0].mxu0
      %v2283 = vpop.f32.mrb[0].mxu0
      %v2284 = vadd.f32 0.0, %v2283
      %v2285 = vpop.f32.mrb[0].mxu0
      %2286 = vmatprep.mubr.bf16.mxu0 0
      %2287 = vmatmul.mubr.bf16.gmra.mrb[0].mxu0 %v2228
      %v2288 = vpop.f32.mrb[0].mxu0
      %v2289 = vadd.f32 0.0, %v2288
      %v2290 = vpop.f32.mrb[0].mxu0
      %v2291 = vpop.f32.mrb[0].mxu0
      %v2292 = vadd.f32 0.0, %v2291
      %v2293 = vpop.f32.mrb[0].mxu0
      %2294 = vdwg.mxu0
      %v2295 = vadd.f32 %v2143, %v2265
      %v2296 = vadd.f32 %v2146, %v2268
      %v2297 = vadd.f32 %v2151, %v2273
      %v2298 = vadd.f32 %v2154, %v2276
      %v2299 = vadd.f32 %v2159, %v2281
      %v2300 = vadd.f32 %v2162, %v2284
      %v2301 = vadd.f32 %v2167, %v2289
      %v2302 = vadd.f32 %v2170, %v2292
      %v2303 = vmul.f32 %v1961, %v999
      %v2304 = vmul.f32 %v1960, %v1004
      %v2305 = vmul.f32 %v1959, %v1009
      %v2306 = vmul.f32 %v1958, %v1014
      %v2307 = vmul.f32 %v1957, %v1019
      %v2308 = vmul.f32 %v1956, %v1024
      %v2309 = vmul.f32 %v1955, %v1029
      %v2310 = vmul.f32 %v1954, %v1034
      %v2311 = vpack.c.bf16 %v2304, %v2303
      %v2312 = vpack.c.bf16 %v2306, %v2305
      %v2313 = vpack.c.bf16 %v2308, %v2307
      %v2314 = vpack.c.bf16 %v2310, %v2309
      %s2315 = scalar_lea.vmem %s5, 48
      %v2316 = vld [vmem:[%s2315] sm:$0xf]
      %v2317 = vld [vmem:[%s2315 + $0x4] sm:$0xf]
      %v2318 = vld [vmem:[%s2315 + $0x8] sm:$0xf]
      %v2319 = vld [vmem:[%s2315 + $0xc] sm:$0xf]
      %v2324 = vunpack.c.l.b16 %v2316
      %v2325 = vunpack.c.l.b16 %v2317
      %v2326 = vunpack.c.l.b16 %v2318
      %v2327 = vunpack.c.l.b16 %v2319
      %v2328 = vpack.c.b16 %v2325, %v2324
      %v2329 = vpack.c.b16 %v2327, %v2326
      %v2333 = vsel %vm640, %v2311, 0
      %v2336 = vsel %vm640, %v2312, 0
      %v2339 = vsel %vm640, %v2313, 0
      %v2342 = vsel %vm640, %v2314, 0
      %2344 = vmatprep.subr.bf16.mxu0 0
      %2345 = vmatpush1.bf16.msra.mxu0 %v2328
      %2346 = vmatprep.subr.bf16.mxu0 0
      %2347 = vmatpush1.bf16.msra.mxu0 %v2329
      %2348 = vmatprep.subr.bf16.mxu0 0
      %2349 = vmatpush1.bf16.msra.mxu0 0
      %2350 = vmatprep.subr.bf16.mxu0 0
      %2351 = vmatpush1.bf16.msra.mxu0 0
      %2352 = vmatprep.subr.bf16.mxu0 0
      %2353 = vmatpush1.bf16.msra.mxu0 0
      %2354 = vmatprep.subr.bf16.mxu0 0
      %2355 = vmatpush1.bf16.msra.mxu0 0
      %2356 = vmatprep.subr.bf16.mxu0 0
      %2357 = vmatpush1.bf16.msra.mxu0 0
      %2358 = vmatprep.subr.bf16.mxu0 0
      %2359 = vmatpush1.bf16.msra.mxu0 0
      %2360 = vmatprep.subr.bf16.mxu0 0
      %2361 = vmatpush1.bf16.msra.mxu0 0
      %2362 = vmatprep.subr.bf16.mxu0 0
      %2363 = vmatpush1.bf16.msra.mxu0 0
      %2364 = vmatprep.subr.bf16.mxu0 0
      %2365 = vmatpush1.bf16.msra.mxu0 0
      %2366 = vmatprep.subr.bf16.mxu0 0
      %2367 = vmatpush1.bf16.msra.mxu0 0
      %2368 = vmatprep.subr.bf16.mxu0 0
      %2369 = vmatpush1.bf16.msra.mxu0 0
      %2370 = vmatprep.subr.bf16.mxu0 0
      %2371 = vmatpush1.bf16.msra.mxu0 0
      %2372 = vmatprep.subr.bf16.mxu0 0
      %2373 = vmatpush1.bf16.msra.mxu0 0
      %2374 = vmatprep.subr.bf16.mxu0 0
      %2375 = vmatpush1.bf16.msra.mxu0 0
      %2376 = vmatprep.mubr.bf16.mxu0 0
      %2377 = vmatmul.mubr.bf16.gmra.mrb[0].mxu0 %v2333
      %v2378 = vpop.f32.mrb[0].mxu0
      %v2379 = vadd.f32 0.0, %v2378
      %v2380 = vpop.f32.mrb[0].mxu0
      %v2381 = vpop.f32.mrb[0].mxu0
      %v2382 = vadd.f32 0.0, %v2381
      %v2383 = vpop.f32.mrb[0].mxu0
      %2384 = vmatprep.mubr.bf16.mxu0 0
      %2385 = vmatmul.mubr.bf16.gmra.mrb[0].mxu0 %v2336
      %v2386 = vpop.f32.mrb[0].mxu0
      %v2387 = vadd.f32 0.0, %v2386
      %v2388 = vpop.f32.mrb[0].mxu0
      %v2389 = vpop.f32.mrb[0].mxu0
      %v2390 = vadd.f32 0.0, %v2389
      %v2391 = vpop.f32.mrb[0].mxu0
      %2392 = vmatprep.mubr.bf16.mxu0 0
      %2393 = vmatmul.mubr.bf16.gmra.mrb[0].mxu0 %v2339
      %v2394 = vpop.f32.mrb[0].mxu0
      %v2395 = vadd.f32 0.0, %v2394
      %v2396 = vpop.f32.mrb[0].mxu0
      %v2397 = vpop.f32.mrb[0].mxu0
      %v2398 = vadd.f32 0.0, %v2397
      %v2399 = vpop.f32.mrb[0].mxu0
      %2400 = vmatprep.mubr.bf16.mxu0 0
      %2401 = vmatmul.mubr.bf16.gmra.mrb[0].mxu0 %v2342
      %v2402 = vpop.f32.mrb[0].mxu0
      %v2403 = vadd.f32 0.0, %v2402
      %v2404 = vpop.f32.mrb[0].mxu0
      %v2405 = vpop.f32.mrb[0].mxu0
      %v2406 = vadd.f32 0.0, %v2405
      %v2407 = vpop.f32.mrb[0].mxu0
      %2408 = vdwg.mxu0
      %v2409 = vadd.f32 %v2295, %v2379
      %v2410 = vadd.f32 %v2296, %v2382
      %v2411 = vadd.f32 %v2297, %v2387
      %v2412 = vadd.f32 %v2298, %v2390
      %v2413 = vadd.f32 %v2299, %v2395
      %v2414 = vadd.f32 %v2300, %v2398
      %v2415 = vadd.f32 %v2301, %v2403
      %v2416 = vadd.f32 %v2302, %v2406
      %v2417 = vpack.c.bf16 %v1937, %v1936
      %v2418 = vpack.c.bf16 %v1939, %v1938
      %v2419 = vpack.c.bf16 %v1941, %v1940
      %v2420 = vpack.c.bf16 %v1943, %v1942
      %s2421 = scalar_lea.vmem %s5, 64
      %v2422 = vld [vmem:[%s2421] sm:$0xf]
      %v2423 = vld [vmem:[%s2421 + $0x4] sm:$0xf]
      %v2424 = vld [vmem:[%s2421 + $0x8] sm:$0xf]
      %v2425 = vld [vmem:[%s2421 + $0xc] sm:$0xf]
      %v2430 = vunpack.c.l.b16 %v2422
      %v2431 = vunpack.c.l.b16 %v2423
      %v2432 = vunpack.c.l.b16 %v2424
      %v2433 = vunpack.c.l.b16 %v2425
      %v2434 = vpack.c.b16 %v2431, %v2430
      %v2435 = vpack.c.b16 %v2433, %v2432
      %v2439 = vsel %vm640, %v2417, 0
      %v2442 = vsel %vm640, %v2418, 0
      %v2445 = vsel %vm640, %v2419, 0
      %v2448 = vsel %vm640, %v2420, 0
      %2450 = vmatprep.subr.bf16.mxu0 0
      %2451 = vmatpush1.bf16.msra.mxu0 %v2434
      %2452 = vmatprep.subr.bf16.mxu0 0
      %2453 = vmatpush1.bf16.msra.mxu0 %v2435
      %2454 = vmatprep.subr.bf16.mxu0 0
      %2455 = vmatpush1.bf16.msra.mxu0 0
      %2456 = vmatprep.subr.bf16.mxu0 0
      %2457 = vmatpush1.bf16.msra.mxu0 0
      %2458 = vmatprep.subr.bf16.mxu0 0
      %2459 = vmatpush1.bf16.msra.mxu0 0
      %2460 = vmatprep.subr.bf16.mxu0 0
      %2461 = vmatpush1.bf16.msra.mxu0 0
      %2462 = vmatprep.subr.bf16.mxu0 0
      %2463 = vmatpush1.bf16.msra.mxu0 0
      %2464 = vmatprep.subr.bf16.mxu0 0
      %2465 = vmatpush1.bf16.msra.mxu0 0
      %2466 = vmatprep.subr.bf16.mxu0 0
      %2467 = vmatpush1.bf16.msra.mxu0 0
      %2468 = vmatprep.subr.bf16.mxu0 0
      %2469 = vmatpush1.bf16.msra.mxu0 0
      %2470 = vmatprep.subr.bf16.mxu0 0
      %2471 = vmatpush1.bf16.msra.mxu0 0
      %2472 = vmatprep.subr.bf16.mxu0 0
      %2473 = vmatpush1.bf16.msra.mxu0 0
      %2474 = vmatprep.subr.bf16.mxu0 0
      %2475 = vmatpush1.bf16.msra.mxu0 0
      %2476 = vmatprep.subr.bf16.mxu0 0
      %2477 = vmatpush1.bf16.msra.mxu0 0
      %2478 = vmatprep.subr.bf16.mxu0 0
      %2479 = vmatpush1.bf16.msra.mxu0 0
      %2480 = vmatprep.subr.bf16.mxu0 0
      %2481 = vmatpush1.bf16.msra.mxu0 0
      %2482 = vmatprep.mubr.bf16.mxu0 0
      %2483 = vmatmul.mubr.bf16.gmra.mrb[0].mxu0 %v2439
      %v2484 = vpop.f32.mrb[0].mxu0
      %v2485 = vadd.f32 0.0, %v2484
      %v2486 = vpop.f32.mrb[0].mxu0
      %v2487 = vpop.f32.mrb[0].mxu0
      %v2488 = vadd.f32 0.0, %v2487
      %v2489 = vpop.f32.mrb[0].mxu0
      %2490 = vmatprep.mubr.bf16.mxu0 0
      %2491 = vmatmul.mubr.bf16.gmra.mrb[0].mxu0 %v2442
      %v2492 = vpop.f32.mrb[0].mxu0
      %v2493 = vadd.f32 0.0, %v2492
      %v2494 = vpop.f32.mrb[0].mxu0
      %v2495 = vpop.f32.mrb[0].mxu0
      %v2496 = vadd.f32 0.0, %v2495
      %v2497 = vpop.f32.mrb[0].mxu0
      %2498 = vmatprep.mubr.bf16.mxu0 0
      %2499 = vmatmul.mubr.bf16.gmra.mrb[0].mxu0 %v2445
      %v2500 = vpop.f32.mrb[0].mxu0
      %v2501 = vadd.f32 0.0, %v2500
      %v2502 = vpop.f32.mrb[0].mxu0
      %v2503 = vpop.f32.mrb[0].mxu0
      %v2504 = vadd.f32 0.0, %v2503
      %v2505 = vpop.f32.mrb[0].mxu0
      %2506 = vmatprep.mubr.bf16.mxu0 0
      %2507 = vmatmul.mubr.bf16.gmra.mrb[0].mxu0 %v2448
      %v2508 = vpop.f32.mrb[0].mxu0
      %v2509 = vadd.f32 0.0, %v2508
      %v2510 = vpop.f32.mrb[0].mxu0
      %v2511 = vpop.f32.mrb[0].mxu0
      %v2512 = vadd.f32 0.0, %v2511
      %v2513 = vpop.f32.mrb[0].mxu0
      %2514 = vdwg.mxu0
      %v2515 = vadd.f32 %v2409, %v2485
      %v2516 = vadd.f32 %v2410, %v2488
      %v2517 = vadd.f32 %v2411, %v2493
      %v2518 = vadd.f32 %v2412, %v2496
      %v2519 = vadd.f32 %v2413, %v2501
      %v2520 = vadd.f32 %v2414, %v2504
      %v2521 = vadd.f32 %v2415, %v2509
      %v2522 = vadd.f32 %v2416, %v2512
      %v2523 = vmul.f32 %v2187, %v1268
      %v2524 = vmul.f32 %v2186, %v1273
      %v2525 = vmul.f32 %v2185, %v1278
      %v2526 = vmul.f32 %v2184, %v1283
      %v2527 = vmul.f32 %v2183, %v1288
      %v2528 = vmul.f32 %v2182, %v1293
      %v2529 = vmul.f32 %v2181, %v1298
      %v2530 = vmul.f32 %v2188, %v1303
      %v2531 = vpack.c.bf16 %v2524, %v2523
      %v2532 = vpack.c.bf16 %v2526, %v2525
      %v2533 = vpack.c.bf16 %v2528, %v2527
      %v2534 = vpack.c.bf16 %v2530, %v2529
      %s2535 = scalar_lea.vmem %s5, 80
      %v2536 = vld [vmem:[%s2535] sm:$0xf]
      %v2537 = vld [vmem:[%s2535 + $0x4] sm:$0xf]
      %v2538 = vld [vmem:[%s2535 + $0x8] sm:$0xf]
      %v2539 = vld [vmem:[%s2535 + $0xc] sm:$0xf]
      %v2544 = vunpack.c.l.b16 %v2536
      %v2545 = vunpack.c.l.b16 %v2537
      %v2546 = vunpack.c.l.b16 %v2538
      %v2547 = vunpack.c.l.b16 %v2539
      %v2548 = vpack.c.b16 %v2545, %v2544
      %v2549 = vpack.c.b16 %v2547, %v2546
      %v2553 = vsel %vm640, %v2531, 0
      %v2556 = vsel %vm640, %v2532, 0
      %v2559 = vsel %vm640, %v2533, 0
      %v2562 = vsel %vm640, %v2534, 0
      %2564 = vmatprep.subr.bf16.mxu0 0
      %2565 = vmatpush1.bf16.msra.mxu0 %v2548
      %2566 = vmatprep.subr.bf16.mxu0 0
      %2567 = vmatpush1.bf16.msra.mxu0 %v2549
      %2568 = vmatprep.subr.bf16.mxu0 0
      %2569 = vmatpush1.bf16.msra.mxu0 0
      %2570 = vmatprep.subr.bf16.mxu0 0
      %2571 = vmatpush1.bf16.msra.mxu0 0
      %2572 = vmatprep.subr.bf16.mxu0 0
      %2573 = vmatpush1.bf16.msra.mxu0 0
      %2574 = vmatprep.subr.bf16.mxu0 0
      %2575 = vmatpush1.bf16.msra.mxu0 0
      %2576 = vmatprep.subr.bf16.mxu0 0
      %2577 = vmatpush1.bf16.msra.mxu0 0
      %2578 = vmatprep.subr.bf16.mxu0 0
      %2579 = vmatpush1.bf16.msra.mxu0 0
      %2580 = vmatprep.subr.bf16.mxu0 0
      %2581 = vmatpush1.bf16.msra.mxu0 0
      %2582 = vmatprep.subr.bf16.mxu0 0
      %2583 = vmatpush1.bf16.msra.mxu0 0
      %2584 = vmatprep.subr.bf16.mxu0 0
      %2585 = vmatpush1.bf16.msra.mxu0 0
      %2586 = vmatprep.subr.bf16.mxu0 0
      %2587 = vmatpush1.bf16.msra.mxu0 0
      %2588 = vmatprep.subr.bf16.mxu0 0
      %2589 = vmatpush1.bf16.msra.mxu0 0
      %2590 = vmatprep.subr.bf16.mxu0 0
      %2591 = vmatpush1.bf16.msra.mxu0 0
      %2592 = vmatprep.subr.bf16.mxu0 0
      %2593 = vmatpush1.bf16.msra.mxu0 0
      %2594 = vmatprep.subr.bf16.mxu0 0
      %2595 = vmatpush1.bf16.msra.mxu0 0
      %2596 = vmatprep.mubr.bf16.mxu0 0
      %2597 = vmatmul.mubr.bf16.gmra.mrb[0].mxu0 %v2553
      %v2598 = vpop.f32.mrb[0].mxu0
      %v2599 = vadd.f32 0.0, %v2598
      %v2600 = vpop.f32.mrb[0].mxu0
      %v2601 = vpop.f32.mrb[0].mxu0
      %v2602 = vadd.f32 0.0, %v2601
      %v2603 = vpop.f32.mrb[0].mxu0
      %2604 = vmatprep.mubr.bf16.mxu0 0
      %2605 = vmatmul.mubr.bf16.gmra.mrb[0].mxu0 %v2556
      %v2606 = vpop.f32.mrb[0].mxu0
      %v2607 = vadd.f32 0.0, %v2606
      %v2608 = vpop.f32.mrb[0].mxu0
      %v2609 = vpop.f32.mrb[0].mxu0
      %v2610 = vadd.f32 0.0, %v2609
      %v2611 = vpop.f32.mrb[0].mxu0
      %2612 = vmatprep.mubr.bf16.mxu0 0
      %2613 = vmatmul.mubr.bf16.gmra.mrb[0].mxu0 %v2559
      %v2614 = vpop.f32.mrb[0].mxu0
      %v2615 = vadd.f32 0.0, %v2614
      %v2616 = vpop.f32.mrb[0].mxu0
      %v2617 = vpop.f32.mrb[0].mxu0
      %v2618 = vadd.f32 0.0, %v2617
      %v2619 = vpop.f32.mrb[0].mxu0
      %2620 = vmatprep.mubr.bf16.mxu0 0
      %2621 = vmatmul.mubr.bf16.gmra.mrb[0].mxu0 %v2562
      %v2622 = vpop.f32.mrb[0].mxu0
      %v2623 = vadd.f32 0.0, %v2622
      %v2624 = vpop.f32.mrb[0].mxu0
      %v2625 = vpop.f32.mrb[0].mxu0
      %v2626 = vadd.f32 0.0, %v2625
      %v2627 = vpop.f32.mrb[0].mxu0
      %2628 = vdwg.mxu0
      %v2629 = vadd.f32 %v2515, %v2599
      %v2630 = vadd.f32 %v2516, %v2602
      %v2631 = vadd.f32 %v2517, %v2607
      %v2632 = vadd.f32 %v2518, %v2610
      %v2633 = vadd.f32 %v2519, %v2615
      %v2634 = vadd.f32 %v2520, %v2618
      %v2635 = vadd.f32 %v2521, %v2623
      %v2636 = vadd.f32 %v2522, %v2626
      %v2637 = vmul.f32 %v1960, %v1431
      %v2638 = vmul.f32 %v1959, %v1436
      %v2639 = vmul.f32 %v1958, %v1441
      %v2640 = vmul.f32 %v1957, %v1446
      %v2641 = vmul.f32 %v1956, %v1451
      %v2642 = vmul.f32 %v1955, %v1456
      %v2643 = vmul.f32 %v1954, %v1461
      %v2644 = vmul.f32 %v1961, %v1466
      %v2645 = vpack.c.bf16 %v2638, %v2637
      %v2646 = vpack.c.bf16 %v2640, %v2639
      %v2647 = vpack.c.bf16 %v2642, %v2641
      %v2648 = vpack.c.bf16 %v2644, %v2643
      %s2649 = scalar_lea.vmem %s5, 96
      %v2650 = vld [vmem:[%s2649] sm:$0xf]
      %v2651 = vld [vmem:[%s2649 + $0x4] sm:$0xf]
      %v2652 = vld [vmem:[%s2649 + $0x8] sm:$0xf]
      %v2653 = vld [vmem:[%s2649 + $0xc] sm:$0xf]
      %v2658 = vunpack.c.l.b16 %v2650
      %v2659 = vunpack.c.l.b16 %v2651
      %v2660 = vunpack.c.l.b16 %v2652
      %v2661 = vunpack.c.l.b16 %v2653
      %v2662 = vpack.c.b16 %v2659, %v2658
      %v2663 = vpack.c.b16 %v2661, %v2660
      %v2667 = vsel %vm640, %v2645, 0
      %v2670 = vsel %vm640, %v2646, 0
      %v2673 = vsel %vm640, %v2647, 0
      %v2676 = vsel %vm640, %v2648, 0
      %2678 = vmatprep.subr.bf16.mxu0 0
      %2679 = vmatpush1.bf16.msra.mxu0 %v2662
      %2680 = vmatprep.subr.bf16.mxu0 0
      %2681 = vmatpush1.bf16.msra.mxu0 %v2663
      %2682 = vmatprep.subr.bf16.mxu0 0
      %2683 = vmatpush1.bf16.msra.mxu0 0
      %2684 = vmatprep.subr.bf16.mxu0 0
      %2685 = vmatpush1.bf16.msra.mxu0 0
      %2686 = vmatprep.subr.bf16.mxu0 0
      %2687 = vmatpush1.bf16.msra.mxu0 0
      %2688 = vmatprep.subr.bf16.mxu0 0
      %2689 = vmatpush1.bf16.msra.mxu0 0
      %2690 = vmatprep.subr.bf16.mxu0 0
      %2691 = vmatpush1.bf16.msra.mxu0 0
      %2692 = vmatprep.subr.bf16.mxu0 0
      %2693 = vmatpush1.bf16.msra.mxu0 0
      %2694 = vmatprep.subr.bf16.mxu0 0
      %2695 = vmatpush1.bf16.msra.mxu0 0
      %2696 = vmatprep.subr.bf16.mxu0 0
      %2697 = vmatpush1.bf16.msra.mxu0 0
      %2698 = vmatprep.subr.bf16.mxu0 0
      %2699 = vmatpush1.bf16.msra.mxu0 0
      %2700 = vmatprep.subr.bf16.mxu0 0
      %2701 = vmatpush1.bf16.msra.mxu0 0
      %2702 = vmatprep.subr.bf16.mxu0 0
      %2703 = vmatpush1.bf16.msra.mxu0 0
      %2704 = vmatprep.subr.bf16.mxu0 0
      %2705 = vmatpush1.bf16.msra.mxu0 0
      %2706 = vmatprep.subr.bf16.mxu0 0
      %2707 = vmatpush1.bf16.msra.mxu0 0
      %2708 = vmatprep.subr.bf16.mxu0 0
      %2709 = vmatpush1.bf16.msra.mxu0 0
      %2710 = vmatprep.mubr.bf16.mxu0 0
      %2711 = vmatmul.mubr.bf16.gmra.mrb[0].mxu0 %v2667
      %v2712 = vpop.f32.mrb[0].mxu0
      %v2713 = vadd.f32 0.0, %v2712
      %v2714 = vpop.f32.mrb[0].mxu0
      %v2715 = vpop.f32.mrb[0].mxu0
      %v2716 = vadd.f32 0.0, %v2715
      %v2717 = vpop.f32.mrb[0].mxu0
      %2718 = vmatprep.mubr.bf16.mxu0 0
      %2719 = vmatmul.mubr.bf16.gmra.mrb[0].mxu0 %v2670
      %v2720 = vpop.f32.mrb[0].mxu0
      %v2721 = vadd.f32 0.0, %v2720
      %v2722 = vpop.f32.mrb[0].mxu0
      %v2723 = vpop.f32.mrb[0].mxu0
      %v2724 = vadd.f32 0.0, %v2723
      %v2725 = vpop.f32.mrb[0].mxu0
      %2726 = vmatprep.mubr.bf16.mxu0 0
      %2727 = vmatmul.mubr.bf16.gmra.mrb[0].mxu0 %v2673
      %v2728 = vpop.f32.mrb[0].mxu0
      %v2729 = vadd.f32 0.0, %v2728
      %v2730 = vpop.f32.mrb[0].mxu0
      %v2731 = vpop.f32.mrb[0].mxu0
      %v2732 = vadd.f32 0.0, %v2731
      %v2733 = vpop.f32.mrb[0].mxu0
      %2734 = vmatprep.mubr.bf16.mxu0 0
      %2735 = vmatmul.mubr.bf16.gmra.mrb[0].mxu0 %v2676
      %v2736 = vpop.f32.mrb[0].mxu0
      %v2737 = vadd.f32 0.0, %v2736
      %v2738 = vpop.f32.mrb[0].mxu0
      %v2739 = vpop.f32.mrb[0].mxu0
      %v2740 = vadd.f32 0.0, %v2739
      %v2741 = vpop.f32.mrb[0].mxu0
      %2742 = vdwg.mxu0
      %v2743 = vadd.f32 %v2629, %v2713
      %v2744 = vadd.f32 %v2630, %v2716
      %v2745 = vadd.f32 %v2631, %v2721
      %v2746 = vadd.f32 %v2632, %v2724
      %v2747 = vadd.f32 %v2633, %v2729
      %v2748 = vadd.f32 %v2634, %v2732
      %v2749 = vadd.f32 %v2635, %v2737
      %v2750 = vadd.f32 %v2636, %v2740
      %v2751 = vmul.f32 %v1937, %v1594
      %v2752 = vmul.f32 %v1938, %v1599
      %v2753 = vmul.f32 %v1939, %v1604
      %v2754 = vmul.f32 %v1940, %v1609
      %v2755 = vmul.f32 %v1941, %v1614
      %v2756 = vmul.f32 %v1942, %v1619
      %v2757 = vmul.f32 %v1943, %v1624
      %v2758 = vmul.f32 %v1936, %v1629
      %v2759 = vpack.c.bf16 %v2752, %v2751
      %v2760 = vpack.c.bf16 %v2754, %v2753
      %v2761 = vpack.c.bf16 %v2756, %v2755
      %v2762 = vpack.c.bf16 %v2758, %v2757
      %s2763 = scalar_lea.vmem %s5, 112
      %v2764 = vld [vmem:[%s2763] sm:$0xf]
      %v2765 = vld [vmem:[%s2763 + $0x4] sm:$0xf]
      %v2766 = vld [vmem:[%s2763 + $0x8] sm:$0xf]
      %v2767 = vld [vmem:[%s2763 + $0xc] sm:$0xf]
      %v2772 = vunpack.c.l.b16 %v2764
      %v2773 = vunpack.c.l.b16 %v2765
      %v2774 = vunpack.c.l.b16 %v2766
      %v2775 = vunpack.c.l.b16 %v2767
      %v2776 = vpack.c.b16 %v2773, %v2772
      %v2777 = vpack.c.b16 %v2775, %v2774
      %v2781 = vsel %vm640, %v2759, 0
      %v2784 = vsel %vm640, %v2760, 0
      %v2787 = vsel %vm640, %v2761, 0
      %v2790 = vsel %vm640, %v2762, 0
      %2792 = vmatprep.subr.bf16.mxu0 0
      %2793 = vmatpush1.bf16.msra.mxu0 %v2776
      %2794 = vmatprep.subr.bf16.mxu0 0
      %2795 = vmatpush1.bf16.msra.mxu0 %v2777
      %2796 = vmatprep.subr.bf16.mxu0 0
      %2797 = vmatpush1.bf16.msra.mxu0 0
      %2798 = vmatprep.subr.bf16.mxu0 0
      %2799 = vmatpush1.bf16.msra.mxu0 0
      %2800 = vmatprep.subr.bf16.mxu0 0
      %2801 = vmatpush1.bf16.msra.mxu0 0
      %2802 = vmatprep.subr.bf16.mxu0 0
      %2803 = vmatpush1.bf16.msra.mxu0 0
      %2804 = vmatprep.subr.bf16.mxu0 0
      %2805 = vmatpush1.bf16.msra.mxu0 0
      %2806 = vmatprep.subr.bf16.mxu0 0
      %2807 = vmatpush1.bf16.msra.mxu0 0
      %2808 = vmatprep.subr.bf16.mxu0 0
      %2809 = vmatpush1.bf16.msra.mxu0 0
      %2810 = vmatprep.subr.bf16.mxu0 0
      %2811 = vmatpush1.bf16.msra.mxu0 0
      %2812 = vmatprep.subr.bf16.mxu0 0
      %2813 = vmatpush1.bf16.msra.mxu0 0
      %2814 = vmatprep.subr.bf16.mxu0 0
      %2815 = vmatpush1.bf16.msra.mxu0 0
      %2816 = vmatprep.subr.bf16.mxu0 0
      %2817 = vmatpush1.bf16.msra.mxu0 0
      %2818 = vmatprep.subr.bf16.mxu0 0
      %2819 = vmatpush1.bf16.msra.mxu0 0
      %2820 = vmatprep.subr.bf16.mxu0 0
      %2821 = vmatpush1.bf16.msra.mxu0 0
      %2822 = vmatprep.subr.bf16.mxu0 0
      %2823 = vmatpush1.bf16.msra.mxu0 0
      %2824 = vmatprep.mubr.bf16.mxu0 0
      %2825 = vmatmul.mubr.bf16.gmra.mrb[0].mxu0 %v2781
      %v2826 = vpop.f32.mrb[0].mxu0
      %v2827 = vadd.f32 0.0, %v2826
      %v2828 = vpop.f32.mrb[0].mxu0
      %v2829 = vpop.f32.mrb[0].mxu0
      %v2830 = vadd.f32 0.0, %v2829
      %v2831 = vpop.f32.mrb[0].mxu0
      %2832 = vmatprep.mubr.bf16.mxu0 0
      %2833 = vmatmul.mubr.bf16.gmra.mrb[0].mxu0 %v2784
      %v2834 = vpop.f32.mrb[0].mxu0
      %v2835 = vadd.f32 0.0, %v2834
      %v2836 = vpop.f32.mrb[0].mxu0
      %v2837 = vpop.f32.mrb[0].mxu0
      %v2838 = vadd.f32 0.0, %v2837
      %v2839 = vpop.f32.mrb[0].mxu0
      %2840 = vmatprep.mubr.bf16.mxu0 0
      %2841 = vmatmul.mubr.bf16.gmra.mrb[0].mxu0 %v2787
      %v2842 = vpop.f32.mrb[0].mxu0
      %v2843 = vadd.f32 0.0, %v2842
      %v2844 = vpop.f32.mrb[0].mxu0
      %v2845 = vpop.f32.mrb[0].mxu0
      %v2846 = vadd.f32 0.0, %v2845
      %v2847 = vpop.f32.mrb[0].mxu0
      %2848 = vmatprep.mubr.bf16.mxu0 0
      %2849 = vmatmul.mubr.bf16.gmra.mrb[0].mxu0 %v2790
      %v2850 = vpop.f32.mrb[0].mxu0
      %v2851 = vadd.f32 0.0, %v2850
      %v2852 = vpop.f32.mrb[0].mxu0
      %v2853 = vpop.f32.mrb[0].mxu0
      %v2854 = vadd.f32 0.0, %v2853
      %v2855 = vpop.f32.mrb[0].mxu0
      %2856 = vdwg.mxu0
      %v2857 = vadd.f32 %v2743, %v2827
      %v2858 = vadd.f32 %v2744, %v2830
      %v2859 = vadd.f32 %v2745, %v2835
      %v2860 = vadd.f32 %v2746, %v2838
      %v2861 = vadd.f32 %v2747, %v2843
      %v2862 = vadd.f32 %v2748, %v2846
      %v2863 = vadd.f32 %v2749, %v2851
      %v2864 = vadd.f32 %v2750, %v2854
      %v2865 = vmul.f32 %v2186, %v1757
      %v2866 = vmul.f32 %v2185, %v1762
      %v2867 = vmul.f32 %v2184, %v1767
      %v2868 = vmul.f32 %v2183, %v1772
      %v2869 = vmul.f32 %v2182, %v1777
      %v2870 = vmul.f32 %v2181, %v1782
      %v2871 = vmul.f32 %v2188, %v1787
      %v2872 = vmul.f32 %v2187, %v1792
      %v2873 = vpack.c.bf16 %v2866, %v2865
      %v2874 = vpack.c.bf16 %v2868, %v2867
      %v2875 = vpack.c.bf16 %v2870, %v2869
      %v2876 = vpack.c.bf16 %v2872, %v2871
      %s2877 = scalar_lea.vmem %s5, 128
      %v2878 = vld [vmem:[%s2877] sm:$0xf]
      %v2879 = vld [vmem:[%s2877 + $0x4] sm:$0xf]
      %v2880 = vld [vmem:[%s2877 + $0x8] sm:$0xf]
      %v2881 = vld [vmem:[%s2877 + $0xc] sm:$0xf]
      %v2886 = vunpack.c.l.b16 %v2878
      %v2887 = vunpack.c.l.b16 %v2879
      %v2888 = vunpack.c.l.b16 %v2880
      %v2889 = vunpack.c.l.b16 %v2881
      %v2890 = vpack.c.b16 %v2887, %v2886
      %v2891 = vpack.c.b16 %v2889, %v2888
      %v2895 = vsel %vm640, %v2873, 0
      %v2898 = vsel %vm640, %v2874, 0
      %v2901 = vsel %vm640, %v2875, 0
      %v2904 = vsel %vm640, %v2876, 0
      %2906 = vmatprep.subr.bf16.mxu0 0
      %2907 = vmatpush1.bf16.msra.mxu0 %v2890
      %2908 = vmatprep.subr.bf16.mxu0 0
      %2909 = vmatpush1.bf16.msra.mxu0 %v2891
      %2910 = vmatprep.subr.bf16.mxu0 0
      %2911 = vmatpush1.bf16.msra.mxu0 0
      %2912 = vmatprep.subr.bf16.mxu0 0
      %2913 = vmatpush1.bf16.msra.mxu0 0
      %2914 = vmatprep.subr.bf16.mxu0 0
      %2915 = vmatpush1.bf16.msra.mxu0 0
      %2916 = vmatprep.subr.bf16.mxu0 0
      %2917 = vmatpush1.bf16.msra.mxu0 0
      %2918 = vmatprep.subr.bf16.mxu0 0
      %2919 = vmatpush1.bf16.msra.mxu0 0
      %2920 = vmatprep.subr.bf16.mxu0 0
      %2921 = vmatpush1.bf16.msra.mxu0 0
      %2922 = vmatprep.subr.bf16.mxu0 0
      %2923 = vmatpush1.bf16.msra.mxu0 0
      %2924 = vmatprep.subr.bf16.mxu0 0
      %2925 = vmatpush1.bf16.msra.mxu0 0
      %2926 = vmatprep.subr.bf16.mxu0 0
      %2927 = vmatpush1.bf16.msra.mxu0 0
      %2928 = vmatprep.subr.bf16.mxu0 0
      %2929 = vmatpush1.bf16.msra.mxu0 0
      %2930 = vmatprep.subr.bf16.mxu0 0
      %2931 = vmatpush1.bf16.msra.mxu0 0
      %2932 = vmatprep.subr.bf16.mxu0 0
      %2933 = vmatpush1.bf16.msra.mxu0 0
      %2934 = vmatprep.subr.bf16.mxu0 0
      %2935 = vmatpush1.bf16.msra.mxu0 0
      %2936 = vmatprep.subr.bf16.mxu0 0
      %2937 = vmatpush1.bf16.msra.mxu0 0
      %2938 = vmatprep.mubr.bf16.mxu0 0
      %2939 = vmatmul.mubr.bf16.gmra.mrb[0].mxu0 %v2895
      %v2940 = vpop.f32.mrb[0].mxu0
      %v2941 = vadd.f32 0.0, %v2940
      %v2942 = vpop.f32.mrb[0].mxu0
      %v2943 = vpop.f32.mrb[0].mxu0
      %v2944 = vadd.f32 0.0, %v2943
      %v2945 = vpop.f32.mrb[0].mxu0
      %2946 = vmatprep.mubr.bf16.mxu0 0
      %2947 = vmatmul.mubr.bf16.gmra.mrb[0].mxu0 %v2898
      %v2948 = vpop.f32.mrb[0].mxu0
      %v2949 = vadd.f32 0.0, %v2948
      %v2950 = vpop.f32.mrb[0].mxu0
      %v2951 = vpop.f32.mrb[0].mxu0
      %v2952 = vadd.f32 0.0, %v2951
      %v2953 = vpop.f32.mrb[0].mxu0
      %2954 = vmatprep.mubr.bf16.mxu0 0
      %2955 = vmatmul.mubr.bf16.gmra.mrb[0].mxu0 %v2901
      %v2956 = vpop.f32.mrb[0].mxu0
      %v2957 = vadd.f32 0.0, %v2956
      %v2958 = vpop.f32.mrb[0].mxu0
      %v2959 = vpop.f32.mrb[0].mxu0
      %v2960 = vadd.f32 0.0, %v2959
      %v2961 = vpop.f32.mrb[0].mxu0
      %2962 = vmatprep.mubr.bf16.mxu0 0
      %2963 = vmatmul.mubr.bf16.gmra.mrb[0].mxu0 %v2904
      %v2964 = vpop.f32.mrb[0].mxu0
      %v2965 = vadd.f32 0.0, %v2964
      %v2966 = vpop.f32.mrb[0].mxu0
      %v2967 = vpop.f32.mrb[0].mxu0
      %v2968 = vadd.f32 0.0, %v2967
      %v2969 = vpop.f32.mrb[0].mxu0
      %2970 = vdwg.mxu0
      %v2971 = vadd.f32 %v2857, %v2941
      %v2972 = vadd.f32 %v2858, %v2944
      %v2973 = vadd.f32 %v2859, %v2949
      %v2974 = vadd.f32 %v2860, %v2952
      %v2975 = vadd.f32 %v2861, %v2957
      %v2976 = vadd.f32 %v2862, %v2960
      %v2977 = vadd.f32 %v2863, %v2965
      %v2978 = vadd.f32 %v2864, %v2968
      %v2980 = vlaneseq
      %v2981 = vshrl.u32 %v2980, 7
      %v2982 = vsub.s32 0, %v2981
      %v2983 = vrot.slane %v1944, %v2982
      %v2985 = vmul.f32 %v2971, %v2983
      %v2986 = vmul.f32 %v2972, %v2983
      %v2987 = vmul.f32 %v2973, %v2983
      %v2988 = vmul.f32 %v2974, %v2983
      %v2989 = vmul.f32 %v2975, %v2983
      %v2990 = vmul.f32 %v2976, %v2983
      %v2991 = vmul.f32 %v2977, %v2983
      %v2992 = vmul.f32 %v2978, %v2983
      %v2994 = vlaneseq
      %v2995 = vshrl.u32 %v2994, 7
      %v2996 = vsub.s32 0, %v2995
      %v2997 = vrot.slane %v1945, %v2996
      %v2999 = vadd.f32 %v2985, %v2997
      %v3000 = vadd.f32 %v2986, %v2997
      %v3001 = vadd.f32 %v2987, %v2997
      %v3002 = vadd.f32 %v2988, %v2997
      %v3003 = vadd.f32 %v2989, %v2997
      %v3004 = vadd.f32 %v2990, %v2997
      %v3005 = vadd.f32 %v2991, %v2997
      %v3006 = vadd.f32 %v2992, %v2997
      %v3007 = vsel %vm640, %v2999, 0.0
      %v3008 = vsel %vm640, %v3000, 0.0
      %v3009 = vadd.f32 %v3007, %v3008
      %v3010 = vsel %vm640, %v3001, 0.0
      %v3011 = vadd.f32 %v3009, %v3010
      %v3012 = vsel %vm640, %v3002, 0.0
      %v3013 = vadd.f32 %v3011, %v3012
      %v3014 = vsel %vm640, %v3003, 0.0
      %v3015 = vadd.f32 %v3013, %v3014
      %v3016 = vsel %vm640, %v3004, 0.0
      %v3017 = vadd.f32 %v3015, %v3016
      %v3018 = vsel %vm640, %v3005, 0.0
      %v3019 = vadd.f32 %v3017, %v3018
      %v3020 = vsel %vm640, %v3006, 0.0
      %v3021 = vadd.f32 %v3019, %v3020
      %v3022 = vrot.slane %v3021, 4
      %v3023 = vadd.f32 %v3021, %v3022
      %v3024 = vrot.slane %v3023, 2
      %v3025 = vadd.f32 %v3023, %v3024
      %v3026 = vrot.slane %v3025, 1
      %v3027 = vadd.f32 %v3025, %v3026
      %v3028 = vrcp.pop 64.0
      %v3029 = vmul.f32 %v3027, %v3028
      %v3030 = vld [vmem:[%s8] sm:$0xff]
      %v3031 = vld [vmem:[%s8 + $0x8] sm:$0xff]
      %v3032 = vld [vmem:[%s8 + $0x10] sm:$0xff]
      %v3033 = vld [vmem:[%s8 + $0x18] sm:$0xff]
      %v3034 = vld [vmem:[%s9] sm:$0x1]
      %v3036 = vsel %vm640, %v3029, 0
      %3038 = vmatprep.subr.mxu0 0.0
      %3039 = vmatpush1.msra.mxu0 %v3030
      %3040 = vmatprep.subr.mxu0 0.0
      %3041 = vmatpush1.msra.mxu0 %v3031
      %3042 = vmatprep.subr.mxu0 0.0
      %3043 = vmatpush1.msra.mxu0 %v3032
      %3044 = vmatprep.subr.mxu0 0.0
      %3045 = vmatpush1.msra.mxu0 %v3033
      %3046 = vmatprep.subr.mxu0 0.0
      %3047 = vmatpush1.msra.mxu0 0.0
      %3048 = vmatprep.subr.mxu0 0.0
      %3049 = vmatpush1.msra.mxu0 0.0
      %3050 = vmatprep.subr.mxu0 0.0
      %3051 = vmatpush1.msra.mxu0 0.0
      %3052 = vmatprep.subr.mxu0 0.0
      %3053 = vmatpush1.msra.mxu0 0.0
      %3054 = vmatprep.subr.mxu0 0.0
      %3055 = vmatpush1.msra.mxu0 0.0
      %3056 = vmatprep.subr.mxu0 0.0
      %3057 = vmatpush1.msra.mxu0 0.0
      %3058 = vmatprep.subr.mxu0 0.0
      %3059 = vmatpush1.msra.mxu0 0.0
      %3060 = vmatprep.subr.mxu0 0.0
      %3061 = vmatpush1.msra.mxu0 0.0
      %3062 = vmatprep.subr.mxu0 0.0
      %3063 = vmatpush1.msra.mxu0 0.0
      %3064 = vmatprep.subr.mxu0 0.0
      %3065 = vmatpush1.msra.mxu0 0.0
      %3066 = vmatprep.subr.mxu0 0.0
      %3067 = vmatpush1.msra.mxu0 0.0
      %3068 = vmatprep.subr.mxu0 0.0
      %3069 = vmatpush1.msra.mxu0 0.0
      %3070 = vmatprep.subr.mxu0 0.0
      %3071 = vmatpush1.msra.mxu0 0.0
      %3072 = vmatprep.subr.mxu0 0.0
      %3073 = vmatpush1.msra.mxu0 0.0
      %3074 = vmatprep.subr.mxu0 0.0
      %3075 = vmatpush1.msra.mxu0 0.0
      %3076 = vmatprep.subr.mxu0 0.0
      %3077 = vmatpush1.msra.mxu0 0.0
      %3078 = vmatprep.subr.mxu0 0.0
      %3079 = vmatpush1.msra.mxu0 0.0
      %3080 = vmatprep.subr.mxu0 0.0
      %3081 = vmatpush1.msra.mxu0 0.0
      %3082 = vmatprep.subr.mxu0 0.0
      %3083 = vmatpush1.msra.mxu0 0.0
      %3084 = vmatprep.subr.mxu0 0.0
      %3085 = vmatpush1.msra.mxu0 0.0
      %3086 = vmatprep.subr.mxu0 0.0
      %3087 = vmatpush1.msra.mxu0 0.0
      %3088 = vmatprep.subr.mxu0 0.0
      %3089 = vmatpush1.msra.mxu0 0.0
      %3090 = vmatprep.subr.mxu0 0.0
      %3091 = vmatpush1.msra.mxu0 0.0
      %3092 = vmatprep.subr.mxu0 0.0
      %3093 = vmatpush1.msra.mxu0 0.0
      %3094 = vmatprep.subr.mxu0 0.0
      %3095 = vmatpush1.msra.mxu0 0.0
      %3096 = vmatprep.subr.mxu0 0.0
      %3097 = vmatpush1.msra.mxu0 0.0
      %3098 = vmatprep.subr.mxu0 0.0
      %3099 = vmatpush1.msra.mxu0 0.0
      %3100 = vmatprep.subr.mxu0 0.0
      %3101 = vmatpush1.msra.mxu0 0.0
      %3102 = vmatprep.mubr.f32.mxu0 0.0
      %3103 = vmatmul.mubr.f32.gmra.mrb[0].mxu0 %v3036
      %v3104 = vpop.f32.mrb[0].mxu0
      %v3105 = vadd.f32 %v3034, %v3104
      %v3106 = vpop.f32.mrb[0].mxu0
      %3107 = vdwg.mxu0
      %v3108 = vmax.f32 %v3105, 0.0
      %v3109 = vld [vmem:[%s10] sm:$0xff]
      %v3110 = vld [vmem:[%s11] sm:$0x1]
      %vm3111 = vcmask 64512
      %v3113 = vsel %vm3111, %v3108, 0
      %3115 = vmatprep.subr.mxu0 0.0
      %3116 = vmatpush1.msra.mxu0 %v3109
      %3117 = vmatprep.subr.mxu0 0.0
      %3118 = vmatpush1.msra.mxu0 0.0
      %3119 = vmatprep.subr.mxu0 0.0
      %3120 = vmatpush1.msra.mxu0 0.0
      %3121 = vmatprep.subr.mxu0 0.0
      %3122 = vmatpush1.msra.mxu0 0.0
      %3123 = vmatprep.subr.mxu0 0.0
      %3124 = vmatpush1.msra.mxu0 0.0
      %3125 = vmatprep.subr.mxu0 0.0
      %3126 = vmatpush1.msra.mxu0 0.0
      %3127 = vmatprep.subr.mxu0 0.0
      %3128 = vmatpush1.msra.mxu0 0.0
      %3129 = vmatprep.subr.mxu0 0.0
      %3130 = vmatpush1.msra.mxu0 0.0
      %3131 = vmatprep.subr.mxu0 0.0
      %3132 = vmatpush1.msra.mxu0 0.0
      %3133 = vmatprep.subr.mxu0 0.0
      %3134 = vmatpush1.msra.mxu0 0.0
      %3135 = vmatprep.subr.mxu0 0.0
      %3136 = vmatpush1.msra.mxu0 0.0
      %3137 = vmatprep.subr.mxu0 0.0
      %3138 = vmatpush1.msra.mxu0 0.0
      %3139 = vmatprep.subr.mxu0 0.0
      %3140 = vmatpush1.msra.mxu0 0.0
      %3141 = vmatprep.subr.mxu0 0.0
      %3142 = vmatpush1.msra.mxu0 0.0
      %3143 = vmatprep.subr.mxu0 0.0
      %3144 = vmatpush1.msra.mxu0 0.0
      %3145 = vmatprep.subr.mxu0 0.0
      %3146 = vmatpush1.msra.mxu0 0.0
      %3147 = vmatprep.subr.mxu0 0.0
      %3148 = vmatpush1.msra.mxu0 0.0
      %3149 = vmatprep.subr.mxu0 0.0
      %3150 = vmatpush1.msra.mxu0 0.0
      %3151 = vmatprep.subr.mxu0 0.0
      %3152 = vmatpush1.msra.mxu0 0.0
      %3153 = vmatprep.subr.mxu0 0.0
      %3154 = vmatpush1.msra.mxu0 0.0
      %3155 = vmatprep.subr.mxu0 0.0
      %3156 = vmatpush1.msra.mxu0 0.0
      %3157 = vmatprep.subr.mxu0 0.0
      %3158 = vmatpush1.msra.mxu0 0.0
      %3159 = vmatprep.subr.mxu0 0.0
      %3160 = vmatpush1.msra.mxu0 0.0
      %3161 = vmatprep.subr.mxu0 0.0
      %3162 = vmatpush1.msra.mxu0 0.0
      %3163 = vmatprep.subr.mxu0 0.0
      %3164 = vmatpush1.msra.mxu0 0.0
      %3165 = vmatprep.subr.mxu0 0.0
      %3166 = vmatpush1.msra.mxu0 0.0
      %3167 = vmatprep.subr.mxu0 0.0
      %3168 = vmatpush1.msra.mxu0 0.0
      %3169 = vmatprep.subr.mxu0 0.0
      %3170 = vmatpush1.msra.mxu0 0.0
      %3171 = vmatprep.subr.mxu0 0.0
      %3172 = vmatpush1.msra.mxu0 0.0
      %3173 = vmatprep.subr.mxu0 0.0
      %3174 = vmatpush1.msra.mxu0 0.0
      %3175 = vmatprep.subr.mxu0 0.0
      %3176 = vmatpush1.msra.mxu0 0.0
      %3177 = vmatprep.subr.mxu0 0.0
      %3178 = vmatpush1.msra.mxu0 0.0
      %3179 = vmatprep.mubr.f32.mxu0 0.0
      %3180 = vmatmul.mubr.f32.gmra.mrb[0].mxu0 %v3113
      %v3181 = vpop.f32.mrb[0].mxu0
      %v3182 = vadd.f32 %v3110, %v3181
      %v3183 = vpop.f32.mrb[0].mxu0
      %3184 = vdwg.mxu0
      %v3185 = vxor.u32 %v3182, 2147483648
      %v3186 = vmul.f32 %v3185, 1.442695
      %v3187 = vpow.pop %v3186
      %v3188 = vadd.f32 %v3187, 1.0
      %v3189 = vrcp.pop %v3188
      %v3190 = vmul.f32 1.0, %v3189
      %v3191 = vld [vmem:[%s12] sm:$0xff]
      %v3192 = vld [vmem:[%s13] sm:$0x1]
      %3193 = vmatprep.subr.mxu0 0.0
      %3194 = vmatpush1.msra.mxu0 %v3191
      %3195 = vmatprep.subr.mxu0 0.0
      %3196 = vmatpush1.msra.mxu0 0.0
      %3197 = vmatprep.subr.mxu0 0.0
      %3198 = vmatpush1.msra.mxu0 0.0
      %3199 = vmatprep.subr.mxu0 0.0
      %3200 = vmatpush1.msra.mxu0 0.0
      %3201 = vmatprep.subr.mxu0 0.0
      %3202 = vmatpush1.msra.mxu0 0.0
      %3203 = vmatprep.subr.mxu0 0.0
      %3204 = vmatpush1.msra.mxu0 0.0
      %3205 = vmatprep.subr.mxu0 0.0
      %3206 = vmatpush1.msra.mxu0 0.0
      %3207 = vmatprep.subr.mxu0 0.0
      %3208 = vmatpush1.msra.mxu0 0.0
      %3209 = vmatprep.subr.mxu0 0.0
      %3210 = vmatpush1.msra.mxu0 0.0
      %3211 = vmatprep.subr.mxu0 0.0
      %3212 = vmatpush1.msra.mxu0 0.0
      %3213 = vmatprep.subr.mxu0 0.0
      %3214 = vmatpush1.msra.mxu0 0.0
      %3215 = vmatprep.subr.mxu0 0.0
      %3216 = vmatpush1.msra.mxu0 0.0
      %3217 = vmatprep.subr.mxu0 0.0
      %3218 = vmatpush1.msra.mxu0 0.0
      %3219 = vmatprep.subr.mxu0 0.0
      %3220 = vmatpush1.msra.mxu0 0.0
      %3221 = vmatprep.subr.mxu0 0.0
      %3222 = vmatpush1.msra.mxu0 0.0
      %3223 = vmatprep.subr.mxu0 0.0
      %3224 = vmatpush1.msra.mxu0 0.0
      %3225 = vmatprep.subr.mxu0 0.0
      %3226 = vmatpush1.msra.mxu0 0.0
      %3227 = vmatprep.subr.mxu0 0.0
      %3228 = vmatpush1.msra.mxu0 0.0
      %3229 = vmatprep.subr.mxu0 0.0
      %3230 = vmatpush1.msra.mxu0 0.0
      %3231 = vmatprep.subr.mxu0 0.0
      %3232 = vmatpush1.msra.mxu0 0.0
      %3233 = vmatprep.subr.mxu0 0.0
      %3234 = vmatpush1.msra.mxu0 0.0
      %3235 = vmatprep.subr.mxu0 0.0
      %3236 = vmatpush1.msra.mxu0 0.0
      %3237 = vmatprep.subr.mxu0 0.0
      %3238 = vmatpush1.msra.mxu0 0.0
      %3239 = vmatprep.subr.mxu0 0.0
      %3240 = vmatpush1.msra.mxu0 0.0
      %3241 = vmatprep.subr.mxu0 0.0
      %3242 = vmatpush1.msra.mxu0 0.0
      %3243 = vmatprep.subr.mxu0 0.0
      %3244 = vmatpush1.msra.mxu0 0.0
      %3245 = vmatprep.subr.mxu0 0.0
      %3246 = vmatpush1.msra.mxu0 0.0
      %3247 = vmatprep.subr.mxu0 0.0
      %3248 = vmatpush1.msra.mxu0 0.0
      %3249 = vmatprep.subr.mxu0 0.0
      %3250 = vmatpush1.msra.mxu0 0.0
      %3251 = vmatprep.subr.mxu0 0.0
      %3252 = vmatpush1.msra.mxu0 0.0
      %3253 = vmatprep.subr.mxu0 0.0
      %3254 = vmatpush1.msra.mxu0 0.0
      %3255 = vmatprep.subr.mxu0 0.0
      %3256 = vmatpush1.msra.mxu0 0.0
      %3257 = vmatprep.mubr.f32.mxu0 0.0
      %3258 = vmatmul.mubr.f32.gmra.mrb[0].mxu0 %v3113
      %v3259 = vpop.f32.mrb[0].mxu0
      %v3260 = vadd.f32 %v3192, %v3259
      %v3261 = vpop.f32.mrb[0].mxu0
      %3262 = vdwg.mxu0
      %v3263 = vlaneseq
      %v3264 = vshrl.u32 %v3263, 7
      %v3265 = vsub.s32 0, %v3264
      %v3266 = vrot.slane %v3190, %v3265
      %v3267 = vmul.f32 %v2999, %v3266
      %v3268 = vmul.f32 %v3000, %v3266
      %v3269 = vmul.f32 %v3001, %v3266
      %v3270 = vmul.f32 %v3002, %v3266
      %v3271 = vmul.f32 %v3003, %v3266
      %v3272 = vmul.f32 %v3004, %v3266
      %v3273 = vmul.f32 %v3005, %v3266
      %v3274 = vmul.f32 %v3006, %v3266
      %v3275 = vlaneseq
      %v3276 = vshrl.u32 %v3275, 7
      %v3277 = vsub.s32 0, %v3276
      %v3278 = vrot.slane %v3260, %v3277
      %v3279 = vadd.f32 %v3267, %v3278
      %v3280 = vadd.f32 %v3268, %v3278
      %v3281 = vadd.f32 %v3269, %v3278
      %v3282 = vadd.f32 %v3270, %v3278
      %v3283 = vadd.f32 %v3271, %v3278
      %v3284 = vadd.f32 %v3272, %v3278
      %v3285 = vadd.f32 %v3273, %v3278
      %v3286 = vadd.f32 %v3274, %v3278
      %v3287 = vadd.f32 %v3279, %v469
      %v3288 = vadd.f32 %v3280, %v470
      %v3289 = vadd.f32 %v3281, %v471
      %v3290 = vadd.f32 %v3282, %v472
      %v3291 = vadd.f32 %v3283, %v473
      %v3292 = vadd.f32 %v3284, %v474
      %v3293 = vadd.f32 %v3285, %v475
      %v3294 = vadd.f32 %v3286, %v476
      %v3295 = vmax.f32 %v3287, 0.0
      %v3296 = vmax.f32 %v3288, 0.0
      %v3297 = vmax.f32 %v3289, 0.0
      %v3298 = vmax.f32 %v3290, 0.0
      %v3299 = vmax.f32 %v3291, 0.0
      %v3300 = vmax.f32 %v3292, 0.0
      %v3301 = vmax.f32 %v3293, 0.0
      %v3302 = vmax.f32 %v3294, 0.0
      %3303 = vst.msk [vmem:[%s467] sm:$0xff] %vm640, %v3295
      %3304 = vst.msk [vmem:[%s467 + $0x8] sm:$0xff] %vm640, %v3296
      %3305 = vst.msk [vmem:[%s467 + $0x10] sm:$0xff] %vm640, %v3297
      %3306 = vst.msk [vmem:[%s467 + $0x18] sm:$0xff] %vm640, %v3298
      %3307 = vst.msk [vmem:[%s467 + $0x20] sm:$0xff] %vm640, %v3299
      %3308 = vst.msk [vmem:[%s467 + $0x28] sm:$0xff] %vm640, %v3300
      %3309 = vst.msk [vmem:[%s467 + $0x30] sm:$0xff] %vm640, %v3301
      %3310 = vst.msk [vmem:[%s467 + $0x38] sm:$0xff] %vm640, %v3302
      %p3311 = scmp.lt.s32.totalorder %s25, 1
      %s3312 = scalar_select %p3311, %s25, 1
      %s3313 = smul.addr %s3312, 8
      %s3314 = smul.addr %s3313, 8
      %s3315 = scalar_lea.vmem %s14, %s3314
      // Predicated region
      $region77: #{leela_forward.10} parent=75 // pred_check
        %p3316 = pneg %p342
      $region78: #{leela_forward.10} parent=75 // pred_check_branch
        %3318 = sbr.rel (%p3316) target = $region80
      $region79: #{leela_forward.10} parent=75 // pred_region
        _
      $region80: #{leela_forward.10} parent=75 // pred_fallthru
        _
    $region76: #{leela_forward.10} parent=5 // pred_fallthru
      _
    %p3319 = scmp.le.s32.totalorder 2, %s20
    // Predicated region
    $region81: #{leela_forward.10} parent=5 // pred_check
      %p3320 = pneg %p3319
    $region82: #{leela_forward.10} parent=5 // pred_check_branch
      %3322 = sbr.rel (%p3320) target = $region84
    $region83: #{leela_forward.10} parent=5 // pred_region
      %s3323 = ssub.s32 %s20, 2
      // Predicated region
      $region85: #{leela_forward.10} parent=83 // pred_check
        %p3324 = pneg %p348
      $region86: #{leela_forward.10} parent=83 // pred_check_branch
        %3326 = sbr.rel (%p3324) target = $region88
      $region87: #{leela_forward.10} parent=83 // pred_region
        %p3327 = scmp.lt.s32.totalorder %s26, 1
        %s3328 = scalar_select %p3327, %s26, 1
        %s3329 = smul.addr %s3328, 8
        %s3330 = smul.addr %s3329, 8
        %s3331 = scalar_lea.vmem %s14, %s3330
      $region88: #{leela_forward.10} parent=83 // pred_fallthru
        _
    $region84: #{leela_forward.10} parent=5 // pred_fallthru
      _
  $region6: #{leela_forward.10} parent=0 // loop_footer
    %s24 = sadd.s32 1, %s20
  $region7: #{leela_forward.10} parent=0 // loop_footer_branch
    %19 = sbr.rel target = $region3
  $region8: #{leela_forward.10} parent=0 // loop_exit
    _

// kernel: leela_forward.9
$region0: #{leela_forward.9}
  #allocation0 [shape = 'u32[]', space=smem, size = 0x4, offset = 0x4, fixed_abs, tag = 'smem constant byte address 0x4 - core index']
  #allocation1 [shape = 'u32[144,128]{1,0:T(1,128)}', space=vmem, size = 0x12000, scoped, tag = 'internal scratch']
  %s0 = inlined_call_operand.vmem [shape: f32[2,64,112], index: 0, kind: input, shape index: {}]
  %s1 = inlined_call_operand.vmem [shape: f32[9,64,1], index: 1, kind: input, shape index: {}]
  %s2 = inlined_call_operand.vmem [shape: bf16[9,112,32], index: 2, kind: input, shape index: {}]
  %s3 = inlined_call_operand.vmem [shape: f32[1,32], index: 3, kind: input, shape index: {}]
  %s4 = inlined_call_operand.vmem [shape: f32[1,32], index: 4, kind: input, shape index: {}]
  %s5 = inlined_call_operand.vmem [shape: f32[2,64,32], index: 5, kind: output, shape index: {}]
  %s6 = sld [smem:[#allocation0]]
  $region53: #{leela_forward.9} parent=0
    _
  %s8 = ssub.s32 1, %s6
  %s9 = scalar_select 0, %s8, %s6
  loop: start=0, step=1, limit=4
  $region2: #{leela_forward.9} parent=0 // loop_pre_header
    _
  $region3: #{leela_forward.9} parent=0 // loop_header
    %s11 = sphi 0, %s15
    %p12 = scmp.ge.s32.totalorder %s11, 4
    %s21 = sphi 0, %s23
    %s24 = sphi 0, %s21
    %s25 = sphi 0, %s24
    %s41 = sphi 0, %s25
    %s45 = sphi 0, %s45
    %s47 = sphi 0, %s45
    %s48 = sphi 0, %s47
    %s62 = sphi 0, %s48
    %s66 = sphi 0, %s66
    %s68 = sphi 0, %s66
    %s69 = sphi 0, %s68
    %s83 = sphi 0, %s69
    %s87 = sphi 0, %s87
    %s89 = sphi 0, %s87
    %s90 = sphi 0, %s89
    %s104 = sphi 0, %s90
    %s108 = sphi 0, %s108
    %s110 = sphi 0, %s108
    %s111 = sphi 0, %s110
    %s125 = sphi 0, %s111
    %s131 = sphi 0, %s133
    %s134 = sphi 0, %s131
    %s135 = sphi 0, %s134
    %s151 = sphi 0, %s135
  $region4: #{leela_forward.9} parent=0 // loop_header_branch
    %14 = sbr.rel (%p12) target = $region8
  $region5: #{leela_forward.9} parent=0 // loop_body
    %s16 = ssub.s32 %s11, 1
    %s17 = ssub.s32 %s11, 2
    %s18 = sadd.s32 %s11, 1
    %s19 = ssub.s32 %s11, %s18
    %p20 = scmp.eq.s32.totalorder %s19, 0
    %s22 = sadd.s32 %s21, 1
    %s23 = scalar_select %p20, %s21, %s22
    %p26 = pneg %p20
    %p27 = scmp.eq.s32.totalorder %s11, 1
    %p28 = por %p26, %p27
    %p29 = scmp.ne.s32.totalorder %s21, %s24
    %p30 = scmp.eq.s32.totalorder %s11, 0
    %p31 = por %p29, %p30
    %p32 = scmp.ne.s32.totalorder %s21, %s24
    %p33 = scmp.eq.s32.totalorder %s16, 1
    %p34 = por %p32, %p33
    %p35 = scmp.ne.s32.totalorder %s24, %s25
    %p36 = scmp.eq.s32.totalorder %s16, 0
    %p37 = por %p35, %p36
    %p38 = scmp.ne.s32.totalorder %s24, %s25
    %p39 = scmp.eq.s32.totalorder %s17, 1
    %p40 = por %p38, %p39
    %p42 = scmp.ne.s32.totalorder %s25, %s41
    %p43 = scmp.eq.s32.totalorder %s17, 0
    %p44 = por %p42, %p43
    %s46 = sadd.s32 %s45, 1
    %p49 = scmp.eq.s32.totalorder %s11, 1
    %p50 = scmp.ne.s32.totalorder %s45, %s47
    %p51 = scmp.eq.s32.totalorder %s11, 0
    %p52 = por %p50, %p51
    %p53 = scmp.ne.s32.totalorder %s45, %s47
    %p54 = scmp.eq.s32.totalorder %s16, 1
    %p55 = por %p53, %p54
    %p56 = scmp.ne.s32.totalorder %s47, %s48
    %p57 = scmp.eq.s32.totalorder %s16, 0
    %p58 = por %p56, %p57
    %p59 = scmp.ne.s32.totalorder %s47, %s48
    %p60 = scmp.eq.s32.totalorder %s17, 1
    %p61 = por %p59, %p60
    %p63 = scmp.ne.s32.totalorder %s48, %s62
    %p64 = scmp.eq.s32.totalorder %s17, 0
    %p65 = por %p63, %p64
    %s67 = sadd.s32 %s66, 1
    %p70 = scmp.eq.s32.totalorder %s11, 1
    %p71 = scmp.ne.s32.totalorder %s66, %s68
    %p72 = scmp.eq.s32.totalorder %s11, 0
    %p73 = por %p71, %p72
    %p74 = scmp.ne.s32.totalorder %s66, %s68
    %p75 = scmp.eq.s32.totalorder %s16, 1
    %p76 = por %p74, %p75
    %p77 = scmp.ne.s32.totalorder %s68, %s69
    %p78 = scmp.eq.s32.totalorder %s16, 0
    %p79 = por %p77, %p78
    %p80 = scmp.ne.s32.totalorder %s68, %s69
    %p81 = scmp.eq.s32.totalorder %s17, 1
    %p82 = por %p80, %p81
    %p84 = scmp.ne.s32.totalorder %s69, %s83
    %p85 = scmp.eq.s32.totalorder %s17, 0
    %p86 = por %p84, %p85
    %s88 = sadd.s32 %s87, 1
    %p91 = scmp.eq.s32.totalorder %s11, 1
    %p92 = scmp.ne.s32.totalorder %s87, %s89
    %p93 = scmp.eq.s32.totalorder %s11, 0
    %p94 = por %p92, %p93
    %p95 = scmp.ne.s32.totalorder %s87, %s89
    %p96 = scmp.eq.s32.totalorder %s16, 1
    %p97 = por %p95, %p96
    %p98 = scmp.ne.s32.totalorder %s89, %s90
    %p99 = scmp.eq.s32.totalorder %s16, 0
    %p100 = por %p98, %p99
    %p101 = scmp.ne.s32.totalorder %s89, %s90
    %p102 = scmp.eq.s32.totalorder %s17, 1
    %p103 = por %p101, %p102
    %p105 = scmp.ne.s32.totalorder %s90, %s104
    %p106 = scmp.eq.s32.totalorder %s17, 0
    %p107 = por %p105, %p106
    %s109 = sadd.s32 %s108, 1
    %p112 = scmp.eq.s32.totalorder %s11, 1
    %p113 = scmp.ne.s32.totalorder %s108, %s110
    %p114 = scmp.eq.s32.totalorder %s11, 0
    %p115 = por %p113, %p114
    %p116 = scmp.ne.s32.totalorder %s108, %s110
    %p117 = scmp.eq.s32.totalorder %s16, 1
    %p118 = por %p116, %p117
    %p119 = scmp.ne.s32.totalorder %s110, %s111
    %p120 = scmp.eq.s32.totalorder %s16, 0
    %p121 = por %p119, %p120
    %p122 = scmp.ne.s32.totalorder %s110, %s111
    %p123 = scmp.eq.s32.totalorder %s17, 1
    %p124 = por %p122, %p123
    %p126 = scmp.ne.s32.totalorder %s111, %s125
    %p127 = scmp.eq.s32.totalorder %s17, 0
    %p128 = por %p126, %p127
    %s129 = ssub.s32 %s11, %s18
    %p130 = scmp.eq.s32.totalorder %s129, 0
    %s132 = sadd.s32 %s131, 1
    %s133 = scalar_select %p130, %s131, %s132
    %p136 = pneg %p130
    %p137 = scmp.eq.s32.totalorder %s11, 1
    %p138 = por %p136, %p137
    %p139 = scmp.ne.s32.totalorder %s131, %s134
    %p140 = scmp.eq.s32.totalorder %s11, 0
    %p141 = por %p139, %p140
    %p142 = scmp.ne.s32.totalorder %s131, %s134
    %p143 = scmp.eq.s32.totalorder %s16, 1
    %p144 = por %p142, %p143
    %p145 = scmp.ne.s32.totalorder %s134, %s135
    %p146 = scmp.eq.s32.totalorder %s16, 0
    %p147 = por %p145, %p146
    %p148 = scmp.ne.s32.totalorder %s134, %s135
    %p149 = scmp.eq.s32.totalorder %s17, 1
    %p150 = por %p148, %p149
    %p152 = scmp.ne.s32.totalorder %s135, %s151
    %p153 = scmp.eq.s32.totalorder %s17, 0
    %p154 = por %p152, %p153
    %p155 = scmp.le.s32.totalorder 1, %s11
    %p156 = scmp.lt.s32.totalorder %s11, 3
    %p157 = pnand %p155, %p156
    %p158 = pneg %p157
    // Predicated region
    $region9: #{leela_forward.9} parent=5 // pred_check
      _
    $region10: #{leela_forward.9} parent=5 // pred_check_branch
      %160 = sbr.rel (%p157) target = $region12
    $region11: #{leela_forward.9} parent=5 // pred_region
      %s161 = ssub.s32 %s11, 1
      // Predicated region
      $region13: #{leela_forward.9} parent=11 // pred_check
        %p162 = pneg %p58
      $region14: #{leela_forward.9} parent=11 // pred_check_branch
        %164 = sbr.rel (%p162) target = $region16
      $region15: #{leela_forward.9} parent=11 // pred_region
        _
      $region16: #{leela_forward.9} parent=11 // pred_fallthru
        _
      // Predicated region
      $region17: #{leela_forward.9} parent=11 // pred_check
        %p165 = pneg %p79
      $region18: #{leela_forward.9} parent=11 // pred_check_branch
        %167 = sbr.rel (%p165) target = $region20
      $region19: #{leela_forward.9} parent=11 // pred_region
        _
      $region20: #{leela_forward.9} parent=11 // pred_fallthru
        _
      // Predicated region
      $region21: #{leela_forward.9} parent=11 // pred_check
        %p168 = pneg %p100
      $region22: #{leela_forward.9} parent=11 // pred_check_branch
        %170 = sbr.rel (%p168) target = $region24
      $region23: #{leela_forward.9} parent=11 // pred_region
        _
      $region24: #{leela_forward.9} parent=11 // pred_fallthru
        _
      // Predicated region
      $region25: #{leela_forward.9} parent=11 // pred_check
        %p171 = pneg %p121
      $region26: #{leela_forward.9} parent=11 // pred_check_branch
        %173 = sbr.rel (%p171) target = $region28
      $region27: #{leela_forward.9} parent=11 // pred_region
        _
      $region28: #{leela_forward.9} parent=11 // pred_fallthru
        _
    $region12: #{leela_forward.9} parent=5 // pred_fallthru
      _
    %p174 = scmp.lt.s32.totalorder %s11, 2
    // Predicated region
    $region29: #{leela_forward.9} parent=5 // pred_check
      %p175 = pneg %p174
    $region30: #{leela_forward.9} parent=5 // pred_check_branch
      %177 = sbr.rel (%p175) target = $region32
    $region31: #{leela_forward.9} parent=5 // pred_region
      // Predicated region
      $region33: #{leela_forward.9} parent=31 // pred_check
        %p178 = pneg %p31
      $region34: #{leela_forward.9} parent=31 // pred_check_branch
        %180 = sbr.rel (%p178) target = $region36
      $region35: #{leela_forward.9} parent=31 // pred_region
        %p181 = scmp.lt.s32.totalorder %s11, 1
        %s182 = scalar_select %p181, %s11, 1
        %s183 = smul.addr %s182, 8
        %s184 = smul.addr %s183, 8
        %s185 = scalar_lea.vmem %s0, %s184
      $region36: #{leela_forward.9} parent=31 // pred_fallthru
        _
    $region32: #{leela_forward.9} parent=5 // pred_fallthru
      _
    %p186 = scmp.le.s32.totalorder 1, %s11
    %p187 = scmp.lt.s32.totalorder %s11, 3
    %p188 = pnand %p186, %p187
    %p189 = pneg %p188
    // Predicated region
    $region37: #{leela_forward.9} parent=5 // pred_check
      _
    $region38: #{leela_forward.9} parent=5 // pred_check_branch
      %191 = sbr.rel (%p188) target = $region40
    $region39: #{leela_forward.9} parent=5 // pred_region
      %s192 = ssub.s32 %s11, 1
      %p193 = scmp.lt.s32.totalorder %s16, 1
      %s194 = scalar_select %p193, %s16, 1
      %s195 = smul.addr %s194, 8
      %s196 = smul.addr %s195, 8
      %s197 = scalar_lea.vmem %s0, %s196
      %p198 = pneg %p37
      %p199 = pneg %p34
      %p200 = pneg %p58
      %p201 = pneg %p55
      %p202 = pneg %p79
      %p203 = pneg %p76
      %p204 = pneg %p100
      %p205 = pneg %p97
      %p206 = pneg %p121
      %p207 = pneg %p118
      %p208 = pneg %p147
      %p209 = pneg %p144
      %p210 = scmp.lt.s32.totalorder %s16, 1
      %s211 = scalar_select %p210, %s16, 1
      %s212 = smul.addr %s211, 8
      %s213 = smul.addr %s212, 8
      %s214 = scalar_lea.vmem %s5, %s213
      %p215 = scmp.lt.s32.totalorder %s16, 1
      %s216 = scalar_select %p215, %s16, 1
      %s217 = smul.addr %s216, 8
      %s218 = smul.addr %s217, 8
      %s219 = scalar_lea.vmem %s0, %s218
      %p220 = scmp.lt.s32.totalorder %s16, 1
      %s221 = scalar_select %p220, %s16, 1
      %s222 = smul.addr %s221, 8
      %s223 = smul.addr %s222, 8
      %s224 = scalar_lea.vmem %s5, %s223
      %v226 = vld [vmem:[%s219] sm:$0xff]
      %v227 = vld [vmem:[%s219 + $0x8] sm:$0xff]
      %v228 = vld [vmem:[%s219 + $0x10] sm:$0xff]
      %v229 = vld [vmem:[%s219 + $0x18] sm:$0xff]
      %v230 = vld [vmem:[%s219 + $0x20] sm:$0xff]
      %v231 = vld [vmem:[%s219 + $0x28] sm:$0xff]
      %v232 = vld [vmem:[%s219 + $0x30] sm:$0xff]
      %v233 = vld [vmem:[%s219 + $0x38] sm:$0xff]
      %v234 = vld [vmem:[%s3] sm:$0x1]
      %v235 = vld [vmem:[%s4] sm:$0x1]
      %v236 = vrot.slane %v226, 7
      %v237 = vrot.slane %v227, 7
      %v238 = vrot.slane %v228, 7
      %v239 = vrot.slane %v229, 7
      %v240 = vrot.slane %v230, 7
      %v241 = vrot.slane %v231, 7
      %v242 = vrot.slane %v232, 7
      %v243 = vrot.slane %v233, 7
      %v244 = vlaneseq
      %v245 = vshrl.u32 %v244, 7
      %vm246 = vcmp.lt.s32.totalorder %v245, 1
      %v247 = vsel %vm246, %v242, %v243
      %v248 = vsel %vm246, %v241, %v242
      %v249 = vsel %vm246, %v240, %v241
      %v250 = vsel %vm246, %v239, %v240
      %v251 = vsel %vm246, %v238, %v239
      %v252 = vsel %vm246, %v237, %v238
      %v253 = vsel %vm246, %v236, %v237
      %v254 = vsel %vm246, %v243, %v236
      %v255 = vld [vmem:[%s1] sm:$0xff]
      %v256 = vld [vmem:[%s1 + $0x8] sm:$0xff]
      %v257 = vld [vmem:[%s1 + $0x10] sm:$0xff]
      %v258 = vld [vmem:[%s1 + $0x18] sm:$0xff]
      %v259 = vld [vmem:[%s1 + $0x20] sm:$0xff]
      %v260 = vld [vmem:[%s1 + $0x28] sm:$0xff]
      %v261 = vld [vmem:[%s1 + $0x30] sm:$0xff]
      %v262 = vld [vmem:[%s1 + $0x38] sm:$0xff]
      %264 = vset.pattern.permute.xlu0 0
      %265 = vperm.xlu0 %264, %v255
      %v266 = vpop.permute.xlu0 %265
      %269 = vset.pattern.permute.xlu0 0
      %270 = vperm.xlu0 %269, %v256
      %v271 = vpop.permute.xlu0 %270
      %274 = vset.pattern.permute.xlu0 0
      %275 = vperm.xlu0 %274, %v257
      %v276 = vpop.permute.xlu0 %275
      %279 = vset.pattern.permute.xlu0 0
      %280 = vperm.xlu0 %279, %v258
      %v281 = vpop.permute.xlu0 %280
      %284 = vset.pattern.permute.xlu0 0
      %285 = vperm.xlu0 %284, %v259
      %v286 = vpop.permute.xlu0 %285
      %289 = vset.pattern.permute.xlu0 0
      %290 = vperm.xlu0 %289, %v260
      %v291 = vpop.permute.xlu0 %290
      %294 = vset.pattern.permute.xlu0 0
      %295 = vperm.xlu0 %294, %v261
      %v296 = vpop.permute.xlu0 %295
      %299 = vset.pattern.permute.xlu0 0
      %300 = vperm.xlu0 %299, %v262
      %v301 = vpop.permute.xlu0 %300
      %v303 = vmul.f32 %v247, %v266
      %v304 = vmul.f32 %v254, %v271
      %v305 = vmul.f32 %v253, %v276
      %v306 = vmul.f32 %v252, %v281
      %v307 = vmul.f32 %v251, %v286
      %v308 = vmul.f32 %v250, %v291
      %v309 = vmul.f32 %v249, %v296
      %v310 = vmul.f32 %v248, %v301
      %v311 = vpack.c.bf16 %v304, %v303
      %v312 = vpack.c.bf16 %v306, %v305
      %v313 = vpack.c.bf16 %v308, %v307
      %v314 = vpack.c.bf16 %v310, %v309
      %v315 = vld [vmem:[%s2] sm:$0xf]
      %v316 = vld [vmem:[%s2 + $0x4] sm:$0xf]
      %v317 = vld [vmem:[%s2 + $0x8] sm:$0xf]
      %v318 = vld [vmem:[%s2 + $0xc] sm:$0xf]
      %v319 = vld [vmem:[%s2 + $0x10] sm:$0xf]
      %v320 = vld [vmem:[%s2 + $0x14] sm:$0xf]
      %v321 = vld [vmem:[%s2 + $0x18] sm:$0xf]
      %v322 = vld [vmem:[%s2 + $0x1c] sm:$0xf]
      %v323 = vld [vmem:[%s2 + $0x20] sm:$0xf]
      %v324 = vld [vmem:[%s2 + $0x24] sm:$0xf]
      %v325 = vld [vmem:[%s2 + $0x28] sm:$0xf]
      %v326 = vld [vmem:[%s2 + $0x2c] sm:$0xf]
      %v327 = vld [vmem:[%s2 + $0x30] sm:$0xf]
      %v328 = vld [vmem:[%s2 + $0x34] sm:$0xf]
      %s329 = scalar_lea.vmem %s1, 64
      %v330 = vld [vmem:[%s329] sm:$0xff]
      %v331 = vld [vmem:[%s329 + $0x8] sm:$0xff]
      %v332 = vld [vmem:[%s329 + $0x10] sm:$0xff]
      %v333 = vld [vmem:[%s329 + $0x18] sm:$0xff]
      %v334 = vld [vmem:[%s329 + $0x20] sm:$0xff]
      %v335 = vld [vmem:[%s329 + $0x28] sm:$0xff]
      %v336 = vld [vmem:[%s329 + $0x30] sm:$0xff]
      %v337 = vld [vmem:[%s329 + $0x38] sm:$0xff]
      %339 = vset.pattern.permute.xlu0 0
      %340 = vperm.xlu0 %339, %v330
      %v341 = vpop.permute.xlu0 %340
      %344 = vset.pattern.permute.xlu0 0
      %345 = vperm.xlu0 %344, %v331
      %v346 = vpop.permute.xlu0 %345
      %349 = vset.pattern.permute.xlu0 0
      %350 = vperm.xlu0 %349, %v332
      %v351 = vpop.permute.xlu0 %350
      %354 = vset.pattern.permute.xlu0 0
      %355 = vperm.xlu0 %354, %v333
      %v356 = vpop.permute.xlu0 %355
      %359 = vset.pattern.permute.xlu0 0
      %360 = vperm.xlu0 %359, %v334
      %v361 = vpop.permute.xlu0 %360
      %364 = vset.pattern.permute.xlu0 0
      %365 = vperm.xlu0 %364, %v335
      %v366 = vpop.permute.xlu0 %365
      %369 = vset.pattern.permute.xlu0 0
      %370 = vperm.xlu0 %369, %v336
      %v371 = vpop.permute.xlu0 %370
      %374 = vset.pattern.permute.xlu0 0
      %375 = vperm.xlu0 %374, %v337
      %v376 = vpop.permute.xlu0 %375
      %v378 = vmul.f32 %v233, %v341
      %v379 = vmul.f32 %v226, %v346
      %v380 = vmul.f32 %v227, %v351
      %v381 = vmul.f32 %v228, %v356
      %v382 = vmul.f32 %v229, %v361
      %v383 = vmul.f32 %v230, %v366
      %v384 = vmul.f32 %v231, %v371
      %v385 = vmul.f32 %v232, %v376
      %v386 = vpack.c.bf16 %v379, %v378
      %v387 = vpack.c.bf16 %v381, %v380
      %v388 = vpack.c.bf16 %v383, %v382
      %v389 = vpack.c.bf16 %v385, %v384
      %s390 = scalar_lea.vmem %s2, 56
      %v391 = vld [vmem:[%s390] sm:$0xf]
      %v392 = vld [vmem:[%s390 + $0x4] sm:$0xf]
      %v393 = vld [vmem:[%s390 + $0x8] sm:$0xf]
      %v394 = vld [vmem:[%s390 + $0xc] sm:$0xf]
      %v395 = vld [vmem:[%s390 + $0x10] sm:$0xf]
      %v396 = vld [vmem:[%s390 + $0x14] sm:$0xf]
      %v397 = vld [vmem:[%s390 + $0x18] sm:$0xf]
      %v398 = vld [vmem:[%s390 + $0x1c] sm:$0xf]
      %v399 = vld [vmem:[%s390 + $0x20] sm:$0xf]
      %v400 = vld [vmem:[%s390 + $0x24] sm:$0xf]
      %v401 = vld [vmem:[%s390 + $0x28] sm:$0xf]
      %v402 = vld [vmem:[%s390 + $0x2c] sm:$0xf]
      %v403 = vld [vmem:[%s390 + $0x30] sm:$0xf]
      %v404 = vld [vmem:[%s390 + $0x34] sm:$0xf]
      %v419 = vunpack.c.l.b16 %v391
      %v420 = vunpack.c.l.b16 %v392
      %v421 = vunpack.c.l.b16 %v393
      %v422 = vunpack.c.l.b16 %v394
      %v423 = vunpack.c.l.b16 %v395
      %v424 = vunpack.c.l.b16 %v396
      %v425 = vunpack.c.l.b16 %v397
      %v426 = vunpack.c.l.b16 %v398
      %v427 = vunpack.c.l.b16 %v399
      %v428 = vunpack.c.l.b16 %v400
      %v429 = vunpack.c.l.b16 %v401
      %v430 = vunpack.c.l.b16 %v402
      %v431 = vunpack.c.l.b16 %v403
      %v432 = vunpack.c.l.b16 %v404
      %v433 = vpack.c.b16 %v420, %v419
      %v434 = vpack.c.b16 %v422, %v421
      %v435 = vpack.c.b16 %v424, %v423
      %v436 = vpack.c.b16 %v426, %v425
      %v437 = vpack.c.b16 %v428, %v427
      %v438 = vpack.c.b16 %v430, %v429
      %v439 = vpack.c.b16 %v432, %v431
      %vm447 = vcmask 916480
      %v449 = vsel %vm447, %v386, 0
      %v452 = vsel %vm447, %v387, 0
      %v455 = vsel %vm447, %v388, 0
      %v458 = vsel %vm447, %v389, 0
      %460 = vmatprep.subr.bf16.mxu0 0
      %461 = vmatpush1.bf16.msra.mxu0 %v433
      %462 = vmatprep.subr.bf16.mxu0 0
      %463 = vmatpush1.bf16.msra.mxu0 %v434
      %464 = vmatprep.subr.bf16.mxu0 0
      %465 = vmatpush1.bf16.msra.mxu0 %v435
      %466 = vmatprep.subr.bf16.mxu0 0
      %467 = vmatpush1.bf16.msra.mxu0 %v436
      %468 = vmatprep.subr.bf16.mxu0 0
      %469 = vmatpush1.bf16.msra.mxu0 %v437
      %470 = vmatprep.subr.bf16.mxu0 0
      %471 = vmatpush1.bf16.msra.mxu0 %v438
      %472 = vmatprep.subr.bf16.mxu0 0
      %473 = vmatpush1.bf16.msra.mxu0 %v439
      %474 = vmatprep.subr.bf16.mxu0 0
      %475 = vmatpush1.bf16.msra.mxu0 0
      %476 = vmatprep.subr.bf16.mxu0 0
      %477 = vmatpush1.bf16.msra.mxu0 0
      %478 = vmatprep.subr.bf16.mxu0 0
      %479 = vmatpush1.bf16.msra.mxu0 0
      %480 = vmatprep.subr.bf16.mxu0 0
      %481 = vmatpush1.bf16.msra.mxu0 0
      %482 = vmatprep.subr.bf16.mxu0 0
      %483 = vmatpush1.bf16.msra.mxu0 0
      %484 = vmatprep.subr.bf16.mxu0 0
      %485 = vmatpush1.bf16.msra.mxu0 0
      %486 = vmatprep.subr.bf16.mxu0 0
      %487 = vmatpush1.bf16.msra.mxu0 0
      %488 = vmatprep.subr.bf16.mxu0 0
      %489 = vmatpush1.bf16.msra.mxu0 0
      %490 = vmatprep.subr.bf16.mxu0 0
      %491 = vmatpush1.bf16.msra.mxu0 0
      %492 = vmatprep.mubr.bf16.mxu0 0
      %493 = vmatmul.mubr.bf16.gmra.mrb[0].mxu0 %v449
      %v494 = vpop.f32.mrb[0].mxu0
      %v495 = vadd.f32 0.0, %v494
      %v496 = vpop.f32.mrb[0].mxu0
      %v497 = vpop.f32.mrb[0].mxu0
      %v498 = vadd.f32 0.0, %v497
      %v499 = vpop.f32.mrb[0].mxu0
      %500 = vmatprep.mubr.bf16.mxu0 0
      %501 = vmatmul.mubr.bf16.gmra.mrb[0].mxu0 %v452
      %v502 = vpop.f32.mrb[0].mxu0
      %v503 = vadd.f32 0.0, %v502
      %v504 = vpop.f32.mrb[0].mxu0
      %v505 = vpop.f32.mrb[0].mxu0
      %v506 = vadd.f32 0.0, %v505
      %v507 = vpop.f32.mrb[0].mxu0
      %508 = vmatprep.mubr.bf16.mxu0 0
      %509 = vmatmul.mubr.bf16.gmra.mrb[0].mxu0 %v455
      %v510 = vpop.f32.mrb[0].mxu0
      %v511 = vadd.f32 0.0, %v510
      %v512 = vpop.f32.mrb[0].mxu0
      %v513 = vpop.f32.mrb[0].mxu0
      %v514 = vadd.f32 0.0, %v513
      %v515 = vpop.f32.mrb[0].mxu0
      %516 = vmatprep.mubr.bf16.mxu0 0
      %517 = vmatmul.mubr.bf16.gmra.mrb[0].mxu0 %v458
      %v518 = vpop.f32.mrb[0].mxu0
      %v519 = vadd.f32 0.0, %v518
      %v520 = vpop.f32.mrb[0].mxu0
      %v521 = vpop.f32.mrb[0].mxu0
      %v522 = vadd.f32 0.0, %v521
      %v523 = vpop.f32.mrb[0].mxu0
      %524 = vdwg.mxu0
      %v539 = vunpack.c.l.b16 %v315
      %v540 = vunpack.c.l.b16 %v316
      %v541 = vunpack.c.l.b16 %v317
      %v542 = vunpack.c.l.b16 %v318
      %v543 = vunpack.c.l.b16 %v319
      %v544 = vunpack.c.l.b16 %v320
      %v545 = vunpack.c.l.b16 %v321
      %v546 = vunpack.c.l.b16 %v322
      %v547 = vunpack.c.l.b16 %v323
      %v548 = vunpack.c.l.b16 %v324
      %v549 = vunpack.c.l.b16 %v325
      %v550 = vunpack.c.l.b16 %v326
      %v551 = vunpack.c.l.b16 %v327
      %v552 = vunpack.c.l.b16 %v328
      %v553 = vpack.c.b16 %v540, %v539
      %v554 = vpack.c.b16 %v542, %v541
      %v555 = vpack.c.b16 %v544, %v543
      %v556 = vpack.c.b16 %v546, %v545
      %v557 = vpack.c.b16 %v548, %v547
      %v558 = vpack.c.b16 %v550, %v549
      %v559 = vpack.c.b16 %v552, %v551
      %v568 = vsel %vm447, %v311, 0
      %v571 = vsel %vm447, %v312, 0
      %v574 = vsel %vm447, %v313, 0
      %v577 = vsel %vm447, %v314, 0
      %579 = vmatprep.subr.bf16.mxu0 0
      %580 = vmatpush1.bf16.msra.mxu0 %v553
      %581 = vmatprep.subr.bf16.mxu0 0
      %582 = vmatpush1.bf16.msra.mxu0 %v554
      %583 = vmatprep.subr.bf16.mxu0 0
      %584 = vmatpush1.bf16.msra.mxu0 %v555
      %585 = vmatprep.subr.bf16.mxu0 0
      %586 = vmatpush1.bf16.msra.mxu0 %v556
      %587 = vmatprep.subr.bf16.mxu0 0
      %588 = vmatpush1.bf16.msra.mxu0 %v557
      %589 = vmatprep.subr.bf16.mxu0 0
      %590 = vmatpush1.bf16.msra.mxu0 %v558
      %591 = vmatprep.subr.bf16.mxu0 0
      %592 = vmatpush1.bf16.msra.mxu0 %v559
      %593 = vmatprep.subr.bf16.mxu0 0
      %594 = vmatpush1.bf16.msra.mxu0 0
      %595 = vmatprep.subr.bf16.mxu0 0
      %596 = vmatpush1.bf16.msra.mxu0 0
      %597 = vmatprep.subr.bf16.mxu0 0
      %598 = vmatpush1.bf16.msra.mxu0 0
      %599 = vmatprep.subr.bf16.mxu0 0
      %600 = vmatpush1.bf16.msra.mxu0 0
      %601 = vmatprep.subr.bf16.mxu0 0
      %602 = vmatpush1.bf16.msra.mxu0 0
      %603 = vmatprep.subr.bf16.mxu0 0
      %604 = vmatpush1.bf16.msra.mxu0 0
      %605 = vmatprep.subr.bf16.mxu0 0
      %606 = vmatpush1.bf16.msra.mxu0 0
      %607 = vmatprep.subr.bf16.mxu0 0
      %608 = vmatpush1.bf16.msra.mxu0 0
      %609 = vmatprep.subr.bf16.mxu0 0
      %610 = vmatpush1.bf16.msra.mxu0 0
      %611 = vmatprep.mubr.bf16.mxu0 0
      %612 = vmatmul.mubr.bf16.gmra.mrb[0].mxu0 %v568
      %v613 = vpop.f32.mrb[0].mxu0
      %v614 = vadd.f32 %v495, %v613
      %v615 = vpop.f32.mrb[0].mxu0
      %v616 = vpop.f32.mrb[0].mxu0
      %v617 = vadd.f32 %v498, %v616
      %v618 = vpop.f32.mrb[0].mxu0
      %619 = vmatprep.mubr.bf16.mxu0 0
      %620 = vmatmul.mubr.bf16.gmra.mrb[0].mxu0 %v571
      %v621 = vpop.f32.mrb[0].mxu0
      %v622 = vadd.f32 %v503, %v621
      %v623 = vpop.f32.mrb[0].mxu0
      %v624 = vpop.f32.mrb[0].mxu0
      %v625 = vadd.f32 %v506, %v624
      %v626 = vpop.f32.mrb[0].mxu0
      %627 = vmatprep.mubr.bf16.mxu0 0
      %628 = vmatmul.mubr.bf16.gmra.mrb[0].mxu0 %v574
      %v629 = vpop.f32.mrb[0].mxu0
      %v630 = vadd.f32 %v511, %v629
      %v631 = vpop.f32.mrb[0].mxu0
      %v632 = vpop.f32.mrb[0].mxu0
      %v633 = vadd.f32 %v514, %v632
      %v634 = vpop.f32.mrb[0].mxu0
      %635 = vmatprep.mubr.bf16.mxu0 0
      %636 = vmatmul.mubr.bf16.gmra.mrb[0].mxu0 %v577
      %v637 = vpop.f32.mrb[0].mxu0
      %v638 = vadd.f32 %v519, %v637
      %v639 = vpop.f32.mrb[0].mxu0
      %v640 = vpop.f32.mrb[0].mxu0
      %v641 = vadd.f32 %v522, %v640
      %v642 = vpop.f32.mrb[0].mxu0
      %643 = vdwg.mxu0
      %v644 = vrot.slane %v226, 1
      %v645 = vrot.slane %v227, 1
      %v646 = vrot.slane %v228, 1
      %v647 = vrot.slane %v229, 1
      %v648 = vrot.slane %v230, 1
      %v649 = vrot.slane %v231, 1
      %v650 = vrot.slane %v232, 1
      %v651 = vrot.slane %v233, 1
      %vm652 = vcmp.lt.s32.totalorder %v245, 7
      %v653 = vsel %vm652, %v650, %v651
      %v654 = vsel %vm652, %v649, %v650
      %v655 = vsel %vm652, %v648, %v649
      %v656 = vsel %vm652, %v647, %v648
      %v657 = vsel %vm652, %v646, %v647
      %v658 = vsel %vm652, %v645, %v646
      %v659 = vsel %vm652, %v644, %v645
      %v660 = vsel %vm652, %v651, %v644
      %s661 = scalar_lea.vmem %s1, 128
      %v662 = vld [vmem:[%s661] sm:$0xff]
      %v663 = vld [vmem:[%s661 + $0x8] sm:$0xff]
      %v664 = vld [vmem:[%s661 + $0x10] sm:$0xff]
      %v665 = vld [vmem:[%s661 + $0x18] sm:$0xff]
      %v666 = vld [vmem:[%s661 + $0x20] sm:$0xff]
      %v667 = vld [vmem:[%s661 + $0x28] sm:$0xff]
      %v668 = vld [vmem:[%s661 + $0x30] sm:$0xff]
      %v669 = vld [vmem:[%s661 + $0x38] sm:$0xff]
      %671 = vset.pattern.permute.xlu0 0
      %672 = vperm.xlu0 %671, %v662
      %v673 = vpop.permute.xlu0 %672
      %676 = vset.pattern.permute.xlu0 0
      %677 = vperm.xlu0 %676, %v663
      %v678 = vpop.permute.xlu0 %677
      %681 = vset.pattern.permute.xlu0 0
      %682 = vperm.xlu0 %681, %v664
      %v683 = vpop.permute.xlu0 %682
      %686 = vset.pattern.permute.xlu0 0
      %687 = vperm.xlu0 %686, %v665
      %v688 = vpop.permute.xlu0 %687
      %691 = vset.pattern.permute.xlu0 0
      %692 = vperm.xlu0 %691, %v666
      %v693 = vpop.permute.xlu0 %692
      %696 = vset.pattern.permute.xlu0 0
      %697 = vperm.xlu0 %696, %v667
      %v698 = vpop.permute.xlu0 %697
      %701 = vset.pattern.permute.xlu0 0
      %702 = vperm.xlu0 %701, %v668
      %v703 = vpop.permute.xlu0 %702
      %706 = vset.pattern.permute.xlu0 0
      %707 = vperm.xlu0 %706, %v669
      %v708 = vpop.permute.xlu0 %707
      %v710 = vmul.f32 %v660, %v673
      %v711 = vmul.f32 %v659, %v678
      %v712 = vmul.f32 %v658, %v683
      %v713 = vmul.f32 %v657, %v688
      %v714 = vmul.f32 %v656, %v693
      %v715 = vmul.f32 %v655, %v698
      %v716 = vmul.f32 %v654, %v703
      %v717 = vmul.f32 %v653, %v708
      %v718 = vpack.c.bf16 %v711, %v710
      %v719 = vpack.c.bf16 %v713, %v712
      %v720 = vpack.c.bf16 %v715, %v714
      %v721 = vpack.c.bf16 %v717, %v716
      %s722 = scalar_lea.vmem %s2, 112
      %v723 = vld [vmem:[%s722] sm:$0xf]
      %v724 = vld [vmem:[%s722 + $0x4] sm:$0xf]
      %v725 = vld [vmem:[%s722 + $0x8] sm:$0xf]
      %v726 = vld [vmem:[%s722 + $0xc] sm:$0xf]
      %v727 = vld [vmem:[%s722 + $0x10] sm:$0xf]
      %v728 = vld [vmem:[%s722 + $0x14] sm:$0xf]
      %v729 = vld [vmem:[%s722 + $0x18] sm:$0xf]
      %v730 = vld [vmem:[%s722 + $0x1c] sm:$0xf]
      %v731 = vld [vmem:[%s722 + $0x20] sm:$0xf]
      %v732 = vld [vmem:[%s722 + $0x24] sm:$0xf]
      %v733 = vld [vmem:[%s722 + $0x28] sm:$0xf]
      %v734 = vld [vmem:[%s722 + $0x2c] sm:$0xf]
      %v735 = vld [vmem:[%s722 + $0x30] sm:$0xf]
      %v736 = vld [vmem:[%s722 + $0x34] sm:$0xf]
      %v751 = vunpack.c.l.b16 %v723
      %v752 = vunpack.c.l.b16 %v724
      %v753 = vunpack.c.l.b16 %v725
      %v754 = vunpack.c.l.b16 %v726
      %v755 = vunpack.c.l.b16 %v727
      %v756 = vunpack.c.l.b16 %v728
      %v757 = vunpack.c.l.b16 %v729
      %v758 = vunpack.c.l.b16 %v730
      %v759 = vunpack.c.l.b16 %v731
      %v760 = vunpack.c.l.b16 %v732
      %v761 = vunpack.c.l.b16 %v733
      %v762 = vunpack.c.l.b16 %v734
      %v763 = vunpack.c.l.b16 %v735
      %v764 = vunpack.c.l.b16 %v736
      %v765 = vpack.c.b16 %v752, %v751
      %v766 = vpack.c.b16 %v754, %v753
      %v767 = vpack.c.b16 %v756, %v755
      %v768 = vpack.c.b16 %v758, %v757
      %v769 = vpack.c.b16 %v760, %v759
      %v770 = vpack.c.b16 %v762, %v761
      %v771 = vpack.c.b16 %v764, %v763
      %v780 = vsel %vm447, %v718, 0
      %v783 = vsel %vm447, %v719, 0
      %v786 = vsel %vm447, %v720, 0
      %v789 = vsel %vm447, %v721, 0
      %791 = vmatprep.subr.bf16.mxu0 0
      %792 = vmatpush1.bf16.msra.mxu0 %v765
      %793 = vmatprep.subr.bf16.mxu0 0
      %794 = vmatpush1.bf16.msra.mxu0 %v766
      %795 = vmatprep.subr.bf16.mxu0 0
      %796 = vmatpush1.bf16.msra.mxu0 %v767
      %797 = vmatprep.subr.bf16.mxu0 0
      %798 = vmatpush1.bf16.msra.mxu0 %v768
      %799 = vmatprep.subr.bf16.mxu0 0
      %800 = vmatpush1.bf16.msra.mxu0 %v769
      %801 = vmatprep.subr.bf16.mxu0 0
      %802 = vmatpush1.bf16.msra.mxu0 %v770
      %803 = vmatprep.subr.bf16.mxu0 0
      %804 = vmatpush1.bf16.msra.mxu0 %v771
      %805 = vmatprep.subr.bf16.mxu0 0
      %806 = vmatpush1.bf16.msra.mxu0 0
      %807 = vmatprep.subr.bf16.mxu0 0
      %808 = vmatpush1.bf16.msra.mxu0 0
      %809 = vmatprep.subr.bf16.mxu0 0
      %810 = vmatpush1.bf16.msra.mxu0 0
      %811 = vmatprep.subr.bf16.mxu0 0
      %812 = vmatpush1.bf16.msra.mxu0 0
      %813 = vmatprep.subr.bf16.mxu0 0
      %814 = vmatpush1.bf16.msra.mxu0 0
      %815 = vmatprep.subr.bf16.mxu0 0
      %816 = vmatpush1.bf16.msra.mxu0 0
      %817 = vmatprep.subr.bf16.mxu0 0
      %818 = vmatpush1.bf16.msra.mxu0 0
      %819 = vmatprep.subr.bf16.mxu0 0
      %820 = vmatpush1.bf16.msra.mxu0 0
      %821 = vmatprep.subr.bf16.mxu0 0
      %822 = vmatpush1.bf16.msra.mxu0 0
      %823 = vmatprep.mubr.bf16.mxu0 0
      %824 = vmatmul.mubr.bf16.gmra.mrb[0].mxu0 %v780
      %v825 = vpop.f32.mrb[0].mxu0
      %v826 = vadd.f32 0.0, %v825
      %v827 = vpop.f32.mrb[0].mxu0
      %v828 = vpop.f32.mrb[0].mxu0
      %v829 = vadd.f32 0.0, %v828
      %v830 = vpop.f32.mrb[0].mxu0
      %831 = vmatprep.mubr.bf16.mxu0 0
      %832 = vmatmul.mubr.bf16.gmra.mrb[0].mxu0 %v783
      %v833 = vpop.f32.mrb[0].mxu0
      %v834 = vadd.f32 0.0, %v833
      %v835 = vpop.f32.mrb[0].mxu0
      %v836 = vpop.f32.mrb[0].mxu0
      %v837 = vadd.f32 0.0, %v836
      %v838 = vpop.f32.mrb[0].mxu0
      %839 = vmatprep.mubr.bf16.mxu0 0
      %840 = vmatmul.mubr.bf16.gmra.mrb[0].mxu0 %v786
      %v841 = vpop.f32.mrb[0].mxu0
      %v842 = vadd.f32 0.0, %v841
      %v843 = vpop.f32.mrb[0].mxu0
      %v844 = vpop.f32.mrb[0].mxu0
      %v845 = vadd.f32 0.0, %v844
      %v846 = vpop.f32.mrb[0].mxu0
      %847 = vmatprep.mubr.bf16.mxu0 0
      %848 = vmatmul.mubr.bf16.gmra.mrb[0].mxu0 %v789
      %v849 = vpop.f32.mrb[0].mxu0
      %v850 = vadd.f32 0.0, %v849
      %v851 = vpop.f32.mrb[0].mxu0
      %v852 = vpop.f32.mrb[0].mxu0
      %v853 = vadd.f32 0.0, %v852
      %v854 = vpop.f32.mrb[0].mxu0
      %855 = vdwg.mxu0
      %v856 = vadd.f32 %v614, %v826
      %v857 = vadd.f32 %v617, %v829
      %v858 = vadd.f32 %v622, %v834
      %v859 = vadd.f32 %v625, %v837
      %v860 = vadd.f32 %v630, %v842
      %v861 = vadd.f32 %v633, %v845
      %v862 = vadd.f32 %v638, %v850
      %v863 = vadd.f32 %v641, %v853
      %s864 = scalar_lea.vmem %s1, 192
      %v865 = vld [vmem:[%s864] sm:$0xff]
      %v866 = vld [vmem:[%s864 + $0x8] sm:$0xff]
      %v867 = vld [vmem:[%s864 + $0x10] sm:$0xff]
      %v868 = vld [vmem:[%s864 + $0x18] sm:$0xff]
      %v869 = vld [vmem:[%s864 + $0x20] sm:$0xff]
      %v870 = vld [vmem:[%s864 + $0x28] sm:$0xff]
      %v871 = vld [vmem:[%s864 + $0x30] sm:$0xff]
      %v872 = vld [vmem:[%s864 + $0x38] sm:$0xff]
      %874 = vset.pattern.permute.xlu0 0
      %875 = vperm.xlu0 %874, %v865
      %v876 = vpop.permute.xlu0 %875
      %879 = vset.pattern.permute.xlu0 0
      %880 = vperm.xlu0 %879, %v866
      %v881 = vpop.permute.xlu0 %880
      %884 = vset.pattern.permute.xlu0 0
      %885 = vperm.xlu0 %884, %v867
      %v886 = vpop.permute.xlu0 %885
      %889 = vset.pattern.permute.xlu0 0
      %890 = vperm.xlu0 %889, %v868
      %v891 = vpop.permute.xlu0 %890
      %894 = vset.pattern.permute.xlu0 0
      %895 = vperm.xlu0 %894, %v869
      %v896 = vpop.permute.xlu0 %895
      %899 = vset.pattern.permute.xlu0 0
      %900 = vperm.xlu0 %899, %v870
      %v901 = vpop.permute.xlu0 %900
      %904 = vset.pattern.permute.xlu0 0
      %905 = vperm.xlu0 %904, %v871
      %v906 = vpop.permute.xlu0 %905
      %909 = vset.pattern.permute.xlu0 0
      %910 = vperm.xlu0 %909, %v872
      %v911 = vpop.permute.xlu0 %910
      %v913 = vmul.f32 %v254, %v876
      %v914 = vmul.f32 %v253, %v881
      %v915 = vmul.f32 %v252, %v886
      %v916 = vmul.f32 %v251, %v891
      %v917 = vmul.f32 %v250, %v896
      %v918 = vmul.f32 %v249, %v901
      %v919 = vmul.f32 %v248, %v906
      %v920 = vmul.f32 %v247, %v911
      %v921 = vpack.c.bf16 %v914, %v913
      %v922 = vpack.c.bf16 %v916, %v915
      %v923 = vpack.c.bf16 %v918, %v917
      %v924 = vpack.c.bf16 %v920, %v919
      %s925 = scalar_lea.vmem %s2, 168
      %v926 = vld [vmem:[%s925] sm:$0xf]
      %v927 = vld [vmem:[%s925 + $0x4] sm:$0xf]
      %v928 = vld [vmem:[%s925 + $0x8] sm:$0xf]
      %v929 = vld [vmem:[%s925 + $0xc] sm:$0xf]
      %v930 = vld [vmem:[%s925 + $0x10] sm:$0xf]
      %v931 = vld [vmem:[%s925 + $0x14] sm:$0xf]
      %v932 = vld [vmem:[%s925 + $0x18] sm:$0xf]
      %v933 = vld [vmem:[%s925 + $0x1c] sm:$0xf]
      %v934 = vld [vmem:[%s925 + $0x20] sm:$0xf]
      %v935 = vld [vmem:[%s925 + $0x24] sm:$0xf]
      %v936 = vld [vmem:[%s925 + $0x28] sm:$0xf]
      %v937 = vld [vmem:[%s925 + $0x2c] sm:$0xf]
      %v938 = vld [vmem:[%s925 + $0x30] sm:$0xf]
      %v939 = vld [vmem:[%s925 + $0x34] sm:$0xf]
      %v954 = vunpack.c.l.b16 %v926
      %v955 = vunpack.c.l.b16 %v927
      %v956 = vunpack.c.l.b16 %v928
      %v957 = vunpack.c.l.b16 %v929
      %v958 = vunpack.c.l.b16 %v930
      %v959 = vunpack.c.l.b16 %v931
      %v960 = vunpack.c.l.b16 %v932
      %v961 = vunpack.c.l.b16 %v933
      %v962 = vunpack.c.l.b16 %v934
      %v963 = vunpack.c.l.b16 %v935
      %v964 = vunpack.c.l.b16 %v936
      %v965 = vunpack.c.l.b16 %v937
      %v966 = vunpack.c.l.b16 %v938
      %v967 = vunpack.c.l.b16 %v939
      %v968 = vpack.c.b16 %v955, %v954
      %v969 = vpack.c.b16 %v957, %v956
      %v970 = vpack.c.b16 %v959, %v958
      %v971 = vpack.c.b16 %v961, %v960
      %v972 = vpack.c.b16 %v963, %v962
      %v973 = vpack.c.b16 %v965, %v964
      %v974 = vpack.c.b16 %v967, %v966
      %v983 = vsel %vm447, %v921, 0
      %v986 = vsel %vm447, %v922, 0
      %v989 = vsel %vm447, %v923, 0
      %v992 = vsel %vm447, %v924, 0
      %994 = vmatprep.subr.bf16.mxu0 0
      %995 = vmatpush1.bf16.msra.mxu0 %v968
      %996 = vmatprep.subr.bf16.mxu0 0
      %997 = vmatpush1.bf16.msra.mxu0 %v969
      %998 = vmatprep.subr.bf16.mxu0 0
      %999 = vmatpush1.bf16.msra.mxu0 %v970
      %1000 = vmatprep.subr.bf16.mxu0 0
      %1001 = vmatpush1.bf16.msra.mxu0 %v971
      %1002 = vmatprep.subr.bf16.mxu0 0
      %1003 = vmatpush1.bf16.msra.mxu0 %v972
      %1004 = vmatprep.subr.bf16.mxu0 0
      %1005 = vmatpush1.bf16.msra.mxu0 %v973
      %1006 = vmatprep.subr.bf16.mxu0 0
      %1007 = vmatpush1.bf16.msra.mxu0 %v974
      %1008 = vmatprep.subr.bf16.mxu0 0
      %1009 = vmatpush1.bf16.msra.mxu0 0
      %1010 = vmatprep.subr.bf16.mxu0 0
      %1011 = vmatpush1.bf16.msra.mxu0 0
      %1012 = vmatprep.subr.bf16.mxu0 0
      %1013 = vmatpush1.bf16.msra.mxu0 0
      %1014 = vmatprep.subr.bf16.mxu0 0
      %1015 = vmatpush1.bf16.msra.mxu0 0
      %1016 = vmatprep.subr.bf16.mxu0 0
      %1017 = vmatpush1.bf16.msra.mxu0 0
      %1018 = vmatprep.subr.bf16.mxu0 0
      %1019 = vmatpush1.bf16.msra.mxu0 0
      %1020 = vmatprep.subr.bf16.mxu0 0
      %1021 = vmatpush1.bf16.msra.mxu0 0
      %1022 = vmatprep.subr.bf16.mxu0 0
      %1023 = vmatpush1.bf16.msra.mxu0 0
      %1024 = vmatprep.subr.bf16.mxu0 0
      %1025 = vmatpush1.bf16.msra.mxu0 0
      %1026 = vmatprep.mubr.bf16.mxu0 0
      %1027 = vmatmul.mubr.bf16.gmra.mrb[0].mxu0 %v983
      %v1028 = vpop.f32.mrb[0].mxu0
      %v1029 = vadd.f32 0.0, %v1028
      %v1030 = vpop.f32.mrb[0].mxu0
      %v1031 = vpop.f32.mrb[0].mxu0
      %v1032 = vadd.f32 0.0, %v1031
      %v1033 = vpop.f32.mrb[0].mxu0
      %1034 = vmatprep.mubr.bf16.mxu0 0
      %1035 = vmatmul.mubr.bf16.gmra.mrb[0].mxu0 %v986
      %v1036 = vpop.f32.mrb[0].mxu0
      %v1037 = vadd.f32 0.0, %v1036
      %v1038 = vpop.f32.mrb[0].mxu0
      %v1039 = vpop.f32.mrb[0].mxu0
      %v1040 = vadd.f32 0.0, %v1039
      %v1041 = vpop.f32.mrb[0].mxu0
      %1042 = vmatprep.mubr.bf16.mxu0 0
      %1043 = vmatmul.mubr.bf16.gmra.mrb[0].mxu0 %v989
      %v1044 = vpop.f32.mrb[0].mxu0
      %v1045 = vadd.f32 0.0, %v1044
      %v1046 = vpop.f32.mrb[0].mxu0
      %v1047 = vpop.f32.mrb[0].mxu0
      %v1048 = vadd.f32 0.0, %v1047
      %v1049 = vpop.f32.mrb[0].mxu0
      %1050 = vmatprep.mubr.bf16.mxu0 0
      %1051 = vmatmul.mubr.bf16.gmra.mrb[0].mxu0 %v992
      %v1052 = vpop.f32.mrb[0].mxu0
      %v1053 = vadd.f32 0.0, %v1052
      %v1054 = vpop.f32.mrb[0].mxu0
      %v1055 = vpop.f32.mrb[0].mxu0
      %v1056 = vadd.f32 0.0, %v1055
      %v1057 = vpop.f32.mrb[0].mxu0
      %1058 = vdwg.mxu0
      %v1059 = vadd.f32 %v856, %v1029
      %v1060 = vadd.f32 %v857, %v1032
      %v1061 = vadd.f32 %v858, %v1037
      %v1062 = vadd.f32 %v859, %v1040
      %v1063 = vadd.f32 %v860, %v1045
      %v1064 = vadd.f32 %v861, %v1048
      %v1065 = vadd.f32 %v862, %v1053
      %v1066 = vadd.f32 %v863, %v1056
      %v1067 = vpack.c.bf16 %v227, %v226
      %v1068 = vpack.c.bf16 %v229, %v228
      %v1069 = vpack.c.bf16 %v231, %v230
      %v1070 = vpack.c.bf16 %v233, %v232
      %s1071 = scalar_lea.vmem %s2, 224
      %v1072 = vld [vmem:[%s1071] sm:$0xf]
      %v1073 = vld [vmem:[%s1071 + $0x4] sm:$0xf]
      %v1074 = vld [vmem:[%s1071 + $0x8] sm:$0xf]
      %v1075 = vld [vmem:[%s1071 + $0xc] sm:$0xf]
      %v1076 = vld [vmem:[%s1071 + $0x10] sm:$0xf]
      %v1077 = vld [vmem:[%s1071 + $0x14] sm:$0xf]
      %v1078 = vld [vmem:[%s1071 + $0x18] sm:$0xf]
      %v1079 = vld [vmem:[%s1071 + $0x1c] sm:$0xf]
      %v1080 = vld [vmem:[%s1071 + $0x20] sm:$0xf]
      %v1081 = vld [vmem:[%s1071 + $0x24] sm:$0xf]
      %v1082 = vld [vmem:[%s1071 + $0x28] sm:$0xf]
      %v1083 = vld [vmem:[%s1071 + $0x2c] sm:$0xf]
      %v1084 = vld [vmem:[%s1071 + $0x30] sm:$0xf]
      %v1085 = vld [vmem:[%s1071 + $0x34] sm:$0xf]
      %v1100 = vunpack.c.l.b16 %v1072
      %v1101 = vunpack.c.l.b16 %v1073
      %v1102 = vunpack.c.l.b16 %v1074
      %v1103 = vunpack.c.l.b16 %v1075
      %v1104 = vunpack.c.l.b16 %v1076
      %v1105 = vunpack.c.l.b16 %v1077
      %v1106 = vunpack.c.l.b16 %v1078
      %v1107 = vunpack.c.l.b16 %v1079
      %v1108 = vunpack.c.l.b16 %v1080
      %v1109 = vunpack.c.l.b16 %v1081
      %v1110 = vunpack.c.l.b16 %v1082
      %v1111 = vunpack.c.l.b16 %v1083
      %v1112 = vunpack.c.l.b16 %v1084
      %v1113 = vunpack.c.l.b16 %v1085
      %v1114 = vpack.c.b16 %v1101, %v1100
      %v1115 = vpack.c.b16 %v1103, %v1102
      %v1116 = vpack.c.b16 %v1105, %v1104
      %v1117 = vpack.c.b16 %v1107, %v1106
      %v1118 = vpack.c.b16 %v1109, %v1108
      %v1119 = vpack.c.b16 %v1111, %v1110
      %v1120 = vpack.c.b16 %v1113, %v1112
      %v1129 = vsel %vm447, %v1067, 0
      %v1132 = vsel %vm447, %v1068, 0
      %v1135 = vsel %vm447, %v1069, 0
      %v1138 = vsel %vm447, %v1070, 0
      %1140 = vmatprep.subr.bf16.mxu0 0
      %1141 = vmatpush1.bf16.msra.mxu0 %v1114
      %1142 = vmatprep.subr.bf16.mxu0 0
      %1143 = vmatpush1.bf16.msra.mxu0 %v1115
      %1144 = vmatprep.subr.bf16.mxu0 0
      %1145 = vmatpush1.bf16.msra.mxu0 %v1116
      %1146 = vmatprep.subr.bf16.mxu0 0
      %1147 = vmatpush1.bf16.msra.mxu0 %v1117
      %1148 = vmatprep.subr.bf16.mxu0 0
      %1149 = vmatpush1.bf16.msra.mxu0 %v1118
      %1150 = vmatprep.subr.bf16.mxu0 0
      %1151 = vmatpush1.bf16.msra.mxu0 %v1119
      %1152 = vmatprep.subr.bf16.mxu0 0
      %1153 = vmatpush1.bf16.msra.mxu0 %v1120
      %1154 = vmatprep.subr.bf16.mxu0 0
      %1155 = vmatpush1.bf16.msra.mxu0 0
      %1156 = vmatprep.subr.bf16.mxu0 0
      %1157 = vmatpush1.bf16.msra.mxu0 0
      %1158 = vmatprep.subr.bf16.mxu0 0
      %1159 = vmatpush1.bf16.msra.mxu0 0
      %1160 = vmatprep.subr.bf16.mxu0 0
      %1161 = vmatpush1.bf16.msra.mxu0 0
      %1162 = vmatprep.subr.bf16.mxu0 0
      %1163 = vmatpush1.bf16.msra.mxu0 0
      %1164 = vmatprep.subr.bf16.mxu0 0
      %1165 = vmatpush1.bf16.msra.mxu0 0
      %1166 = vmatprep.subr.bf16.mxu0 0
      %1167 = vmatpush1.bf16.msra.mxu0 0
      %1168 = vmatprep.subr.bf16.mxu0 0
      %1169 = vmatpush1.bf16.msra.mxu0 0
      %1170 = vmatprep.subr.bf16.mxu0 0
      %1171 = vmatpush1.bf16.msra.mxu0 0
      %1172 = vmatprep.mubr.bf16.mxu0 0
      %1173 = vmatmul.mubr.bf16.gmra.mrb[0].mxu0 %v1129
      %v1174 = vpop.f32.mrb[0].mxu0
      %v1175 = vadd.f32 0.0, %v1174
      %v1176 = vpop.f32.mrb[0].mxu0
      %v1177 = vpop.f32.mrb[0].mxu0
      %v1178 = vadd.f32 0.0, %v1177
      %v1179 = vpop.f32.mrb[0].mxu0
      %1180 = vmatprep.mubr.bf16.mxu0 0
      %1181 = vmatmul.mubr.bf16.gmra.mrb[0].mxu0 %v1132
      %v1182 = vpop.f32.mrb[0].mxu0
      %v1183 = vadd.f32 0.0, %v1182
      %v1184 = vpop.f32.mrb[0].mxu0
      %v1185 = vpop.f32.mrb[0].mxu0
      %v1186 = vadd.f32 0.0, %v1185
      %v1187 = vpop.f32.mrb[0].mxu0
      %1188 = vmatprep.mubr.bf16.mxu0 0
      %1189 = vmatmul.mubr.bf16.gmra.mrb[0].mxu0 %v1135
      %v1190 = vpop.f32.mrb[0].mxu0
      %v1191 = vadd.f32 0.0, %v1190
      %v1192 = vpop.f32.mrb[0].mxu0
      %v1193 = vpop.f32.mrb[0].mxu0
      %v1194 = vadd.f32 0.0, %v1193
      %v1195 = vpop.f32.mrb[0].mxu0
      %1196 = vmatprep.mubr.bf16.mxu0 0
      %1197 = vmatmul.mubr.bf16.gmra.mrb[0].mxu0 %v1138
      %v1198 = vpop.f32.mrb[0].mxu0
      %v1199 = vadd.f32 0.0, %v1198
      %v1200 = vpop.f32.mrb[0].mxu0
      %v1201 = vpop.f32.mrb[0].mxu0
      %v1202 = vadd.f32 0.0, %v1201
      %v1203 = vpop.f32.mrb[0].mxu0
      %1204 = vdwg.mxu0
      %v1205 = vadd.f32 %v1059, %v1175
      %v1206 = vadd.f32 %v1060, %v1178
      %v1207 = vadd.f32 %v1061, %v1183
      %v1208 = vadd.f32 %v1062, %v1186
      %v1209 = vadd.f32 %v1063, %v1191
      %v1210 = vadd.f32 %v1064, %v1194
      %v1211 = vadd.f32 %v1065, %v1199
      %v1212 = vadd.f32 %v1066, %v1202
      %s1213 = scalar_lea.vmem %s1, 320
      %v1214 = vld [vmem:[%s1213] sm:$0xff]
      %v1215 = vld [vmem:[%s1213 + $0x8] sm:$0xff]
      %v1216 = vld [vmem:[%s1213 + $0x10] sm:$0xff]
      %v1217 = vld [vmem:[%s1213 + $0x18] sm:$0xff]
      %v1218 = vld [vmem:[%s1213 + $0x20] sm:$0xff]
      %v1219 = vld [vmem:[%s1213 + $0x28] sm:$0xff]
      %v1220 = vld [vmem:[%s1213 + $0x30] sm:$0xff]
      %v1221 = vld [vmem:[%s1213 + $0x38] sm:$0xff]
      %1223 = vset.pattern.permute.xlu0 0
      %1224 = vperm.xlu0 %1223, %v1214
      %v1225 = vpop.permute.xlu0 %1224
      %1228 = vset.pattern.permute.xlu0 0
      %1229 = vperm.xlu0 %1228, %v1215
      %v1230 = vpop.permute.xlu0 %1229
      %1233 = vset.pattern.permute.xlu0 0
      %1234 = vperm.xlu0 %1233, %v1216
      %v1235 = vpop.permute.xlu0 %1234
      %1238 = vset.pattern.permute.xlu0 0
      %1239 = vperm.xlu0 %1238, %v1217
      %v1240 = vpop.permute.xlu0 %1239
      %1243 = vset.pattern.permute.xlu0 0
      %1244 = vperm.xlu0 %1243, %v1218
      %v1245 = vpop.permute.xlu0 %1244
      %1248 = vset.pattern.permute.xlu0 0
      %1249 = vperm.xlu0 %1248, %v1219
      %v1250 = vpop.permute.xlu0 %1249
      %1253 = vset.pattern.permute.xlu0 0
      %1254 = vperm.xlu0 %1253, %v1220
      %v1255 = vpop.permute.xlu0 %1254
      %1258 = vset.pattern.permute.xlu0 0
      %1259 = vperm.xlu0 %1258, %v1221
      %v1260 = vpop.permute.xlu0 %1259
      %v1262 = vmul.f32 %v659, %v1225
      %v1263 = vmul.f32 %v658, %v1230
      %v1264 = vmul.f32 %v657, %v1235
      %v1265 = vmul.f32 %v656, %v1240
      %v1266 = vmul.f32 %v655, %v1245
      %v1267 = vmul.f32 %v654, %v1250
      %v1268 = vmul.f32 %v653, %v1255
      %v1269 = vmul.f32 %v660, %v1260
      %v1270 = vpack.c.bf16 %v1263, %v1262
      %v1271 = vpack.c.bf16 %v1265, %v1264
      %v1272 = vpack.c.bf16 %v1267, %v1266
      %v1273 = vpack.c.bf16 %v1269, %v1268
      %s1274 = scalar_lea.vmem %s2, 280
      %v1275 = vld [vmem:[%s1274] sm:$0xf]
      %v1276 = vld [vmem:[%s1274 + $0x4] sm:$0xf]
      %v1277 = vld [vmem:[%s1274 + $0x8] sm:$0xf]
      %v1278 = vld [vmem:[%s1274 + $0xc] sm:$0xf]
      %v1279 = vld [vmem:[%s1274 + $0x10] sm:$0xf]
      %v1280 = vld [vmem:[%s1274 + $0x14] sm:$0xf]
      %v1281 = vld [vmem:[%s1274 + $0x18] sm:$0xf]
      %v1282 = vld [vmem:[%s1274 + $0x1c] sm:$0xf]
      %v1283 = vld [vmem:[%s1274 + $0x20] sm:$0xf]
      %v1284 = vld [vmem:[%s1274 + $0x24] sm:$0xf]
      %v1285 = vld [vmem:[%s1274 + $0x28] sm:$0xf]
      %v1286 = vld [vmem:[%s1274 + $0x2c] sm:$0xf]
      %v1287 = vld [vmem:[%s1274 + $0x30] sm:$0xf]
      %v1288 = vld [vmem:[%s1274 + $0x34] sm:$0xf]
      %v1303 = vunpack.c.l.b16 %v1275
      %v1304 = vunpack.c.l.b16 %v1276
      %v1305 = vunpack.c.l.b16 %v1277
      %v1306 = vunpack.c.l.b16 %v1278
      %v1307 = vunpack.c.l.b16 %v1279
      %v1308 = vunpack.c.l.b16 %v1280
      %v1309 = vunpack.c.l.b16 %v1281
      %v1310 = vunpack.c.l.b16 %v1282
      %v1311 = vunpack.c.l.b16 %v1283
      %v1312 = vunpack.c.l.b16 %v1284
      %v1313 = vunpack.c.l.b16 %v1285
      %v1314 = vunpack.c.l.b16 %v1286
      %v1315 = vunpack.c.l.b16 %v1287
      %v1316 = vunpack.c.l.b16 %v1288
      %v1317 = vpack.c.b16 %v1304, %v1303
      %v1318 = vpack.c.b16 %v1306, %v1305
      %v1319 = vpack.c.b16 %v1308, %v1307
      %v1320 = vpack.c.b16 %v1310, %v1309
      %v1321 = vpack.c.b16 %v1312, %v1311
      %v1322 = vpack.c.b16 %v1314, %v1313
      %v1323 = vpack.c.b16 %v1316, %v1315
      %v1332 = vsel %vm447, %v1270, 0
      %v1335 = vsel %vm447, %v1271, 0
      %v1338 = vsel %vm447, %v1272, 0
      %v1341 = vsel %vm447, %v1273, 0
      %1343 = vmatprep.subr.bf16.mxu0 0
      %1344 = vmatpush1.bf16.msra.mxu0 %v1317
      %1345 = vmatprep.subr.bf16.mxu0 0
      %1346 = vmatpush1.bf16.msra.mxu0 %v1318
      %1347 = vmatprep.subr.bf16.mxu0 0
      %1348 = vmatpush1.bf16.msra.mxu0 %v1319
      %1349 = vmatprep.subr.bf16.mxu0 0
      %1350 = vmatpush1.bf16.msra.mxu0 %v1320
      %1351 = vmatprep.subr.bf16.mxu0 0
      %1352 = vmatpush1.bf16.msra.mxu0 %v1321
      %1353 = vmatprep.subr.bf16.mxu0 0
      %1354 = vmatpush1.bf16.msra.mxu0 %v1322
      %1355 = vmatprep.subr.bf16.mxu0 0
      %1356 = vmatpush1.bf16.msra.mxu0 %v1323
      %1357 = vmatprep.subr.bf16.mxu0 0
      %1358 = vmatpush1.bf16.msra.mxu0 0
      %1359 = vmatprep.subr.bf16.mxu0 0
      %1360 = vmatpush1.bf16.msra.mxu0 0
      %1361 = vmatprep.subr.bf16.mxu0 0
      %1362 = vmatpush1.bf16.msra.mxu0 0
      %1363 = vmatprep.subr.bf16.mxu0 0
      %1364 = vmatpush1.bf16.msra.mxu0 0
      %1365 = vmatprep.subr.bf16.mxu0 0
      %1366 = vmatpush1.bf16.msra.mxu0 0
      %1367 = vmatprep.subr.bf16.mxu0 0
      %1368 = vmatpush1.bf16.msra.mxu0 0
      %1369 = vmatprep.subr.bf16.mxu0 0
      %1370 = vmatpush1.bf16.msra.mxu0 0
      %1371 = vmatprep.subr.bf16.mxu0 0
      %1372 = vmatpush1.bf16.msra.mxu0 0
      %1373 = vmatprep.subr.bf16.mxu0 0
      %1374 = vmatpush1.bf16.msra.mxu0 0
      %1375 = vmatprep.mubr.bf16.mxu0 0
      %1376 = vmatmul.mubr.bf16.gmra.mrb[0].mxu0 %v1332
      %v1377 = vpop.f32.mrb[0].mxu0
      %v1378 = vadd.f32 0.0, %v1377
      %v1379 = vpop.f32.mrb[0].mxu0
      %v1380 = vpop.f32.mrb[0].mxu0
      %v1381 = vadd.f32 0.0, %v1380
      %v1382 = vpop.f32.mrb[0].mxu0
      %1383 = vmatprep.mubr.bf16.mxu0 0
      %1384 = vmatmul.mubr.bf16.gmra.mrb[0].mxu0 %v1335
      %v1385 = vpop.f32.mrb[0].mxu0
      %v1386 = vadd.f32 0.0, %v1385
      %v1387 = vpop.f32.mrb[0].mxu0
      %v1388 = vpop.f32.mrb[0].mxu0
      %v1389 = vadd.f32 0.0, %v1388
      %v1390 = vpop.f32.mrb[0].mxu0
      %1391 = vmatprep.mubr.bf16.mxu0 0
      %1392 = vmatmul.mubr.bf16.gmra.mrb[0].mxu0 %v1338
      %v1393 = vpop.f32.mrb[0].mxu0
      %v1394 = vadd.f32 0.0, %v1393
      %v1395 = vpop.f32.mrb[0].mxu0
      %v1396 = vpop.f32.mrb[0].mxu0
      %v1397 = vadd.f32 0.0, %v1396
      %v1398 = vpop.f32.mrb[0].mxu0
      %1399 = vmatprep.mubr.bf16.mxu0 0
      %1400 = vmatmul.mubr.bf16.gmra.mrb[0].mxu0 %v1341
      %v1401 = vpop.f32.mrb[0].mxu0
      %v1402 = vadd.f32 0.0, %v1401
      %v1403 = vpop.f32.mrb[0].mxu0
      %v1404 = vpop.f32.mrb[0].mxu0
      %v1405 = vadd.f32 0.0, %v1404
      %v1406 = vpop.f32.mrb[0].mxu0
      %1407 = vdwg.mxu0
      %v1408 = vadd.f32 %v1205, %v1378
      %v1409 = vadd.f32 %v1206, %v1381
      %v1410 = vadd.f32 %v1207, %v1386
      %v1411 = vadd.f32 %v1208, %v1389
      %v1412 = vadd.f32 %v1209, %v1394
      %v1413 = vadd.f32 %v1210, %v1397
      %v1414 = vadd.f32 %v1211, %v1402
      %v1415 = vadd.f32 %v1212, %v1405
      %s1416 = scalar_lea.vmem %s1, 384
      %v1417 = vld [vmem:[%s1416] sm:$0xff]
      %v1418 = vld [vmem:[%s1416 + $0x8] sm:$0xff]
      %v1419 = vld [vmem:[%s1416 + $0x10] sm:$0xff]
      %v1420 = vld [vmem:[%s1416 + $0x18] sm:$0xff]
      %v1421 = vld [vmem:[%s1416 + $0x20] sm:$0xff]
      %v1422 = vld [vmem:[%s1416 + $0x28] sm:$0xff]
      %v1423 = vld [vmem:[%s1416 + $0x30] sm:$0xff]
      %v1424 = vld [vmem:[%s1416 + $0x38] sm:$0xff]
      %1426 = vset.pattern.permute.xlu0 0
      %1427 = vperm.xlu0 %1426, %v1417
      %v1428 = vpop.permute.xlu0 %1427
      %1431 = vset.pattern.permute.xlu0 0
      %1432 = vperm.xlu0 %1431, %v1418
      %v1433 = vpop.permute.xlu0 %1432
      %1436 = vset.pattern.permute.xlu0 0
      %1437 = vperm.xlu0 %1436, %v1419
      %v1438 = vpop.permute.xlu0 %1437
      %1441 = vset.pattern.permute.xlu0 0
      %1442 = vperm.xlu0 %1441, %v1420
      %v1443 = vpop.permute.xlu0 %1442
      %1446 = vset.pattern.permute.xlu0 0
      %1447 = vperm.xlu0 %1446, %v1421
      %v1448 = vpop.permute.xlu0 %1447
      %1451 = vset.pattern.permute.xlu0 0
      %1452 = vperm.xlu0 %1451, %v1422
      %v1453 = vpop.permute.xlu0 %1452
      %1456 = vset.pattern.permute.xlu0 0
      %1457 = vperm.xlu0 %1456, %v1423
      %v1458 = vpop.permute.xlu0 %1457
      %1461 = vset.pattern.permute.xlu0 0
      %1462 = vperm.xlu0 %1461, %v1424
      %v1463 = vpop.permute.xlu0 %1462
      %v1465 = vmul.f32 %v253, %v1428
      %v1466 = vmul.f32 %v252, %v1433
      %v1467 = vmul.f32 %v251, %v1438
      %v1468 = vmul.f32 %v250, %v1443
      %v1469 = vmul.f32 %v249, %v1448
      %v1470 = vmul.f32 %v248, %v1453
      %v1471 = vmul.f32 %v247, %v1458
      %v1472 = vmul.f32 %v254, %v1463
      %v1473 = vpack.c.bf16 %v1466, %v1465
      %v1474 = vpack.c.bf16 %v1468, %v1467
      %v1475 = vpack.c.bf16 %v1470, %v1469
      %v1476 = vpack.c.bf16 %v1472, %v1471
      %s1477 = scalar_lea.vmem %s2, 336
      %v1478 = vld [vmem:[%s1477] sm:$0xf]
      %v1479 = vld [vmem:[%s1477 + $0x4] sm:$0xf]
      %v1480 = vld [vmem:[%s1477 + $0x8] sm:$0xf]
      %v1481 = vld [vmem:[%s1477 + $0xc] sm:$0xf]
      %v1482 = vld [vmem:[%s1477 + $0x10] sm:$0xf]
      %v1483 = vld [vmem:[%s1477 + $0x14] sm:$0xf]
      %v1484 = vld [vmem:[%s1477 + $0x18] sm:$0xf]
      %v1485 = vld [vmem:[%s1477 + $0x1c] sm:$0xf]
      %v1486 = vld [vmem:[%s1477 + $0x20] sm:$0xf]
      %v1487 = vld [vmem:[%s1477 + $0x24] sm:$0xf]
      %v1488 = vld [vmem:[%s1477 + $0x28] sm:$0xf]
      %v1489 = vld [vmem:[%s1477 + $0x2c] sm:$0xf]
      %v1490 = vld [vmem:[%s1477 + $0x30] sm:$0xf]
      %v1491 = vld [vmem:[%s1477 + $0x34] sm:$0xf]
      %v1506 = vunpack.c.l.b16 %v1478
      %v1507 = vunpack.c.l.b16 %v1479
      %v1508 = vunpack.c.l.b16 %v1480
      %v1509 = vunpack.c.l.b16 %v1481
      %v1510 = vunpack.c.l.b16 %v1482
      %v1511 = vunpack.c.l.b16 %v1483
      %v1512 = vunpack.c.l.b16 %v1484
      %v1513 = vunpack.c.l.b16 %v1485
      %v1514 = vunpack.c.l.b16 %v1486
      %v1515 = vunpack.c.l.b16 %v1487
      %v1516 = vunpack.c.l.b16 %v1488
      %v1517 = vunpack.c.l.b16 %v1489
      %v1518 = vunpack.c.l.b16 %v1490
      %v1519 = vunpack.c.l.b16 %v1491
      %v1520 = vpack.c.b16 %v1507, %v1506
      %v1521 = vpack.c.b16 %v1509, %v1508
      %v1522 = vpack.c.b16 %v1511, %v1510
      %v1523 = vpack.c.b16 %v1513, %v1512
      %v1524 = vpack.c.b16 %v1515, %v1514
      %v1525 = vpack.c.b16 %v1517, %v1516
      %v1526 = vpack.c.b16 %v1519, %v1518
      %v1535 = vsel %vm447, %v1473, 0
      %v1538 = vsel %vm447, %v1474, 0
      %v1541 = vsel %vm447, %v1475, 0
      %v1544 = vsel %vm447, %v1476, 0
      %1546 = vmatprep.subr.bf16.mxu0 0
      %1547 = vmatpush1.bf16.msra.mxu0 %v1520
      %1548 = vmatprep.subr.bf16.mxu0 0
      %1549 = vmatpush1.bf16.msra.mxu0 %v1521
      %1550 = vmatprep.subr.bf16.mxu0 0
      %1551 = vmatpush1.bf16.msra.mxu0 %v1522
      %1552 = vmatprep.subr.bf16.mxu0 0
      %1553 = vmatpush1.bf16.msra.mxu0 %v1523
      %1554 = vmatprep.subr.bf16.mxu0 0
      %1555 = vmatpush1.bf16.msra.mxu0 %v1524
      %1556 = vmatprep.subr.bf16.mxu0 0
      %1557 = vmatpush1.bf16.msra.mxu0 %v1525
      %1558 = vmatprep.subr.bf16.mxu0 0
      %1559 = vmatpush1.bf16.msra.mxu0 %v1526
      %1560 = vmatprep.subr.bf16.mxu0 0
      %1561 = vmatpush1.bf16.msra.mxu0 0
      %1562 = vmatprep.subr.bf16.mxu0 0
      %1563 = vmatpush1.bf16.msra.mxu0 0
      %1564 = vmatprep.subr.bf16.mxu0 0
      %1565 = vmatpush1.bf16.msra.mxu0 0
      %1566 = vmatprep.subr.bf16.mxu0 0
      %1567 = vmatpush1.bf16.msra.mxu0 0
      %1568 = vmatprep.subr.bf16.mxu0 0
      %1569 = vmatpush1.bf16.msra.mxu0 0
      %1570 = vmatprep.subr.bf16.mxu0 0
      %1571 = vmatpush1.bf16.msra.mxu0 0
      %1572 = vmatprep.subr.bf16.mxu0 0
      %1573 = vmatpush1.bf16.msra.mxu0 0
      %1574 = vmatprep.subr.bf16.mxu0 0
      %1575 = vmatpush1.bf16.msra.mxu0 0
      %1576 = vmatprep.subr.bf16.mxu0 0
      %1577 = vmatpush1.bf16.msra.mxu0 0
      %1578 = vmatprep.mubr.bf16.mxu0 0
      %1579 = vmatmul.mubr.bf16.gmra.mrb[0].mxu0 %v1535
      %v1580 = vpop.f32.mrb[0].mxu0
      %v1581 = vadd.f32 0.0, %v1580
      %v1582 = vpop.f32.mrb[0].mxu0
      %v1583 = vpop.f32.mrb[0].mxu0
      %v1584 = vadd.f32 0.0, %v1583
      %v1585 = vpop.f32.mrb[0].mxu0
      %1586 = vmatprep.mubr.bf16.mxu0 0
      %1587 = vmatmul.mubr.bf16.gmra.mrb[0].mxu0 %v1538
      %v1588 = vpop.f32.mrb[0].mxu0
      %v1589 = vadd.f32 0.0, %v1588
      %v1590 = vpop.f32.mrb[0].mxu0
      %v1591 = vpop.f32.mrb[0].mxu0
      %v1592 = vadd.f32 0.0, %v1591
      %v1593 = vpop.f32.mrb[0].mxu0
      %1594 = vmatprep.mubr.bf16.mxu0 0
      %1595 = vmatmul.mubr.bf16.gmra.mrb[0].mxu0 %v1541
      %v1596 = vpop.f32.mrb[0].mxu0
      %v1597 = vadd.f32 0.0, %v1596
      %v1598 = vpop.f32.mrb[0].mxu0
      %v1599 = vpop.f32.mrb[0].mxu0
      %v1600 = vadd.f32 0.0, %v1599
      %v1601 = vpop.f32.mrb[0].mxu0
      %1602 = vmatprep.mubr.bf16.mxu0 0
      %1603 = vmatmul.mubr.bf16.gmra.mrb[0].mxu0 %v1544
      %v1604 = vpop.f32.mrb[0].mxu0
      %v1605 = vadd.f32 0.0, %v1604
      %v1606 = vpop.f32.mrb[0].mxu0
      %v1607 = vpop.f32.mrb[0].mxu0
      %v1608 = vadd.f32 0.0, %v1607
      %v1609 = vpop.f32.mrb[0].mxu0
      %1610 = vdwg.mxu0
      %v1611 = vadd.f32 %v1408, %v1581
      %v1612 = vadd.f32 %v1409, %v1584
      %v1613 = vadd.f32 %v1410, %v1589
      %v1614 = vadd.f32 %v1411, %v1592
      %v1615 = vadd.f32 %v1412, %v1597
      %v1616 = vadd.f32 %v1413, %v1600
      %v1617 = vadd.f32 %v1414, %v1605
      %v1618 = vadd.f32 %v1415, %v1608
      %s1619 = scalar_lea.vmem %s1, 448
      %v1620 = vld [vmem:[%s1619] sm:$0xff]
      %v1621 = vld [vmem:[%s1619 + $0x8] sm:$0xff]
      %v1622 = vld [vmem:[%s1619 + $0x10] sm:$0xff]
      %v1623 = vld [vmem:[%s1619 + $0x18] sm:$0xff]
      %v1624 = vld [vmem:[%s1619 + $0x20] sm:$0xff]
      %v1625 = vld [vmem:[%s1619 + $0x28] sm:$0xff]
      %v1626 = vld [vmem:[%s1619 + $0x30] sm:$0xff]
      %v1627 = vld [vmem:[%s1619 + $0x38] sm:$0xff]
      %1629 = vset.pattern.permute.xlu0 0
      %1630 = vperm.xlu0 %1629, %v1620
      %v1631 = vpop.permute.xlu0 %1630
      %1634 = vset.pattern.permute.xlu0 0
      %1635 = vperm.xlu0 %1634, %v1621
      %v1636 = vpop.permute.xlu0 %1635
      %1639 = vset.pattern.permute.xlu0 0
      %1640 = vperm.xlu0 %1639, %v1622
      %v1641 = vpop.permute.xlu0 %1640
      %1644 = vset.pattern.permute.xlu0 0
      %1645 = vperm.xlu0 %1644, %v1623
      %v1646 = vpop.permute.xlu0 %1645
      %1649 = vset.pattern.permute.xlu0 0
      %1650 = vperm.xlu0 %1649, %v1624
      %v1651 = vpop.permute.xlu0 %1650
      %1654 = vset.pattern.permute.xlu0 0
      %1655 = vperm.xlu0 %1654, %v1625
      %v1656 = vpop.permute.xlu0 %1655
      %1659 = vset.pattern.permute.xlu0 0
      %1660 = vperm.xlu0 %1659, %v1626
      %v1661 = vpop.permute.xlu0 %1660
      %1664 = vset.pattern.permute.xlu0 0
      %1665 = vperm.xlu0 %1664, %v1627
      %v1666 = vpop.permute.xlu0 %1665
      %v1668 = vmul.f32 %v227, %v1631
      %v1669 = vmul.f32 %v228, %v1636
      %v1670 = vmul.f32 %v229, %v1641
      %v1671 = vmul.f32 %v230, %v1646
      %v1672 = vmul.f32 %v231, %v1651
      %v1673 = vmul.f32 %v232, %v1656
      %v1674 = vmul.f32 %v233, %v1661
      %v1675 = vmul.f32 %v226, %v1666
      %v1676 = vpack.c.bf16 %v1669, %v1668
      %v1677 = vpack.c.bf16 %v1671, %v1670
      %v1678 = vpack.c.bf16 %v1673, %v1672
      %v1679 = vpack.c.bf16 %v1675, %v1674
      %s1680 = scalar_lea.vmem %s2, 392
      %v1681 = vld [vmem:[%s1680] sm:$0xf]
      %v1682 = vld [vmem:[%s1680 + $0x4] sm:$0xf]
      %v1683 = vld [vmem:[%s1680 + $0x8] sm:$0xf]
      %v1684 = vld [vmem:[%s1680 + $0xc] sm:$0xf]
      %v1685 = vld [vmem:[%s1680 + $0x10] sm:$0xf]
      %v1686 = vld [vmem:[%s1680 + $0x14] sm:$0xf]
      %v1687 = vld [vmem:[%s1680 + $0x18] sm:$0xf]
      %v1688 = vld [vmem:[%s1680 + $0x1c] sm:$0xf]
      %v1689 = vld [vmem:[%s1680 + $0x20] sm:$0xf]
      %v1690 = vld [vmem:[%s1680 + $0x24] sm:$0xf]
      %v1691 = vld [vmem:[%s1680 + $0x28] sm:$0xf]
      %v1692 = vld [vmem:[%s1680 + $0x2c] sm:$0xf]
      %v1693 = vld [vmem:[%s1680 + $0x30] sm:$0xf]
      %v1694 = vld [vmem:[%s1680 + $0x34] sm:$0xf]
      %v1709 = vunpack.c.l.b16 %v1681
      %v1710 = vunpack.c.l.b16 %v1682
      %v1711 = vunpack.c.l.b16 %v1683
      %v1712 = vunpack.c.l.b16 %v1684
      %v1713 = vunpack.c.l.b16 %v1685
      %v1714 = vunpack.c.l.b16 %v1686
      %v1715 = vunpack.c.l.b16 %v1687
      %v1716 = vunpack.c.l.b16 %v1688
      %v1717 = vunpack.c.l.b16 %v1689
      %v1718 = vunpack.c.l.b16 %v1690
      %v1719 = vunpack.c.l.b16 %v1691
      %v1720 = vunpack.c.l.b16 %v1692
      %v1721 = vunpack.c.l.b16 %v1693
      %v1722 = vunpack.c.l.b16 %v1694
      %v1723 = vpack.c.b16 %v1710, %v1709
      %v1724 = vpack.c.b16 %v1712, %v1711
      %v1725 = vpack.c.b16 %v1714, %v1713
      %v1726 = vpack.c.b16 %v1716, %v1715
      %v1727 = vpack.c.b16 %v1718, %v1717
      %v1728 = vpack.c.b16 %v1720, %v1719
      %v1729 = vpack.c.b16 %v1722, %v1721
      %v1738 = vsel %vm447, %v1676, 0
      %v1741 = vsel %vm447, %v1677, 0
      %v1744 = vsel %vm447, %v1678, 0
      %v1747 = vsel %vm447, %v1679, 0
      %1749 = vmatprep.subr.bf16.mxu0 0
      %1750 = vmatpush1.bf16.msra.mxu0 %v1723
      %1751 = vmatprep.subr.bf16.mxu0 0
      %1752 = vmatpush1.bf16.msra.mxu0 %v1724
      %1753 = vmatprep.subr.bf16.mxu0 0
      %1754 = vmatpush1.bf16.msra.mxu0 %v1725
      %1755 = vmatprep.subr.bf16.mxu0 0
      %1756 = vmatpush1.bf16.msra.mxu0 %v1726
      %1757 = vmatprep.subr.bf16.mxu0 0
      %1758 = vmatpush1.bf16.msra.mxu0 %v1727
      %1759 = vmatprep.subr.bf16.mxu0 0
      %1760 = vmatpush1.bf16.msra.mxu0 %v1728
      %1761 = vmatprep.subr.bf16.mxu0 0
      %1762 = vmatpush1.bf16.msra.mxu0 %v1729
      %1763 = vmatprep.subr.bf16.mxu0 0
      %1764 = vmatpush1.bf16.msra.mxu0 0
      %1765 = vmatprep.subr.bf16.mxu0 0
      %1766 = vmatpush1.bf16.msra.mxu0 0
      %1767 = vmatprep.subr.bf16.mxu0 0
      %1768 = vmatpush1.bf16.msra.mxu0 0
      %1769 = vmatprep.subr.bf16.mxu0 0
      %1770 = vmatpush1.bf16.msra.mxu0 0
      %1771 = vmatprep.subr.bf16.mxu0 0
      %1772 = vmatpush1.bf16.msra.mxu0 0
      %1773 = vmatprep.subr.bf16.mxu0 0
      %1774 = vmatpush1.bf16.msra.mxu0 0
      %1775 = vmatprep.subr.bf16.mxu0 0
      %1776 = vmatpush1.bf16.msra.mxu0 0
      %1777 = vmatprep.subr.bf16.mxu0 0
      %1778 = vmatpush1.bf16.msra.mxu0 0
      %1779 = vmatprep.subr.bf16.mxu0 0
      %1780 = vmatpush1.bf16.msra.mxu0 0
      %1781 = vmatprep.mubr.bf16.mxu0 0
      %1782 = vmatmul.mubr.bf16.gmra.mrb[0].mxu0 %v1738
      %v1783 = vpop.f32.mrb[0].mxu0
      %v1784 = vadd.f32 0.0, %v1783
      %v1785 = vpop.f32.mrb[0].mxu0
      %v1786 = vpop.f32.mrb[0].mxu0
      %v1787 = vadd.f32 0.0, %v1786
      %v1788 = vpop.f32.mrb[0].mxu0
      %1789 = vmatprep.mubr.bf16.mxu0 0
      %1790 = vmatmul.mubr.bf16.gmra.mrb[0].mxu0 %v1741
      %v1791 = vpop.f32.mrb[0].mxu0
      %v1792 = vadd.f32 0.0, %v1791
      %v1793 = vpop.f32.mrb[0].mxu0
      %v1794 = vpop.f32.mrb[0].mxu0
      %v1795 = vadd.f32 0.0, %v1794
      %v1796 = vpop.f32.mrb[0].mxu0
      %1797 = vmatprep.mubr.bf16.mxu0 0
      %1798 = vmatmul.mubr.bf16.gmra.mrb[0].mxu0 %v1744
      %v1799 = vpop.f32.mrb[0].mxu0
      %v1800 = vadd.f32 0.0, %v1799
      %v1801 = vpop.f32.mrb[0].mxu0
      %v1802 = vpop.f32.mrb[0].mxu0
      %v1803 = vadd.f32 0.0, %v1802
      %v1804 = vpop.f32.mrb[0].mxu0
      %1805 = vmatprep.mubr.bf16.mxu0 0
      %1806 = vmatmul.mubr.bf16.gmra.mrb[0].mxu0 %v1747
      %v1807 = vpop.f32.mrb[0].mxu0
      %v1808 = vadd.f32 0.0, %v1807
      %v1809 = vpop.f32.mrb[0].mxu0
      %v1810 = vpop.f32.mrb[0].mxu0
      %v1811 = vadd.f32 0.0, %v1810
      %v1812 = vpop.f32.mrb[0].mxu0
      %1813 = vdwg.mxu0
      %v1814 = vadd.f32 %v1611, %v1784
      %v1815 = vadd.f32 %v1612, %v1787
      %v1816 = vadd.f32 %v1613, %v1792
      %v1817 = vadd.f32 %v1614, %v1795
      %v1818 = vadd.f32 %v1615, %v1800
      %v1819 = vadd.f32 %v1616, %v1803
      %v1820 = vadd.f32 %v1617, %v1808
      %v1821 = vadd.f32 %v1618, %v1811
      %s1822 = scalar_lea.vmem %s1, 512
      %v1823 = vld [vmem:[%s1822] sm:$0xff]
      %v1824 = vld [vmem:[%s1822 + $0x8] sm:$0xff]
      %v1825 = vld [vmem:[%s1822 + $0x10] sm:$0xff]
      %v1826 = vld [vmem:[%s1822 + $0x18] sm:$0xff]
      %v1827 = vld [vmem:[%s1822 + $0x20] sm:$0xff]
      %v1828 = vld [vmem:[%s1822 + $0x28] sm:$0xff]
      %v1829 = vld [vmem:[%s1822 + $0x30] sm:$0xff]
      %v1830 = vld [vmem:[%s1822 + $0x38] sm:$0xff]
      %1832 = vset.pattern.permute.xlu0 0
      %1833 = vperm.xlu0 %1832, %v1823
      %v1834 = vpop.permute.xlu0 %1833
      %1837 = vset.pattern.permute.xlu0 0
      %1838 = vperm.xlu0 %1837, %v1824
      %v1839 = vpop.permute.xlu0 %1838
      %1842 = vset.pattern.permute.xlu0 0
      %1843 = vperm.xlu0 %1842, %v1825
      %v1844 = vpop.permute.xlu0 %1843
      %1847 = vset.pattern.permute.xlu0 0
      %1848 = vperm.xlu0 %1847, %v1826
      %v1849 = vpop.permute.xlu0 %1848
      %1852 = vset.pattern.permute.xlu0 0
      %1853 = vperm.xlu0 %1852, %v1827
      %v1854 = vpop.permute.xlu0 %1853
      %1857 = vset.pattern.permute.xlu0 0
      %1858 = vperm.xlu0 %1857, %v1828
      %v1859 = vpop.permute.xlu0 %1858
      %1862 = vset.pattern.permute.xlu0 0
      %1863 = vperm.xlu0 %1862, %v1829
      %v1864 = vpop.permute.xlu0 %1863
      %1867 = vset.pattern.permute.xlu0 0
      %1868 = vperm.xlu0 %1867, %v1830
      %v1869 = vpop.permute.xlu0 %1868
      %v1871 = vmul.f32 %v658, %v1834
      %v1872 = vmul.f32 %v657, %v1839
      %v1873 = vmul.f32 %v656, %v1844
      %v1874 = vmul.f32 %v655, %v1849
      %v1875 = vmul.f32 %v654, %v1854
      %v1876 = vmul.f32 %v653, %v1859
      %v1877 = vmul.f32 %v660, %v1864
      %v1878 = vmul.f32 %v659, %v1869
      %v1879 = vpack.c.bf16 %v1872, %v1871
      %v1880 = vpack.c.bf16 %v1874, %v1873
      %v1881 = vpack.c.bf16 %v1876, %v1875
      %v1882 = vpack.c.bf16 %v1878, %v1877
      %s1883 = scalar_lea.vmem %s2, 448
      %v1884 = vld [vmem:[%s1883] sm:$0xf]
      %v1885 = vld [vmem:[%s1883 + $0x4] sm:$0xf]
      %v1886 = vld [vmem:[%s1883 + $0x8] sm:$0xf]
      %v1887 = vld [vmem:[%s1883 + $0xc] sm:$0xf]
      %v1888 = vld [vmem:[%s1883 + $0x10] sm:$0xf]
      %v1889 = vld [vmem:[%s1883 + $0x14] sm:$0xf]
      %v1890 = vld [vmem:[%s1883 + $0x18] sm:$0xf]
      %v1891 = vld [vmem:[%s1883 + $0x1c] sm:$0xf]
      %v1892 = vld [vmem:[%s1883 + $0x20] sm:$0xf]
      %v1893 = vld [vmem:[%s1883 + $0x24] sm:$0xf]
      %v1894 = vld [vmem:[%s1883 + $0x28] sm:$0xf]
      %v1895 = vld [vmem:[%s1883 + $0x2c] sm:$0xf]
      %v1896 = vld [vmem:[%s1883 + $0x30] sm:$0xf]
      %v1897 = vld [vmem:[%s1883 + $0x34] sm:$0xf]
      %v1912 = vunpack.c.l.b16 %v1884
      %v1913 = vunpack.c.l.b16 %v1885
      %v1914 = vunpack.c.l.b16 %v1886
      %v1915 = vunpack.c.l.b16 %v1887
      %v1916 = vunpack.c.l.b16 %v1888
      %v1917 = vunpack.c.l.b16 %v1889
      %v1918 = vunpack.c.l.b16 %v1890
      %v1919 = vunpack.c.l.b16 %v1891
      %v1920 = vunpack.c.l.b16 %v1892
      %v1921 = vunpack.c.l.b16 %v1893
      %v1922 = vunpack.c.l.b16 %v1894
      %v1923 = vunpack.c.l.b16 %v1895
      %v1924 = vunpack.c.l.b16 %v1896
      %v1925 = vunpack.c.l.b16 %v1897
      %v1926 = vpack.c.b16 %v1913, %v1912
      %v1927 = vpack.c.b16 %v1915, %v1914
      %v1928 = vpack.c.b16 %v1917, %v1916
      %v1929 = vpack.c.b16 %v1919, %v1918
      %v1930 = vpack.c.b16 %v1921, %v1920
      %v1931 = vpack.c.b16 %v1923, %v1922
      %v1932 = vpack.c.b16 %v1925, %v1924
      %v1941 = vsel %vm447, %v1879, 0
      %v1944 = vsel %vm447, %v1880, 0
      %v1947 = vsel %vm447, %v1881, 0
      %v1950 = vsel %vm447, %v1882, 0
      %1952 = vmatprep.subr.bf16.mxu0 0
      %1953 = vmatpush1.bf16.msra.mxu0 %v1926
      %1954 = vmatprep.subr.bf16.mxu0 0
      %1955 = vmatpush1.bf16.msra.mxu0 %v1927
      %1956 = vmatprep.subr.bf16.mxu0 0
      %1957 = vmatpush1.bf16.msra.mxu0 %v1928
      %1958 = vmatprep.subr.bf16.mxu0 0
      %1959 = vmatpush1.bf16.msra.mxu0 %v1929
      %1960 = vmatprep.subr.bf16.mxu0 0
      %1961 = vmatpush1.bf16.msra.mxu0 %v1930
      %1962 = vmatprep.subr.bf16.mxu0 0
      %1963 = vmatpush1.bf16.msra.mxu0 %v1931
      %1964 = vmatprep.subr.bf16.mxu0 0
      %1965 = vmatpush1.bf16.msra.mxu0 %v1932
      %1966 = vmatprep.subr.bf16.mxu0 0
      %1967 = vmatpush1.bf16.msra.mxu0 0
      %1968 = vmatprep.subr.bf16.mxu0 0
      %1969 = vmatpush1.bf16.msra.mxu0 0
      %1970 = vmatprep.subr.bf16.mxu0 0
      %1971 = vmatpush1.bf16.msra.mxu0 0
      %1972 = vmatprep.subr.bf16.mxu0 0
      %1973 = vmatpush1.bf16.msra.mxu0 0
      %1974 = vmatprep.subr.bf16.mxu0 0
      %1975 = vmatpush1.bf16.msra.mxu0 0
      %1976 = vmatprep.subr.bf16.mxu0 0
      %1977 = vmatpush1.bf16.msra.mxu0 0
      %1978 = vmatprep.subr.bf16.mxu0 0
      %1979 = vmatpush1.bf16.msra.mxu0 0
      %1980 = vmatprep.subr.bf16.mxu0 0
      %1981 = vmatpush1.bf16.msra.mxu0 0
      %1982 = vmatprep.subr.bf16.mxu0 0
      %1983 = vmatpush1.bf16.msra.mxu0 0
      %1984 = vmatprep.mubr.bf16.mxu0 0
      %1985 = vmatmul.mubr.bf16.gmra.mrb[0].mxu0 %v1941
      %v1986 = vpop.f32.mrb[0].mxu0
      %v1987 = vadd.f32 0.0, %v1986
      %v1988 = vpop.f32.mrb[0].mxu0
      %v1989 = vpop.f32.mrb[0].mxu0
      %v1990 = vadd.f32 0.0, %v1989
      %v1991 = vpop.f32.mrb[0].mxu0
      %1992 = vmatprep.mubr.bf16.mxu0 0
      %1993 = vmatmul.mubr.bf16.gmra.mrb[0].mxu0 %v1944
      %v1994 = vpop.f32.mrb[0].mxu0
      %v1995 = vadd.f32 0.0, %v1994
      %v1996 = vpop.f32.mrb[0].mxu0
      %v1997 = vpop.f32.mrb[0].mxu0
      %v1998 = vadd.f32 0.0, %v1997
      %v1999 = vpop.f32.mrb[0].mxu0
      %2000 = vmatprep.mubr.bf16.mxu0 0
      %2001 = vmatmul.mubr.bf16.gmra.mrb[0].mxu0 %v1947
      %v2002 = vpop.f32.mrb[0].mxu0
      %v2003 = vadd.f32 0.0, %v2002
      %v2004 = vpop.f32.mrb[0].mxu0
      %v2005 = vpop.f32.mrb[0].mxu0
      %v2006 = vadd.f32 0.0, %v2005
      %v2007 = vpop.f32.mrb[0].mxu0
      %2008 = vmatprep.mubr.bf16.mxu0 0
      %2009 = vmatmul.mubr.bf16.gmra.mrb[0].mxu0 %v1950
      %v2010 = vpop.f32.mrb[0].mxu0
      %v2011 = vadd.f32 0.0, %v2010
      %v2012 = vpop.f32.mrb[0].mxu0
      %v2013 = vpop.f32.mrb[0].mxu0
      %v2014 = vadd.f32 0.0, %v2013
      %v2015 = vpop.f32.mrb[0].mxu0
      %2016 = vdwg.mxu0
      %v2017 = vadd.f32 %v1814, %v1987
      %v2018 = vadd.f32 %v1815, %v1990
      %v2019 = vadd.f32 %v1816, %v1995
      %v2020 = vadd.f32 %v1817, %v1998
      %v2021 = vadd.f32 %v1818, %v2003
      %v2022 = vadd.f32 %v1819, %v2006
      %v2023 = vadd.f32 %v1820, %v2011
      %v2024 = vadd.f32 %v1821, %v2014
      %v2026 = vlaneseq
      %v2027 = vshrl.u32 %v2026, 7
      %v2028 = vsub.s32 0, %v2027
      %v2029 = vrot.slane %v234, %v2028
      %v2031 = vmul.f32 %v2017, %v2029
      %v2032 = vmul.f32 %v2018, %v2029
      %v2033 = vmul.f32 %v2019, %v2029
      %v2034 = vmul.f32 %v2020, %v2029
      %v2035 = vmul.f32 %v2021, %v2029
      %v2036 = vmul.f32 %v2022, %v2029
      %v2037 = vmul.f32 %v2023, %v2029
      %v2038 = vmul.f32 %v2024, %v2029
      %v2040 = vlaneseq
      %v2041 = vshrl.u32 %v2040, 7
      %v2042 = vsub.s32 0, %v2041
      %v2043 = vrot.slane %v235, %v2042
      %v2045 = vadd.f32 %v2031, %v2043
      %v2046 = vadd.f32 %v2032, %v2043
      %v2047 = vadd.f32 %v2033, %v2043
      %v2048 = vadd.f32 %v2034, %v2043
      %v2049 = vadd.f32 %v2035, %v2043
      %v2050 = vadd.f32 %v2036, %v2043
      %v2051 = vadd.f32 %v2037, %v2043
      %v2052 = vadd.f32 %v2038, %v2043
      %v2053 = vmax.f32 %v2045, 0.0
      %v2054 = vmax.f32 %v2046, 0.0
      %v2055 = vmax.f32 %v2047, 0.0
      %v2056 = vmax.f32 %v2048, 0.0
      %v2057 = vmax.f32 %v2049, 0.0
      %v2058 = vmax.f32 %v2050, 0.0
      %v2059 = vmax.f32 %v2051, 0.0
      %v2060 = vmax.f32 %v2052, 0.0
      %vm2061 = vcmask 261120
      %2062 = vst.msk [vmem:[%s224] sm:$0xff] %vm2061, %v2053
      %2063 = vst.msk [vmem:[%s224 + $0x8] sm:$0xff] %vm2061, %v2054
      %2064 = vst.msk [vmem:[%s224 + $0x10] sm:$0xff] %vm2061, %v2055
      %2065 = vst.msk [vmem:[%s224 + $0x18] sm:$0xff] %vm2061, %v2056
      %2066 = vst.msk [vmem:[%s224 + $0x20] sm:$0xff] %vm2061, %v2057
      %2067 = vst.msk [vmem:[%s224 + $0x28] sm:$0xff] %vm2061, %v2058
      %2068 = vst.msk [vmem:[%s224 + $0x30] sm:$0xff] %vm2061, %v2059
      %2069 = vst.msk [vmem:[%s224 + $0x38] sm:$0xff] %vm2061, %v2060
      %p2070 = scmp.lt.s32.totalorder %s16, 1
      %s2071 = scalar_select %p2070, %s16, 1
      %s2072 = smul.addr %s2071, 8
      %s2073 = smul.addr %s2072, 8
      %s2074 = scalar_lea.vmem %s5, %s2073
      // Predicated region
      $region41: #{leela_forward.9} parent=39 // pred_check
        %p2075 = pneg %p144
      $region42: #{leela_forward.9} parent=39 // pred_check_branch
        %2077 = sbr.rel (%p2075) target = $region44
      $region43: #{leela_forward.9} parent=39 // pred_region
        _
      $region44: #{leela_forward.9} parent=39 // pred_fallthru
        _
    $region40: #{leela_forward.9} parent=5 // pred_fallthru
      _
    %p2078 = scmp.le.s32.totalorder 2, %s11
    // Predicated region
    $region45: #{leela_forward.9} parent=5 // pred_check
      %p2079 = pneg %p2078
    $region46: #{leela_forward.9} parent=5 // pred_check_branch
      %2081 = sbr.rel (%p2079) target = $region48
    $region47: #{leela_forward.9} parent=5 // pred_region
      %s2082 = ssub.s32 %s11, 2
      // Predicated region
      $region49: #{leela_forward.9} parent=47 // pred_check
        %p2083 = pneg %p150
      $region50: #{leela_forward.9} parent=47 // pred_check_branch
        %2085 = sbr.rel (%p2083) target = $region52
      $region51: #{leela_forward.9} parent=47 // pred_region
        %p2086 = scmp.lt.s32.totalorder %s17, 1
        %s2087 = scalar_select %p2086, %s17, 1
        %s2088 = smul.addr %s2087, 8
        %s2089 = smul.addr %s2088, 8
        %s2090 = scalar_lea.vmem %s5, %s2089
      $region52: #{leela_forward.9} parent=47 // pred_fallthru
        _
    $region48: #{leela_forward.9} parent=5 // pred_fallthru
      _
  $region6: #{leela_forward.9} parent=0 // loop_footer
    %s15 = sadd.s32 1, %s11
  $region7: #{leela_forward.9} parent=0 // loop_footer_branch
    %10 = sbr.rel target = $region3
  $region8: #{leela_forward.9} parent=0 // loop_exit
    _

// kernel: leela_forward.17
$region0: #{leela_forward.17}
  #allocation0 [shape = 'u32[]', space=smem, size = 0x4, offset = 0x4, fixed_abs, tag = 'smem constant byte address 0x4 - core index']
  #allocation1 [shape = 'u32[144,128]{1,0:T(1,128)}', space=vmem, size = 0x12000, scoped, tag = 'internal scratch']
  #allocation2 [shape = 'f32[1,1]{1,0:T(1,128)S(1)}', space=vmem, size = 0x200, scoped, tag = 'scoped memory for leela_forward.17']
  %s0 = inlined_call_operand.vmem [shape: f32[2,128], index: 0, kind: input, shape index: {}]
  %s1 = inlined_call_operand.vmem [shape: bf16[128,1], index: 1, kind: input, shape index: {}]
  %s2 = inlined_call_operand.<no memory space> [shape: f32[1,1], index: 2, kind: input, shape index: {}]
  %s3 = inlined_call_operand.vmem [shape: f32[2,1], index: 3, kind: output, shape index: {}]
  %s4 = sld [smem:[#allocation0]]
  $region22: #{leela_forward.17} parent=0
    _
  %s6 = ssub.s32 1, %s4
  %s7 = scalar_select 0, %s6, %s4
  %v8 = vstv %s2
  %9 = vst [vmem:[#allocation2] sm:$0x1] %v8
  // Predicated region
  $region2: #{leela_forward.17} parent=0 // pred_check
    _
  $region3: #{leela_forward.17} parent=0 // pred_check_branch
    %11 = sbr.rel (0) target = $region5
  $region4: #{leela_forward.17} parent=0 // pred_region
    _
  $region5: #{leela_forward.17} parent=0 // pred_fallthru
    _
  // Predicated region
  $region6: #{leela_forward.17} parent=0 // pred_check
    _
  $region7: #{leela_forward.17} parent=0 // pred_check_branch
    %13 = sbr.rel (0) target = $region9
  $region8: #{leela_forward.17} parent=0 // pred_region
    _
  $region9: #{leela_forward.17} parent=0 // pred_fallthru
    _
  // Predicated region
  $region10: #{leela_forward.17} parent=0 // pred_check
    _
  $region11: #{leela_forward.17} parent=0 // pred_check_branch
    %15 = sbr.rel (0) target = $region13
  $region12: #{leela_forward.17} parent=0 // pred_region
    _
  $region13: #{leela_forward.17} parent=0 // pred_fallthru
    _
  %v17 = vld [vmem:[%s0] sm:$0x3]
  %v18 = vpack.c.bf16 %v17, %v17
  %v19 = vld [vmem:[%s1] sm:$0xf]
  %v20 = vld [vmem:[%s1 + $0x4] sm:$0xf]
  %v21 = vld [vmem:[%s1 + $0x8] sm:$0xf]
  %v22 = vld [vmem:[%s1 + $0xc] sm:$0xf]
  %v23 = vld [vmem:[%s1 + $0x10] sm:$0xf]
  %v24 = vld [vmem:[%s1 + $0x14] sm:$0xf]
  %v25 = vld [vmem:[%s1 + $0x18] sm:$0xf]
  %v26 = vld [vmem:[%s1 + $0x1c] sm:$0xf]
  %v27 = vld [vmem:[%s1 + $0x20] sm:$0xf]
  %v28 = vld [vmem:[%s1 + $0x24] sm:$0xf]
  %v29 = vld [vmem:[%s1 + $0x28] sm:$0xf]
  %v30 = vld [vmem:[%s1 + $0x2c] sm:$0xf]
  %v31 = vld [vmem:[%s1 + $0x30] sm:$0xf]
  %v32 = vld [vmem:[%s1 + $0x34] sm:$0xf]
  %v33 = vld [vmem:[%s1 + $0x38] sm:$0xf]
  %v34 = vld [vmem:[%s1 + $0x3c] sm:$0xf]
  %v35 = vld [vmem:[#allocation2] sm:$0x1]
  %v37 = vlaneseq
  %v38 = vshrl.u32 %v37, 7
  %v39 = vsub.s32 0, %v38
  %v40 = vrot.slane %v35, %v39
  %v58 = vunpack.c.l.b16 %v19
  %v59 = vunpack.c.l.b16 %v20
  %v60 = vunpack.c.l.b16 %v21
  %v61 = vunpack.c.l.b16 %v22
  %v62 = vunpack.c.l.b16 %v23
  %v63 = vunpack.c.l.b16 %v24
  %v64 = vunpack.c.l.b16 %v25
  %v65 = vunpack.c.l.b16 %v26
  %v66 = vunpack.c.l.b16 %v27
  %v67 = vunpack.c.l.b16 %v28
  %v68 = vunpack.c.l.b16 %v29
  %v69 = vunpack.c.l.b16 %v30
  %v70 = vunpack.c.l.b16 %v31
  %v71 = vunpack.c.l.b16 %v32
  %v72 = vunpack.c.l.b16 %v33
  %v73 = vunpack.c.l.b16 %v34
  %v74 = vpack.c.b16 %v59, %v58
  %v75 = vpack.c.b16 %v61, %v60
  %v76 = vpack.c.b16 %v63, %v62
  %v77 = vpack.c.b16 %v65, %v64
  %v78 = vpack.c.b16 %v67, %v66
  %v79 = vpack.c.b16 %v69, %v68
  %v80 = vpack.c.b16 %v71, %v70
  %v81 = vpack.c.b16 %v73, %v72
  %90 = vmatprep.subr.bf16.mxu0 0
  %91 = vmatpush1.bf16.msra.mxu0 %v74
  %92 = vmatprep.subr.bf16.mxu0 0
  %93 = vmatpush1.bf16.msra.mxu0 %v75
  %94 = vmatprep.subr.bf16.mxu0 0
  %95 = vmatpush1.bf16.msra.mxu0 %v76
  %96 = vmatprep.subr.bf16.mxu0 0
  %97 = vmatpush1.bf16.msra.mxu0 %v77
  %98 = vmatprep.subr.bf16.mxu0 0
  %99 = vmatpush1.bf16.msra.mxu0 %v78
  %100 = vmatprep.subr.bf16.mxu0 0
  %101 = vmatpush1.bf16.msra.mxu0 %v79
  %102 = vmatprep.subr.bf16.mxu0 0
  %103 = vmatpush1.bf16.msra.mxu0 %v80
  %104 = vmatprep.subr.bf16.mxu0 0
  %105 = vmatpush1.bf16.msra.mxu0 %v81
  %106 = vmatprep.subr.bf16.mxu0 0
  %107 = vmatpush1.bf16.msra.mxu0 0
  %108 = vmatprep.subr.bf16.mxu0 0
  %109 = vmatpush1.bf16.msra.mxu0 0
  %110 = vmatprep.subr.bf16.mxu0 0
  %111 = vmatpush1.bf16.msra.mxu0 0
  %112 = vmatprep.subr.bf16.mxu0 0
  %113 = vmatpush1.bf16.msra.mxu0 0
  %114 = vmatprep.subr.bf16.mxu0 0
  %115 = vmatpush1.bf16.msra.mxu0 0
  %116 = vmatprep.subr.bf16.mxu0 0
  %117 = vmatpush1.bf16.msra.mxu0 0
  %118 = vmatprep.subr.bf16.mxu0 0
  %119 = vmatpush1.bf16.msra.mxu0 0
  %120 = vmatprep.subr.bf16.mxu0 0
  %121 = vmatpush1.bf16.msra.mxu0 0
  %122 = vmatprep.mubr.bf16.mxu0 0
  %123 = vmatmul.mubr.bf16.gmra.mrb[0].mxu0 %v18
  %v124 = vpop.f32.mrb[0].mxu0
  %v125 = vadd.f32 %v40, %v124
  %v126 = vpop.f32.mrb[0].mxu0
  %v127 = vpop.f32.mrb[0].mxu0
  %v128 = vpop.f32.mrb[0].mxu0
  %129 = vdwg.mxu0
  %v130 = vmax.f32 %v125, 0.0
  %vm131 = vcmask 1024
  %132 = vst.msk [vmem:[%s3] sm:$0x3] %vm131, %v130
  // Predicated region
  $region14: #{leela_forward.17} parent=0 // pred_check
    _
  $region15: #{leela_forward.17} parent=0 // pred_check_branch
    %134 = sbr.rel (0) target = $region17
  $region16: #{leela_forward.17} parent=0 // pred_region
    _
  $region17: #{leela_forward.17} parent=0 // pred_fallthru
    _
  // Predicated region
  $region18: #{leela_forward.17} parent=0 // pred_check
    _
  $region19: #{leela_forward.17} parent=0 // pred_check_branch
    %136 = sbr.rel (0) target = $region21
  $region20: #{leela_forward.17} parent=0 // pred_region
    _
  $region21: #{leela_forward.17} parent=0 // pred_fallthru
    _

// kernel: leela_forward.15
$region0: #{leela_forward.15}
  #allocation0 [shape = 'u32[]', space=smem, size = 0x4, offset = 0x4, fixed_abs, tag = 'smem constant byte address 0x4 - core index']
  #allocation1 [shape = 'u32[144,128]{1,0:T(1,128)}', space=vmem, size = 0x12000, scoped, tag = 'internal scratch']
  %s0 = inlined_call_operand.vmem [shape: f32[2,128], index: 0, kind: input, shape index: {}]
  %s1 = inlined_call_operand.vmem [shape: bf16[128,3], index: 1, kind: input, shape index: {}]
  %s2 = inlined_call_operand.vmem [shape: f32[1,3], index: 2, kind: input, shape index: {}]
  %s3 = inlined_call_operand.hbm [shape: f32[2,3], index: 3, kind: output, shape index: {}]
  %s4 = sld [smem:[#allocation0]]
  $region22: #{leela_forward.15} parent=0
    _
  %s6 = ssub.s32 1, %s4
  %s7 = scalar_select 0, %s6, %s4
  $region1: #{leela_forward.15} parent=0
    #allocation2 [shape = 'u8[1024]{0}', space=vmem, size = 0x400, scoped, tag = 'output window, operand 0, single buffered']
    #allocation3 [shape = 's32[1]{0}', space=sflag, size = 0x4, scoped, tag = 'scoped memory for leela_forward.15']
    %8 = vsyncpa [#allocation3], 0
    // Predicated region
    $region2: #{leela_forward.15} parent=1 // pred_check
      _
    $region3: #{leela_forward.15} parent=1 // pred_check_branch
      %10 = sbr.rel (0) target = $region5
    $region4: #{leela_forward.15} parent=1 // pred_region
      _
    $region5: #{leela_forward.15} parent=1 // pred_fallthru
      _
    // Predicated region
    $region6: #{leela_forward.15} parent=1 // pred_check
      _
    $region7: #{leela_forward.15} parent=1 // pred_check_branch
      %12 = sbr.rel (0) target = $region9
    $region8: #{leela_forward.15} parent=1 // pred_region
      _
    $region9: #{leela_forward.15} parent=1 // pred_fallthru
      _
    // Predicated region
    $region10: #{leela_forward.15} parent=1 // pred_check
      _
    $region11: #{leela_forward.15} parent=1 // pred_check_branch
      %14 = sbr.rel (0) target = $region13
    $region12: #{leela_forward.15} parent=1 // pred_region
      _
    $region13: #{leela_forward.15} parent=1 // pred_fallthru
      _
    %v16 = vld [vmem:[%s0] sm:$0x3]
    %v17 = vpack.c.bf16 %v16, %v16
    %v18 = vld [vmem:[%s1] sm:$0xf]
    %v19 = vld [vmem:[%s1 + $0x4] sm:$0xf]
    %v20 = vld [vmem:[%s1 + $0x8] sm:$0xf]
    %v21 = vld [vmem:[%s1 + $0xc] sm:$0xf]
    %v22 = vld [vmem:[%s1 + $0x10] sm:$0xf]
    %v23 = vld [vmem:[%s1 + $0x14] sm:$0xf]
    %v24 = vld [vmem:[%s1 + $0x18] sm:$0xf]
    %v25 = vld [vmem:[%s1 + $0x1c] sm:$0xf]
    %v26 = vld [vmem:[%s1 + $0x20] sm:$0xf]
    %v27 = vld [vmem:[%s1 + $0x24] sm:$0xf]
    %v28 = vld [vmem:[%s1 + $0x28] sm:$0xf]
    %v29 = vld [vmem:[%s1 + $0x2c] sm:$0xf]
    %v30 = vld [vmem:[%s1 + $0x30] sm:$0xf]
    %v31 = vld [vmem:[%s1 + $0x34] sm:$0xf]
    %v32 = vld [vmem:[%s1 + $0x38] sm:$0xf]
    %v33 = vld [vmem:[%s1 + $0x3c] sm:$0xf]
    %v34 = vld [vmem:[%s2] sm:$0x1]
    %v36 = vlaneseq
    %v37 = vshrl.u32 %v36, 7
    %v38 = vsub.s32 0, %v37
    %v39 = vrot.slane %v34, %v38
    %v57 = vunpack.c.l.b16 %v18
    %v58 = vunpack.c.l.b16 %v19
    %v59 = vunpack.c.l.b16 %v20
    %v60 = vunpack.c.l.b16 %v21
    %v61 = vunpack.c.l.b16 %v22
    %v62 = vunpack.c.l.b16 %v23
    %v63 = vunpack.c.l.b16 %v24
    %v64 = vunpack.c.l.b16 %v25
    %v65 = vunpack.c.l.b16 %v26
    %v66 = vunpack.c.l.b16 %v27
    %v67 = vunpack.c.l.b16 %v28
    %v68 = vunpack.c.l.b16 %v29
    %v69 = vunpack.c.l.b16 %v30
    %v70 = vunpack.c.l.b16 %v31
    %v71 = vunpack.c.l.b16 %v32
    %v72 = vunpack.c.l.b16 %v33
    %v73 = vpack.c.b16 %v58, %v57
    %v74 = vpack.c.b16 %v60, %v59
    %v75 = vpack.c.b16 %v62, %v61
    %v76 = vpack.c.b16 %v64, %v63
    %v77 = vpack.c.b16 %v66, %v65
    %v78 = vpack.c.b16 %v68, %v67
    %v79 = vpack.c.b16 %v70, %v69
    %v80 = vpack.c.b16 %v72, %v71
    %89 = vmatprep.subr.bf16.mxu0 0
    %90 = vmatpush1.bf16.msra.mxu0 %v73
    %91 = vmatprep.subr.bf16.mxu0 0
    %92 = vmatpush1.bf16.msra.mxu0 %v74
    %93 = vmatprep.subr.bf16.mxu0 0
    %94 = vmatpush1.bf16.msra.mxu0 %v75
    %95 = vmatprep.subr.bf16.mxu0 0
    %96 = vmatpush1.bf16.msra.mxu0 %v76
    %97 = vmatprep.subr.bf16.mxu0 0
    %98 = vmatpush1.bf16.msra.mxu0 %v77
    %99 = vmatprep.subr.bf16.mxu0 0
    %100 = vmatpush1.bf16.msra.mxu0 %v78
    %101 = vmatprep.subr.bf16.mxu0 0
    %102 = vmatpush1.bf16.msra.mxu0 %v79
    %103 = vmatprep.subr.bf16.mxu0 0
    %104 = vmatpush1.bf16.msra.mxu0 %v80
    %105 = vmatprep.subr.bf16.mxu0 0
    %106 = vmatpush1.bf16.msra.mxu0 0
    %107 = vmatprep.subr.bf16.mxu0 0
    %108 = vmatpush1.bf16.msra.mxu0 0
    %109 = vmatprep.subr.bf16.mxu0 0
    %110 = vmatpush1.bf16.msra.mxu0 0
    %111 = vmatprep.subr.bf16.mxu0 0
    %112 = vmatpush1.bf16.msra.mxu0 0
    %113 = vmatprep.subr.bf16.mxu0 0
    %114 = vmatpush1.bf16.msra.mxu0 0
    %115 = vmatprep.subr.bf16.mxu0 0
    %116 = vmatpush1.bf16.msra.mxu0 0
    %117 = vmatprep.subr.bf16.mxu0 0
    %118 = vmatpush1.bf16.msra.mxu0 0
    %119 = vmatprep.subr.bf16.mxu0 0
    %120 = vmatpush1.bf16.msra.mxu0 0
    %121 = vmatprep.mubr.bf16.mxu0 0
    %122 = vmatmul.mubr.bf16.gmra.mrb[0].mxu0 %v17
    %v123 = vpop.f32.mrb[0].mxu0
    %v124 = vadd.f32 %v39, %v123
    %v125 = vpop.f32.mrb[0].mxu0
    %v126 = vpop.f32.mrb[0].mxu0
    %v127 = vpop.f32.mrb[0].mxu0
    %128 = vdwg.mxu0
    %vm129 = vcmask 17408
    %130 = vst.msk [vmem:[#allocation2] sm:$0x3] %vm129, %v124
    // Predicated region
    $region14: #{leela_forward.15} parent=1 // pred_check
      _
    $region15: #{leela_forward.15} parent=1 // pred_check_branch
      %132 = sbr.rel (0) target = $region17
    $region16: #{leela_forward.15} parent=1 // pred_region
      %s134 = ssub.s32 32, 32
      %135 = vsyncadd [#allocation3], %s134
      %s137 = sshll.u32 [#allocation2], 4
      %s138 = int_to_ptr.vmem [resolvable:$true] %s137
      %140 = dma.vmem_to_hbm [thread:$0]  %s138, 32, %s3, [#allocation3]
    $region17: #{leela_forward.15} parent=1 // pred_fallthru
      _
    // Predicated region
    $region18: #{leela_forward.15} parent=1 // pred_check
      _
    $region19: #{leela_forward.15} parent=1 // pred_check_branch
      %142 = sbr.rel (0) target = $region21
    $region20: #{leela_forward.15} parent=1 // pred_region
      %143 = dma.done [#allocation3], 32
    $region21: #{leela_forward.15} parent=1 // pred_fallthru
      _
    %144 = vsyncpa [#allocation3], 1

// kernel: leela_forward.14
$region0: #{leela_forward.14}
  #allocation0 [shape = 'u32[]', space=smem, size = 0x4, offset = 0x4, fixed_abs, tag = 'smem constant byte address 0x4 - core index']
  #allocation1 [shape = 'u32[144,128]{1,0:T(1,128)}', space=vmem, size = 0x12000, scoped, tag = 'internal scratch']
  %s0 = inlined_call_operand.vmem [shape: f32[2,2048], index: 0, kind: input, shape index: {}]
  %s1 = inlined_call_operand.vmem [shape: bf16[2048,128], index: 1, kind: input, shape index: {}]
  %s2 = inlined_call_operand.vmem [shape: f32[1,128], index: 2, kind: input, shape index: {}]
  %s3 = inlined_call_operand.vmem [shape: f32[2,128], index: 3, kind: output, shape index: {}]
  %s4 = sld [smem:[#allocation0]]
  $region22: #{leela_forward.14} parent=0
    _
  %s6 = ssub.s32 1, %s4
  %s7 = scalar_select 0, %s6, %s4
  // Predicated region
  $region2: #{leela_forward.14} parent=0 // pred_check
    _
  $region3: #{leela_forward.14} parent=0 // pred_check_branch
    %9 = sbr.rel (0) target = $region5
  $region4: #{leela_forward.14} parent=0 // pred_region
    _
  $region5: #{leela_forward.14} parent=0 // pred_fallthru
    _
  // Predicated region
  $region6: #{leela_forward.14} parent=0 // pred_check
    _
  $region7: #{leela_forward.14} parent=0 // pred_check_branch
    %11 = sbr.rel (0) target = $region9
  $region8: #{leela_forward.14} parent=0 // pred_region
    _
  $region9: #{leela_forward.14} parent=0 // pred_fallthru
    _
  // Predicated region
  $region10: #{leela_forward.14} parent=0 // pred_check
    _
  $region11: #{leela_forward.14} parent=0 // pred_check_branch
    %13 = sbr.rel (0) target = $region13
  $region12: #{leela_forward.14} parent=0 // pred_region
    _
  $region13: #{leela_forward.14} parent=0 // pred_fallthru
    _
  %v15 = vld [vmem:[%s0] sm:$0xff]
  %v16 = vld [vmem:[%s0 + $0x8] sm:$0xff]
  %v17 = vld [vmem:[%s0 + $0x10] sm:$0xff]
  %v18 = vld [vmem:[%s0 + $0x18] sm:$0xff]
  %v23 = vcombine.high %v15, %v15
  %v25 = vunpack.c.l.s4 1983009808
  %v26 = vunpack.c.0.s8 %v25
  %v27 = vlaneseq
  %v28 = vshrl.u32 %v27, 7
  %v29 = vsub.s32 %v26, %v28
  %v30 = vrot.slane %v15, %v29
  %v32 = vunpack.c.l.s4 1983009808
  %v33 = vunpack.c.0.s8 %v32
  %v34 = vlaneseq
  %v35 = vshrl.u32 %v34, 7
  %v36 = vsub.s32 %v33, %v35
  %v37 = vrot.slane %v23, %v36
  %v38 = vcombine.high %v30, %v30
  %v39 = vcombine.high %v37, %v37
  %v40 = vcombine.high %v16, %v16
  %v42 = vunpack.c.l.s4 1983009808
  %v43 = vunpack.c.0.s8 %v42
  %v44 = vlaneseq
  %v45 = vshrl.u32 %v44, 7
  %v46 = vsub.s32 %v43, %v45
  %v47 = vrot.slane %v16, %v46
  %v49 = vunpack.c.l.s4 1983009808
  %v50 = vunpack.c.0.s8 %v49
  %v51 = vlaneseq
  %v52 = vshrl.u32 %v51, 7
  %v53 = vsub.s32 %v50, %v52
  %v54 = vrot.slane %v40, %v53
  %v55 = vcombine.high %v47, %v47
  %v56 = vcombine.high %v54, %v54
  %v57 = vcombine.high %v17, %v17
  %v59 = vunpack.c.l.s4 1983009808
  %v60 = vunpack.c.0.s8 %v59
  %v61 = vlaneseq
  %v62 = vshrl.u32 %v61, 7
  %v63 = vsub.s32 %v60, %v62
  %v64 = vrot.slane %v17, %v63
  %v66 = vunpack.c.l.s4 1983009808
  %v67 = vunpack.c.0.s8 %v66
  %v68 = vlaneseq
  %v69 = vshrl.u32 %v68, 7
  %v70 = vsub.s32 %v67, %v69
  %v71 = vrot.slane %v57, %v70
  %v72 = vcombine.high %v64, %v64
  %v73 = vcombine.high %v71, %v71
  %v74 = vcombine.high %v18, %v18
  %v76 = vunpack.c.l.s4 1983009808
  %v77 = vunpack.c.0.s8 %v76
  %v78 = vlaneseq
  %v79 = vshrl.u32 %v78, 7
  %v80 = vsub.s32 %v77, %v79
  %v81 = vrot.slane %v18, %v80
  %v83 = vunpack.c.l.s4 1983009808
  %v84 = vunpack.c.0.s8 %v83
  %v85 = vlaneseq
  %v86 = vshrl.u32 %v85, 7
  %v87 = vsub.s32 %v84, %v86
  %v88 = vrot.slane %v74, %v87
  %v89 = vcombine.high %v81, %v81
  %v90 = vcombine.high %v88, %v88
  %v107 = vpack.c.bf16 %v30, %v30
  %v108 = vpack.c.bf16 %v38, %v38
  %v109 = vpack.c.bf16 %v37, %v37
  %v110 = vpack.c.bf16 %v39, %v39
  %v111 = vpack.c.bf16 %v47, %v47
  %v112 = vpack.c.bf16 %v55, %v55
  %v113 = vpack.c.bf16 %v54, %v54
  %v114 = vpack.c.bf16 %v56, %v56
  %v115 = vpack.c.bf16 %v64, %v64
  %v116 = vpack.c.bf16 %v72, %v72
  %v117 = vpack.c.bf16 %v71, %v71
  %v118 = vpack.c.bf16 %v73, %v73
  %v119 = vpack.c.bf16 %v81, %v81
  %v120 = vpack.c.bf16 %v89, %v89
  %v121 = vpack.c.bf16 %v88, %v88
  %v122 = vpack.c.bf16 %v90, %v90
  %v123 = vld [vmem:[%s1] sm:$0xf]
  %v124 = vld [vmem:[%s1 + $0x4] sm:$0xf]
  %v125 = vld [vmem:[%s1 + $0x8] sm:$0xf]
  %v126 = vld [vmem:[%s1 + $0xc] sm:$0xf]
  %v127 = vld [vmem:[%s1 + $0x10] sm:$0xf]
  %v128 = vld [vmem:[%s1 + $0x14] sm:$0xf]
  %v129 = vld [vmem:[%s1 + $0x18] sm:$0xf]
  %v130 = vld [vmem:[%s1 + $0x1c] sm:$0xf]
  %v131 = vld [vmem:[%s1 + $0x20] sm:$0xf]
  %v132 = vld [vmem:[%s1 + $0x24] sm:$0xf]
  %v133 = vld [vmem:[%s1 + $0x28] sm:$0xf]
  %v134 = vld [vmem:[%s1 + $0x2c] sm:$0xf]
  %v135 = vld [vmem:[%s1 + $0x30] sm:$0xf]
  %v136 = vld [vmem:[%s1 + $0x34] sm:$0xf]
  %v137 = vld [vmem:[%s1 + $0x38] sm:$0xf]
  %v138 = vld [vmem:[%s1 + $0x3c] sm:$0xf]
  %v139 = vld [vmem:[%s1 + $0x40] sm:$0xf]
  %v140 = vld [vmem:[%s1 + $0x44] sm:$0xf]
  %v141 = vld [vmem:[%s1 + $0x48] sm:$0xf]
  %v142 = vld [vmem:[%s1 + $0x4c] sm:$0xf]
  %v143 = vld [vmem:[%s1 + $0x50] sm:$0xf]
  %v144 = vld [vmem:[%s1 + $0x54] sm:$0xf]
  %v145 = vld [vmem:[%s1 + $0x58] sm:$0xf]
  %v146 = vld [vmem:[%s1 + $0x5c] sm:$0xf]
  %v147 = vld [vmem:[%s1 + $0x60] sm:$0xf]
  %v148 = vld [vmem:[%s1 + $0x64] sm:$0xf]
  %v149 = vld [vmem:[%s1 + $0x68] sm:$0xf]
  %v150 = vld [vmem:[%s1 + $0x6c] sm:$0xf]
  %v151 = vld [vmem:[%s1 + $0x70] sm:$0xf]
  %v152 = vld [vmem:[%s1 + $0x74] sm:$0xf]
  %v153 = vld [vmem:[%s1 + $0x78] sm:$0xf]
  %v154 = vld [vmem:[%s1 + $0x7c] sm:$0xf]
  %v155 = vld [vmem:[%s1 + $0x80] sm:$0xf]
  %v156 = vld [vmem:[%s1 + $0x84] sm:$0xf]
  %v157 = vld [vmem:[%s1 + $0x88] sm:$0xf]
  %v158 = vld [vmem:[%s1 + $0x8c] sm:$0xf]
  %v159 = vld [vmem:[%s1 + $0x90] sm:$0xf]
  %v160 = vld [vmem:[%s1 + $0x94] sm:$0xf]
  %v161 = vld [vmem:[%s1 + $0x98] sm:$0xf]
  %v162 = vld [vmem:[%s1 + $0x9c] sm:$0xf]
  %v163 = vld [vmem:[%s1 + $0xa0] sm:$0xf]
  %v164 = vld [vmem:[%s1 + $0xa4] sm:$0xf]
  %v165 = vld [vmem:[%s1 + $0xa8] sm:$0xf]
  %v166 = vld [vmem:[%s1 + $0xac] sm:$0xf]
  %v167 = vld [vmem:[%s1 + $0xb0] sm:$0xf]
  %v168 = vld [vmem:[%s1 + $0xb4] sm:$0xf]
  %v169 = vld [vmem:[%s1 + $0xb8] sm:$0xf]
  %v170 = vld [vmem:[%s1 + $0xbc] sm:$0xf]
  %v171 = vld [vmem:[%s1 + $0xc0] sm:$0xf]
  %v172 = vld [vmem:[%s1 + $0xc4] sm:$0xf]
  %v173 = vld [vmem:[%s1 + $0xc8] sm:$0xf]
  %v174 = vld [vmem:[%s1 + $0xcc] sm:$0xf]
  %v175 = vld [vmem:[%s1 + $0xd0] sm:$0xf]
  %v176 = vld [vmem:[%s1 + $0xd4] sm:$0xf]
  %v177 = vld [vmem:[%s1 + $0xd8] sm:$0xf]
  %v178 = vld [vmem:[%s1 + $0xdc] sm:$0xf]
  %v179 = vld [vmem:[%s1 + $0xe0] sm:$0xf]
  %v180 = vld [vmem:[%s1 + $0xe4] sm:$0xf]
  %v181 = vld [vmem:[%s1 + $0xe8] sm:$0xf]
  %v182 = vld [vmem:[%s1 + $0xec] sm:$0xf]
  %v183 = vld [vmem:[%s1 + $0xf0] sm:$0xf]
  %v184 = vld [vmem:[%s1 + $0xf4] sm:$0xf]
  %v185 = vld [vmem:[%s1 + $0xf8] sm:$0xf]
  %v186 = vld [vmem:[%s1 + $0xfc] sm:$0xf]
  %v187 = vld [vmem:[%s1 + $0x100] sm:$0xf]
  %v188 = vld [vmem:[%s1 + $0x104] sm:$0xf]
  %v189 = vld [vmem:[%s1 + $0x108] sm:$0xf]
  %v190 = vld [vmem:[%s1 + $0x10c] sm:$0xf]
  %v191 = vld [vmem:[%s1 + $0x110] sm:$0xf]
  %v192 = vld [vmem:[%s1 + $0x114] sm:$0xf]
  %v193 = vld [vmem:[%s1 + $0x118] sm:$0xf]
  %v194 = vld [vmem:[%s1 + $0x11c] sm:$0xf]
  %v195 = vld [vmem:[%s1 + $0x120] sm:$0xf]
  %v196 = vld [vmem:[%s1 + $0x124] sm:$0xf]
  %v197 = vld [vmem:[%s1 + $0x128] sm:$0xf]
  %v198 = vld [vmem:[%s1 + $0x12c] sm:$0xf]
  %v199 = vld [vmem:[%s1 + $0x130] sm:$0xf]
  %v200 = vld [vmem:[%s1 + $0x134] sm:$0xf]
  %v201 = vld [vmem:[%s1 + $0x138] sm:$0xf]
  %v202 = vld [vmem:[%s1 + $0x13c] sm:$0xf]
  %v203 = vld [vmem:[%s1 + $0x140] sm:$0xf]
  %v204 = vld [vmem:[%s1 + $0x144] sm:$0xf]
  %v205 = vld [vmem:[%s1 + $0x148] sm:$0xf]
  %v206 = vld [vmem:[%s1 + $0x14c] sm:$0xf]
  %v207 = vld [vmem:[%s1 + $0x150] sm:$0xf]
  %v208 = vld [vmem:[%s1 + $0x154] sm:$0xf]
  %v209 = vld [vmem:[%s1 + $0x158] sm:$0xf]
  %v210 = vld [vmem:[%s1 + $0x15c] sm:$0xf]
  %v211 = vld [vmem:[%s1 + $0x160] sm:$0xf]
  %v212 = vld [vmem:[%s1 + $0x164] sm:$0xf]
  %v213 = vld [vmem:[%s1 + $0x168] sm:$0xf]
  %v214 = vld [vmem:[%s1 + $0x16c] sm:$0xf]
  %v215 = vld [vmem:[%s1 + $0x170] sm:$0xf]
  %v216 = vld [vmem:[%s1 + $0x174] sm:$0xf]
  %v217 = vld [vmem:[%s1 + $0x178] sm:$0xf]
  %v218 = vld [vmem:[%s1 + $0x17c] sm:$0xf]
  %v219 = vld [vmem:[%s1 + $0x180] sm:$0xf]
  %v220 = vld [vmem:[%s1 + $0x184] sm:$0xf]
  %v221 = vld [vmem:[%s1 + $0x188] sm:$0xf]
  %v222 = vld [vmem:[%s1 + $0x18c] sm:$0xf]
  %v223 = vld [vmem:[%s1 + $0x190] sm:$0xf]
  %v224 = vld [vmem:[%s1 + $0x194] sm:$0xf]
  %v225 = vld [vmem:[%s1 + $0x198] sm:$0xf]
  %v226 = vld [vmem:[%s1 + $0x19c] sm:$0xf]
  %v227 = vld [vmem:[%s1 + $0x1a0] sm:$0xf]
  %v228 = vld [vmem:[%s1 + $0x1a4] sm:$0xf]
  %v229 = vld [vmem:[%s1 + $0x1a8] sm:$0xf]
  %v230 = vld [vmem:[%s1 + $0x1ac] sm:$0xf]
  %v231 = vld [vmem:[%s1 + $0x1b0] sm:$0xf]
  %v232 = vld [vmem:[%s1 + $0x1b4] sm:$0xf]
  %v233 = vld [vmem:[%s1 + $0x1b8] sm:$0xf]
  %v234 = vld [vmem:[%s1 + $0x1bc] sm:$0xf]
  %v235 = vld [vmem:[%s1 + $0x1c0] sm:$0xf]
  %v236 = vld [vmem:[%s1 + $0x1c4] sm:$0xf]
  %v237 = vld [vmem:[%s1 + $0x1c8] sm:$0xf]
  %v238 = vld [vmem:[%s1 + $0x1cc] sm:$0xf]
  %v239 = vld [vmem:[%s1 + $0x1d0] sm:$0xf]
  %v240 = vld [vmem:[%s1 + $0x1d4] sm:$0xf]
  %v241 = vld [vmem:[%s1 + $0x1d8] sm:$0xf]
  %v242 = vld [vmem:[%s1 + $0x1dc] sm:$0xf]
  %v243 = vld [vmem:[%s1 + $0x1e0] sm:$0xf]
  %v244 = vld [vmem:[%s1 + $0x1e4] sm:$0xf]
  %v245 = vld [vmem:[%s1 + $0x1e8] sm:$0xf]
  %v246 = vld [vmem:[%s1 + $0x1ec] sm:$0xf]
  %v247 = vld [vmem:[%s1 + $0x1f0] sm:$0xf]
  %v248 = vld [vmem:[%s1 + $0x1f4] sm:$0xf]
  %v249 = vld [vmem:[%s1 + $0x1f8] sm:$0xf]
  %v250 = vld [vmem:[%s1 + $0x1fc] sm:$0xf]
  %v251 = vld [vmem:[%s1 + $0x200] sm:$0xf]
  %v252 = vld [vmem:[%s1 + $0x204] sm:$0xf]
  %v253 = vld [vmem:[%s1 + $0x208] sm:$0xf]
  %v254 = vld [vmem:[%s1 + $0x20c] sm:$0xf]
  %v255 = vld [vmem:[%s1 + $0x210] sm:$0xf]
  %v256 = vld [vmem:[%s1 + $0x214] sm:$0xf]
  %v257 = vld [vmem:[%s1 + $0x218] sm:$0xf]
  %v258 = vld [vmem:[%s1 + $0x21c] sm:$0xf]
  %v259 = vld [vmem:[%s1 + $0x220] sm:$0xf]
  %v260 = vld [vmem:[%s1 + $0x224] sm:$0xf]
  %v261 = vld [vmem:[%s1 + $0x228] sm:$0xf]
  %v262 = vld [vmem:[%s1 + $0x22c] sm:$0xf]
  %v263 = vld [vmem:[%s1 + $0x230] sm:$0xf]
  %v264 = vld [vmem:[%s1 + $0x234] sm:$0xf]
  %v265 = vld [vmem:[%s1 + $0x238] sm:$0xf]
  %v266 = vld [vmem:[%s1 + $0x23c] sm:$0xf]
  %v267 = vld [vmem:[%s1 + $0x240] sm:$0xf]
  %v268 = vld [vmem:[%s1 + $0x244] sm:$0xf]
  %v269 = vld [vmem:[%s1 + $0x248] sm:$0xf]
  %v270 = vld [vmem:[%s1 + $0x24c] sm:$0xf]
  %v271 = vld [vmem:[%s1 + $0x250] sm:$0xf]
  %v272 = vld [vmem:[%s1 + $0x254] sm:$0xf]
  %v273 = vld [vmem:[%s1 + $0x258] sm:$0xf]
  %v274 = vld [vmem:[%s1 + $0x25c] sm:$0xf]
  %v275 = vld [vmem:[%s1 + $0x260] sm:$0xf]
  %v276 = vld [vmem:[%s1 + $0x264] sm:$0xf]
  %v277 = vld [vmem:[%s1 + $0x268] sm:$0xf]
  %v278 = vld [vmem:[%s1 + $0x26c] sm:$0xf]
  %v279 = vld [vmem:[%s1 + $0x270] sm:$0xf]
  %v280 = vld [vmem:[%s1 + $0x274] sm:$0xf]
  %v281 = vld [vmem:[%s1 + $0x278] sm:$0xf]
  %v282 = vld [vmem:[%s1 + $0x27c] sm:$0xf]
  %v283 = vld [vmem:[%s1 + $0x280] sm:$0xf]
  %v284 = vld [vmem:[%s1 + $0x284] sm:$0xf]
  %v285 = vld [vmem:[%s1 + $0x288] sm:$0xf]
  %v286 = vld [vmem:[%s1 + $0x28c] sm:$0xf]
  %v287 = vld [vmem:[%s1 + $0x290] sm:$0xf]
  %v288 = vld [vmem:[%s1 + $0x294] sm:$0xf]
  %v289 = vld [vmem:[%s1 + $0x298] sm:$0xf]
  %v290 = vld [vmem:[%s1 + $0x29c] sm:$0xf]
  %v291 = vld [vmem:[%s1 + $0x2a0] sm:$0xf]
  %v292 = vld [vmem:[%s1 + $0x2a4] sm:$0xf]
  %v293 = vld [vmem:[%s1 + $0x2a8] sm:$0xf]
  %v294 = vld [vmem:[%s1 + $0x2ac] sm:$0xf]
  %v295 = vld [vmem:[%s1 + $0x2b0] sm:$0xf]
  %v296 = vld [vmem:[%s1 + $0x2b4] sm:$0xf]
  %v297 = vld [vmem:[%s1 + $0x2b8] sm:$0xf]
  %v298 = vld [vmem:[%s1 + $0x2bc] sm:$0xf]
  %v299 = vld [vmem:[%s1 + $0x2c0] sm:$0xf]
  %v300 = vld [vmem:[%s1 + $0x2c4] sm:$0xf]
  %v301 = vld [vmem:[%s1 + $0x2c8] sm:$0xf]
  %v302 = vld [vmem:[%s1 + $0x2cc] sm:$0xf]
  %v303 = vld [vmem:[%s1 + $0x2d0] sm:$0xf]
  %v304 = vld [vmem:[%s1 + $0x2d4] sm:$0xf]
  %v305 = vld [vmem:[%s1 + $0x2d8] sm:$0xf]
  %v306 = vld [vmem:[%s1 + $0x2dc] sm:$0xf]
  %v307 = vld [vmem:[%s1 + $0x2e0] sm:$0xf]
  %v308 = vld [vmem:[%s1 + $0x2e4] sm:$0xf]
  %v309 = vld [vmem:[%s1 + $0x2e8] sm:$0xf]
  %v310 = vld [vmem:[%s1 + $0x2ec] sm:$0xf]
  %v311 = vld [vmem:[%s1 + $0x2f0] sm:$0xf]
  %v312 = vld [vmem:[%s1 + $0x2f4] sm:$0xf]
  %v313 = vld [vmem:[%s1 + $0x2f8] sm:$0xf]
  %v314 = vld [vmem:[%s1 + $0x2fc] sm:$0xf]
  %v315 = vld [vmem:[%s1 + $0x300] sm:$0xf]
  %v316 = vld [vmem:[%s1 + $0x304] sm:$0xf]
  %v317 = vld [vmem:[%s1 + $0x308] sm:$0xf]
  %v318 = vld [vmem:[%s1 + $0x30c] sm:$0xf]
  %v319 = vld [vmem:[%s1 + $0x310] sm:$0xf]
  %v320 = vld [vmem:[%s1 + $0x314] sm:$0xf]
  %v321 = vld [vmem:[%s1 + $0x318] sm:$0xf]
  %v322 = vld [vmem:[%s1 + $0x31c] sm:$0xf]
  %v323 = vld [vmem:[%s1 + $0x320] sm:$0xf]
  %v324 = vld [vmem:[%s1 + $0x324] sm:$0xf]
  %v325 = vld [vmem:[%s1 + $0x328] sm:$0xf]
  %v326 = vld [vmem:[%s1 + $0x32c] sm:$0xf]
  %v327 = vld [vmem:[%s1 + $0x330] sm:$0xf]
  %v328 = vld [vmem:[%s1 + $0x334] sm:$0xf]
  %v329 = vld [vmem:[%s1 + $0x338] sm:$0xf]
  %v330 = vld [vmem:[%s1 + $0x33c] sm:$0xf]
  %v331 = vld [vmem:[%s1 + $0x340] sm:$0xf]
  %v332 = vld [vmem:[%s1 + $0x344] sm:$0xf]
  %v333 = vld [vmem:[%s1 + $0x348] sm:$0xf]
  %v334 = vld [vmem:[%s1 + $0x34c] sm:$0xf]
  %v335 = vld [vmem:[%s1 + $0x350] sm:$0xf]
  %v336 = vld [vmem:[%s1 + $0x354] sm:$0xf]
  %v337 = vld [vmem:[%s1 + $0x358] sm:$0xf]
  %v338 = vld [vmem:[%s1 + $0x35c] sm:$0xf]
  %v339 = vld [vmem:[%s1 + $0x360] sm:$0xf]
  %v340 = vld [vmem:[%s1 + $0x364] sm:$0xf]
  %v341 = vld [vmem:[%s1 + $0x368] sm:$0xf]
  %v342 = vld [vmem:[%s1 + $0x36c] sm:$0xf]
  %v343 = vld [vmem:[%s1 + $0x370] sm:$0xf]
  %v344 = vld [vmem:[%s1 + $0x374] sm:$0xf]
  %v345 = vld [vmem:[%s1 + $0x378] sm:$0xf]
  %v346 = vld [vmem:[%s1 + $0x37c] sm:$0xf]
  %v347 = vld [vmem:[%s1 + $0x380] sm:$0xf]
  %v348 = vld [vmem:[%s1 + $0x384] sm:$0xf]
  %v349 = vld [vmem:[%s1 + $0x388] sm:$0xf]
  %v350 = vld [vmem:[%s1 + $0x38c] sm:$0xf]
  %v351 = vld [vmem:[%s1 + $0x390] sm:$0xf]
  %v352 = vld [vmem:[%s1 + $0x394] sm:$0xf]
  %v353 = vld [vmem:[%s1 + $0x398] sm:$0xf]
  %v354 = vld [vmem:[%s1 + $0x39c] sm:$0xf]
  %v355 = vld [vmem:[%s1 + $0x3a0] sm:$0xf]
  %v356 = vld [vmem:[%s1 + $0x3a4] sm:$0xf]
  %v357 = vld [vmem:[%s1 + $0x3a8] sm:$0xf]
  %v358 = vld [vmem:[%s1 + $0x3ac] sm:$0xf]
  %v359 = vld [vmem:[%s1 + $0x3b0] sm:$0xf]
  %v360 = vld [vmem:[%s1 + $0x3b4] sm:$0xf]
  %v361 = vld [vmem:[%s1 + $0x3b8] sm:$0xf]
  %v362 = vld [vmem:[%s1 + $0x3bc] sm:$0xf]
  %v363 = vld [vmem:[%s1 + $0x3c0] sm:$0xf]
  %v364 = vld [vmem:[%s1 + $0x3c4] sm:$0xf]
  %v365 = vld [vmem:[%s1 + $0x3c8] sm:$0xf]
  %v366 = vld [vmem:[%s1 + $0x3cc] sm:$0xf]
  %v367 = vld [vmem:[%s1 + $0x3d0] sm:$0xf]
  %v368 = vld [vmem:[%s1 + $0x3d4] sm:$0xf]
  %v369 = vld [vmem:[%s1 + $0x3d8] sm:$0xf]
  %v370 = vld [vmem:[%s1 + $0x3dc] sm:$0xf]
  %v371 = vld [vmem:[%s1 + $0x3e0] sm:$0xf]
  %v372 = vld [vmem:[%s1 + $0x3e4] sm:$0xf]
  %v373 = vld [vmem:[%s1 + $0x3e8] sm:$0xf]
  %v374 = vld [vmem:[%s1 + $0x3ec] sm:$0xf]
  %v375 = vld [vmem:[%s1 + $0x3f0] sm:$0xf]
  %v376 = vld [vmem:[%s1 + $0x3f4] sm:$0xf]
  %v377 = vld [vmem:[%s1 + $0x3f8] sm:$0xf]
  %v378 = vld [vmem:[%s1 + $0x3fc] sm:$0xf]
  %v379 = vld [vmem:[%s2] sm:$0x1]
  %v381 = vlaneseq
  %v382 = vshrl.u32 %v381, 7
  %v383 = vsub.s32 0, %v382
  %v384 = vrot.slane %v379, %v383
  %v642 = vunpack.c.l.b16 %v123
  %v643 = vunpack.c.l.b16 %v124
  %v644 = vunpack.c.l.b16 %v125
  %v645 = vunpack.c.l.b16 %v126
  %v646 = vunpack.c.l.b16 %v127
  %v647 = vunpack.c.l.b16 %v128
  %v648 = vunpack.c.l.b16 %v129
  %v649 = vunpack.c.l.b16 %v130
  %v650 = vunpack.c.l.b16 %v131
  %v651 = vunpack.c.l.b16 %v132
  %v652 = vunpack.c.l.b16 %v133
  %v653 = vunpack.c.l.b16 %v134
  %v654 = vunpack.c.l.b16 %v135
  %v655 = vunpack.c.l.b16 %v136
  %v656 = vunpack.c.l.b16 %v137
  %v657 = vunpack.c.l.b16 %v138
  %v658 = vunpack.c.l.b16 %v139
  %v659 = vunpack.c.l.b16 %v140
  %v660 = vunpack.c.l.b16 %v141
  %v661 = vunpack.c.l.b16 %v142
  %v662 = vunpack.c.l.b16 %v143
  %v663 = vunpack.c.l.b16 %v144
  %v664 = vunpack.c.l.b16 %v145
  %v665 = vunpack.c.l.b16 %v146
  %v666 = vunpack.c.l.b16 %v147
  %v667 = vunpack.c.l.b16 %v148
  %v668 = vunpack.c.l.b16 %v149
  %v669 = vunpack.c.l.b16 %v150
  %v670 = vunpack.c.l.b16 %v151
  %v671 = vunpack.c.l.b16 %v152
  %v672 = vunpack.c.l.b16 %v153
  %v673 = vunpack.c.l.b16 %v154
  %v674 = vunpack.c.l.b16 %v155
  %v675 = vunpack.c.l.b16 %v156
  %v676 = vunpack.c.l.b16 %v157
  %v677 = vunpack.c.l.b16 %v158
  %v678 = vunpack.c.l.b16 %v159
  %v679 = vunpack.c.l.b16 %v160
  %v680 = vunpack.c.l.b16 %v161
  %v681 = vunpack.c.l.b16 %v162
  %v682 = vunpack.c.l.b16 %v163
  %v683 = vunpack.c.l.b16 %v164
  %v684 = vunpack.c.l.b16 %v165
  %v685 = vunpack.c.l.b16 %v166
  %v686 = vunpack.c.l.b16 %v167
  %v687 = vunpack.c.l.b16 %v168
  %v688 = vunpack.c.l.b16 %v169
  %v689 = vunpack.c.l.b16 %v170
  %v690 = vunpack.c.l.b16 %v171
  %v691 = vunpack.c.l.b16 %v172
  %v692 = vunpack.c.l.b16 %v173
  %v693 = vunpack.c.l.b16 %v174
  %v694 = vunpack.c.l.b16 %v175
  %v695 = vunpack.c.l.b16 %v176
  %v696 = vunpack.c.l.b16 %v177
  %v697 = vunpack.c.l.b16 %v178
  %v698 = vunpack.c.l.b16 %v179
  %v699 = vunpack.c.l.b16 %v180
  %v700 = vunpack.c.l.b16 %v181
  %v701 = vunpack.c.l.b16 %v182
  %v702 = vunpack.c.l.b16 %v183
  %v703 = vunpack.c.l.b16 %v184
  %v704 = vunpack.c.l.b16 %v185
  %v705 = vunpack.c.l.b16 %v186
  %v706 = vunpack.c.l.b16 %v187
  %v707 = vunpack.c.l.b16 %v188
  %v708 = vunpack.c.l.b16 %v189
  %v709 = vunpack.c.l.b16 %v190
  %v710 = vunpack.c.l.b16 %v191
  %v711 = vunpack.c.l.b16 %v192
  %v712 = vunpack.c.l.b16 %v193
  %v713 = vunpack.c.l.b16 %v194
  %v714 = vunpack.c.l.b16 %v195
  %v715 = vunpack.c.l.b16 %v196
  %v716 = vunpack.c.l.b16 %v197
  %v717 = vunpack.c.l.b16 %v198
  %v718 = vunpack.c.l.b16 %v199
  %v719 = vunpack.c.l.b16 %v200
  %v720 = vunpack.c.l.b16 %v201
  %v721 = vunpack.c.l.b16 %v202
  %v722 = vunpack.c.l.b16 %v203
  %v723 = vunpack.c.l.b16 %v204
  %v724 = vunpack.c.l.b16 %v205
  %v725 = vunpack.c.l.b16 %v206
  %v726 = vunpack.c.l.b16 %v207
  %v727 = vunpack.c.l.b16 %v208
  %v728 = vunpack.c.l.b16 %v209
  %v729 = vunpack.c.l.b16 %v210
  %v730 = vunpack.c.l.b16 %v211
  %v731 = vunpack.c.l.b16 %v212
  %v732 = vunpack.c.l.b16 %v213
  %v733 = vunpack.c.l.b16 %v214
  %v734 = vunpack.c.l.b16 %v215
  %v735 = vunpack.c.l.b16 %v216
  %v736 = vunpack.c.l.b16 %v217
  %v737 = vunpack.c.l.b16 %v218
  %v738 = vunpack.c.l.b16 %v219
  %v739 = vunpack.c.l.b16 %v220
  %v740 = vunpack.c.l.b16 %v221
  %v741 = vunpack.c.l.b16 %v222
  %v742 = vunpack.c.l.b16 %v223
  %v743 = vunpack.c.l.b16 %v224
  %v744 = vunpack.c.l.b16 %v225
  %v745 = vunpack.c.l.b16 %v226
  %v746 = vunpack.c.l.b16 %v227
  %v747 = vunpack.c.l.b16 %v228
  %v748 = vunpack.c.l.b16 %v229
  %v749 = vunpack.c.l.b16 %v230
  %v750 = vunpack.c.l.b16 %v231
  %v751 = vunpack.c.l.b16 %v232
  %v752 = vunpack.c.l.b16 %v233
  %v753 = vunpack.c.l.b16 %v234
  %v754 = vunpack.c.l.b16 %v235
  %v755 = vunpack.c.l.b16 %v236
  %v756 = vunpack.c.l.b16 %v237
  %v757 = vunpack.c.l.b16 %v238
  %v758 = vunpack.c.l.b16 %v239
  %v759 = vunpack.c.l.b16 %v240
  %v760 = vunpack.c.l.b16 %v241
  %v761 = vunpack.c.l.b16 %v242
  %v762 = vunpack.c.l.b16 %v243
  %v763 = vunpack.c.l.b16 %v244
  %v764 = vunpack.c.l.b16 %v245
  %v765 = vunpack.c.l.b16 %v246
  %v766 = vunpack.c.l.b16 %v247
  %v767 = vunpack.c.l.b16 %v248
  %v768 = vunpack.c.l.b16 %v249
  %v769 = vunpack.c.l.b16 %v250
  %v770 = vunpack.c.l.b16 %v251
  %v771 = vunpack.c.l.b16 %v252
  %v772 = vunpack.c.l.b16 %v253
  %v773 = vunpack.c.l.b16 %v254
  %v774 = vunpack.c.l.b16 %v255
  %v775 = vunpack.c.l.b16 %v256
  %v776 = vunpack.c.l.b16 %v257
  %v777 = vunpack.c.l.b16 %v258
  %v778 = vunpack.c.l.b16 %v259
  %v779 = vunpack.c.l.b16 %v260
  %v780 = vunpack.c.l.b16 %v261
  %v781 = vunpack.c.l.b16 %v262
  %v782 = vunpack.c.l.b16 %v263
  %v783 = vunpack.c.l.b16 %v264
  %v784 = vunpack.c.l.b16 %v265
  %v785 = vunpack.c.l.b16 %v266
  %v786 = vunpack.c.l.b16 %v267
  %v787 = vunpack.c.l.b16 %v268
  %v788 = vunpack.c.l.b16 %v269
  %v789 = vunpack.c.l.b16 %v270
  %v790 = vunpack.c.l.b16 %v271
  %v791 = vunpack.c.l.b16 %v272
  %v792 = vunpack.c.l.b16 %v273
  %v793 = vunpack.c.l.b16 %v274
  %v794 = vunpack.c.l.b16 %v275
  %v795 = vunpack.c.l.b16 %v276
  %v796 = vunpack.c.l.b16 %v277
  %v797 = vunpack.c.l.b16 %v278
  %v798 = vunpack.c.l.b16 %v279
  %v799 = vunpack.c.l.b16 %v280
  %v800 = vunpack.c.l.b16 %v281
  %v801 = vunpack.c.l.b16 %v282
  %v802 = vunpack.c.l.b16 %v283
  %v803 = vunpack.c.l.b16 %v284
  %v804 = vunpack.c.l.b16 %v285
  %v805 = vunpack.c.l.b16 %v286
  %v806 = vunpack.c.l.b16 %v287
  %v807 = vunpack.c.l.b16 %v288
  %v808 = vunpack.c.l.b16 %v289
  %v809 = vunpack.c.l.b16 %v290
  %v810 = vunpack.c.l.b16 %v291
  %v811 = vunpack.c.l.b16 %v292
  %v812 = vunpack.c.l.b16 %v293
  %v813 = vunpack.c.l.b16 %v294
  %v814 = vunpack.c.l.b16 %v295
  %v815 = vunpack.c.l.b16 %v296
  %v816 = vunpack.c.l.b16 %v297
  %v817 = vunpack.c.l.b16 %v298
  %v818 = vunpack.c.l.b16 %v299
  %v819 = vunpack.c.l.b16 %v300
  %v820 = vunpack.c.l.b16 %v301
  %v821 = vunpack.c.l.b16 %v302
  %v822 = vunpack.c.l.b16 %v303
  %v823 = vunpack.c.l.b16 %v304
  %v824 = vunpack.c.l.b16 %v305
  %v825 = vunpack.c.l.b16 %v306
  %v826 = vunpack.c.l.b16 %v307
  %v827 = vunpack.c.l.b16 %v308
  %v828 = vunpack.c.l.b16 %v309
  %v829 = vunpack.c.l.b16 %v310
  %v830 = vunpack.c.l.b16 %v311
  %v831 = vunpack.c.l.b16 %v312
  %v832 = vunpack.c.l.b16 %v313
  %v833 = vunpack.c.l.b16 %v314
  %v834 = vunpack.c.l.b16 %v315
  %v835 = vunpack.c.l.b16 %v316
  %v836 = vunpack.c.l.b16 %v317
  %v837 = vunpack.c.l.b16 %v318
  %v838 = vunpack.c.l.b16 %v319
  %v839 = vunpack.c.l.b16 %v320
  %v840 = vunpack.c.l.b16 %v321
  %v841 = vunpack.c.l.b16 %v322
  %v842 = vunpack.c.l.b16 %v323
  %v843 = vunpack.c.l.b16 %v324
  %v844 = vunpack.c.l.b16 %v325
  %v845 = vunpack.c.l.b16 %v326
  %v846 = vunpack.c.l.b16 %v327
  %v847 = vunpack.c.l.b16 %v328
  %v848 = vunpack.c.l.b16 %v329
  %v849 = vunpack.c.l.b16 %v330
  %v850 = vunpack.c.l.b16 %v331
  %v851 = vunpack.c.l.b16 %v332
  %v852 = vunpack.c.l.b16 %v333
  %v853 = vunpack.c.l.b16 %v334
  %v854 = vunpack.c.l.b16 %v335
  %v855 = vunpack.c.l.b16 %v336
  %v856 = vunpack.c.l.b16 %v337
  %v857 = vunpack.c.l.b16 %v338
  %v858 = vunpack.c.l.b16 %v339
  %v859 = vunpack.c.l.b16 %v340
  %v860 = vunpack.c.l.b16 %v341
  %v861 = vunpack.c.l.b16 %v342
  %v862 = vunpack.c.l.b16 %v343
  %v863 = vunpack.c.l.b16 %v344
  %v864 = vunpack.c.l.b16 %v345
  %v865 = vunpack.c.l.b16 %v346
  %v866 = vunpack.c.l.b16 %v347
  %v867 = vunpack.c.l.b16 %v348
  %v868 = vunpack.c.l.b16 %v349
  %v869 = vunpack.c.l.b16 %v350
  %v870 = vunpack.c.l.b16 %v351
  %v871 = vunpack.c.l.b16 %v352
  %v872 = vunpack.c.l.b16 %v353
  %v873 = vunpack.c.l.b16 %v354
  %v874 = vunpack.c.l.b16 %v355
  %v875 = vunpack.c.l.b16 %v356
  %v876 = vunpack.c.l.b16 %v357
  %v877 = vunpack.c.l.b16 %v358
  %v878 = vunpack.c.l.b16 %v359
  %v879 = vunpack.c.l.b16 %v360
  %v880 = vunpack.c.l.b16 %v361
  %v881 = vunpack.c.l.b16 %v362
  %v882 = vunpack.c.l.b16 %v363
  %v883 = vunpack.c.l.b16 %v364
  %v884 = vunpack.c.l.b16 %v365
  %v885 = vunpack.c.l.b16 %v366
  %v886 = vunpack.c.l.b16 %v367
  %v887 = vunpack.c.l.b16 %v368
  %v888 = vunpack.c.l.b16 %v369
  %v889 = vunpack.c.l.b16 %v370
  %v890 = vunpack.c.l.b16 %v371
  %v891 = vunpack.c.l.b16 %v372
  %v892 = vunpack.c.l.b16 %v373
  %v893 = vunpack.c.l.b16 %v374
  %v894 = vunpack.c.l.b16 %v375
  %v895 = vunpack.c.l.b16 %v376
  %v896 = vunpack.c.l.b16 %v377
  %v897 = vunpack.c.l.b16 %v378
  %v898 = vpack.c.b16 %v643, %v642
  %v899 = vpack.c.b16 %v645, %v644
  %v900 = vpack.c.b16 %v647, %v646
  %v901 = vpack.c.b16 %v649, %v648
  %v902 = vpack.c.b16 %v651, %v650
  %v903 = vpack.c.b16 %v653, %v652
  %v904 = vpack.c.b16 %v655, %v654
  %v905 = vpack.c.b16 %v657, %v656
  %v906 = vpack.c.b16 %v659, %v658
  %v907 = vpack.c.b16 %v661, %v660
  %v908 = vpack.c.b16 %v663, %v662
  %v909 = vpack.c.b16 %v665, %v664
  %v910 = vpack.c.b16 %v667, %v666
  %v911 = vpack.c.b16 %v669, %v668
  %v912 = vpack.c.b16 %v671, %v670
  %v913 = vpack.c.b16 %v673, %v672
  %v914 = vpack.c.b16 %v675, %v674
  %v915 = vpack.c.b16 %v677, %v676
  %v916 = vpack.c.b16 %v679, %v678
  %v917 = vpack.c.b16 %v681, %v680
  %v918 = vpack.c.b16 %v683, %v682
  %v919 = vpack.c.b16 %v685, %v684
  %v920 = vpack.c.b16 %v687, %v686
  %v921 = vpack.c.b16 %v689, %v688
  %v922 = vpack.c.b16 %v691, %v690
  %v923 = vpack.c.b16 %v693, %v692
  %v924 = vpack.c.b16 %v695, %v694
  %v925 = vpack.c.b16 %v697, %v696
  %v926 = vpack.c.b16 %v699, %v698
  %v927 = vpack.c.b16 %v701, %v700
  %v928 = vpack.c.b16 %v703, %v702
  %v929 = vpack.c.b16 %v705, %v704
  %v930 = vpack.c.b16 %v707, %v706
  %v931 = vpack.c.b16 %v709, %v708
  %v932 = vpack.c.b16 %v711, %v710
  %v933 = vpack.c.b16 %v713, %v712
  %v934 = vpack.c.b16 %v715, %v714
  %v935 = vpack.c.b16 %v717, %v716
  %v936 = vpack.c.b16 %v719, %v718
  %v937 = vpack.c.b16 %v721, %v720
  %v938 = vpack.c.b16 %v723, %v722
  %v939 = vpack.c.b16 %v725, %v724
  %v940 = vpack.c.b16 %v727, %v726
  %v941 = vpack.c.b16 %v729, %v728
  %v942 = vpack.c.b16 %v731, %v730
  %v943 = vpack.c.b16 %v733, %v732
  %v944 = vpack.c.b16 %v735, %v734
  %v945 = vpack.c.b16 %v737, %v736
  %v946 = vpack.c.b16 %v739, %v738
  %v947 = vpack.c.b16 %v741, %v740
  %v948 = vpack.c.b16 %v743, %v742
  %v949 = vpack.c.b16 %v745, %v744
  %v950 = vpack.c.b16 %v747, %v746
  %v951 = vpack.c.b16 %v749, %v748
  %v952 = vpack.c.b16 %v751, %v750
  %v953 = vpack.c.b16 %v753, %v752
  %v954 = vpack.c.b16 %v755, %v754
  %v955 = vpack.c.b16 %v757, %v756
  %v956 = vpack.c.b16 %v759, %v758
  %v957 = vpack.c.b16 %v761, %v760
  %v958 = vpack.c.b16 %v763, %v762
  %v959 = vpack.c.b16 %v765, %v764
  %v960 = vpack.c.b16 %v767, %v766
  %v961 = vpack.c.b16 %v769, %v768
  %v962 = vpack.c.b16 %v771, %v770
  %v963 = vpack.c.b16 %v773, %v772
  %v964 = vpack.c.b16 %v775, %v774
  %v965 = vpack.c.b16 %v777, %v776
  %v966 = vpack.c.b16 %v779, %v778
  %v967 = vpack.c.b16 %v781, %v780
  %v968 = vpack.c.b16 %v783, %v782
  %v969 = vpack.c.b16 %v785, %v784
  %v970 = vpack.c.b16 %v787, %v786
  %v971 = vpack.c.b16 %v789, %v788
  %v972 = vpack.c.b16 %v791, %v790
  %v973 = vpack.c.b16 %v793, %v792
  %v974 = vpack.c.b16 %v795, %v794
  %v975 = vpack.c.b16 %v797, %v796
  %v976 = vpack.c.b16 %v799, %v798
  %v977 = vpack.c.b16 %v801, %v800
  %v978 = vpack.c.b16 %v803, %v802
  %v979 = vpack.c.b16 %v805, %v804
  %v980 = vpack.c.b16 %v807, %v806
  %v981 = vpack.c.b16 %v809, %v808
  %v982 = vpack.c.b16 %v811, %v810
  %v983 = vpack.c.b16 %v813, %v812
  %v984 = vpack.c.b16 %v815, %v814
  %v985 = vpack.c.b16 %v817, %v816
  %v986 = vpack.c.b16 %v819, %v818
  %v987 = vpack.c.b16 %v821, %v820
  %v988 = vpack.c.b16 %v823, %v822
  %v989 = vpack.c.b16 %v825, %v824
  %v990 = vpack.c.b16 %v827, %v826
  %v991 = vpack.c.b16 %v829, %v828
  %v992 = vpack.c.b16 %v831, %v830
  %v993 = vpack.c.b16 %v833, %v832
  %v994 = vpack.c.b16 %v835, %v834
  %v995 = vpack.c.b16 %v837, %v836
  %v996 = vpack.c.b16 %v839, %v838
  %v997 = vpack.c.b16 %v841, %v840
  %v998 = vpack.c.b16 %v843, %v842
  %v999 = vpack.c.b16 %v845, %v844
  %v1000 = vpack.c.b16 %v847, %v846
  %v1001 = vpack.c.b16 %v849, %v848
  %v1002 = vpack.c.b16 %v851, %v850
  %v1003 = vpack.c.b16 %v853, %v852
  %v1004 = vpack.c.b16 %v855, %v854
  %v1005 = vpack.c.b16 %v857, %v856
  %v1006 = vpack.c.b16 %v859, %v858
  %v1007 = vpack.c.b16 %v861, %v860
  %v1008 = vpack.c.b16 %v863, %v862
  %v1009 = vpack.c.b16 %v865, %v864
  %v1010 = vpack.c.b16 %v867, %v866
  %v1011 = vpack.c.b16 %v869, %v868
  %v1012 = vpack.c.b16 %v871, %v870
  %v1013 = vpack.c.b16 %v873, %v872
  %v1014 = vpack.c.b16 %v875, %v874
  %v1015 = vpack.c.b16 %v877, %v876
  %v1016 = vpack.c.b16 %v879, %v878
  %v1017 = vpack.c.b16 %v881, %v880
  %v1018 = vpack.c.b16 %v883, %v882
  %v1019 = vpack.c.b16 %v885, %v884
  %v1020 = vpack.c.b16 %v887, %v886
  %v1021 = vpack.c.b16 %v889, %v888
  %v1022 = vpack.c.b16 %v891, %v890
  %v1023 = vpack.c.b16 %v893, %v892
  %v1024 = vpack.c.b16 %v895, %v894
  %v1025 = vpack.c.b16 %v897, %v896
  %1154 = vmatprep.subr.bf16.mxu0 0
  %1155 = vmatpush1.bf16.msra.mxu0 %v898
  %1156 = vmatprep.subr.bf16.mxu0 0
  %1157 = vmatpush1.bf16.msra.mxu0 %v899
  %1158 = vmatprep.subr.bf16.mxu0 0
  %1159 = vmatpush1.bf16.msra.mxu0 %v900
  %1160 = vmatprep.subr.bf16.mxu0 0
  %1161 = vmatpush1.bf16.msra.mxu0 %v901
  %1162 = vmatprep.subr.bf16.mxu0 0
  %1163 = vmatpush1.bf16.msra.mxu0 %v902
  %1164 = vmatprep.subr.bf16.mxu0 0
  %1165 = vmatpush1.bf16.msra.mxu0 %v903
  %1166 = vmatprep.subr.bf16.mxu0 0
  %1167 = vmatpush1.bf16.msra.mxu0 %v904
  %1168 = vmatprep.subr.bf16.mxu0 0
  %1169 = vmatpush1.bf16.msra.mxu0 %v905
  %1170 = vmatprep.subr.bf16.mxu0 0
  %1171 = vmatpush1.bf16.msra.mxu0 %v906
  %1172 = vmatprep.subr.bf16.mxu0 0
  %1173 = vmatpush1.bf16.msra.mxu0 %v907
  %1174 = vmatprep.subr.bf16.mxu0 0
  %1175 = vmatpush1.bf16.msra.mxu0 %v908
  %1176 = vmatprep.subr.bf16.mxu0 0
  %1177 = vmatpush1.bf16.msra.mxu0 %v909
  %1178 = vmatprep.subr.bf16.mxu0 0
  %1179 = vmatpush1.bf16.msra.mxu0 %v910
  %1180 = vmatprep.subr.bf16.mxu0 0
  %1181 = vmatpush1.bf16.msra.mxu0 %v911
  %1182 = vmatprep.subr.bf16.mxu0 0
  %1183 = vmatpush1.bf16.msra.mxu0 %v912
  %1184 = vmatprep.subr.bf16.mxu0 0
  %1185 = vmatpush1.bf16.msra.mxu0 %v913
  %1186 = vmatprep.mubr.bf16.mxu0 %v108
  %1187 = vmatmul.mubr.bf16.gmra.mrb[0].mxu0 %v107
  %v1188 = vpop.f32.mrb[0].mxu0
  %v1189 = vadd.f32 %v384, %v1188
  %v1190 = vpop.f32.mrb[0].mxu0
  %v1191 = vpop.f32.mrb[0].mxu0
  %v1192 = vpop.f32.mrb[0].mxu0
  %1193 = vdwg.mxu0
  %1194 = vmatprep.subr.bf16.mxu0 0
  %1195 = vmatpush1.bf16.msra.mxu0 %v914
  %1196 = vmatprep.subr.bf16.mxu0 0
  %1197 = vmatpush1.bf16.msra.mxu0 %v915
  %1198 = vmatprep.subr.bf16.mxu0 0
  %1199 = vmatpush1.bf16.msra.mxu0 %v916
  %1200 = vmatprep.subr.bf16.mxu0 0
  %1201 = vmatpush1.bf16.msra.mxu0 %v917
  %1202 = vmatprep.subr.bf16.mxu0 0
  %1203 = vmatpush1.bf16.msra.mxu0 %v918
  %1204 = vmatprep.subr.bf16.mxu0 0
  %1205 = vmatpush1.bf16.msra.mxu0 %v919
  %1206 = vmatprep.subr.bf16.mxu0 0
  %1207 = vmatpush1.bf16.msra.mxu0 %v920
  %1208 = vmatprep.subr.bf16.mxu0 0
  %1209 = vmatpush1.bf16.msra.mxu0 %v921
  %1210 = vmatprep.subr.bf16.mxu0 0
  %1211 = vmatpush1.bf16.msra.mxu0 %v922
  %1212 = vmatprep.subr.bf16.mxu0 0
  %1213 = vmatpush1.bf16.msra.mxu0 %v923
  %1214 = vmatprep.subr.bf16.mxu0 0
  %1215 = vmatpush1.bf16.msra.mxu0 %v924
  %1216 = vmatprep.subr.bf16.mxu0 0
  %1217 = vmatpush1.bf16.msra.mxu0 %v925
  %1218 = vmatprep.subr.bf16.mxu0 0
  %1219 = vmatpush1.bf16.msra.mxu0 %v926
  %1220 = vmatprep.subr.bf16.mxu0 0
  %1221 = vmatpush1.bf16.msra.mxu0 %v927
  %1222 = vmatprep.subr.bf16.mxu0 0
  %1223 = vmatpush1.bf16.msra.mxu0 %v928
  %1224 = vmatprep.subr.bf16.mxu0 0
  %1225 = vmatpush1.bf16.msra.mxu0 %v929
  %1226 = vmatprep.mubr.bf16.mxu0 %v110
  %1227 = vmatmul.mubr.bf16.gmra.mrb[0].mxu0 %v109
  %v1228 = vpop.f32.mrb[0].mxu0
  %v1229 = vadd.f32 %v1189, %v1228
  %v1230 = vpop.f32.mrb[0].mxu0
  %v1231 = vpop.f32.mrb[0].mxu0
  %v1232 = vpop.f32.mrb[0].mxu0
  %1233 = vdwg.mxu0
  %1234 = vmatprep.subr.bf16.mxu0 0
  %1235 = vmatpush1.bf16.msra.mxu0 %v930
  %1236 = vmatprep.subr.bf16.mxu0 0
  %1237 = vmatpush1.bf16.msra.mxu0 %v931
  %1238 = vmatprep.subr.bf16.mxu0 0
  %1239 = vmatpush1.bf16.msra.mxu0 %v932
  %1240 = vmatprep.subr.bf16.mxu0 0
  %1241 = vmatpush1.bf16.msra.mxu0 %v933
  %1242 = vmatprep.subr.bf16.mxu0 0
  %1243 = vmatpush1.bf16.msra.mxu0 %v934
  %1244 = vmatprep.subr.bf16.mxu0 0
  %1245 = vmatpush1.bf16.msra.mxu0 %v935
  %1246 = vmatprep.subr.bf16.mxu0 0
  %1247 = vmatpush1.bf16.msra.mxu0 %v936
  %1248 = vmatprep.subr.bf16.mxu0 0
  %1249 = vmatpush1.bf16.msra.mxu0 %v937
  %1250 = vmatprep.subr.bf16.mxu0 0
  %1251 = vmatpush1.bf16.msra.mxu0 %v938
  %1252 = vmatprep.subr.bf16.mxu0 0
  %1253 = vmatpush1.bf16.msra.mxu0 %v939
  %1254 = vmatprep.subr.bf16.mxu0 0
  %1255 = vmatpush1.bf16.msra.mxu0 %v940
  %1256 = vmatprep.subr.bf16.mxu0 0
  %1257 = vmatpush1.bf16.msra.mxu0 %v941
  %1258 = vmatprep.subr.bf16.mxu0 0
  %1259 = vmatpush1.bf16.msra.mxu0 %v942
  %1260 = vmatprep.subr.bf16.mxu0 0
  %1261 = vmatpush1.bf16.msra.mxu0 %v943
  %1262 = vmatprep.subr.bf16.mxu0 0
  %1263 = vmatpush1.bf16.msra.mxu0 %v944
  %1264 = vmatprep.subr.bf16.mxu0 0
  %1265 = vmatpush1.bf16.msra.mxu0 %v945
  %1266 = vmatprep.mubr.bf16.mxu0 %v112
  %1267 = vmatmul.mubr.bf16.gmra.mrb[0].mxu0 %v111
  %v1268 = vpop.f32.mrb[0].mxu0
  %v1269 = vadd.f32 %v1229, %v1268
  %v1270 = vpop.f32.mrb[0].mxu0
  %v1271 = vpop.f32.mrb[0].mxu0
  %v1272 = vpop.f32.mrb[0].mxu0
  %1273 = vdwg.mxu0
  %1274 = vmatprep.subr.bf16.mxu0 0
  %1275 = vmatpush1.bf16.msra.mxu0 %v946
  %1276 = vmatprep.subr.bf16.mxu0 0
  %1277 = vmatpush1.bf16.msra.mxu0 %v947
  %1278 = vmatprep.subr.bf16.mxu0 0
  %1279 = vmatpush1.bf16.msra.mxu0 %v948
  %1280 = vmatprep.subr.bf16.mxu0 0
  %1281 = vmatpush1.bf16.msra.mxu0 %v949
  %1282 = vmatprep.subr.bf16.mxu0 0
  %1283 = vmatpush1.bf16.msra.mxu0 %v950
  %1284 = vmatprep.subr.bf16.mxu0 0
  %1285 = vmatpush1.bf16.msra.mxu0 %v951
  %1286 = vmatprep.subr.bf16.mxu0 0
  %1287 = vmatpush1.bf16.msra.mxu0 %v952
  %1288 = vmatprep.subr.bf16.mxu0 0
  %1289 = vmatpush1.bf16.msra.mxu0 %v953
  %1290 = vmatprep.subr.bf16.mxu0 0
  %1291 = vmatpush1.bf16.msra.mxu0 %v954
  %1292 = vmatprep.subr.bf16.mxu0 0
  %1293 = vmatpush1.bf16.msra.mxu0 %v955
  %1294 = vmatprep.subr.bf16.mxu0 0
  %1295 = vmatpush1.bf16.msra.mxu0 %v956
  %1296 = vmatprep.subr.bf16.mxu0 0
  %1297 = vmatpush1.bf16.msra.mxu0 %v957
  %1298 = vmatprep.subr.bf16.mxu0 0
  %1299 = vmatpush1.bf16.msra.mxu0 %v958
  %1300 = vmatprep.subr.bf16.mxu0 0
  %1301 = vmatpush1.bf16.msra.mxu0 %v959
  %1302 = vmatprep.subr.bf16.mxu0 0
  %1303 = vmatpush1.bf16.msra.mxu0 %v960
  %1304 = vmatprep.subr.bf16.mxu0 0
  %1305 = vmatpush1.bf16.msra.mxu0 %v961
  %1306 = vmatprep.mubr.bf16.mxu0 %v114
  %1307 = vmatmul.mubr.bf16.gmra.mrb[0].mxu0 %v113
  %v1308 = vpop.f32.mrb[0].mxu0
  %v1309 = vadd.f32 %v1269, %v1308
  %v1310 = vpop.f32.mrb[0].mxu0
  %v1311 = vpop.f32.mrb[0].mxu0
  %v1312 = vpop.f32.mrb[0].mxu0
  %1313 = vdwg.mxu0
  %1314 = vmatprep.subr.bf16.mxu0 0
  %1315 = vmatpush1.bf16.msra.mxu0 %v962
  %1316 = vmatprep.subr.bf16.mxu0 0
  %1317 = vmatpush1.bf16.msra.mxu0 %v963
  %1318 = vmatprep.subr.bf16.mxu0 0
  %1319 = vmatpush1.bf16.msra.mxu0 %v964
  %1320 = vmatprep.subr.bf16.mxu0 0
  %1321 = vmatpush1.bf16.msra.mxu0 %v965
  %1322 = vmatprep.subr.bf16.mxu0 0
  %1323 = vmatpush1.bf16.msra.mxu0 %v966
  %1324 = vmatprep.subr.bf16.mxu0 0
  %1325 = vmatpush1.bf16.msra.mxu0 %v967
  %1326 = vmatprep.subr.bf16.mxu0 0
  %1327 = vmatpush1.bf16.msra.mxu0 %v968
  %1328 = vmatprep.subr.bf16.mxu0 0
  %1329 = vmatpush1.bf16.msra.mxu0 %v969
  %1330 = vmatprep.subr.bf16.mxu0 0
  %1331 = vmatpush1.bf16.msra.mxu0 %v970
  %1332 = vmatprep.subr.bf16.mxu0 0
  %1333 = vmatpush1.bf16.msra.mxu0 %v971
  %1334 = vmatprep.subr.bf16.mxu0 0
  %1335 = vmatpush1.bf16.msra.mxu0 %v972
  %1336 = vmatprep.subr.bf16.mxu0 0
  %1337 = vmatpush1.bf16.msra.mxu0 %v973
  %1338 = vmatprep.subr.bf16.mxu0 0
  %1339 = vmatpush1.bf16.msra.mxu0 %v974
  %1340 = vmatprep.subr.bf16.mxu0 0
  %1341 = vmatpush1.bf16.msra.mxu0 %v975
  %1342 = vmatprep.subr.bf16.mxu0 0
  %1343 = vmatpush1.bf16.msra.mxu0 %v976
  %1344 = vmatprep.subr.bf16.mxu0 0
  %1345 = vmatpush1.bf16.msra.mxu0 %v977
  %1346 = vmatprep.mubr.bf16.mxu0 %v116
  %1347 = vmatmul.mubr.bf16.gmra.mrb[0].mxu0 %v115
  %v1348 = vpop.f32.mrb[0].mxu0
  %v1349 = vadd.f32 %v1309, %v1348
  %v1350 = vpop.f32.mrb[0].mxu0
  %v1351 = vpop.f32.mrb[0].mxu0
  %v1352 = vpop.f32.mrb[0].mxu0
  %1353 = vdwg.mxu0
  %1354 = vmatprep.subr.bf16.mxu0 0
  %1355 = vmatpush1.bf16.msra.mxu0 %v978
  %1356 = vmatprep.subr.bf16.mxu0 0
  %1357 = vmatpush1.bf16.msra.mxu0 %v979
  %1358 = vmatprep.subr.bf16.mxu0 0
  %1359 = vmatpush1.bf16.msra.mxu0 %v980
  %1360 = vmatprep.subr.bf16.mxu0 0
  %1361 = vmatpush1.bf16.msra.mxu0 %v981
  %1362 = vmatprep.subr.bf16.mxu0 0
  %1363 = vmatpush1.bf16.msra.mxu0 %v982
  %1364 = vmatprep.subr.bf16.mxu0 0
  %1365 = vmatpush1.bf16.msra.mxu0 %v983
  %1366 = vmatprep.subr.bf16.mxu0 0
  %1367 = vmatpush1.bf16.msra.mxu0 %v984
  %1368 = vmatprep.subr.bf16.mxu0 0
  %1369 = vmatpush1.bf16.msra.mxu0 %v985
  %1370 = vmatprep.subr.bf16.mxu0 0
  %1371 = vmatpush1.bf16.msra.mxu0 %v986
  %1372 = vmatprep.subr.bf16.mxu0 0
  %1373 = vmatpush1.bf16.msra.mxu0 %v987
  %1374 = vmatprep.subr.bf16.mxu0 0
  %1375 = vmatpush1.bf16.msra.mxu0 %v988
  %1376 = vmatprep.subr.bf16.mxu0 0
  %1377 = vmatpush1.bf16.msra.mxu0 %v989
  %1378 = vmatprep.subr.bf16.mxu0 0
  %1379 = vmatpush1.bf16.msra.mxu0 %v990
  %1380 = vmatprep.subr.bf16.mxu0 0
  %1381 = vmatpush1.bf16.msra.mxu0 %v991
  %1382 = vmatprep.subr.bf16.mxu0 0
  %1383 = vmatpush1.bf16.msra.mxu0 %v992
  %1384 = vmatprep.subr.bf16.mxu0 0
  %1385 = vmatpush1.bf16.msra.mxu0 %v993
  %1386 = vmatprep.mubr.bf16.mxu0 %v118
  %1387 = vmatmul.mubr.bf16.gmra.mrb[0].mxu0 %v117
  %v1388 = vpop.f32.mrb[0].mxu0
  %v1389 = vadd.f32 %v1349, %v1388
  %v1390 = vpop.f32.mrb[0].mxu0
  %v1391 = vpop.f32.mrb[0].mxu0
  %v1392 = vpop.f32.mrb[0].mxu0
  %1393 = vdwg.mxu0
  %1394 = vmatprep.subr.bf16.mxu0 0
  %1395 = vmatpush1.bf16.msra.mxu0 %v994
  %1396 = vmatprep.subr.bf16.mxu0 0
  %1397 = vmatpush1.bf16.msra.mxu0 %v995
  %1398 = vmatprep.subr.bf16.mxu0 0
  %1399 = vmatpush1.bf16.msra.mxu0 %v996
  %1400 = vmatprep.subr.bf16.mxu0 0
  %1401 = vmatpush1.bf16.msra.mxu0 %v997
  %1402 = vmatprep.subr.bf16.mxu0 0
  %1403 = vmatpush1.bf16.msra.mxu0 %v998
  %1404 = vmatprep.subr.bf16.mxu0 0
  %1405 = vmatpush1.bf16.msra.mxu0 %v999
  %1406 = vmatprep.subr.bf16.mxu0 0
  %1407 = vmatpush1.bf16.msra.mxu0 %v1000
  %1408 = vmatprep.subr.bf16.mxu0 0
  %1409 = vmatpush1.bf16.msra.mxu0 %v1001
  %1410 = vmatprep.subr.bf16.mxu0 0
  %1411 = vmatpush1.bf16.msra.mxu0 %v1002
  %1412 = vmatprep.subr.bf16.mxu0 0
  %1413 = vmatpush1.bf16.msra.mxu0 %v1003
  %1414 = vmatprep.subr.bf16.mxu0 0
  %1415 = vmatpush1.bf16.msra.mxu0 %v1004
  %1416 = vmatprep.subr.bf16.mxu0 0
  %1417 = vmatpush1.bf16.msra.mxu0 %v1005
  %1418 = vmatprep.subr.bf16.mxu0 0
  %1419 = vmatpush1.bf16.msra.mxu0 %v1006
  %1420 = vmatprep.subr.bf16.mxu0 0
  %1421 = vmatpush1.bf16.msra.mxu0 %v1007
  %1422 = vmatprep.subr.bf16.mxu0 0
  %1423 = vmatpush1.bf16.msra.mxu0 %v1008
  %1424 = vmatprep.subr.bf16.mxu0 0
  %1425 = vmatpush1.bf16.msra.mxu0 %v1009
  %1426 = vmatprep.mubr.bf16.mxu0 %v120
  %1427 = vmatmul.mubr.bf16.gmra.mrb[0].mxu0 %v119
  %v1428 = vpop.f32.mrb[0].mxu0
  %v1429 = vadd.f32 %v1389, %v1428
  %v1430 = vpop.f32.mrb[0].mxu0
  %v1431 = vpop.f32.mrb[0].mxu0
  %v1432 = vpop.f32.mrb[0].mxu0
  %1433 = vdwg.mxu0
  %1434 = vmatprep.subr.bf16.mxu0 0
  %1435 = vmatpush1.bf16.msra.mxu0 %v1010
  %1436 = vmatprep.subr.bf16.mxu0 0
  %1437 = vmatpush1.bf16.msra.mxu0 %v1011
  %1438 = vmatprep.subr.bf16.mxu0 0
  %1439 = vmatpush1.bf16.msra.mxu0 %v1012
  %1440 = vmatprep.subr.bf16.mxu0 0
  %1441 = vmatpush1.bf16.msra.mxu0 %v1013
  %1442 = vmatprep.subr.bf16.mxu0 0
  %1443 = vmatpush1.bf16.msra.mxu0 %v1014
  %1444 = vmatprep.subr.bf16.mxu0 0
  %1445 = vmatpush1.bf16.msra.mxu0 %v1015
  %1446 = vmatprep.subr.bf16.mxu0 0
  %1447 = vmatpush1.bf16.msra.mxu0 %v1016
  %1448 = vmatprep.subr.bf16.mxu0 0
  %1449 = vmatpush1.bf16.msra.mxu0 %v1017
  %1450 = vmatprep.subr.bf16.mxu0 0
  %1451 = vmatpush1.bf16.msra.mxu0 %v1018
  %1452 = vmatprep.subr.bf16.mxu0 0
  %1453 = vmatpush1.bf16.msra.mxu0 %v1019
  %1454 = vmatprep.subr.bf16.mxu0 0
  %1455 = vmatpush1.bf16.msra.mxu0 %v1020
  %1456 = vmatprep.subr.bf16.mxu0 0
  %1457 = vmatpush1.bf16.msra.mxu0 %v1021
  %1458 = vmatprep.subr.bf16.mxu0 0
  %1459 = vmatpush1.bf16.msra.mxu0 %v1022
  %1460 = vmatprep.subr.bf16.mxu0 0
  %1461 = vmatpush1.bf16.msra.mxu0 %v1023
  %1462 = vmatprep.subr.bf16.mxu0 0
  %1463 = vmatpush1.bf16.msra.mxu0 %v1024
  %1464 = vmatprep.subr.bf16.mxu0 0
  %1465 = vmatpush1.bf16.msra.mxu0 %v1025
  %1466 = vmatprep.mubr.bf16.mxu0 %v122
  %1467 = vmatmul.mubr.bf16.gmra.mrb[0].mxu0 %v121
  %v1468 = vpop.f32.mrb[0].mxu0
  %v1469 = vadd.f32 %v1429, %v1468
  %v1470 = vpop.f32.mrb[0].mxu0
  %v1471 = vpop.f32.mrb[0].mxu0
  %v1472 = vpop.f32.mrb[0].mxu0
  %1473 = vdwg.mxu0
  %v1474 = vmax.f32 %v1469, 0.0
  %1475 = vst [vmem:[%s3] sm:$0x3] %v1474
  // Predicated region
  $region14: #{leela_forward.14} parent=0 // pred_check
    _
  $region15: #{leela_forward.14} parent=0 // pred_check_branch
    %1477 = sbr.rel (0) target = $region17
  $region16: #{leela_forward.14} parent=0 // pred_region
    _
  $region17: #{leela_forward.14} parent=0 // pred_fallthru
    _
  // Predicated region
  $region18: #{leela_forward.14} parent=0 // pred_check
    _
  $region19: #{leela_forward.14} parent=0 // pred_check_branch
    %1479 = sbr.rel (0) target = $region21
  $region20: #{leela_forward.14} parent=0 // pred_region
    _
  $region21: #{leela_forward.14} parent=0 // pred_fallthru
    _

// kernel: leela_forward.12
$region0: #{leela_forward.12}
  #allocation0 [shape = 'u32[]', space=smem, size = 0x4, offset = 0x4, fixed_abs, tag = 'smem constant byte address 0x4 - core index']
  #allocation1 [shape = 'u32[144,128]{1,0:T(1,128)}', space=vmem, size = 0x12000, scoped, tag = 'internal scratch']
  %s0 = inlined_call_operand.vmem [shape: f32[2,64,32], index: 0, kind: input, shape index: {}]
  %s1 = inlined_call_operand.vmem [shape: f32[9,64,1], index: 1, kind: input, shape index: {}]
  %s2 = inlined_call_operand.vmem [shape: bf16[9,32,32], index: 2, kind: input, shape index: {}]
  %s3 = inlined_call_operand.vmem [shape: f32[1,32], index: 3, kind: input, shape index: {}]
  %s4 = inlined_call_operand.vmem [shape: f32[1,32], index: 4, kind: input, shape index: {}]
  %s5 = inlined_call_operand.vmem [shape: bf16[9,32,128], index: 5, kind: input, shape index: {}]
  %s6 = inlined_call_operand.vmem [shape: f32[1,128], index: 6, kind: input, shape index: {}]
  %s7 = inlined_call_operand.vmem [shape: f32[1,128], index: 7, kind: input, shape index: {}]
  %s8 = inlined_call_operand.vmem [shape: f32[2,64,128], index: 8, kind: output, shape index: {}]
  %s9 = sld [smem:[#allocation0]]
  $region65: #{leela_forward.12} parent=0
    _
  %s11 = ssub.s32 1, %s9
  %s12 = scalar_select 0, %s11, %s9
  loop: start=0, step=1, limit=4
  $region2: #{leela_forward.12} parent=0 // loop_pre_header
    _
  $region3: #{leela_forward.12} parent=0 // loop_header
    %s14 = sphi 0, %s18
    %p15 = scmp.ge.s32.totalorder %s14, 4
    %s24 = sphi 0, %s26
    %s27 = sphi 0, %s24
    %s28 = sphi 0, %s27
    %s44 = sphi 0, %s28
    %s48 = sphi 0, %s48
    %s50 = sphi 0, %s48
    %s51 = sphi 0, %s50
    %s65 = sphi 0, %s51
    %s69 = sphi 0, %s69
    %s71 = sphi 0, %s69
    %s72 = sphi 0, %s71
    %s86 = sphi 0, %s72
    %s90 = sphi 0, %s90
    %s92 = sphi 0, %s90
    %s93 = sphi 0, %s92
    %s107 = sphi 0, %s93
    %s111 = sphi 0, %s111
    %s113 = sphi 0, %s111
    %s114 = sphi 0, %s113
    %s128 = sphi 0, %s114
    %s132 = sphi 0, %s132
    %s134 = sphi 0, %s132
    %s135 = sphi 0, %s134
    %s149 = sphi 0, %s135
    %s153 = sphi 0, %s153
    %s155 = sphi 0, %s153
    %s156 = sphi 0, %s155
    %s170 = sphi 0, %s156
    %s174 = sphi 0, %s174
    %s176 = sphi 0, %s174
    %s177 = sphi 0, %s176
    %s191 = sphi 0, %s177
    %s197 = sphi 0, %s199
    %s200 = sphi 0, %s197
    %s201 = sphi 0, %s200
    %s217 = sphi 0, %s201
  $region4: #{leela_forward.12} parent=0 // loop_header_branch
    %17 = sbr.rel (%p15) target = $region8
  $region5: #{leela_forward.12} parent=0 // loop_body
    %s19 = ssub.s32 %s14, 1
    %s20 = ssub.s32 %s14, 2
    %s21 = sadd.s32 %s14, 1
    %s22 = ssub.s32 %s14, %s21
    %p23 = scmp.eq.s32.totalorder %s22, 0
    %s25 = sadd.s32 %s24, 1
    %s26 = scalar_select %p23, %s24, %s25
    %p29 = pneg %p23
    %p30 = scmp.eq.s32.totalorder %s14, 1
    %p31 = por %p29, %p30
    %p32 = scmp.ne.s32.totalorder %s24, %s27
    %p33 = scmp.eq.s32.totalorder %s14, 0
    %p34 = por %p32, %p33
    %p35 = scmp.ne.s32.totalorder %s24, %s27
    %p36 = scmp.eq.s32.totalorder %s19, 1
    %p37 = por %p35, %p36
    %p38 = scmp.ne.s32.totalorder %s27, %s28
    %p39 = scmp.eq.s32.totalorder %s19, 0
    %p40 = por %p38, %p39
    %p41 = scmp.ne.s32.totalorder %s27, %s28
    %p42 = scmp.eq.s32.totalorder %s20, 1
    %p43 = por %p41, %p42
    %p45 = scmp.ne.s32.totalorder %s28, %s44
    %p46 = scmp.eq.s32.totalorder %s20, 0
    %p47 = por %p45, %p46
    %s49 = sadd.s32 %s48, 1
    %p52 = scmp.eq.s32.totalorder %s14, 1
    %p53 = scmp.ne.s32.totalorder %s48, %s50
    %p54 = scmp.eq.s32.totalorder %s14, 0
    %p55 = por %p53, %p54
    %p56 = scmp.ne.s32.totalorder %s48, %s50
    %p57 = scmp.eq.s32.totalorder %s19, 1
    %p58 = por %p56, %p57
    %p59 = scmp.ne.s32.totalorder %s50, %s51
    %p60 = scmp.eq.s32.totalorder %s19, 0
    %p61 = por %p59, %p60
    %p62 = scmp.ne.s32.totalorder %s50, %s51
    %p63 = scmp.eq.s32.totalorder %s20, 1
    %p64 = por %p62, %p63
    %p66 = scmp.ne.s32.totalorder %s51, %s65
    %p67 = scmp.eq.s32.totalorder %s20, 0
    %p68 = por %p66, %p67
    %s70 = sadd.s32 %s69, 1
    %p73 = scmp.eq.s32.totalorder %s14, 1
    %p74 = scmp.ne.s32.totalorder %s69, %s71
    %p75 = scmp.eq.s32.totalorder %s14, 0
    %p76 = por %p74, %p75
    %p77 = scmp.ne.s32.totalorder %s69, %s71
    %p78 = scmp.eq.s32.totalorder %s19, 1
    %p79 = por %p77, %p78
    %p80 = scmp.ne.s32.totalorder %s71, %s72
    %p81 = scmp.eq.s32.totalorder %s19, 0
    %p82 = por %p80, %p81
    %p83 = scmp.ne.s32.totalorder %s71, %s72
    %p84 = scmp.eq.s32.totalorder %s20, 1
    %p85 = por %p83, %p84
    %p87 = scmp.ne.s32.totalorder %s72, %s86
    %p88 = scmp.eq.s32.totalorder %s20, 0
    %p89 = por %p87, %p88
    %s91 = sadd.s32 %s90, 1
    %p94 = scmp.eq.s32.totalorder %s14, 1
    %p95 = scmp.ne.s32.totalorder %s90, %s92
    %p96 = scmp.eq.s32.totalorder %s14, 0
    %p97 = por %p95, %p96
    %p98 = scmp.ne.s32.totalorder %s90, %s92
    %p99 = scmp.eq.s32.totalorder %s19, 1
    %p100 = por %p98, %p99
    %p101 = scmp.ne.s32.totalorder %s92, %s93
    %p102 = scmp.eq.s32.totalorder %s19, 0
    %p103 = por %p101, %p102
    %p104 = scmp.ne.s32.totalorder %s92, %s93
    %p105 = scmp.eq.s32.totalorder %s20, 1
    %p106 = por %p104, %p105
    %p108 = scmp.ne.s32.totalorder %s93, %s107
    %p109 = scmp.eq.s32.totalorder %s20, 0
    %p110 = por %p108, %p109
    %s112 = sadd.s32 %s111, 1
    %p115 = scmp.eq.s32.totalorder %s14, 1
    %p116 = scmp.ne.s32.totalorder %s111, %s113
    %p117 = scmp.eq.s32.totalorder %s14, 0
    %p118 = por %p116, %p117
    %p119 = scmp.ne.s32.totalorder %s111, %s113
    %p120 = scmp.eq.s32.totalorder %s19, 1
    %p121 = por %p119, %p120
    %p122 = scmp.ne.s32.totalorder %s113, %s114
    %p123 = scmp.eq.s32.totalorder %s19, 0
    %p124 = por %p122, %p123
    %p125 = scmp.ne.s32.totalorder %s113, %s114
    %p126 = scmp.eq.s32.totalorder %s20, 1
    %p127 = por %p125, %p126
    %p129 = scmp.ne.s32.totalorder %s114, %s128
    %p130 = scmp.eq.s32.totalorder %s20, 0
    %p131 = por %p129, %p130
    %s133 = sadd.s32 %s132, 1
    %p136 = scmp.eq.s32.totalorder %s14, 1
    %p137 = scmp.ne.s32.totalorder %s132, %s134
    %p138 = scmp.eq.s32.totalorder %s14, 0
    %p139 = por %p137, %p138
    %p140 = scmp.ne.s32.totalorder %s132, %s134
    %p141 = scmp.eq.s32.totalorder %s19, 1
    %p142 = por %p140, %p141
    %p143 = scmp.ne.s32.totalorder %s134, %s135
    %p144 = scmp.eq.s32.totalorder %s19, 0
    %p145 = por %p143, %p144
    %p146 = scmp.ne.s32.totalorder %s134, %s135
    %p147 = scmp.eq.s32.totalorder %s20, 1
    %p148 = por %p146, %p147
    %p150 = scmp.ne.s32.totalorder %s135, %s149
    %p151 = scmp.eq.s32.totalorder %s20, 0
    %p152 = por %p150, %p151
    %s154 = sadd.s32 %s153, 1
    %p157 = scmp.eq.s32.totalorder %s14, 1
    %p158 = scmp.ne.s32.totalorder %s153, %s155
    %p159 = scmp.eq.s32.totalorder %s14, 0
    %p160 = por %p158, %p159
    %p161 = scmp.ne.s32.totalorder %s153, %s155
    %p162 = scmp.eq.s32.totalorder %s19, 1
    %p163 = por %p161, %p162
    %p164 = scmp.ne.s32.totalorder %s155, %s156
    %p165 = scmp.eq.s32.totalorder %s19, 0
    %p166 = por %p164, %p165
    %p167 = scmp.ne.s32.totalorder %s155, %s156
    %p168 = scmp.eq.s32.totalorder %s20, 1
    %p169 = por %p167, %p168
    %p171 = scmp.ne.s32.totalorder %s156, %s170
    %p172 = scmp.eq.s32.totalorder %s20, 0
    %p173 = por %p171, %p172
    %s175 = sadd.s32 %s174, 1
    %p178 = scmp.eq.s32.totalorder %s14, 1
    %p179 = scmp.ne.s32.totalorder %s174, %s176
    %p180 = scmp.eq.s32.totalorder %s14, 0
    %p181 = por %p179, %p180
    %p182 = scmp.ne.s32.totalorder %s174, %s176
    %p183 = scmp.eq.s32.totalorder %s19, 1
    %p184 = por %p182, %p183
    %p185 = scmp.ne.s32.totalorder %s176, %s177
    %p186 = scmp.eq.s32.totalorder %s19, 0
    %p187 = por %p185, %p186
    %p188 = scmp.ne.s32.totalorder %s176, %s177
    %p189 = scmp.eq.s32.totalorder %s20, 1
    %p190 = por %p188, %p189
    %p192 = scmp.ne.s32.totalorder %s177, %s191
    %p193 = scmp.eq.s32.totalorder %s20, 0
    %p194 = por %p192, %p193
    %s195 = ssub.s32 %s14, %s21
    %p196 = scmp.eq.s32.totalorder %s195, 0
    %s198 = sadd.s32 %s197, 1
    %s199 = scalar_select %p196, %s197, %s198
    %p202 = pneg %p196
    %p203 = scmp.eq.s32.totalorder %s14, 1
    %p204 = por %p202, %p203
    %p205 = scmp.ne.s32.totalorder %s197, %s200
    %p206 = scmp.eq.s32.totalorder %s14, 0
    %p207 = por %p205, %p206
    %p208 = scmp.ne.s32.totalorder %s197, %s200
    %p209 = scmp.eq.s32.totalorder %s19, 1
    %p210 = por %p208, %p209
    %p211 = scmp.ne.s32.totalorder %s200, %s201
    %p212 = scmp.eq.s32.totalorder %s19, 0
    %p213 = por %p211, %p212
    %p214 = scmp.ne.s32.totalorder %s200, %s201
    %p215 = scmp.eq.s32.totalorder %s20, 1
    %p216 = por %p214, %p215
    %p218 = scmp.ne.s32.totalorder %s201, %s217
    %p219 = scmp.eq.s32.totalorder %s20, 0
    %p220 = por %p218, %p219
    %p221 = scmp.le.s32.totalorder 1, %s14
    %p222 = scmp.lt.s32.totalorder %s14, 3
    %p223 = pnand %p221, %p222
    %p224 = pneg %p223
    // Predicated region
    $region9: #{leela_forward.12} parent=5 // pred_check
      _
    $region10: #{leela_forward.12} parent=5 // pred_check_branch
      %226 = sbr.rel (%p223) target = $region12
    $region11: #{leela_forward.12} parent=5 // pred_region
      %s227 = ssub.s32 %s14, 1
      // Predicated region
      $region13: #{leela_forward.12} parent=11 // pred_check
        %p228 = pneg %p61
      $region14: #{leela_forward.12} parent=11 // pred_check_branch
        %230 = sbr.rel (%p228) target = $region16
      $region15: #{leela_forward.12} parent=11 // pred_region
        _
      $region16: #{leela_forward.12} parent=11 // pred_fallthru
        _
      // Predicated region
      $region17: #{leela_forward.12} parent=11 // pred_check
        %p231 = pneg %p82
      $region18: #{leela_forward.12} parent=11 // pred_check_branch
        %233 = sbr.rel (%p231) target = $region20
      $region19: #{leela_forward.12} parent=11 // pred_region
        _
      $region20: #{leela_forward.12} parent=11 // pred_fallthru
        _
      // Predicated region
      $region21: #{leela_forward.12} parent=11 // pred_check
        %p234 = pneg %p103
      $region22: #{leela_forward.12} parent=11 // pred_check_branch
        %236 = sbr.rel (%p234) target = $region24
      $region23: #{leela_forward.12} parent=11 // pred_region
        _
      $region24: #{leela_forward.12} parent=11 // pred_fallthru
        _
      // Predicated region
      $region25: #{leela_forward.12} parent=11 // pred_check
        %p237 = pneg %p124
      $region26: #{leela_forward.12} parent=11 // pred_check_branch
        %239 = sbr.rel (%p237) target = $region28
      $region27: #{leela_forward.12} parent=11 // pred_region
        _
      $region28: #{leela_forward.12} parent=11 // pred_fallthru
        _
      // Predicated region
      $region29: #{leela_forward.12} parent=11 // pred_check
        %p240 = pneg %p145
      $region30: #{leela_forward.12} parent=11 // pred_check_branch
        %242 = sbr.rel (%p240) target = $region32
      $region31: #{leela_forward.12} parent=11 // pred_region
        _
      $region32: #{leela_forward.12} parent=11 // pred_fallthru
        _
      // Predicated region
      $region33: #{leela_forward.12} parent=11 // pred_check
        %p243 = pneg %p166
      $region34: #{leela_forward.12} parent=11 // pred_check_branch
        %245 = sbr.rel (%p243) target = $region36
      $region35: #{leela_forward.12} parent=11 // pred_region
        _
      $region36: #{leela_forward.12} parent=11 // pred_fallthru
        _
      // Predicated region
      $region37: #{leela_forward.12} parent=11 // pred_check
        %p246 = pneg %p187
      $region38: #{leela_forward.12} parent=11 // pred_check_branch
        %248 = sbr.rel (%p246) target = $region40
      $region39: #{leela_forward.12} parent=11 // pred_region
        _
      $region40: #{leela_forward.12} parent=11 // pred_fallthru
        _
    $region12: #{leela_forward.12} parent=5 // pred_fallthru
      _
    %p249 = scmp.lt.s32.totalorder %s14, 2
    // Predicated region
    $region41: #{leela_forward.12} parent=5 // pred_check
      %p250 = pneg %p249
    $region42: #{leela_forward.12} parent=5 // pred_check_branch
      %252 = sbr.rel (%p250) target = $region44
    $region43: #{leela_forward.12} parent=5 // pred_region
      // Predicated region
      $region45: #{leela_forward.12} parent=43 // pred_check
        %p253 = pneg %p34
      $region46: #{leela_forward.12} parent=43 // pred_check_branch
        %255 = sbr.rel (%p253) target = $region48
      $region47: #{leela_forward.12} parent=43 // pred_region
        %p256 = scmp.lt.s32.totalorder %s14, 1
        %s257 = scalar_select %p256, %s14, 1
        %s258 = smul.addr %s257, 8
        %s259 = smul.addr %s258, 8
        %s260 = scalar_lea.vmem %s0, %s259
      $region48: #{leela_forward.12} parent=43 // pred_fallthru
        _
    $region44: #{leela_forward.12} parent=5 // pred_fallthru
      _
    %p261 = scmp.le.s32.totalorder 1, %s14
    %p262 = scmp.lt.s32.totalorder %s14, 3
    %p263 = pnand %p261, %p262
    %p264 = pneg %p263
    // Predicated region
    $region49: #{leela_forward.12} parent=5 // pred_check
      _
    $region50: #{leela_forward.12} parent=5 // pred_check_branch
      %266 = sbr.rel (%p263) target = $region52
    $region51: #{leela_forward.12} parent=5 // pred_region
      %s267 = ssub.s32 %s14, 1
      %p268 = scmp.lt.s32.totalorder %s19, 1
      %s269 = scalar_select %p268, %s19, 1
      %s270 = smul.addr %s269, 8
      %s271 = smul.addr %s270, 8
      %s272 = scalar_lea.vmem %s0, %s271
      %p273 = pneg %p40
      %p274 = pneg %p37
      %p275 = pneg %p61
      %p276 = pneg %p58
      %p277 = pneg %p82
      %p278 = pneg %p79
      %p279 = pneg %p103
      %p280 = pneg %p100
      %p281 = pneg %p124
      %p282 = pneg %p121
      %p283 = pneg %p145
      %p284 = pneg %p142
      %p285 = pneg %p166
      %p286 = pneg %p163
      %p287 = pneg %p187
      %p288 = pneg %p184
      %p289 = pneg %p213
      %p290 = pneg %p210
      %p291 = scmp.lt.s32.totalorder %s19, 1
      %s292 = scalar_select %p291, %s19, 1
      %s293 = smul.addr %s292, 8
      %s294 = smul.addr %s293, 8
      %s295 = scalar_lea.vmem %s8, %s294
      %p296 = scmp.lt.s32.totalorder %s19, 1
      %s297 = scalar_select %p296, %s19, 1
      %s298 = smul.addr %s297, 8
      %s299 = smul.addr %s298, 8
      %s300 = scalar_lea.vmem %s0, %s299
      %p301 = scmp.lt.s32.totalorder %s19, 1
      %s302 = scalar_select %p301, %s19, 1
      %s303 = smul.addr %s302, 8
      %s304 = smul.addr %s303, 8
      %s305 = scalar_lea.vmem %s8, %s304
      %v307 = vld [vmem:[%s300] sm:$0xff]
      %v308 = vld [vmem:[%s300 + $0x8] sm:$0xff]
      %v309 = vld [vmem:[%s300 + $0x10] sm:$0xff]
      %v310 = vld [vmem:[%s300 + $0x18] sm:$0xff]
      %v311 = vld [vmem:[%s300 + $0x20] sm:$0xff]
      %v312 = vld [vmem:[%s300 + $0x28] sm:$0xff]
      %v313 = vld [vmem:[%s300 + $0x30] sm:$0xff]
      %v314 = vld [vmem:[%s300 + $0x38] sm:$0xff]
      %v315 = vld [vmem:[%s3] sm:$0x1]
      %v316 = vld [vmem:[%s4] sm:$0x1]
      %v317 = vrot.slane %v307, 7
      %v318 = vrot.slane %v308, 7
      %v319 = vrot.slane %v309, 7
      %v320 = vrot.slane %v310, 7
      %v321 = vrot.slane %v311, 7
      %v322 = vrot.slane %v312, 7
      %v323 = vrot.slane %v313, 7
      %v324 = vrot.slane %v314, 7
      %v325 = vlaneseq
      %v326 = vshrl.u32 %v325, 7
      %vm327 = vcmp.lt.s32.totalorder %v326, 1
      %v328 = vsel %vm327, %v323, %v324
      %v329 = vsel %vm327, %v322, %v323
      %v330 = vsel %vm327, %v321, %v322
      %v331 = vsel %vm327, %v320, %v321
      %v332 = vsel %vm327, %v319, %v320
      %v333 = vsel %vm327, %v318, %v319
      %v334 = vsel %vm327, %v317, %v318
      %v335 = vsel %vm327, %v324, %v317
      %v336 = vld [vmem:[%s1] sm:$0xff]
      %v337 = vld [vmem:[%s1 + $0x8] sm:$0xff]
      %v338 = vld [vmem:[%s1 + $0x10] sm:$0xff]
      %v339 = vld [vmem:[%s1 + $0x18] sm:$0xff]
      %v340 = vld [vmem:[%s1 + $0x20] sm:$0xff]
      %v341 = vld [vmem:[%s1 + $0x28] sm:$0xff]
      %v342 = vld [vmem:[%s1 + $0x30] sm:$0xff]
      %v343 = vld [vmem:[%s1 + $0x38] sm:$0xff]
      %345 = vset.pattern.permute.xlu0 0
      %346 = vperm.xlu0 %345, %v336
      %v347 = vpop.permute.xlu0 %346
      %350 = vset.pattern.permute.xlu0 0
      %351 = vperm.xlu0 %350, %v337
      %v352 = vpop.permute.xlu0 %351
      %355 = vset.pattern.permute.xlu0 0
      %356 = vperm.xlu0 %355, %v338
      %v357 = vpop.permute.xlu0 %356
      %360 = vset.pattern.permute.xlu0 0
      %361 = vperm.xlu0 %360, %v339
      %v362 = vpop.permute.xlu0 %361
      %365 = vset.pattern.permute.xlu0 0
      %366 = vperm.xlu0 %365, %v340
      %v367 = vpop.permute.xlu0 %366
      %370 = vset.pattern.permute.xlu0 0
      %371 = vperm.xlu0 %370, %v341
      %v372 = vpop.permute.xlu0 %371
      %375 = vset.pattern.permute.xlu0 0
      %376 = vperm.xlu0 %375, %v342
      %v377 = vpop.permute.xlu0 %376
      %380 = vset.pattern.permute.xlu0 0
      %381 = vperm.xlu0 %380, %v343
      %v382 = vpop.permute.xlu0 %381
      %v384 = vmul.f32 %v328, %v347
      %v385 = vmul.f32 %v335, %v352
      %v386 = vmul.f32 %v334, %v357
      %v387 = vmul.f32 %v333, %v362
      %v388 = vmul.f32 %v332, %v367
      %v389 = vmul.f32 %v331, %v372
      %v390 = vmul.f32 %v330, %v377
      %v391 = vmul.f32 %v329, %v382
      %v392 = vpack.c.bf16 %v385, %v384
      %v393 = vpack.c.bf16 %v387, %v386
      %v394 = vpack.c.bf16 %v389, %v388
      %v395 = vpack.c.bf16 %v391, %v390
      %v396 = vld [vmem:[%s2] sm:$0xf]
      %v397 = vld [vmem:[%s2 + $0x4] sm:$0xf]
      %v398 = vld [vmem:[%s2 + $0x8] sm:$0xf]
      %v399 = vld [vmem:[%s2 + $0xc] sm:$0xf]
      %s400 = scalar_lea.vmem %s1, 64
      %v401 = vld [vmem:[%s400] sm:$0xff]
      %v402 = vld [vmem:[%s400 + $0x8] sm:$0xff]
      %v403 = vld [vmem:[%s400 + $0x10] sm:$0xff]
      %v404 = vld [vmem:[%s400 + $0x18] sm:$0xff]
      %v405 = vld [vmem:[%s400 + $0x20] sm:$0xff]
      %v406 = vld [vmem:[%s400 + $0x28] sm:$0xff]
      %v407 = vld [vmem:[%s400 + $0x30] sm:$0xff]
      %v408 = vld [vmem:[%s400 + $0x38] sm:$0xff]
      %410 = vset.pattern.permute.xlu0 0
      %411 = vperm.xlu0 %410, %v401
      %v412 = vpop.permute.xlu0 %411
      %415 = vset.pattern.permute.xlu0 0
      %416 = vperm.xlu0 %415, %v402
      %v417 = vpop.permute.xlu0 %416
      %420 = vset.pattern.permute.xlu0 0
      %421 = vperm.xlu0 %420, %v403
      %v422 = vpop.permute.xlu0 %421
      %425 = vset.pattern.permute.xlu0 0
      %426 = vperm.xlu0 %425, %v404
      %v427 = vpop.permute.xlu0 %426
      %430 = vset.pattern.permute.xlu0 0
      %431 = vperm.xlu0 %430, %v405
      %v432 = vpop.permute.xlu0 %431
      %435 = vset.pattern.permute.xlu0 0
      %436 = vperm.xlu0 %435, %v406
      %v437 = vpop.permute.xlu0 %436
      %440 = vset.pattern.permute.xlu0 0
      %441 = vperm.xlu0 %440, %v407
      %v442 = vpop.permute.xlu0 %441
      %445 = vset.pattern.permute.xlu0 0
      %446 = vperm.xlu0 %445, %v408
      %v447 = vpop.permute.xlu0 %446
      %v449 = vmul.f32 %v314, %v412
      %v450 = vmul.f32 %v307, %v417
      %v451 = vmul.f32 %v308, %v422
      %v452 = vmul.f32 %v309, %v427
      %v453 = vmul.f32 %v310, %v432
      %v454 = vmul.f32 %v311, %v437
      %v455 = vmul.f32 %v312, %v442
      %v456 = vmul.f32 %v313, %v447
      %v457 = vpack.c.bf16 %v450, %v449
      %v458 = vpack.c.bf16 %v452, %v451
      %v459 = vpack.c.bf16 %v454, %v453
      %v460 = vpack.c.bf16 %v456, %v455
      %s461 = scalar_lea.vmem %s2, 16
      %v462 = vld [vmem:[%s461] sm:$0xf]
      %v463 = vld [vmem:[%s461 + $0x4] sm:$0xf]
      %v464 = vld [vmem:[%s461 + $0x8] sm:$0xf]
      %v465 = vld [vmem:[%s461 + $0xc] sm:$0xf]
      %v470 = vunpack.c.l.b16 %v462
      %v471 = vunpack.c.l.b16 %v463
      %v472 = vunpack.c.l.b16 %v464
      %v473 = vunpack.c.l.b16 %v465
      %v474 = vpack.c.b16 %v471, %v470
      %v475 = vpack.c.b16 %v473, %v472
      %vm478 = vcmask 261120
      %v480 = vsel %vm478, %v457, 0
      %v483 = vsel %vm478, %v458, 0
      %v486 = vsel %vm478, %v459, 0
      %v489 = vsel %vm478, %v460, 0
      %491 = vmatprep.subr.bf16.mxu0 0
      %492 = vmatpush1.bf16.msra.mxu0 %v474
      %493 = vmatprep.subr.bf16.mxu0 0
      %494 = vmatpush1.bf16.msra.mxu0 %v475
      %495 = vmatprep.subr.bf16.mxu0 0
      %496 = vmatpush1.bf16.msra.mxu0 0
      %497 = vmatprep.subr.bf16.mxu0 0
      %498 = vmatpush1.bf16.msra.mxu0 0
      %499 = vmatprep.subr.bf16.mxu0 0
      %500 = vmatpush1.bf16.msra.mxu0 0
      %501 = vmatprep.subr.bf16.mxu0 0
      %502 = vmatpush1.bf16.msra.mxu0 0
      %503 = vmatprep.subr.bf16.mxu0 0
      %504 = vmatpush1.bf16.msra.mxu0 0
      %505 = vmatprep.subr.bf16.mxu0 0
      %506 = vmatpush1.bf16.msra.mxu0 0
      %507 = vmatprep.subr.bf16.mxu0 0
      %508 = vmatpush1.bf16.msra.mxu0 0
      %509 = vmatprep.subr.bf16.mxu0 0
      %510 = vmatpush1.bf16.msra.mxu0 0
      %511 = vmatprep.subr.bf16.mxu0 0
      %512 = vmatpush1.bf16.msra.mxu0 0
      %513 = vmatprep.subr.bf16.mxu0 0
      %514 = vmatpush1.bf16.msra.mxu0 0
      %515 = vmatprep.subr.bf16.mxu0 0
      %516 = vmatpush1.bf16.msra.mxu0 0
      %517 = vmatprep.subr.bf16.mxu0 0
      %518 = vmatpush1.bf16.msra.mxu0 0
      %519 = vmatprep.subr.bf16.mxu0 0
      %520 = vmatpush1.bf16.msra.mxu0 0
      %521 = vmatprep.subr.bf16.mxu0 0
      %522 = vmatpush1.bf16.msra.mxu0 0
      %523 = vmatprep.mubr.bf16.mxu0 0
      %524 = vmatmul.mubr.bf16.gmra.mrb[0].mxu0 %v480
      %v525 = vpop.f32.mrb[0].mxu0
      %v526 = vadd.f32 0.0, %v525
      %v527 = vpop.f32.mrb[0].mxu0
      %v528 = vpop.f32.mrb[0].mxu0
      %v529 = vadd.f32 0.0, %v528
      %v530 = vpop.f32.mrb[0].mxu0
      %531 = vmatprep.mubr.bf16.mxu0 0
      %532 = vmatmul.mubr.bf16.gmra.mrb[0].mxu0 %v483
      %v533 = vpop.f32.mrb[0].mxu0
      %v534 = vadd.f32 0.0, %v533
      %v535 = vpop.f32.mrb[0].mxu0
      %v536 = vpop.f32.mrb[0].mxu0
      %v537 = vadd.f32 0.0, %v536
      %v538 = vpop.f32.mrb[0].mxu0
      %539 = vmatprep.mubr.bf16.mxu0 0
      %540 = vmatmul.mubr.bf16.gmra.mrb[0].mxu0 %v486
      %v541 = vpop.f32.mrb[0].mxu0
      %v542 = vadd.f32 0.0, %v541
      %v543 = vpop.f32.mrb[0].mxu0
      %v544 = vpop.f32.mrb[0].mxu0
      %v545 = vadd.f32 0.0, %v544
      %v546 = vpop.f32.mrb[0].mxu0
      %547 = vmatprep.mubr.bf16.mxu0 0
      %548 = vmatmul.mubr.bf16.gmra.mrb[0].mxu0 %v489
      %v549 = vpop.f32.mrb[0].mxu0
      %v550 = vadd.f32 0.0, %v549
      %v551 = vpop.f32.mrb[0].mxu0
      %v552 = vpop.f32.mrb[0].mxu0
      %v553 = vadd.f32 0.0, %v552
      %v554 = vpop.f32.mrb[0].mxu0
      %555 = vdwg.mxu0
      %v560 = vunpack.c.l.b16 %v396
      %v561 = vunpack.c.l.b16 %v397
      %v562 = vunpack.c.l.b16 %v398
      %v563 = vunpack.c.l.b16 %v399
      %v564 = vpack.c.b16 %v561, %v560
      %v565 = vpack.c.b16 %v563, %v562
      %v569 = vsel %vm478, %v392, 0
      %v572 = vsel %vm478, %v393, 0
      %v575 = vsel %vm478, %v394, 0
      %v578 = vsel %vm478, %v395, 0
      %580 = vmatprep.subr.bf16.mxu0 0
      %581 = vmatpush1.bf16.msra.mxu0 %v564
      %582 = vmatprep.subr.bf16.mxu0 0
      %583 = vmatpush1.bf16.msra.mxu0 %v565
      %584 = vmatprep.subr.bf16.mxu0 0
      %585 = vmatpush1.bf16.msra.mxu0 0
      %586 = vmatprep.subr.bf16.mxu0 0
      %587 = vmatpush1.bf16.msra.mxu0 0
      %588 = vmatprep.subr.bf16.mxu0 0
      %589 = vmatpush1.bf16.msra.mxu0 0
      %590 = vmatprep.subr.bf16.mxu0 0
      %591 = vmatpush1.bf16.msra.mxu0 0
      %592 = vmatprep.subr.bf16.mxu0 0
      %593 = vmatpush1.bf16.msra.mxu0 0
      %594 = vmatprep.subr.bf16.mxu0 0
      %595 = vmatpush1.bf16.msra.mxu0 0
      %596 = vmatprep.subr.bf16.mxu0 0
      %597 = vmatpush1.bf16.msra.mxu0 0
      %598 = vmatprep.subr.bf16.mxu0 0
      %599 = vmatpush1.bf16.msra.mxu0 0
      %600 = vmatprep.subr.bf16.mxu0 0
      %601 = vmatpush1.bf16.msra.mxu0 0
      %602 = vmatprep.subr.bf16.mxu0 0
      %603 = vmatpush1.bf16.msra.mxu0 0
      %604 = vmatprep.subr.bf16.mxu0 0
      %605 = vmatpush1.bf16.msra.mxu0 0
      %606 = vmatprep.subr.bf16.mxu0 0
      %607 = vmatpush1.bf16.msra.mxu0 0
      %608 = vmatprep.subr.bf16.mxu0 0
      %609 = vmatpush1.bf16.msra.mxu0 0
      %610 = vmatprep.subr.bf16.mxu0 0
      %611 = vmatpush1.bf16.msra.mxu0 0
      %612 = vmatprep.mubr.bf16.mxu0 0
      %613 = vmatmul.mubr.bf16.gmra.mrb[0].mxu0 %v569
      %v614 = vpop.f32.mrb[0].mxu0
      %v615 = vadd.f32 %v526, %v614
      %v616 = vpop.f32.mrb[0].mxu0
      %v617 = vpop.f32.mrb[0].mxu0
      %v618 = vadd.f32 %v529, %v617
      %v619 = vpop.f32.mrb[0].mxu0
      %620 = vmatprep.mubr.bf16.mxu0 0
      %621 = vmatmul.mubr.bf16.gmra.mrb[0].mxu0 %v572
      %v622 = vpop.f32.mrb[0].mxu0
      %v623 = vadd.f32 %v534, %v622
      %v624 = vpop.f32.mrb[0].mxu0
      %v625 = vpop.f32.mrb[0].mxu0
      %v626 = vadd.f32 %v537, %v625
      %v627 = vpop.f32.mrb[0].mxu0
      %628 = vmatprep.mubr.bf16.mxu0 0
      %629 = vmatmul.mubr.bf16.gmra.mrb[0].mxu0 %v575
      %v630 = vpop.f32.mrb[0].mxu0
      %v631 = vadd.f32 %v542, %v630
      %v632 = vpop.f32.mrb[0].mxu0
      %v633 = vpop.f32.mrb[0].mxu0
      %v634 = vadd.f32 %v545, %v633
      %v635 = vpop.f32.mrb[0].mxu0
      %636 = vmatprep.mubr.bf16.mxu0 0
      %637 = vmatmul.mubr.bf16.gmra.mrb[0].mxu0 %v578
      %v638 = vpop.f32.mrb[0].mxu0
      %v639 = vadd.f32 %v550, %v638
      %v640 = vpop.f32.mrb[0].mxu0
      %v641 = vpop.f32.mrb[0].mxu0
      %v642 = vadd.f32 %v553, %v641
      %v643 = vpop.f32.mrb[0].mxu0
      %644 = vdwg.mxu0
      %v645 = vrot.slane %v307, 1
      %v646 = vrot.slane %v308, 1
      %v647 = vrot.slane %v309, 1
      %v648 = vrot.slane %v310, 1
      %v649 = vrot.slane %v311, 1
      %v650 = vrot.slane %v312, 1
      %v651 = vrot.slane %v313, 1
      %v652 = vrot.slane %v314, 1
      %vm653 = vcmp.lt.s32.totalorder %v326, 7
      %v654 = vsel %vm653, %v651, %v652
      %v655 = vsel %vm653, %v650, %v651
      %v656 = vsel %vm653, %v649, %v650
      %v657 = vsel %vm653, %v648, %v649
      %v658 = vsel %vm653, %v647, %v648
      %v659 = vsel %vm653, %v646, %v647
      %v660 = vsel %vm653, %v645, %v646
      %v661 = vsel %vm653, %v652, %v645
      %s662 = scalar_lea.vmem %s1, 128
      %v663 = vld [vmem:[%s662] sm:$0xff]
      %v664 = vld [vmem:[%s662 + $0x8] sm:$0xff]
      %v665 = vld [vmem:[%s662 + $0x10] sm:$0xff]
      %v666 = vld [vmem:[%s662 + $0x18] sm:$0xff]
      %v667 = vld [vmem:[%s662 + $0x20] sm:$0xff]
      %v668 = vld [vmem:[%s662 + $0x28] sm:$0xff]
      %v669 = vld [vmem:[%s662 + $0x30] sm:$0xff]
      %v670 = vld [vmem:[%s662 + $0x38] sm:$0xff]
      %672 = vset.pattern.permute.xlu0 0
      %673 = vperm.xlu0 %672, %v663
      %v674 = vpop.permute.xlu0 %673
      %677 = vset.pattern.permute.xlu0 0
      %678 = vperm.xlu0 %677, %v664
      %v679 = vpop.permute.xlu0 %678
      %682 = vset.pattern.permute.xlu0 0
      %683 = vperm.xlu0 %682, %v665
      %v684 = vpop.permute.xlu0 %683
      %687 = vset.pattern.permute.xlu0 0
      %688 = vperm.xlu0 %687, %v666
      %v689 = vpop.permute.xlu0 %688
      %692 = vset.pattern.permute.xlu0 0
      %693 = vperm.xlu0 %692, %v667
      %v694 = vpop.permute.xlu0 %693
      %697 = vset.pattern.permute.xlu0 0
      %698 = vperm.xlu0 %697, %v668
      %v699 = vpop.permute.xlu0 %698
      %702 = vset.pattern.permute.xlu0 0
      %703 = vperm.xlu0 %702, %v669
      %v704 = vpop.permute.xlu0 %703
      %707 = vset.pattern.permute.xlu0 0
      %708 = vperm.xlu0 %707, %v670
      %v709 = vpop.permute.xlu0 %708
      %v711 = vmul.f32 %v661, %v674
      %v712 = vmul.f32 %v660, %v679
      %v713 = vmul.f32 %v659, %v684
      %v714 = vmul.f32 %v658, %v689
      %v715 = vmul.f32 %v657, %v694
      %v716 = vmul.f32 %v656, %v699
      %v717 = vmul.f32 %v655, %v704
      %v718 = vmul.f32 %v654, %v709
      %v719 = vpack.c.bf16 %v712, %v711
      %v720 = vpack.c.bf16 %v714, %v713
      %v721 = vpack.c.bf16 %v716, %v715
      %v722 = vpack.c.bf16 %v718, %v717
      %s723 = scalar_lea.vmem %s2, 32
      %v724 = vld [vmem:[%s723] sm:$0xf]
      %v725 = vld [vmem:[%s723 + $0x4] sm:$0xf]
      %v726 = vld [vmem:[%s723 + $0x8] sm:$0xf]
      %v727 = vld [vmem:[%s723 + $0xc] sm:$0xf]
      %v732 = vunpack.c.l.b16 %v724
      %v733 = vunpack.c.l.b16 %v725
      %v734 = vunpack.c.l.b16 %v726
      %v735 = vunpack.c.l.b16 %v727
      %v736 = vpack.c.b16 %v733, %v732
      %v737 = vpack.c.b16 %v735, %v734
      %v741 = vsel %vm478, %v719, 0
      %v744 = vsel %vm478, %v720, 0
      %v747 = vsel %vm478, %v721, 0
      %v750 = vsel %vm478, %v722, 0
      %752 = vmatprep.subr.bf16.mxu0 0
      %753 = vmatpush1.bf16.msra.mxu0 %v736
      %754 = vmatprep.subr.bf16.mxu0 0
      %755 = vmatpush1.bf16.msra.mxu0 %v737
      %756 = vmatprep.subr.bf16.mxu0 0
      %757 = vmatpush1.bf16.msra.mxu0 0
      %758 = vmatprep.subr.bf16.mxu0 0
      %759 = vmatpush1.bf16.msra.mxu0 0
      %760 = vmatprep.subr.bf16.mxu0 0
      %761 = vmatpush1.bf16.msra.mxu0 0
      %762 = vmatprep.subr.bf16.mxu0 0
      %763 = vmatpush1.bf16.msra.mxu0 0
      %764 = vmatprep.subr.bf16.mxu0 0
      %765 = vmatpush1.bf16.msra.mxu0 0
      %766 = vmatprep.subr.bf16.mxu0 0
      %767 = vmatpush1.bf16.msra.mxu0 0
      %768 = vmatprep.subr.bf16.mxu0 0
      %769 = vmatpush1.bf16.msra.mxu0 0
      %770 = vmatprep.subr.bf16.mxu0 0
      %771 = vmatpush1.bf16.msra.mxu0 0
      %772 = vmatprep.subr.bf16.mxu0 0
      %773 = vmatpush1.bf16.msra.mxu0 0
      %774 = vmatprep.subr.bf16.mxu0 0
      %775 = vmatpush1.bf16.msra.mxu0 0
      %776 = vmatprep.subr.bf16.mxu0 0
      %777 = vmatpush1.bf16.msra.mxu0 0
      %778 = vmatprep.subr.bf16.mxu0 0
      %779 = vmatpush1.bf16.msra.mxu0 0
      %780 = vmatprep.subr.bf16.mxu0 0
      %781 = vmatpush1.bf16.msra.mxu0 0
      %782 = vmatprep.subr.bf16.mxu0 0
      %783 = vmatpush1.bf16.msra.mxu0 0
      %784 = vmatprep.mubr.bf16.mxu0 0
      %785 = vmatmul.mubr.bf16.gmra.mrb[0].mxu0 %v741
      %v786 = vpop.f32.mrb[0].mxu0
      %v787 = vadd.f32 0.0, %v786
      %v788 = vpop.f32.mrb[0].mxu0
      %v789 = vpop.f32.mrb[0].mxu0
      %v790 = vadd.f32 0.0, %v789
      %v791 = vpop.f32.mrb[0].mxu0
      %792 = vmatprep.mubr.bf16.mxu0 0
      %793 = vmatmul.mubr.bf16.gmra.mrb[0].mxu0 %v744
      %v794 = vpop.f32.mrb[0].mxu0
      %v795 = vadd.f32 0.0, %v794
      %v796 = vpop.f32.mrb[0].mxu0
      %v797 = vpop.f32.mrb[0].mxu0
      %v798 = vadd.f32 0.0, %v797
      %v799 = vpop.f32.mrb[0].mxu0
      %800 = vmatprep.mubr.bf16.mxu0 0
      %801 = vmatmul.mubr.bf16.gmra.mrb[0].mxu0 %v747
      %v802 = vpop.f32.mrb[0].mxu0
      %v803 = vadd.f32 0.0, %v802
      %v804 = vpop.f32.mrb[0].mxu0
      %v805 = vpop.f32.mrb[0].mxu0
      %v806 = vadd.f32 0.0, %v805
      %v807 = vpop.f32.mrb[0].mxu0
      %808 = vmatprep.mubr.bf16.mxu0 0
      %809 = vmatmul.mubr.bf16.gmra.mrb[0].mxu0 %v750
      %v810 = vpop.f32.mrb[0].mxu0
      %v811 = vadd.f32 0.0, %v810
      %v812 = vpop.f32.mrb[0].mxu0
      %v813 = vpop.f32.mrb[0].mxu0
      %v814 = vadd.f32 0.0, %v813
      %v815 = vpop.f32.mrb[0].mxu0
      %816 = vdwg.mxu0
      %v817 = vadd.f32 %v615, %v787
      %v818 = vadd.f32 %v618, %v790
      %v819 = vadd.f32 %v623, %v795
      %v820 = vadd.f32 %v626, %v798
      %v821 = vadd.f32 %v631, %v803
      %v822 = vadd.f32 %v634, %v806
      %v823 = vadd.f32 %v639, %v811
      %v824 = vadd.f32 %v642, %v814
      %s825 = scalar_lea.vmem %s1, 192
      %v826 = vld [vmem:[%s825] sm:$0xff]
      %v827 = vld [vmem:[%s825 + $0x8] sm:$0xff]
      %v828 = vld [vmem:[%s825 + $0x10] sm:$0xff]
      %v829 = vld [vmem:[%s825 + $0x18] sm:$0xff]
      %v830 = vld [vmem:[%s825 + $0x20] sm:$0xff]
      %v831 = vld [vmem:[%s825 + $0x28] sm:$0xff]
      %v832 = vld [vmem:[%s825 + $0x30] sm:$0xff]
      %v833 = vld [vmem:[%s825 + $0x38] sm:$0xff]
      %835 = vset.pattern.permute.xlu0 0
      %836 = vperm.xlu0 %835, %v826
      %v837 = vpop.permute.xlu0 %836
      %840 = vset.pattern.permute.xlu0 0
      %841 = vperm.xlu0 %840, %v827
      %v842 = vpop.permute.xlu0 %841
      %845 = vset.pattern.permute.xlu0 0
      %846 = vperm.xlu0 %845, %v828
      %v847 = vpop.permute.xlu0 %846
      %850 = vset.pattern.permute.xlu0 0
      %851 = vperm.xlu0 %850, %v829
      %v852 = vpop.permute.xlu0 %851
      %855 = vset.pattern.permute.xlu0 0
      %856 = vperm.xlu0 %855, %v830
      %v857 = vpop.permute.xlu0 %856
      %860 = vset.pattern.permute.xlu0 0
      %861 = vperm.xlu0 %860, %v831
      %v862 = vpop.permute.xlu0 %861
      %865 = vset.pattern.permute.xlu0 0
      %866 = vperm.xlu0 %865, %v832
      %v867 = vpop.permute.xlu0 %866
      %870 = vset.pattern.permute.xlu0 0
      %871 = vperm.xlu0 %870, %v833
      %v872 = vpop.permute.xlu0 %871
      %v874 = vmul.f32 %v335, %v837
      %v875 = vmul.f32 %v334, %v842
      %v876 = vmul.f32 %v333, %v847
      %v877 = vmul.f32 %v332, %v852
      %v878 = vmul.f32 %v331, %v857
      %v879 = vmul.f32 %v330, %v862
      %v880 = vmul.f32 %v329, %v867
      %v881 = vmul.f32 %v328, %v872
      %v882 = vpack.c.bf16 %v875, %v874
      %v883 = vpack.c.bf16 %v877, %v876
      %v884 = vpack.c.bf16 %v879, %v878
      %v885 = vpack.c.bf16 %v881, %v880
      %s886 = scalar_lea.vmem %s2, 48
      %v887 = vld [vmem:[%s886] sm:$0xf]
      %v888 = vld [vmem:[%s886 + $0x4] sm:$0xf]
      %v889 = vld [vmem:[%s886 + $0x8] sm:$0xf]
      %v890 = vld [vmem:[%s886 + $0xc] sm:$0xf]
      %v895 = vunpack.c.l.b16 %v887
      %v896 = vunpack.c.l.b16 %v888
      %v897 = vunpack.c.l.b16 %v889
      %v898 = vunpack.c.l.b16 %v890
      %v899 = vpack.c.b16 %v896, %v895
      %v900 = vpack.c.b16 %v898, %v897
      %v904 = vsel %vm478, %v882, 0
      %v907 = vsel %vm478, %v883, 0
      %v910 = vsel %vm478, %v884, 0
      %v913 = vsel %vm478, %v885, 0
      %915 = vmatprep.subr.bf16.mxu0 0
      %916 = vmatpush1.bf16.msra.mxu0 %v899
      %917 = vmatprep.subr.bf16.mxu0 0
      %918 = vmatpush1.bf16.msra.mxu0 %v900
      %919 = vmatprep.subr.bf16.mxu0 0
      %920 = vmatpush1.bf16.msra.mxu0 0
      %921 = vmatprep.subr.bf16.mxu0 0
      %922 = vmatpush1.bf16.msra.mxu0 0
      %923 = vmatprep.subr.bf16.mxu0 0
      %924 = vmatpush1.bf16.msra.mxu0 0
      %925 = vmatprep.subr.bf16.mxu0 0
      %926 = vmatpush1.bf16.msra.mxu0 0
      %927 = vmatprep.subr.bf16.mxu0 0
      %928 = vmatpush1.bf16.msra.mxu0 0
      %929 = vmatprep.subr.bf16.mxu0 0
      %930 = vmatpush1.bf16.msra.mxu0 0
      %931 = vmatprep.subr.bf16.mxu0 0
      %932 = vmatpush1.bf16.msra.mxu0 0
      %933 = vmatprep.subr.bf16.mxu0 0
      %934 = vmatpush1.bf16.msra.mxu0 0
      %935 = vmatprep.subr.bf16.mxu0 0
      %936 = vmatpush1.bf16.msra.mxu0 0
      %937 = vmatprep.subr.bf16.mxu0 0
      %938 = vmatpush1.bf16.msra.mxu0 0
      %939 = vmatprep.subr.bf16.mxu0 0
      %940 = vmatpush1.bf16.msra.mxu0 0
      %941 = vmatprep.subr.bf16.mxu0 0
      %942 = vmatpush1.bf16.msra.mxu0 0
      %943 = vmatprep.subr.bf16.mxu0 0
      %944 = vmatpush1.bf16.msra.mxu0 0
      %945 = vmatprep.subr.bf16.mxu0 0
      %946 = vmatpush1.bf16.msra.mxu0 0
      %947 = vmatprep.mubr.bf16.mxu0 0
      %948 = vmatmul.mubr.bf16.gmra.mrb[0].mxu0 %v904
      %v949 = vpop.f32.mrb[0].mxu0
      %v950 = vadd.f32 0.0, %v949
      %v951 = vpop.f32.mrb[0].mxu0
      %v952 = vpop.f32.mrb[0].mxu0
      %v953 = vadd.f32 0.0, %v952
      %v954 = vpop.f32.mrb[0].mxu0
      %955 = vmatprep.mubr.bf16.mxu0 0
      %956 = vmatmul.mubr.bf16.gmra.mrb[0].mxu0 %v907
      %v957 = vpop.f32.mrb[0].mxu0
      %v958 = vadd.f32 0.0, %v957
      %v959 = vpop.f32.mrb[0].mxu0
      %v960 = vpop.f32.mrb[0].mxu0
      %v961 = vadd.f32 0.0, %v960
      %v962 = vpop.f32.mrb[0].mxu0
      %963 = vmatprep.mubr.bf16.mxu0 0
      %964 = vmatmul.mubr.bf16.gmra.mrb[0].mxu0 %v910
      %v965 = vpop.f32.mrb[0].mxu0
      %v966 = vadd.f32 0.0, %v965
      %v967 = vpop.f32.mrb[0].mxu0
      %v968 = vpop.f32.mrb[0].mxu0
      %v969 = vadd.f32 0.0, %v968
      %v970 = vpop.f32.mrb[0].mxu0
      %971 = vmatprep.mubr.bf16.mxu0 0
      %972 = vmatmul.mubr.bf16.gmra.mrb[0].mxu0 %v913
      %v973 = vpop.f32.mrb[0].mxu0
      %v974 = vadd.f32 0.0, %v973
      %v975 = vpop.f32.mrb[0].mxu0
      %v976 = vpop.f32.mrb[0].mxu0
      %v977 = vadd.f32 0.0, %v976
      %v978 = vpop.f32.mrb[0].mxu0
      %979 = vdwg.mxu0
      %v980 = vadd.f32 %v817, %v950
      %v981 = vadd.f32 %v818, %v953
      %v982 = vadd.f32 %v819, %v958
      %v983 = vadd.f32 %v820, %v961
      %v984 = vadd.f32 %v821, %v966
      %v985 = vadd.f32 %v822, %v969
      %v986 = vadd.f32 %v823, %v974
      %v987 = vadd.f32 %v824, %v977
      %v988 = vpack.c.bf16 %v308, %v307
      %v989 = vpack.c.bf16 %v310, %v309
      %v990 = vpack.c.bf16 %v312, %v311
      %v991 = vpack.c.bf16 %v314, %v313
      %s992 = scalar_lea.vmem %s2, 64
      %v993 = vld [vmem:[%s992] sm:$0xf]
      %v994 = vld [vmem:[%s992 + $0x4] sm:$0xf]
      %v995 = vld [vmem:[%s992 + $0x8] sm:$0xf]
      %v996 = vld [vmem:[%s992 + $0xc] sm:$0xf]
      %v1001 = vunpack.c.l.b16 %v993
      %v1002 = vunpack.c.l.b16 %v994
      %v1003 = vunpack.c.l.b16 %v995
      %v1004 = vunpack.c.l.b16 %v996
      %v1005 = vpack.c.b16 %v1002, %v1001
      %v1006 = vpack.c.b16 %v1004, %v1003
      %v1010 = vsel %vm478, %v988, 0
      %v1013 = vsel %vm478, %v989, 0
      %v1016 = vsel %vm478, %v990, 0
      %v1019 = vsel %vm478, %v991, 0
      %1021 = vmatprep.subr.bf16.mxu0 0
      %1022 = vmatpush1.bf16.msra.mxu0 %v1005
      %1023 = vmatprep.subr.bf16.mxu0 0
      %1024 = vmatpush1.bf16.msra.mxu0 %v1006
      %1025 = vmatprep.subr.bf16.mxu0 0
      %1026 = vmatpush1.bf16.msra.mxu0 0
      %1027 = vmatprep.subr.bf16.mxu0 0
      %1028 = vmatpush1.bf16.msra.mxu0 0
      %1029 = vmatprep.subr.bf16.mxu0 0
      %1030 = vmatpush1.bf16.msra.mxu0 0
      %1031 = vmatprep.subr.bf16.mxu0 0
      %1032 = vmatpush1.bf16.msra.mxu0 0
      %1033 = vmatprep.subr.bf16.mxu0 0
      %1034 = vmatpush1.bf16.msra.mxu0 0
      %1035 = vmatprep.subr.bf16.mxu0 0
      %1036 = vmatpush1.bf16.msra.mxu0 0
      %1037 = vmatprep.subr.bf16.mxu0 0
      %1038 = vmatpush1.bf16.msra.mxu0 0
      %1039 = vmatprep.subr.bf16.mxu0 0
      %1040 = vmatpush1.bf16.msra.mxu0 0
      %1041 = vmatprep.subr.bf16.mxu0 0
      %1042 = vmatpush1.bf16.msra.mxu0 0
      %1043 = vmatprep.subr.bf16.mxu0 0
      %1044 = vmatpush1.bf16.msra.mxu0 0
      %1045 = vmatprep.subr.bf16.mxu0 0
      %1046 = vmatpush1.bf16.msra.mxu0 0
      %1047 = vmatprep.subr.bf16.mxu0 0
      %1048 = vmatpush1.bf16.msra.mxu0 0
      %1049 = vmatprep.subr.bf16.mxu0 0
      %1050 = vmatpush1.bf16.msra.mxu0 0
      %1051 = vmatprep.subr.bf16.mxu0 0
      %1052 = vmatpush1.bf16.msra.mxu0 0
      %1053 = vmatprep.mubr.bf16.mxu0 0
      %1054 = vmatmul.mubr.bf16.gmra.mrb[0].mxu0 %v1010
      %v1055 = vpop.f32.mrb[0].mxu0
      %v1056 = vadd.f32 0.0, %v1055
      %v1057 = vpop.f32.mrb[0].mxu0
      %v1058 = vpop.f32.mrb[0].mxu0
      %v1059 = vadd.f32 0.0, %v1058
      %v1060 = vpop.f32.mrb[0].mxu0
      %1061 = vmatprep.mubr.bf16.mxu0 0
      %1062 = vmatmul.mubr.bf16.gmra.mrb[0].mxu0 %v1013
      %v1063 = vpop.f32.mrb[0].mxu0
      %v1064 = vadd.f32 0.0, %v1063
      %v1065 = vpop.f32.mrb[0].mxu0
      %v1066 = vpop.f32.mrb[0].mxu0
      %v1067 = vadd.f32 0.0, %v1066
      %v1068 = vpop.f32.mrb[0].mxu0
      %1069 = vmatprep.mubr.bf16.mxu0 0
      %1070 = vmatmul.mubr.bf16.gmra.mrb[0].mxu0 %v1016
      %v1071 = vpop.f32.mrb[0].mxu0
      %v1072 = vadd.f32 0.0, %v1071
      %v1073 = vpop.f32.mrb[0].mxu0
      %v1074 = vpop.f32.mrb[0].mxu0
      %v1075 = vadd.f32 0.0, %v1074
      %v1076 = vpop.f32.mrb[0].mxu0
      %1077 = vmatprep.mubr.bf16.mxu0 0
      %1078 = vmatmul.mubr.bf16.gmra.mrb[0].mxu0 %v1019
      %v1079 = vpop.f32.mrb[0].mxu0
      %v1080 = vadd.f32 0.0, %v1079
      %v1081 = vpop.f32.mrb[0].mxu0
      %v1082 = vpop.f32.mrb[0].mxu0
      %v1083 = vadd.f32 0.0, %v1082
      %v1084 = vpop.f32.mrb[0].mxu0
      %1085 = vdwg.mxu0
      %v1086 = vadd.f32 %v980, %v1056
      %v1087 = vadd.f32 %v981, %v1059
      %v1088 = vadd.f32 %v982, %v1064
      %v1089 = vadd.f32 %v983, %v1067
      %v1090 = vadd.f32 %v984, %v1072
      %v1091 = vadd.f32 %v985, %v1075
      %v1092 = vadd.f32 %v986, %v1080
      %v1093 = vadd.f32 %v987, %v1083
      %s1094 = scalar_lea.vmem %s1, 320
      %v1095 = vld [vmem:[%s1094] sm:$0xff]
      %v1096 = vld [vmem:[%s1094 + $0x8] sm:$0xff]
      %v1097 = vld [vmem:[%s1094 + $0x10] sm:$0xff]
      %v1098 = vld [vmem:[%s1094 + $0x18] sm:$0xff]
      %v1099 = vld [vmem:[%s1094 + $0x20] sm:$0xff]
      %v1100 = vld [vmem:[%s1094 + $0x28] sm:$0xff]
      %v1101 = vld [vmem:[%s1094 + $0x30] sm:$0xff]
      %v1102 = vld [vmem:[%s1094 + $0x38] sm:$0xff]
      %1104 = vset.pattern.permute.xlu0 0
      %1105 = vperm.xlu0 %1104, %v1095
      %v1106 = vpop.permute.xlu0 %1105
      %1109 = vset.pattern.permute.xlu0 0
      %1110 = vperm.xlu0 %1109, %v1096
      %v1111 = vpop.permute.xlu0 %1110
      %1114 = vset.pattern.permute.xlu0 0
      %1115 = vperm.xlu0 %1114, %v1097
      %v1116 = vpop.permute.xlu0 %1115
      %1119 = vset.pattern.permute.xlu0 0
      %1120 = vperm.xlu0 %1119, %v1098
      %v1121 = vpop.permute.xlu0 %1120
      %1124 = vset.pattern.permute.xlu0 0
      %1125 = vperm.xlu0 %1124, %v1099
      %v1126 = vpop.permute.xlu0 %1125
      %1129 = vset.pattern.permute.xlu0 0
      %1130 = vperm.xlu0 %1129, %v1100
      %v1131 = vpop.permute.xlu0 %1130
      %1134 = vset.pattern.permute.xlu0 0
      %1135 = vperm.xlu0 %1134, %v1101
      %v1136 = vpop.permute.xlu0 %1135
      %1139 = vset.pattern.permute.xlu0 0
      %1140 = vperm.xlu0 %1139, %v1102
      %v1141 = vpop.permute.xlu0 %1140
      %v1143 = vmul.f32 %v660, %v1106
      %v1144 = vmul.f32 %v659, %v1111
      %v1145 = vmul.f32 %v658, %v1116
      %v1146 = vmul.f32 %v657, %v1121
      %v1147 = vmul.f32 %v656, %v1126
      %v1148 = vmul.f32 %v655, %v1131
      %v1149 = vmul.f32 %v654, %v1136
      %v1150 = vmul.f32 %v661, %v1141
      %v1151 = vpack.c.bf16 %v1144, %v1143
      %v1152 = vpack.c.bf16 %v1146, %v1145
      %v1153 = vpack.c.bf16 %v1148, %v1147
      %v1154 = vpack.c.bf16 %v1150, %v1149
      %s1155 = scalar_lea.vmem %s2, 80
      %v1156 = vld [vmem:[%s1155] sm:$0xf]
      %v1157 = vld [vmem:[%s1155 + $0x4] sm:$0xf]
      %v1158 = vld [vmem:[%s1155 + $0x8] sm:$0xf]
      %v1159 = vld [vmem:[%s1155 + $0xc] sm:$0xf]
      %v1164 = vunpack.c.l.b16 %v1156
      %v1165 = vunpack.c.l.b16 %v1157
      %v1166 = vunpack.c.l.b16 %v1158
      %v1167 = vunpack.c.l.b16 %v1159
      %v1168 = vpack.c.b16 %v1165, %v1164
      %v1169 = vpack.c.b16 %v1167, %v1166
      %v1173 = vsel %vm478, %v1151, 0
      %v1176 = vsel %vm478, %v1152, 0
      %v1179 = vsel %vm478, %v1153, 0
      %v1182 = vsel %vm478, %v1154, 0
      %1184 = vmatprep.subr.bf16.mxu0 0
      %1185 = vmatpush1.bf16.msra.mxu0 %v1168
      %1186 = vmatprep.subr.bf16.mxu0 0
      %1187 = vmatpush1.bf16.msra.mxu0 %v1169
      %1188 = vmatprep.subr.bf16.mxu0 0
      %1189 = vmatpush1.bf16.msra.mxu0 0
      %1190 = vmatprep.subr.bf16.mxu0 0
      %1191 = vmatpush1.bf16.msra.mxu0 0
      %1192 = vmatprep.subr.bf16.mxu0 0
      %1193 = vmatpush1.bf16.msra.mxu0 0
      %1194 = vmatprep.subr.bf16.mxu0 0
      %1195 = vmatpush1.bf16.msra.mxu0 0
      %1196 = vmatprep.subr.bf16.mxu0 0
      %1197 = vmatpush1.bf16.msra.mxu0 0
      %1198 = vmatprep.subr.bf16.mxu0 0
      %1199 = vmatpush1.bf16.msra.mxu0 0
      %1200 = vmatprep.subr.bf16.mxu0 0
      %1201 = vmatpush1.bf16.msra.mxu0 0
      %1202 = vmatprep.subr.bf16.mxu0 0
      %1203 = vmatpush1.bf16.msra.mxu0 0
      %1204 = vmatprep.subr.bf16.mxu0 0
      %1205 = vmatpush1.bf16.msra.mxu0 0
      %1206 = vmatprep.subr.bf16.mxu0 0
      %1207 = vmatpush1.bf16.msra.mxu0 0
      %1208 = vmatprep.subr.bf16.mxu0 0
      %1209 = vmatpush1.bf16.msra.mxu0 0
      %1210 = vmatprep.subr.bf16.mxu0 0
      %1211 = vmatpush1.bf16.msra.mxu0 0
      %1212 = vmatprep.subr.bf16.mxu0 0
      %1213 = vmatpush1.bf16.msra.mxu0 0
      %1214 = vmatprep.subr.bf16.mxu0 0
      %1215 = vmatpush1.bf16.msra.mxu0 0
      %1216 = vmatprep.mubr.bf16.mxu0 0
      %1217 = vmatmul.mubr.bf16.gmra.mrb[0].mxu0 %v1173
      %v1218 = vpop.f32.mrb[0].mxu0
      %v1219 = vadd.f32 0.0, %v1218
      %v1220 = vpop.f32.mrb[0].mxu0
      %v1221 = vpop.f32.mrb[0].mxu0
      %v1222 = vadd.f32 0.0, %v1221
      %v1223 = vpop.f32.mrb[0].mxu0
      %1224 = vmatprep.mubr.bf16.mxu0 0
      %1225 = vmatmul.mubr.bf16.gmra.mrb[0].mxu0 %v1176
      %v1226 = vpop.f32.mrb[0].mxu0
      %v1227 = vadd.f32 0.0, %v1226
      %v1228 = vpop.f32.mrb[0].mxu0
      %v1229 = vpop.f32.mrb[0].mxu0
      %v1230 = vadd.f32 0.0, %v1229
      %v1231 = vpop.f32.mrb[0].mxu0
      %1232 = vmatprep.mubr.bf16.mxu0 0
      %1233 = vmatmul.mubr.bf16.gmra.mrb[0].mxu0 %v1179
      %v1234 = vpop.f32.mrb[0].mxu0
      %v1235 = vadd.f32 0.0, %v1234
      %v1236 = vpop.f32.mrb[0].mxu0
      %v1237 = vpop.f32.mrb[0].mxu0
      %v1238 = vadd.f32 0.0, %v1237
      %v1239 = vpop.f32.mrb[0].mxu0
      %1240 = vmatprep.mubr.bf16.mxu0 0
      %1241 = vmatmul.mubr.bf16.gmra.mrb[0].mxu0 %v1182
      %v1242 = vpop.f32.mrb[0].mxu0
      %v1243 = vadd.f32 0.0, %v1242
      %v1244 = vpop.f32.mrb[0].mxu0
      %v1245 = vpop.f32.mrb[0].mxu0
      %v1246 = vadd.f32 0.0, %v1245
      %v1247 = vpop.f32.mrb[0].mxu0
      %1248 = vdwg.mxu0
      %v1249 = vadd.f32 %v1086, %v1219
      %v1250 = vadd.f32 %v1087, %v1222
      %v1251 = vadd.f32 %v1088, %v1227
      %v1252 = vadd.f32 %v1089, %v1230
      %v1253 = vadd.f32 %v1090, %v1235
      %v1254 = vadd.f32 %v1091, %v1238
      %v1255 = vadd.f32 %v1092, %v1243
      %v1256 = vadd.f32 %v1093, %v1246
      %s1257 = scalar_lea.vmem %s1, 384
      %v1258 = vld [vmem:[%s1257] sm:$0xff]
      %v1259 = vld [vmem:[%s1257 + $0x8] sm:$0xff]
      %v1260 = vld [vmem:[%s1257 + $0x10] sm:$0xff]
      %v1261 = vld [vmem:[%s1257 + $0x18] sm:$0xff]
      %v1262 = vld [vmem:[%s1257 + $0x20] sm:$0xff]
      %v1263 = vld [vmem:[%s1257 + $0x28] sm:$0xff]
      %v1264 = vld [vmem:[%s1257 + $0x30] sm:$0xff]
      %v1265 = vld [vmem:[%s1257 + $0x38] sm:$0xff]
      %1267 = vset.pattern.permute.xlu0 0
      %1268 = vperm.xlu0 %1267, %v1258
      %v1269 = vpop.permute.xlu0 %1268
      %1272 = vset.pattern.permute.xlu0 0
      %1273 = vperm.xlu0 %1272, %v1259
      %v1274 = vpop.permute.xlu0 %1273
      %1277 = vset.pattern.permute.xlu0 0
      %1278 = vperm.xlu0 %1277, %v1260
      %v1279 = vpop.permute.xlu0 %1278
      %1282 = vset.pattern.permute.xlu0 0
      %1283 = vperm.xlu0 %1282, %v1261
      %v1284 = vpop.permute.xlu0 %1283
      %1287 = vset.pattern.permute.xlu0 0
      %1288 = vperm.xlu0 %1287, %v1262
      %v1289 = vpop.permute.xlu0 %1288
      %1292 = vset.pattern.permute.xlu0 0
      %1293 = vperm.xlu0 %1292, %v1263
      %v1294 = vpop.permute.xlu0 %1293
      %1297 = vset.pattern.permute.xlu0 0
      %1298 = vperm.xlu0 %1297, %v1264
      %v1299 = vpop.permute.xlu0 %1298
      %1302 = vset.pattern.permute.xlu0 0
      %1303 = vperm.xlu0 %1302, %v1265
      %v1304 = vpop.permute.xlu0 %1303
      %v1306 = vmul.f32 %v334, %v1269
      %v1307 = vmul.f32 %v333, %v1274
      %v1308 = vmul.f32 %v332, %v1279
      %v1309 = vmul.f32 %v331, %v1284
      %v1310 = vmul.f32 %v330, %v1289
      %v1311 = vmul.f32 %v329, %v1294
      %v1312 = vmul.f32 %v328, %v1299
      %v1313 = vmul.f32 %v335, %v1304
      %v1314 = vpack.c.bf16 %v1307, %v1306
      %v1315 = vpack.c.bf16 %v1309, %v1308
      %v1316 = vpack.c.bf16 %v1311, %v1310
      %v1317 = vpack.c.bf16 %v1313, %v1312
      %s1318 = scalar_lea.vmem %s2, 96
      %v1319 = vld [vmem:[%s1318] sm:$0xf]
      %v1320 = vld [vmem:[%s1318 + $0x4] sm:$0xf]
      %v1321 = vld [vmem:[%s1318 + $0x8] sm:$0xf]
      %v1322 = vld [vmem:[%s1318 + $0xc] sm:$0xf]
      %v1327 = vunpack.c.l.b16 %v1319
      %v1328 = vunpack.c.l.b16 %v1320
      %v1329 = vunpack.c.l.b16 %v1321
      %v1330 = vunpack.c.l.b16 %v1322
      %v1331 = vpack.c.b16 %v1328, %v1327
      %v1332 = vpack.c.b16 %v1330, %v1329
      %v1336 = vsel %vm478, %v1314, 0
      %v1339 = vsel %vm478, %v1315, 0
      %v1342 = vsel %vm478, %v1316, 0
      %v1345 = vsel %vm478, %v1317, 0
      %1347 = vmatprep.subr.bf16.mxu0 0
      %1348 = vmatpush1.bf16.msra.mxu0 %v1331
      %1349 = vmatprep.subr.bf16.mxu0 0
      %1350 = vmatpush1.bf16.msra.mxu0 %v1332
      %1351 = vmatprep.subr.bf16.mxu0 0
      %1352 = vmatpush1.bf16.msra.mxu0 0
      %1353 = vmatprep.subr.bf16.mxu0 0
      %1354 = vmatpush1.bf16.msra.mxu0 0
      %1355 = vmatprep.subr.bf16.mxu0 0
      %1356 = vmatpush1.bf16.msra.mxu0 0
      %1357 = vmatprep.subr.bf16.mxu0 0
      %1358 = vmatpush1.bf16.msra.mxu0 0
      %1359 = vmatprep.subr.bf16.mxu0 0
      %1360 = vmatpush1.bf16.msra.mxu0 0
      %1361 = vmatprep.subr.bf16.mxu0 0
      %1362 = vmatpush1.bf16.msra.mxu0 0
      %1363 = vmatprep.subr.bf16.mxu0 0
      %1364 = vmatpush1.bf16.msra.mxu0 0
      %1365 = vmatprep.subr.bf16.mxu0 0
      %1366 = vmatpush1.bf16.msra.mxu0 0
      %1367 = vmatprep.subr.bf16.mxu0 0
      %1368 = vmatpush1.bf16.msra.mxu0 0
      %1369 = vmatprep.subr.bf16.mxu0 0
      %1370 = vmatpush1.bf16.msra.mxu0 0
      %1371 = vmatprep.subr.bf16.mxu0 0
      %1372 = vmatpush1.bf16.msra.mxu0 0
      %1373 = vmatprep.subr.bf16.mxu0 0
      %1374 = vmatpush1.bf16.msra.mxu0 0
      %1375 = vmatprep.subr.bf16.mxu0 0
      %1376 = vmatpush1.bf16.msra.mxu0 0
      %1377 = vmatprep.subr.bf16.mxu0 0
      %1378 = vmatpush1.bf16.msra.mxu0 0
      %1379 = vmatprep.mubr.bf16.mxu0 0
      %1380 = vmatmul.mubr.bf16.gmra.mrb[0].mxu0 %v1336
      %v1381 = vpop.f32.mrb[0].mxu0
      %v1382 = vadd.f32 0.0, %v1381
      %v1383 = vpop.f32.mrb[0].mxu0
      %v1384 = vpop.f32.mrb[0].mxu0
      %v1385 = vadd.f32 0.0, %v1384
      %v1386 = vpop.f32.mrb[0].mxu0
      %1387 = vmatprep.mubr.bf16.mxu0 0
      %1388 = vmatmul.mubr.bf16.gmra.mrb[0].mxu0 %v1339
      %v1389 = vpop.f32.mrb[0].mxu0
      %v1390 = vadd.f32 0.0, %v1389
      %v1391 = vpop.f32.mrb[0].mxu0
      %v1392 = vpop.f32.mrb[0].mxu0
      %v1393 = vadd.f32 0.0, %v1392
      %v1394 = vpop.f32.mrb[0].mxu0
      %1395 = vmatprep.mubr.bf16.mxu0 0
      %1396 = vmatmul.mubr.bf16.gmra.mrb[0].mxu0 %v1342
      %v1397 = vpop.f32.mrb[0].mxu0
      %v1398 = vadd.f32 0.0, %v1397
      %v1399 = vpop.f32.mrb[0].mxu0
      %v1400 = vpop.f32.mrb[0].mxu0
      %v1401 = vadd.f32 0.0, %v1400
      %v1402 = vpop.f32.mrb[0].mxu0
      %1403 = vmatprep.mubr.bf16.mxu0 0
      %1404 = vmatmul.mubr.bf16.gmra.mrb[0].mxu0 %v1345
      %v1405 = vpop.f32.mrb[0].mxu0
      %v1406 = vadd.f32 0.0, %v1405
      %v1407 = vpop.f32.mrb[0].mxu0
      %v1408 = vpop.f32.mrb[0].mxu0
      %v1409 = vadd.f32 0.0, %v1408
      %v1410 = vpop.f32.mrb[0].mxu0
      %1411 = vdwg.mxu0
      %v1412 = vadd.f32 %v1249, %v1382
      %v1413 = vadd.f32 %v1250, %v1385
      %v1414 = vadd.f32 %v1251, %v1390
      %v1415 = vadd.f32 %v1252, %v1393
      %v1416 = vadd.f32 %v1253, %v1398
      %v1417 = vadd.f32 %v1254, %v1401
      %v1418 = vadd.f32 %v1255, %v1406
      %v1419 = vadd.f32 %v1256, %v1409
      %s1420 = scalar_lea.vmem %s1, 448
      %v1421 = vld [vmem:[%s1420] sm:$0xff]
      %v1422 = vld [vmem:[%s1420 + $0x8] sm:$0xff]
      %v1423 = vld [vmem:[%s1420 + $0x10] sm:$0xff]
      %v1424 = vld [vmem:[%s1420 + $0x18] sm:$0xff]
      %v1425 = vld [vmem:[%s1420 + $0x20] sm:$0xff]
      %v1426 = vld [vmem:[%s1420 + $0x28] sm:$0xff]
      %v1427 = vld [vmem:[%s1420 + $0x30] sm:$0xff]
      %v1428 = vld [vmem:[%s1420 + $0x38] sm:$0xff]
      %1430 = vset.pattern.permute.xlu0 0
      %1431 = vperm.xlu0 %1430, %v1421
      %v1432 = vpop.permute.xlu0 %1431
      %1435 = vset.pattern.permute.xlu0 0
      %1436 = vperm.xlu0 %1435, %v1422
      %v1437 = vpop.permute.xlu0 %1436
      %1440 = vset.pattern.permute.xlu0 0
      %1441 = vperm.xlu0 %1440, %v1423
      %v1442 = vpop.permute.xlu0 %1441
      %1445 = vset.pattern.permute.xlu0 0
      %1446 = vperm.xlu0 %1445, %v1424
      %v1447 = vpop.permute.xlu0 %1446
      %1450 = vset.pattern.permute.xlu0 0
      %1451 = vperm.xlu0 %1450, %v1425
      %v1452 = vpop.permute.xlu0 %1451
      %1455 = vset.pattern.permute.xlu0 0
      %1456 = vperm.xlu0 %1455, %v1426
      %v1457 = vpop.permute.xlu0 %1456
      %1460 = vset.pattern.permute.xlu0 0
      %1461 = vperm.xlu0 %1460, %v1427
      %v1462 = vpop.permute.xlu0 %1461
      %1465 = vset.pattern.permute.xlu0 0
      %1466 = vperm.xlu0 %1465, %v1428
      %v1467 = vpop.permute.xlu0 %1466
      %v1469 = vmul.f32 %v308, %v1432
      %v1470 = vmul.f32 %v309, %v1437
      %v1471 = vmul.f32 %v310, %v1442
      %v1472 = vmul.f32 %v311, %v1447
      %v1473 = vmul.f32 %v312, %v1452
      %v1474 = vmul.f32 %v313, %v1457
      %v1475 = vmul.f32 %v314, %v1462
      %v1476 = vmul.f32 %v307, %v1467
      %v1477 = vpack.c.bf16 %v1470, %v1469
      %v1478 = vpack.c.bf16 %v1472, %v1471
      %v1479 = vpack.c.bf16 %v1474, %v1473
      %v1480 = vpack.c.bf16 %v1476, %v1475
      %s1481 = scalar_lea.vmem %s2, 112
      %v1482 = vld [vmem:[%s1481] sm:$0xf]
      %v1483 = vld [vmem:[%s1481 + $0x4] sm:$0xf]
      %v1484 = vld [vmem:[%s1481 + $0x8] sm:$0xf]
      %v1485 = vld [vmem:[%s1481 + $0xc] sm:$0xf]
      %v1490 = vunpack.c.l.b16 %v1482
      %v1491 = vunpack.c.l.b16 %v1483
      %v1492 = vunpack.c.l.b16 %v1484
      %v1493 = vunpack.c.l.b16 %v1485
      %v1494 = vpack.c.b16 %v1491, %v1490
      %v1495 = vpack.c.b16 %v1493, %v1492
      %v1499 = vsel %vm478, %v1477, 0
      %v1502 = vsel %vm478, %v1478, 0
      %v1505 = vsel %vm478, %v1479, 0
      %v1508 = vsel %vm478, %v1480, 0
      %1510 = vmatprep.subr.bf16.mxu0 0
      %1511 = vmatpush1.bf16.msra.mxu0 %v1494
      %1512 = vmatprep.subr.bf16.mxu0 0
      %1513 = vmatpush1.bf16.msra.mxu0 %v1495
      %1514 = vmatprep.subr.bf16.mxu0 0
      %1515 = vmatpush1.bf16.msra.mxu0 0
      %1516 = vmatprep.subr.bf16.mxu0 0
      %1517 = vmatpush1.bf16.msra.mxu0 0
      %1518 = vmatprep.subr.bf16.mxu0 0
      %1519 = vmatpush1.bf16.msra.mxu0 0
      %1520 = vmatprep.subr.bf16.mxu0 0
      %1521 = vmatpush1.bf16.msra.mxu0 0
      %1522 = vmatprep.subr.bf16.mxu0 0
      %1523 = vmatpush1.bf16.msra.mxu0 0
      %1524 = vmatprep.subr.bf16.mxu0 0
      %1525 = vmatpush1.bf16.msra.mxu0 0
      %1526 = vmatprep.subr.bf16.mxu0 0
      %1527 = vmatpush1.bf16.msra.mxu0 0
      %1528 = vmatprep.subr.bf16.mxu0 0
      %1529 = vmatpush1.bf16.msra.mxu0 0
      %1530 = vmatprep.subr.bf16.mxu0 0
      %1531 = vmatpush1.bf16.msra.mxu0 0
      %1532 = vmatprep.subr.bf16.mxu0 0
      %1533 = vmatpush1.bf16.msra.mxu0 0
      %1534 = vmatprep.subr.bf16.mxu0 0
      %1535 = vmatpush1.bf16.msra.mxu0 0
      %1536 = vmatprep.subr.bf16.mxu0 0
      %1537 = vmatpush1.bf16.msra.mxu0 0
      %1538 = vmatprep.subr.bf16.mxu0 0
      %1539 = vmatpush1.bf16.msra.mxu0 0
      %1540 = vmatprep.subr.bf16.mxu0 0
      %1541 = vmatpush1.bf16.msra.mxu0 0
      %1542 = vmatprep.mubr.bf16.mxu0 0
      %1543 = vmatmul.mubr.bf16.gmra.mrb[0].mxu0 %v1499
      %v1544 = vpop.f32.mrb[0].mxu0
      %v1545 = vadd.f32 0.0, %v1544
      %v1546 = vpop.f32.mrb[0].mxu0
      %v1547 = vpop.f32.mrb[0].mxu0
      %v1548 = vadd.f32 0.0, %v1547
      %v1549 = vpop.f32.mrb[0].mxu0
      %1550 = vmatprep.mubr.bf16.mxu0 0
      %1551 = vmatmul.mubr.bf16.gmra.mrb[0].mxu0 %v1502
      %v1552 = vpop.f32.mrb[0].mxu0
      %v1553 = vadd.f32 0.0, %v1552
      %v1554 = vpop.f32.mrb[0].mxu0
      %v1555 = vpop.f32.mrb[0].mxu0
      %v1556 = vadd.f32 0.0, %v1555
      %v1557 = vpop.f32.mrb[0].mxu0
      %1558 = vmatprep.mubr.bf16.mxu0 0
      %1559 = vmatmul.mubr.bf16.gmra.mrb[0].mxu0 %v1505
      %v1560 = vpop.f32.mrb[0].mxu0
      %v1561 = vadd.f32 0.0, %v1560
      %v1562 = vpop.f32.mrb[0].mxu0
      %v1563 = vpop.f32.mrb[0].mxu0
      %v1564 = vadd.f32 0.0, %v1563
      %v1565 = vpop.f32.mrb[0].mxu0
      %1566 = vmatprep.mubr.bf16.mxu0 0
      %1567 = vmatmul.mubr.bf16.gmra.mrb[0].mxu0 %v1508
      %v1568 = vpop.f32.mrb[0].mxu0
      %v1569 = vadd.f32 0.0, %v1568
      %v1570 = vpop.f32.mrb[0].mxu0
      %v1571 = vpop.f32.mrb[0].mxu0
      %v1572 = vadd.f32 0.0, %v1571
      %v1573 = vpop.f32.mrb[0].mxu0
      %1574 = vdwg.mxu0
      %v1575 = vadd.f32 %v1412, %v1545
      %v1576 = vadd.f32 %v1413, %v1548
      %v1577 = vadd.f32 %v1414, %v1553
      %v1578 = vadd.f32 %v1415, %v1556
      %v1579 = vadd.f32 %v1416, %v1561
      %v1580 = vadd.f32 %v1417, %v1564
      %v1581 = vadd.f32 %v1418, %v1569
      %v1582 = vadd.f32 %v1419, %v1572
      %s1583 = scalar_lea.vmem %s1, 512
      %v1584 = vld [vmem:[%s1583] sm:$0xff]
      %v1585 = vld [vmem:[%s1583 + $0x8] sm:$0xff]
      %v1586 = vld [vmem:[%s1583 + $0x10] sm:$0xff]
      %v1587 = vld [vmem:[%s1583 + $0x18] sm:$0xff]
      %v1588 = vld [vmem:[%s1583 + $0x20] sm:$0xff]
      %v1589 = vld [vmem:[%s1583 + $0x28] sm:$0xff]
      %v1590 = vld [vmem:[%s1583 + $0x30] sm:$0xff]
      %v1591 = vld [vmem:[%s1583 + $0x38] sm:$0xff]
      %1593 = vset.pattern.permute.xlu0 0
      %1594 = vperm.xlu0 %1593, %v1584
      %v1595 = vpop.permute.xlu0 %1594
      %1598 = vset.pattern.permute.xlu0 0
      %1599 = vperm.xlu0 %1598, %v1585
      %v1600 = vpop.permute.xlu0 %1599
      %1603 = vset.pattern.permute.xlu0 0
      %1604 = vperm.xlu0 %1603, %v1586
      %v1605 = vpop.permute.xlu0 %1604
      %1608 = vset.pattern.permute.xlu0 0
      %1609 = vperm.xlu0 %1608, %v1587
      %v1610 = vpop.permute.xlu0 %1609
      %1613 = vset.pattern.permute.xlu0 0
      %1614 = vperm.xlu0 %1613, %v1588
      %v1615 = vpop.permute.xlu0 %1614
      %1618 = vset.pattern.permute.xlu0 0
      %1619 = vperm.xlu0 %1618, %v1589
      %v1620 = vpop.permute.xlu0 %1619
      %1623 = vset.pattern.permute.xlu0 0
      %1624 = vperm.xlu0 %1623, %v1590
      %v1625 = vpop.permute.xlu0 %1624
      %1628 = vset.pattern.permute.xlu0 0
      %1629 = vperm.xlu0 %1628, %v1591
      %v1630 = vpop.permute.xlu0 %1629
      %v1632 = vmul.f32 %v659, %v1595
      %v1633 = vmul.f32 %v658, %v1600
      %v1634 = vmul.f32 %v657, %v1605
      %v1635 = vmul.f32 %v656, %v1610
      %v1636 = vmul.f32 %v655, %v1615
      %v1637 = vmul.f32 %v654, %v1620
      %v1638 = vmul.f32 %v661, %v1625
      %v1639 = vmul.f32 %v660, %v1630
      %v1640 = vpack.c.bf16 %v1633, %v1632
      %v1641 = vpack.c.bf16 %v1635, %v1634
      %v1642 = vpack.c.bf16 %v1637, %v1636
      %v1643 = vpack.c.bf16 %v1639, %v1638
      %s1644 = scalar_lea.vmem %s2, 128
      %v1645 = vld [vmem:[%s1644] sm:$0xf]
      %v1646 = vld [vmem:[%s1644 + $0x4] sm:$0xf]
      %v1647 = vld [vmem:[%s1644 + $0x8] sm:$0xf]
      %v1648 = vld [vmem:[%s1644 + $0xc] sm:$0xf]
      %v1653 = vunpack.c.l.b16 %v1645
      %v1654 = vunpack.c.l.b16 %v1646
      %v1655 = vunpack.c.l.b16 %v1647
      %v1656 = vunpack.c.l.b16 %v1648
      %v1657 = vpack.c.b16 %v1654, %v1653
      %v1658 = vpack.c.b16 %v1656, %v1655
      %v1662 = vsel %vm478, %v1640, 0
      %v1665 = vsel %vm478, %v1641, 0
      %v1668 = vsel %vm478, %v1642, 0
      %v1671 = vsel %vm478, %v1643, 0
      %1673 = vmatprep.subr.bf16.mxu0 0
      %1674 = vmatpush1.bf16.msra.mxu0 %v1657
      %1675 = vmatprep.subr.bf16.mxu0 0
      %1676 = vmatpush1.bf16.msra.mxu0 %v1658
      %1677 = vmatprep.subr.bf16.mxu0 0
      %1678 = vmatpush1.bf16.msra.mxu0 0
      %1679 = vmatprep.subr.bf16.mxu0 0
      %1680 = vmatpush1.bf16.msra.mxu0 0
      %1681 = vmatprep.subr.bf16.mxu0 0
      %1682 = vmatpush1.bf16.msra.mxu0 0
      %1683 = vmatprep.subr.bf16.mxu0 0
      %1684 = vmatpush1.bf16.msra.mxu0 0
      %1685 = vmatprep.subr.bf16.mxu0 0
      %1686 = vmatpush1.bf16.msra.mxu0 0
      %1687 = vmatprep.subr.bf16.mxu0 0
      %1688 = vmatpush1.bf16.msra.mxu0 0
      %1689 = vmatprep.subr.bf16.mxu0 0
      %1690 = vmatpush1.bf16.msra.mxu0 0
      %1691 = vmatprep.subr.bf16.mxu0 0
      %1692 = vmatpush1.bf16.msra.mxu0 0
      %1693 = vmatprep.subr.bf16.mxu0 0
      %1694 = vmatpush1.bf16.msra.mxu0 0
      %1695 = vmatprep.subr.bf16.mxu0 0
      %1696 = vmatpush1.bf16.msra.mxu0 0
      %1697 = vmatprep.subr.bf16.mxu0 0
      %1698 = vmatpush1.bf16.msra.mxu0 0
      %1699 = vmatprep.subr.bf16.mxu0 0
      %1700 = vmatpush1.bf16.msra.mxu0 0
      %1701 = vmatprep.subr.bf16.mxu0 0
      %1702 = vmatpush1.bf16.msra.mxu0 0
      %1703 = vmatprep.subr.bf16.mxu0 0
      %1704 = vmatpush1.bf16.msra.mxu0 0
      %1705 = vmatprep.mubr.bf16.mxu0 0
      %1706 = vmatmul.mubr.bf16.gmra.mrb[0].mxu0 %v1662
      %v1707 = vpop.f32.mrb[0].mxu0
      %v1708 = vadd.f32 0.0, %v1707
      %v1709 = vpop.f32.mrb[0].mxu0
      %v1710 = vpop.f32.mrb[0].mxu0
      %v1711 = vadd.f32 0.0, %v1710
      %v1712 = vpop.f32.mrb[0].mxu0
      %1713 = vmatprep.mubr.bf16.mxu0 0
      %1714 = vmatmul.mubr.bf16.gmra.mrb[0].mxu0 %v1665
      %v1715 = vpop.f32.mrb[0].mxu0
      %v1716 = vadd.f32 0.0, %v1715
      %v1717 = vpop.f32.mrb[0].mxu0
      %v1718 = vpop.f32.mrb[0].mxu0
      %v1719 = vadd.f32 0.0, %v1718
      %v1720 = vpop.f32.mrb[0].mxu0
      %1721 = vmatprep.mubr.bf16.mxu0 0
      %1722 = vmatmul.mubr.bf16.gmra.mrb[0].mxu0 %v1668
      %v1723 = vpop.f32.mrb[0].mxu0
      %v1724 = vadd.f32 0.0, %v1723
      %v1725 = vpop.f32.mrb[0].mxu0
      %v1726 = vpop.f32.mrb[0].mxu0
      %v1727 = vadd.f32 0.0, %v1726
      %v1728 = vpop.f32.mrb[0].mxu0
      %1729 = vmatprep.mubr.bf16.mxu0 0
      %1730 = vmatmul.mubr.bf16.gmra.mrb[0].mxu0 %v1671
      %v1731 = vpop.f32.mrb[0].mxu0
      %v1732 = vadd.f32 0.0, %v1731
      %v1733 = vpop.f32.mrb[0].mxu0
      %v1734 = vpop.f32.mrb[0].mxu0
      %v1735 = vadd.f32 0.0, %v1734
      %v1736 = vpop.f32.mrb[0].mxu0
      %1737 = vdwg.mxu0
      %v1738 = vadd.f32 %v1575, %v1708
      %v1739 = vadd.f32 %v1576, %v1711
      %v1740 = vadd.f32 %v1577, %v1716
      %v1741 = vadd.f32 %v1578, %v1719
      %v1742 = vadd.f32 %v1579, %v1724
      %v1743 = vadd.f32 %v1580, %v1727
      %v1744 = vadd.f32 %v1581, %v1732
      %v1745 = vadd.f32 %v1582, %v1735
      %v1747 = vlaneseq
      %v1748 = vshrl.u32 %v1747, 7
      %v1749 = vsub.s32 0, %v1748
      %v1750 = vrot.slane %v315, %v1749
      %v1752 = vmul.f32 %v1738, %v1750
      %v1753 = vmul.f32 %v1739, %v1750
      %v1754 = vmul.f32 %v1740, %v1750
      %v1755 = vmul.f32 %v1741, %v1750
      %v1756 = vmul.f32 %v1742, %v1750
      %v1757 = vmul.f32 %v1743, %v1750
      %v1758 = vmul.f32 %v1744, %v1750
      %v1759 = vmul.f32 %v1745, %v1750
      %v1761 = vlaneseq
      %v1762 = vshrl.u32 %v1761, 7
      %v1763 = vsub.s32 0, %v1762
      %v1764 = vrot.slane %v316, %v1763
      %v1766 = vadd.f32 %v1752, %v1764
      %v1767 = vadd.f32 %v1753, %v1764
      %v1768 = vadd.f32 %v1754, %v1764
      %v1769 = vadd.f32 %v1755, %v1764
      %v1770 = vadd.f32 %v1756, %v1764
      %v1771 = vadd.f32 %v1757, %v1764
      %v1772 = vadd.f32 %v1758, %v1764
      %v1773 = vadd.f32 %v1759, %v1764
      %v1774 = vmax.f32 %v1766, 0.0
      %v1775 = vmax.f32 %v1767, 0.0
      %v1776 = vmax.f32 %v1768, 0.0
      %v1777 = vmax.f32 %v1769, 0.0
      %v1778 = vmax.f32 %v1770, 0.0
      %v1779 = vmax.f32 %v1771, 0.0
      %v1780 = vmax.f32 %v1772, 0.0
      %v1781 = vmax.f32 %v1773, 0.0
      %v1782 = vld [vmem:[%s6] sm:$0x1]
      %v1783 = vld [vmem:[%s7] sm:$0x1]
      %v1784 = vrot.slane %v1774, 7
      %v1785 = vrot.slane %v1775, 7
      %v1786 = vrot.slane %v1776, 7
      %v1787 = vrot.slane %v1777, 7
      %v1788 = vrot.slane %v1778, 7
      %v1789 = vrot.slane %v1779, 7
      %v1790 = vrot.slane %v1780, 7
      %v1791 = vrot.slane %v1781, 7
      %v1792 = vsel %vm327, %v1790, %v1791
      %v1793 = vsel %vm327, %v1789, %v1790
      %v1794 = vsel %vm327, %v1788, %v1789
      %v1795 = vsel %vm327, %v1787, %v1788
      %v1796 = vsel %vm327, %v1786, %v1787
      %v1797 = vsel %vm327, %v1785, %v1786
      %v1798 = vsel %vm327, %v1784, %v1785
      %v1799 = vsel %vm327, %v1791, %v1784
      %v1800 = vmul.f32 %v1792, %v347
      %v1801 = vmul.f32 %v1799, %v352
      %v1802 = vmul.f32 %v1798, %v357
      %v1803 = vmul.f32 %v1797, %v362
      %v1804 = vmul.f32 %v1796, %v367
      %v1805 = vmul.f32 %v1795, %v372
      %v1806 = vmul.f32 %v1794, %v377
      %v1807 = vmul.f32 %v1793, %v382
      %v1808 = vpack.c.bf16 %v1801, %v1800
      %v1809 = vpack.c.bf16 %v1803, %v1802
      %v1810 = vpack.c.bf16 %v1805, %v1804
      %v1811 = vpack.c.bf16 %v1807, %v1806
      %v1812 = vld [vmem:[%s5] sm:$0xf]
      %v1813 = vld [vmem:[%s5 + $0x4] sm:$0xf]
      %v1814 = vld [vmem:[%s5 + $0x8] sm:$0xf]
      %v1815 = vld [vmem:[%s5 + $0xc] sm:$0xf]
      %v1816 = vmul.f32 %v1781, %v412
      %v1817 = vmul.f32 %v1774, %v417
      %v1818 = vmul.f32 %v1775, %v422
      %v1819 = vmul.f32 %v1776, %v427
      %v1820 = vmul.f32 %v1777, %v432
      %v1821 = vmul.f32 %v1778, %v437
      %v1822 = vmul.f32 %v1779, %v442
      %v1823 = vmul.f32 %v1780, %v447
      %v1824 = vpack.c.bf16 %v1817, %v1816
      %v1825 = vpack.c.bf16 %v1819, %v1818
      %v1826 = vpack.c.bf16 %v1821, %v1820
      %v1827 = vpack.c.bf16 %v1823, %v1822
      %s1828 = scalar_lea.vmem %s5, 16
      %v1829 = vld [vmem:[%s1828] sm:$0xf]
      %v1830 = vld [vmem:[%s1828 + $0x4] sm:$0xf]
      %v1831 = vld [vmem:[%s1828 + $0x8] sm:$0xf]
      %v1832 = vld [vmem:[%s1828 + $0xc] sm:$0xf]
      %v1837 = vunpack.c.l.b16 %v1829
      %v1838 = vunpack.c.l.b16 %v1830
      %v1839 = vunpack.c.l.b16 %v1831
      %v1840 = vunpack.c.l.b16 %v1832
      %v1841 = vpack.c.b16 %v1838, %v1837
      %v1842 = vpack.c.b16 %v1840, %v1839
      %v1846 = vsel %vm478, %v1824, 0
      %v1849 = vsel %vm478, %v1825, 0
      %v1852 = vsel %vm478, %v1826, 0
      %v1855 = vsel %vm478, %v1827, 0
      %1857 = vmatprep.subr.bf16.mxu0 0
      %1858 = vmatpush1.bf16.msra.mxu0 %v1841
      %1859 = vmatprep.subr.bf16.mxu0 0
      %1860 = vmatpush1.bf16.msra.mxu0 %v1842
      %1861 = vmatprep.subr.bf16.mxu0 0
      %1862 = vmatpush1.bf16.msra.mxu0 0
      %1863 = vmatprep.subr.bf16.mxu0 0
      %1864 = vmatpush1.bf16.msra.mxu0 0
      %1865 = vmatprep.subr.bf16.mxu0 0
      %1866 = vmatpush1.bf16.msra.mxu0 0
      %1867 = vmatprep.subr.bf16.mxu0 0
      %1868 = vmatpush1.bf16.msra.mxu0 0
      %1869 = vmatprep.subr.bf16.mxu0 0
      %1870 = vmatpush1.bf16.msra.mxu0 0
      %1871 = vmatprep.subr.bf16.mxu0 0
      %1872 = vmatpush1.bf16.msra.mxu0 0
      %1873 = vmatprep.subr.bf16.mxu0 0
      %1874 = vmatpush1.bf16.msra.mxu0 0
      %1875 = vmatprep.subr.bf16.mxu0 0
      %1876 = vmatpush1.bf16.msra.mxu0 0
      %1877 = vmatprep.subr.bf16.mxu0 0
      %1878 = vmatpush1.bf16.msra.mxu0 0
      %1879 = vmatprep.subr.bf16.mxu0 0
      %1880 = vmatpush1.bf16.msra.mxu0 0
      %1881 = vmatprep.subr.bf16.mxu0 0
      %1882 = vmatpush1.bf16.msra.mxu0 0
      %1883 = vmatprep.subr.bf16.mxu0 0
      %1884 = vmatpush1.bf16.msra.mxu0 0
      %1885 = vmatprep.subr.bf16.mxu0 0
      %1886 = vmatpush1.bf16.msra.mxu0 0
      %1887 = vmatprep.subr.bf16.mxu0 0
      %1888 = vmatpush1.bf16.msra.mxu0 0
      %1889 = vmatprep.mubr.bf16.mxu0 0
      %1890 = vmatmul.mubr.bf16.gmra.mrb[0].mxu0 %v1846
      %v1891 = vpop.f32.mrb[0].mxu0
      %v1892 = vadd.f32 0.0, %v1891
      %v1893 = vpop.f32.mrb[0].mxu0
      %v1894 = vpop.f32.mrb[0].mxu0
      %v1895 = vadd.f32 0.0, %v1894
      %v1896 = vpop.f32.mrb[0].mxu0
      %1897 = vmatprep.mubr.bf16.mxu0 0
      %1898 = vmatmul.mubr.bf16.gmra.mrb[0].mxu0 %v1849
      %v1899 = vpop.f32.mrb[0].mxu0
      %v1900 = vadd.f32 0.0, %v1899
      %v1901 = vpop.f32.mrb[0].mxu0
      %v1902 = vpop.f32.mrb[0].mxu0
      %v1903 = vadd.f32 0.0, %v1902
      %v1904 = vpop.f32.mrb[0].mxu0
      %1905 = vmatprep.mubr.bf16.mxu0 0
      %1906 = vmatmul.mubr.bf16.gmra.mrb[0].mxu0 %v1852
      %v1907 = vpop.f32.mrb[0].mxu0
      %v1908 = vadd.f32 0.0, %v1907
      %v1909 = vpop.f32.mrb[0].mxu0
      %v1910 = vpop.f32.mrb[0].mxu0
      %v1911 = vadd.f32 0.0, %v1910
      %v1912 = vpop.f32.mrb[0].mxu0
      %1913 = vmatprep.mubr.bf16.mxu0 0
      %1914 = vmatmul.mubr.bf16.gmra.mrb[0].mxu0 %v1855
      %v1915 = vpop.f32.mrb[0].mxu0
      %v1916 = vadd.f32 0.0, %v1915
      %v1917 = vpop.f32.mrb[0].mxu0
      %v1918 = vpop.f32.mrb[0].mxu0
      %v1919 = vadd.f32 0.0, %v1918
      %v1920 = vpop.f32.mrb[0].mxu0
      %1921 = vdwg.mxu0
      %v1926 = vunpack.c.l.b16 %v1812
      %v1927 = vunpack.c.l.b16 %v1813
      %v1928 = vunpack.c.l.b16 %v1814
      %v1929 = vunpack.c.l.b16 %v1815
      %v1930 = vpack.c.b16 %v1927, %v1926
      %v1931 = vpack.c.b16 %v1929, %v1928
      %v1935 = vsel %vm478, %v1808, 0
      %v1938 = vsel %vm478, %v1809, 0
      %v1941 = vsel %vm478, %v1810, 0
      %v1944 = vsel %vm478, %v1811, 0
      %1946 = vmatprep.subr.bf16.mxu0 0
      %1947 = vmatpush1.bf16.msra.mxu0 %v1930
      %1948 = vmatprep.subr.bf16.mxu0 0
      %1949 = vmatpush1.bf16.msra.mxu0 %v1931
      %1950 = vmatprep.subr.bf16.mxu0 0
      %1951 = vmatpush1.bf16.msra.mxu0 0
      %1952 = vmatprep.subr.bf16.mxu0 0
      %1953 = vmatpush1.bf16.msra.mxu0 0
      %1954 = vmatprep.subr.bf16.mxu0 0
      %1955 = vmatpush1.bf16.msra.mxu0 0
      %1956 = vmatprep.subr.bf16.mxu0 0
      %1957 = vmatpush1.bf16.msra.mxu0 0
      %1958 = vmatprep.subr.bf16.mxu0 0
      %1959 = vmatpush1.bf16.msra.mxu0 0
      %1960 = vmatprep.subr.bf16.mxu0 0
      %1961 = vmatpush1.bf16.msra.mxu0 0
      %1962 = vmatprep.subr.bf16.mxu0 0
      %1963 = vmatpush1.bf16.msra.mxu0 0
      %1964 = vmatprep.subr.bf16.mxu0 0
      %1965 = vmatpush1.bf16.msra.mxu0 0
      %1966 = vmatprep.subr.bf16.mxu0 0
      %1967 = vmatpush1.bf16.msra.mxu0 0
      %1968 = vmatprep.subr.bf16.mxu0 0
      %1969 = vmatpush1.bf16.msra.mxu0 0
      %1970 = vmatprep.subr.bf16.mxu0 0
      %1971 = vmatpush1.bf16.msra.mxu0 0
      %1972 = vmatprep.subr.bf16.mxu0 0
      %1973 = vmatpush1.bf16.msra.mxu0 0
      %1974 = vmatprep.subr.bf16.mxu0 0
      %1975 = vmatpush1.bf16.msra.mxu0 0
      %1976 = vmatprep.subr.bf16.mxu0 0
      %1977 = vmatpush1.bf16.msra.mxu0 0
      %1978 = vmatprep.mubr.bf16.mxu0 0
      %1979 = vmatmul.mubr.bf16.gmra.mrb[0].mxu0 %v1935
      %v1980 = vpop.f32.mrb[0].mxu0
      %v1981 = vadd.f32 %v1892, %v1980
      %v1982 = vpop.f32.mrb[0].mxu0
      %v1983 = vpop.f32.mrb[0].mxu0
      %v1984 = vadd.f32 %v1895, %v1983
      %v1985 = vpop.f32.mrb[0].mxu0
      %1986 = vmatprep.mubr.bf16.mxu0 0
      %1987 = vmatmul.mubr.bf16.gmra.mrb[0].mxu0 %v1938
      %v1988 = vpop.f32.mrb[0].mxu0
      %v1989 = vadd.f32 %v1900, %v1988
      %v1990 = vpop.f32.mrb[0].mxu0
      %v1991 = vpop.f32.mrb[0].mxu0
      %v1992 = vadd.f32 %v1903, %v1991
      %v1993 = vpop.f32.mrb[0].mxu0
      %1994 = vmatprep.mubr.bf16.mxu0 0
      %1995 = vmatmul.mubr.bf16.gmra.mrb[0].mxu0 %v1941
      %v1996 = vpop.f32.mrb[0].mxu0
      %v1997 = vadd.f32 %v1908, %v1996
      %v1998 = vpop.f32.mrb[0].mxu0
      %v1999 = vpop.f32.mrb[0].mxu0
      %v2000 = vadd.f32 %v1911, %v1999
      %v2001 = vpop.f32.mrb[0].mxu0
      %2002 = vmatprep.mubr.bf16.mxu0 0
      %2003 = vmatmul.mubr.bf16.gmra.mrb[0].mxu0 %v1944
      %v2004 = vpop.f32.mrb[0].mxu0
      %v2005 = vadd.f32 %v1916, %v2004
      %v2006 = vpop.f32.mrb[0].mxu0
      %v2007 = vpop.f32.mrb[0].mxu0
      %v2008 = vadd.f32 %v1919, %v2007
      %v2009 = vpop.f32.mrb[0].mxu0
      %2010 = vdwg.mxu0
      %v2011 = vrot.slane %v1774, 1
      %v2012 = vrot.slane %v1775, 1
      %v2013 = vrot.slane %v1776, 1
      %v2014 = vrot.slane %v1777, 1
      %v2015 = vrot.slane %v1778, 1
      %v2016 = vrot.slane %v1779, 1
      %v2017 = vrot.slane %v1780, 1
      %v2018 = vrot.slane %v1781, 1
      %v2019 = vsel %vm653, %v2017, %v2018
      %v2020 = vsel %vm653, %v2016, %v2017
      %v2021 = vsel %vm653, %v2015, %v2016
      %v2022 = vsel %vm653, %v2014, %v2015
      %v2023 = vsel %vm653, %v2013, %v2014
      %v2024 = vsel %vm653, %v2012, %v2013
      %v2025 = vsel %vm653, %v2011, %v2012
      %v2026 = vsel %vm653, %v2018, %v2011
      %v2027 = vmul.f32 %v2026, %v674
      %v2028 = vmul.f32 %v2025, %v679
      %v2029 = vmul.f32 %v2024, %v684
      %v2030 = vmul.f32 %v2023, %v689
      %v2031 = vmul.f32 %v2022, %v694
      %v2032 = vmul.f32 %v2021, %v699
      %v2033 = vmul.f32 %v2020, %v704
      %v2034 = vmul.f32 %v2019, %v709
      %v2035 = vpack.c.bf16 %v2028, %v2027
      %v2036 = vpack.c.bf16 %v2030, %v2029
      %v2037 = vpack.c.bf16 %v2032, %v2031
      %v2038 = vpack.c.bf16 %v2034, %v2033
      %s2039 = scalar_lea.vmem %s5, 32
      %v2040 = vld [vmem:[%s2039] sm:$0xf]
      %v2041 = vld [vmem:[%s2039 + $0x4] sm:$0xf]
      %v2042 = vld [vmem:[%s2039 + $0x8] sm:$0xf]
      %v2043 = vld [vmem:[%s2039 + $0xc] sm:$0xf]
      %v2048 = vunpack.c.l.b16 %v2040
      %v2049 = vunpack.c.l.b16 %v2041
      %v2050 = vunpack.c.l.b16 %v2042
      %v2051 = vunpack.c.l.b16 %v2043
      %v2052 = vpack.c.b16 %v2049, %v2048
      %v2053 = vpack.c.b16 %v2051, %v2050
      %v2057 = vsel %vm478, %v2035, 0
      %v2060 = vsel %vm478, %v2036, 0
      %v2063 = vsel %vm478, %v2037, 0
      %v2066 = vsel %vm478, %v2038, 0
      %2068 = vmatprep.subr.bf16.mxu0 0
      %2069 = vmatpush1.bf16.msra.mxu0 %v2052
      %2070 = vmatprep.subr.bf16.mxu0 0
      %2071 = vmatpush1.bf16.msra.mxu0 %v2053
      %2072 = vmatprep.subr.bf16.mxu0 0
      %2073 = vmatpush1.bf16.msra.mxu0 0
      %2074 = vmatprep.subr.bf16.mxu0 0
      %2075 = vmatpush1.bf16.msra.mxu0 0
      %2076 = vmatprep.subr.bf16.mxu0 0
      %2077 = vmatpush1.bf16.msra.mxu0 0
      %2078 = vmatprep.subr.bf16.mxu0 0
      %2079 = vmatpush1.bf16.msra.mxu0 0
      %2080 = vmatprep.subr.bf16.mxu0 0
      %2081 = vmatpush1.bf16.msra.mxu0 0
      %2082 = vmatprep.subr.bf16.mxu0 0
      %2083 = vmatpush1.bf16.msra.mxu0 0
      %2084 = vmatprep.subr.bf16.mxu0 0
      %2085 = vmatpush1.bf16.msra.mxu0 0
      %2086 = vmatprep.subr.bf16.mxu0 0
      %2087 = vmatpush1.bf16.msra.mxu0 0
      %2088 = vmatprep.subr.bf16.mxu0 0
      %2089 = vmatpush1.bf16.msra.mxu0 0
      %2090 = vmatprep.subr.bf16.mxu0 0
      %2091 = vmatpush1.bf16.msra.mxu0 0
      %2092 = vmatprep.subr.bf16.mxu0 0
      %2093 = vmatpush1.bf16.msra.mxu0 0
      %2094 = vmatprep.subr.bf16.mxu0 0
      %2095 = vmatpush1.bf16.msra.mxu0 0
      %2096 = vmatprep.subr.bf16.mxu0 0
      %2097 = vmatpush1.bf16.msra.mxu0 0
      %2098 = vmatprep.subr.bf16.mxu0 0
      %2099 = vmatpush1.bf16.msra.mxu0 0
      %2100 = vmatprep.mubr.bf16.mxu0 0
      %2101 = vmatmul.mubr.bf16.gmra.mrb[0].mxu0 %v2057
      %v2102 = vpop.f32.mrb[0].mxu0
      %v2103 = vadd.f32 0.0, %v2102
      %v2104 = vpop.f32.mrb[0].mxu0
      %v2105 = vpop.f32.mrb[0].mxu0
      %v2106 = vadd.f32 0.0, %v2105
      %v2107 = vpop.f32.mrb[0].mxu0
      %2108 = vmatprep.mubr.bf16.mxu0 0
      %2109 = vmatmul.mubr.bf16.gmra.mrb[0].mxu0 %v2060
      %v2110 = vpop.f32.mrb[0].mxu0
      %v2111 = vadd.f32 0.0, %v2110
      %v2112 = vpop.f32.mrb[0].mxu0
      %v2113 = vpop.f32.mrb[0].mxu0
      %v2114 = vadd.f32 0.0, %v2113
      %v2115 = vpop.f32.mrb[0].mxu0
      %2116 = vmatprep.mubr.bf16.mxu0 0
      %2117 = vmatmul.mubr.bf16.gmra.mrb[0].mxu0 %v2063
      %v2118 = vpop.f32.mrb[0].mxu0
      %v2119 = vadd.f32 0.0, %v2118
      %v2120 = vpop.f32.mrb[0].mxu0
      %v2121 = vpop.f32.mrb[0].mxu0
      %v2122 = vadd.f32 0.0, %v2121
      %v2123 = vpop.f32.mrb[0].mxu0
      %2124 = vmatprep.mubr.bf16.mxu0 0
      %2125 = vmatmul.mubr.bf16.gmra.mrb[0].mxu0 %v2066
      %v2126 = vpop.f32.mrb[0].mxu0
      %v2127 = vadd.f32 0.0, %v2126
      %v2128 = vpop.f32.mrb[0].mxu0
      %v2129 = vpop.f32.mrb[0].mxu0
      %v2130 = vadd.f32 0.0, %v2129
      %v2131 = vpop.f32.mrb[0].mxu0
      %2132 = vdwg.mxu0
      %v2133 = vadd.f32 %v1981, %v2103
      %v2134 = vadd.f32 %v1984, %v2106
      %v2135 = vadd.f32 %v1989, %v2111
      %v2136 = vadd.f32 %v1992, %v2114
      %v2137 = vadd.f32 %v1997, %v2119
      %v2138 = vadd.f32 %v2000, %v2122
      %v2139 = vadd.f32 %v2005, %v2127
      %v2140 = vadd.f32 %v2008, %v2130
      %v2141 = vmul.f32 %v1799, %v837
      %v2142 = vmul.f32 %v1798, %v842
      %v2143 = vmul.f32 %v1797, %v847
      %v2144 = vmul.f32 %v1796, %v852
      %v2145 = vmul.f32 %v1795, %v857
      %v2146 = vmul.f32 %v1794, %v862
      %v2147 = vmul.f32 %v1793, %v867
      %v2148 = vmul.f32 %v1792, %v872
      %v2149 = vpack.c.bf16 %v2142, %v2141
      %v2150 = vpack.c.bf16 %v2144, %v2143
      %v2151 = vpack.c.bf16 %v2146, %v2145
      %v2152 = vpack.c.bf16 %v2148, %v2147
      %s2153 = scalar_lea.vmem %s5, 48
      %v2154 = vld [vmem:[%s2153] sm:$0xf]
      %v2155 = vld [vmem:[%s2153 + $0x4] sm:$0xf]
      %v2156 = vld [vmem:[%s2153 + $0x8] sm:$0xf]
      %v2157 = vld [vmem:[%s2153 + $0xc] sm:$0xf]
      %v2162 = vunpack.c.l.b16 %v2154
      %v2163 = vunpack.c.l.b16 %v2155
      %v2164 = vunpack.c.l.b16 %v2156
      %v2165 = vunpack.c.l.b16 %v2157
      %v2166 = vpack.c.b16 %v2163, %v2162
      %v2167 = vpack.c.b16 %v2165, %v2164
      %v2171 = vsel %vm478, %v2149, 0
      %v2174 = vsel %vm478, %v2150, 0
      %v2177 = vsel %vm478, %v2151, 0
      %v2180 = vsel %vm478, %v2152, 0
      %2182 = vmatprep.subr.bf16.mxu0 0
      %2183 = vmatpush1.bf16.msra.mxu0 %v2166
      %2184 = vmatprep.subr.bf16.mxu0 0
      %2185 = vmatpush1.bf16.msra.mxu0 %v2167
      %2186 = vmatprep.subr.bf16.mxu0 0
      %2187 = vmatpush1.bf16.msra.mxu0 0
      %2188 = vmatprep.subr.bf16.mxu0 0
      %2189 = vmatpush1.bf16.msra.mxu0 0
      %2190 = vmatprep.subr.bf16.mxu0 0
      %2191 = vmatpush1.bf16.msra.mxu0 0
      %2192 = vmatprep.subr.bf16.mxu0 0
      %2193 = vmatpush1.bf16.msra.mxu0 0
      %2194 = vmatprep.subr.bf16.mxu0 0
      %2195 = vmatpush1.bf16.msra.mxu0 0
      %2196 = vmatprep.subr.bf16.mxu0 0
      %2197 = vmatpush1.bf16.msra.mxu0 0
      %2198 = vmatprep.subr.bf16.mxu0 0
      %2199 = vmatpush1.bf16.msra.mxu0 0
      %2200 = vmatprep.subr.bf16.mxu0 0
      %2201 = vmatpush1.bf16.msra.mxu0 0
      %2202 = vmatprep.subr.bf16.mxu0 0
      %2203 = vmatpush1.bf16.msra.mxu0 0
      %2204 = vmatprep.subr.bf16.mxu0 0
      %2205 = vmatpush1.bf16.msra.mxu0 0
      %2206 = vmatprep.subr.bf16.mxu0 0
      %2207 = vmatpush1.bf16.msra.mxu0 0
      %2208 = vmatprep.subr.bf16.mxu0 0
      %2209 = vmatpush1.bf16.msra.mxu0 0
      %2210 = vmatprep.subr.bf16.mxu0 0
      %2211 = vmatpush1.bf16.msra.mxu0 0
      %2212 = vmatprep.subr.bf16.mxu0 0
      %2213 = vmatpush1.bf16.msra.mxu0 0
      %2214 = vmatprep.mubr.bf16.mxu0 0
      %2215 = vmatmul.mubr.bf16.gmra.mrb[0].mxu0 %v2171
      %v2216 = vpop.f32.mrb[0].mxu0
      %v2217 = vadd.f32 0.0, %v2216
      %v2218 = vpop.f32.mrb[0].mxu0
      %v2219 = vpop.f32.mrb[0].mxu0
      %v2220 = vadd.f32 0.0, %v2219
      %v2221 = vpop.f32.mrb[0].mxu0
      %2222 = vmatprep.mubr.bf16.mxu0 0
      %2223 = vmatmul.mubr.bf16.gmra.mrb[0].mxu0 %v2174
      %v2224 = vpop.f32.mrb[0].mxu0
      %v2225 = vadd.f32 0.0, %v2224
      %v2226 = vpop.f32.mrb[0].mxu0
      %v2227 = vpop.f32.mrb[0].mxu0
      %v2228 = vadd.f32 0.0, %v2227
      %v2229 = vpop.f32.mrb[0].mxu0
      %2230 = vmatprep.mubr.bf16.mxu0 0
      %2231 = vmatmul.mubr.bf16.gmra.mrb[0].mxu0 %v2177
      %v2232 = vpop.f32.mrb[0].mxu0
      %v2233 = vadd.f32 0.0, %v2232
      %v2234 = vpop.f32.mrb[0].mxu0
      %v2235 = vpop.f32.mrb[0].mxu0
      %v2236 = vadd.f32 0.0, %v2235
      %v2237 = vpop.f32.mrb[0].mxu0
      %2238 = vmatprep.mubr.bf16.mxu0 0
      %2239 = vmatmul.mubr.bf16.gmra.mrb[0].mxu0 %v2180
      %v2240 = vpop.f32.mrb[0].mxu0
      %v2241 = vadd.f32 0.0, %v2240
      %v2242 = vpop.f32.mrb[0].mxu0
      %v2243 = vpop.f32.mrb[0].mxu0
      %v2244 = vadd.f32 0.0, %v2243
      %v2245 = vpop.f32.mrb[0].mxu0
      %2246 = vdwg.mxu0
      %v2247 = vadd.f32 %v2133, %v2217
      %v2248 = vadd.f32 %v2134, %v2220
      %v2249 = vadd.f32 %v2135, %v2225
      %v2250 = vadd.f32 %v2136, %v2228
      %v2251 = vadd.f32 %v2137, %v2233
      %v2252 = vadd.f32 %v2138, %v2236
      %v2253 = vadd.f32 %v2139, %v2241
      %v2254 = vadd.f32 %v2140, %v2244
      %v2255 = vpack.c.bf16 %v1775, %v1774
      %v2256 = vpack.c.bf16 %v1777, %v1776
      %v2257 = vpack.c.bf16 %v1779, %v1778
      %v2258 = vpack.c.bf16 %v1781, %v1780
      %s2259 = scalar_lea.vmem %s5, 64
      %v2260 = vld [vmem:[%s2259] sm:$0xf]
      %v2261 = vld [vmem:[%s2259 + $0x4] sm:$0xf]
      %v2262 = vld [vmem:[%s2259 + $0x8] sm:$0xf]
      %v2263 = vld [vmem:[%s2259 + $0xc] sm:$0xf]
      %v2268 = vunpack.c.l.b16 %v2260
      %v2269 = vunpack.c.l.b16 %v2261
      %v2270 = vunpack.c.l.b16 %v2262
      %v2271 = vunpack.c.l.b16 %v2263
      %v2272 = vpack.c.b16 %v2269, %v2268
      %v2273 = vpack.c.b16 %v2271, %v2270
      %v2277 = vsel %vm478, %v2255, 0
      %v2280 = vsel %vm478, %v2256, 0
      %v2283 = vsel %vm478, %v2257, 0
      %v2286 = vsel %vm478, %v2258, 0
      %2288 = vmatprep.subr.bf16.mxu0 0
      %2289 = vmatpush1.bf16.msra.mxu0 %v2272
      %2290 = vmatprep.subr.bf16.mxu0 0
      %2291 = vmatpush1.bf16.msra.mxu0 %v2273
      %2292 = vmatprep.subr.bf16.mxu0 0
      %2293 = vmatpush1.bf16.msra.mxu0 0
      %2294 = vmatprep.subr.bf16.mxu0 0
      %2295 = vmatpush1.bf16.msra.mxu0 0
      %2296 = vmatprep.subr.bf16.mxu0 0
      %2297 = vmatpush1.bf16.msra.mxu0 0
      %2298 = vmatprep.subr.bf16.mxu0 0
      %2299 = vmatpush1.bf16.msra.mxu0 0
      %2300 = vmatprep.subr.bf16.mxu0 0
      %2301 = vmatpush1.bf16.msra.mxu0 0
      %2302 = vmatprep.subr.bf16.mxu0 0
      %2303 = vmatpush1.bf16.msra.mxu0 0
      %2304 = vmatprep.subr.bf16.mxu0 0
      %2305 = vmatpush1.bf16.msra.mxu0 0
      %2306 = vmatprep.subr.bf16.mxu0 0
      %2307 = vmatpush1.bf16.msra.mxu0 0
      %2308 = vmatprep.subr.bf16.mxu0 0
      %2309 = vmatpush1.bf16.msra.mxu0 0
      %2310 = vmatprep.subr.bf16.mxu0 0
      %2311 = vmatpush1.bf16.msra.mxu0 0
      %2312 = vmatprep.subr.bf16.mxu0 0
      %2313 = vmatpush1.bf16.msra.mxu0 0
      %2314 = vmatprep.subr.bf16.mxu0 0
      %2315 = vmatpush1.bf16.msra.mxu0 0
      %2316 = vmatprep.subr.bf16.mxu0 0
      %2317 = vmatpush1.bf16.msra.mxu0 0
      %2318 = vmatprep.subr.bf16.mxu0 0
      %2319 = vmatpush1.bf16.msra.mxu0 0
      %2320 = vmatprep.mubr.bf16.mxu0 0
      %2321 = vmatmul.mubr.bf16.gmra.mrb[0].mxu0 %v2277
      %v2322 = vpop.f32.mrb[0].mxu0
      %v2323 = vadd.f32 0.0, %v2322
      %v2324 = vpop.f32.mrb[0].mxu0
      %v2325 = vpop.f32.mrb[0].mxu0
      %v2326 = vadd.f32 0.0, %v2325
      %v2327 = vpop.f32.mrb[0].mxu0
      %2328 = vmatprep.mubr.bf16.mxu0 0
      %2329 = vmatmul.mubr.bf16.gmra.mrb[0].mxu0 %v2280
      %v2330 = vpop.f32.mrb[0].mxu0
      %v2331 = vadd.f32 0.0, %v2330
      %v2332 = vpop.f32.mrb[0].mxu0
      %v2333 = vpop.f32.mrb[0].mxu0
      %v2334 = vadd.f32 0.0, %v2333
      %v2335 = vpop.f32.mrb[0].mxu0
      %2336 = vmatprep.mubr.bf16.mxu0 0
      %2337 = vmatmul.mubr.bf16.gmra.mrb[0].mxu0 %v2283
      %v2338 = vpop.f32.mrb[0].mxu0
      %v2339 = vadd.f32 0.0, %v2338
      %v2340 = vpop.f32.mrb[0].mxu0
      %v2341 = vpop.f32.mrb[0].mxu0
      %v2342 = vadd.f32 0.0, %v2341
      %v2343 = vpop.f32.mrb[0].mxu0
      %2344 = vmatprep.mubr.bf16.mxu0 0
      %2345 = vmatmul.mubr.bf16.gmra.mrb[0].mxu0 %v2286
      %v2346 = vpop.f32.mrb[0].mxu0
      %v2347 = vadd.f32 0.0, %v2346
      %v2348 = vpop.f32.mrb[0].mxu0
      %v2349 = vpop.f32.mrb[0].mxu0
      %v2350 = vadd.f32 0.0, %v2349
      %v2351 = vpop.f32.mrb[0].mxu0
      %2352 = vdwg.mxu0
      %v2353 = vadd.f32 %v2247, %v2323
      %v2354 = vadd.f32 %v2248, %v2326
      %v2355 = vadd.f32 %v2249, %v2331
      %v2356 = vadd.f32 %v2250, %v2334
      %v2357 = vadd.f32 %v2251, %v2339
      %v2358 = vadd.f32 %v2252, %v2342
      %v2359 = vadd.f32 %v2253, %v2347
      %v2360 = vadd.f32 %v2254, %v2350
      %v2361 = vmul.f32 %v2025, %v1106
      %v2362 = vmul.f32 %v2024, %v1111
      %v2363 = vmul.f32 %v2023, %v1116
      %v2364 = vmul.f32 %v2022, %v1121
      %v2365 = vmul.f32 %v2021, %v1126
      %v2366 = vmul.f32 %v2020, %v1131
      %v2367 = vmul.f32 %v2019, %v1136
      %v2368 = vmul.f32 %v2026, %v1141
      %v2369 = vpack.c.bf16 %v2362, %v2361
      %v2370 = vpack.c.bf16 %v2364, %v2363
      %v2371 = vpack.c.bf16 %v2366, %v2365
      %v2372 = vpack.c.bf16 %v2368, %v2367
      %s2373 = scalar_lea.vmem %s5, 80
      %v2374 = vld [vmem:[%s2373] sm:$0xf]
      %v2375 = vld [vmem:[%s2373 + $0x4] sm:$0xf]
      %v2376 = vld [vmem:[%s2373 + $0x8] sm:$0xf]
      %v2377 = vld [vmem:[%s2373 + $0xc] sm:$0xf]
      %v2382 = vunpack.c.l.b16 %v2374
      %v2383 = vunpack.c.l.b16 %v2375
      %v2384 = vunpack.c.l.b16 %v2376
      %v2385 = vunpack.c.l.b16 %v2377
      %v2386 = vpack.c.b16 %v2383, %v2382
      %v2387 = vpack.c.b16 %v2385, %v2384
      %v2391 = vsel %vm478, %v2369, 0
      %v2394 = vsel %vm478, %v2370, 0
      %v2397 = vsel %vm478, %v2371, 0
      %v2400 = vsel %vm478, %v2372, 0
      %2402 = vmatprep.subr.bf16.mxu0 0
      %2403 = vmatpush1.bf16.msra.mxu0 %v2386
      %2404 = vmatprep.subr.bf16.mxu0 0
      %2405 = vmatpush1.bf16.msra.mxu0 %v2387
      %2406 = vmatprep.subr.bf16.mxu0 0
      %2407 = vmatpush1.bf16.msra.mxu0 0
      %2408 = vmatprep.subr.bf16.mxu0 0
      %2409 = vmatpush1.bf16.msra.mxu0 0
      %2410 = vmatprep.subr.bf16.mxu0 0
      %2411 = vmatpush1.bf16.msra.mxu0 0
      %2412 = vmatprep.subr.bf16.mxu0 0
      %2413 = vmatpush1.bf16.msra.mxu0 0
      %2414 = vmatprep.subr.bf16.mxu0 0
      %2415 = vmatpush1.bf16.msra.mxu0 0
      %2416 = vmatprep.subr.bf16.mxu0 0
      %2417 = vmatpush1.bf16.msra.mxu0 0
      %2418 = vmatprep.subr.bf16.mxu0 0
      %2419 = vmatpush1.bf16.msra.mxu0 0
      %2420 = vmatprep.subr.bf16.mxu0 0
      %2421 = vmatpush1.bf16.msra.mxu0 0
      %2422 = vmatprep.subr.bf16.mxu0 0
      %2423 = vmatpush1.bf16.msra.mxu0 0
      %2424 = vmatprep.subr.bf16.mxu0 0
      %2425 = vmatpush1.bf16.msra.mxu0 0
      %2426 = vmatprep.subr.bf16.mxu0 0
      %2427 = vmatpush1.bf16.msra.mxu0 0
      %2428 = vmatprep.subr.bf16.mxu0 0
      %2429 = vmatpush1.bf16.msra.mxu0 0
      %2430 = vmatprep.subr.bf16.mxu0 0
      %2431 = vmatpush1.bf16.msra.mxu0 0
      %2432 = vmatprep.subr.bf16.mxu0 0
      %2433 = vmatpush1.bf16.msra.mxu0 0
      %2434 = vmatprep.mubr.bf16.mxu0 0
      %2435 = vmatmul.mubr.bf16.gmra.mrb[0].mxu0 %v2391
      %v2436 = vpop.f32.mrb[0].mxu0
      %v2437 = vadd.f32 0.0, %v2436
      %v2438 = vpop.f32.mrb[0].mxu0
      %v2439 = vpop.f32.mrb[0].mxu0
      %v2440 = vadd.f32 0.0, %v2439
      %v2441 = vpop.f32.mrb[0].mxu0
      %2442 = vmatprep.mubr.bf16.mxu0 0
      %2443 = vmatmul.mubr.bf16.gmra.mrb[0].mxu0 %v2394
      %v2444 = vpop.f32.mrb[0].mxu0
      %v2445 = vadd.f32 0.0, %v2444
      %v2446 = vpop.f32.mrb[0].mxu0
      %v2447 = vpop.f32.mrb[0].mxu0
      %v2448 = vadd.f32 0.0, %v2447
      %v2449 = vpop.f32.mrb[0].mxu0
      %2450 = vmatprep.mubr.bf16.mxu0 0
      %2451 = vmatmul.mubr.bf16.gmra.mrb[0].mxu0 %v2397
      %v2452 = vpop.f32.mrb[0].mxu0
      %v2453 = vadd.f32 0.0, %v2452
      %v2454 = vpop.f32.mrb[0].mxu0
      %v2455 = vpop.f32.mrb[0].mxu0
      %v2456 = vadd.f32 0.0, %v2455
      %v2457 = vpop.f32.mrb[0].mxu0
      %2458 = vmatprep.mubr.bf16.mxu0 0
      %2459 = vmatmul.mubr.bf16.gmra.mrb[0].mxu0 %v2400
      %v2460 = vpop.f32.mrb[0].mxu0
      %v2461 = vadd.f32 0.0, %v2460
      %v2462 = vpop.f32.mrb[0].mxu0
      %v2463 = vpop.f32.mrb[0].mxu0
      %v2464 = vadd.f32 0.0, %v2463
      %v2465 = vpop.f32.mrb[0].mxu0
      %2466 = vdwg.mxu0
      %v2467 = vadd.f32 %v2353, %v2437
      %v2468 = vadd.f32 %v2354, %v2440
      %v2469 = vadd.f32 %v2355, %v2445
      %v2470 = vadd.f32 %v2356, %v2448
      %v2471 = vadd.f32 %v2357, %v2453
      %v2472 = vadd.f32 %v2358, %v2456
      %v2473 = vadd.f32 %v2359, %v2461
      %v2474 = vadd.f32 %v2360, %v2464
      %v2475 = vmul.f32 %v1798, %v1269
      %v2476 = vmul.f32 %v1797, %v1274
      %v2477 = vmul.f32 %v1796, %v1279
      %v2478 = vmul.f32 %v1795, %v1284
      %v2479 = vmul.f32 %v1794, %v1289
      %v2480 = vmul.f32 %v1793, %v1294
      %v2481 = vmul.f32 %v1792, %v1299
      %v2482 = vmul.f32 %v1799, %v1304
      %v2483 = vpack.c.bf16 %v2476, %v2475
      %v2484 = vpack.c.bf16 %v2478, %v2477
      %v2485 = vpack.c.bf16 %v2480, %v2479
      %v2486 = vpack.c.bf16 %v2482, %v2481
      %s2487 = scalar_lea.vmem %s5, 96
      %v2488 = vld [vmem:[%s2487] sm:$0xf]
      %v2489 = vld [vmem:[%s2487 + $0x4] sm:$0xf]
      %v2490 = vld [vmem:[%s2487 + $0x8] sm:$0xf]
      %v2491 = vld [vmem:[%s2487 + $0xc] sm:$0xf]
      %v2496 = vunpack.c.l.b16 %v2488
      %v2497 = vunpack.c.l.b16 %v2489
      %v2498 = vunpack.c.l.b16 %v2490
      %v2499 = vunpack.c.l.b16 %v2491
      %v2500 = vpack.c.b16 %v2497, %v2496
      %v2501 = vpack.c.b16 %v2499, %v2498
      %v2505 = vsel %vm478, %v2483, 0
      %v2508 = vsel %vm478, %v2484, 0
      %v2511 = vsel %vm478, %v2485, 0
      %v2514 = vsel %vm478, %v2486, 0
      %2516 = vmatprep.subr.bf16.mxu0 0
      %2517 = vmatpush1.bf16.msra.mxu0 %v2500
      %2518 = vmatprep.subr.bf16.mxu0 0
      %2519 = vmatpush1.bf16.msra.mxu0 %v2501
      %2520 = vmatprep.subr.bf16.mxu0 0
      %2521 = vmatpush1.bf16.msra.mxu0 0
      %2522 = vmatprep.subr.bf16.mxu0 0
      %2523 = vmatpush1.bf16.msra.mxu0 0
      %2524 = vmatprep.subr.bf16.mxu0 0
      %2525 = vmatpush1.bf16.msra.mxu0 0
      %2526 = vmatprep.subr.bf16.mxu0 0
      %2527 = vmatpush1.bf16.msra.mxu0 0
      %2528 = vmatprep.subr.bf16.mxu0 0
      %2529 = vmatpush1.bf16.msra.mxu0 0
      %2530 = vmatprep.subr.bf16.mxu0 0
      %2531 = vmatpush1.bf16.msra.mxu0 0
      %2532 = vmatprep.subr.bf16.mxu0 0
      %2533 = vmatpush1.bf16.msra.mxu0 0
      %2534 = vmatprep.subr.bf16.mxu0 0
      %2535 = vmatpush1.bf16.msra.mxu0 0
      %2536 = vmatprep.subr.bf16.mxu0 0
      %2537 = vmatpush1.bf16.msra.mxu0 0
      %2538 = vmatprep.subr.bf16.mxu0 0
      %2539 = vmatpush1.bf16.msra.mxu0 0
      %2540 = vmatprep.subr.bf16.mxu0 0
      %2541 = vmatpush1.bf16.msra.mxu0 0
      %2542 = vmatprep.subr.bf16.mxu0 0
      %2543 = vmatpush1.bf16.msra.mxu0 0
      %2544 = vmatprep.subr.bf16.mxu0 0
      %2545 = vmatpush1.bf16.msra.mxu0 0
      %2546 = vmatprep.subr.bf16.mxu0 0
      %2547 = vmatpush1.bf16.msra.mxu0 0
      %2548 = vmatprep.mubr.bf16.mxu0 0
      %2549 = vmatmul.mubr.bf16.gmra.mrb[0].mxu0 %v2505
      %v2550 = vpop.f32.mrb[0].mxu0
      %v2551 = vadd.f32 0.0, %v2550
      %v2552 = vpop.f32.mrb[0].mxu0
      %v2553 = vpop.f32.mrb[0].mxu0
      %v2554 = vadd.f32 0.0, %v2553
      %v2555 = vpop.f32.mrb[0].mxu0
      %2556 = vmatprep.mubr.bf16.mxu0 0
      %2557 = vmatmul.mubr.bf16.gmra.mrb[0].mxu0 %v2508
      %v2558 = vpop.f32.mrb[0].mxu0
      %v2559 = vadd.f32 0.0, %v2558
      %v2560 = vpop.f32.mrb[0].mxu0
      %v2561 = vpop.f32.mrb[0].mxu0
      %v2562 = vadd.f32 0.0, %v2561
      %v2563 = vpop.f32.mrb[0].mxu0
      %2564 = vmatprep.mubr.bf16.mxu0 0
      %2565 = vmatmul.mubr.bf16.gmra.mrb[0].mxu0 %v2511
      %v2566 = vpop.f32.mrb[0].mxu0
      %v2567 = vadd.f32 0.0, %v2566
      %v2568 = vpop.f32.mrb[0].mxu0
      %v2569 = vpop.f32.mrb[0].mxu0
      %v2570 = vadd.f32 0.0, %v2569
      %v2571 = vpop.f32.mrb[0].mxu0
      %2572 = vmatprep.mubr.bf16.mxu0 0
      %2573 = vmatmul.mubr.bf16.gmra.mrb[0].mxu0 %v2514
      %v2574 = vpop.f32.mrb[0].mxu0
      %v2575 = vadd.f32 0.0, %v2574
      %v2576 = vpop.f32.mrb[0].mxu0
      %v2577 = vpop.f32.mrb[0].mxu0
      %v2578 = vadd.f32 0.0, %v2577
      %v2579 = vpop.f32.mrb[0].mxu0
      %2580 = vdwg.mxu0
      %v2581 = vadd.f32 %v2467, %v2551
      %v2582 = vadd.f32 %v2468, %v2554
      %v2583 = vadd.f32 %v2469, %v2559
      %v2584 = vadd.f32 %v2470, %v2562
      %v2585 = vadd.f32 %v2471, %v2567
      %v2586 = vadd.f32 %v2472, %v2570
      %v2587 = vadd.f32 %v2473, %v2575
      %v2588 = vadd.f32 %v2474, %v2578
      %v2589 = vmul.f32 %v1775, %v1432
      %v2590 = vmul.f32 %v1776, %v1437
      %v2591 = vmul.f32 %v1777, %v1442
      %v2592 = vmul.f32 %v1778, %v1447
      %v2593 = vmul.f32 %v1779, %v1452
      %v2594 = vmul.f32 %v1780, %v1457
      %v2595 = vmul.f32 %v1781, %v1462
      %v2596 = vmul.f32 %v1774, %v1467
      %v2597 = vpack.c.bf16 %v2590, %v2589
      %v2598 = vpack.c.bf16 %v2592, %v2591
      %v2599 = vpack.c.bf16 %v2594, %v2593
      %v2600 = vpack.c.bf16 %v2596, %v2595
      %s2601 = scalar_lea.vmem %s5, 112
      %v2602 = vld [vmem:[%s2601] sm:$0xf]
      %v2603 = vld [vmem:[%s2601 + $0x4] sm:$0xf]
      %v2604 = vld [vmem:[%s2601 + $0x8] sm:$0xf]
      %v2605 = vld [vmem:[%s2601 + $0xc] sm:$0xf]
      %v2610 = vunpack.c.l.b16 %v2602
      %v2611 = vunpack.c.l.b16 %v2603
      %v2612 = vunpack.c.l.b16 %v2604
      %v2613 = vunpack.c.l.b16 %v2605
      %v2614 = vpack.c.b16 %v2611, %v2610
      %v2615 = vpack.c.b16 %v2613, %v2612
      %v2619 = vsel %vm478, %v2597, 0
      %v2622 = vsel %vm478, %v2598, 0
      %v2625 = vsel %vm478, %v2599, 0
      %v2628 = vsel %vm478, %v2600, 0
      %2630 = vmatprep.subr.bf16.mxu0 0
      %2631 = vmatpush1.bf16.msra.mxu0 %v2614
      %2632 = vmatprep.subr.bf16.mxu0 0
      %2633 = vmatpush1.bf16.msra.mxu0 %v2615
      %2634 = vmatprep.subr.bf16.mxu0 0
      %2635 = vmatpush1.bf16.msra.mxu0 0
      %2636 = vmatprep.subr.bf16.mxu0 0
      %2637 = vmatpush1.bf16.msra.mxu0 0
      %2638 = vmatprep.subr.bf16.mxu0 0
      %2639 = vmatpush1.bf16.msra.mxu0 0
      %2640 = vmatprep.subr.bf16.mxu0 0
      %2641 = vmatpush1.bf16.msra.mxu0 0
      %2642 = vmatprep.subr.bf16.mxu0 0
      %2643 = vmatpush1.bf16.msra.mxu0 0
      %2644 = vmatprep.subr.bf16.mxu0 0
      %2645 = vmatpush1.bf16.msra.mxu0 0
      %2646 = vmatprep.subr.bf16.mxu0 0
      %2647 = vmatpush1.bf16.msra.mxu0 0
      %2648 = vmatprep.subr.bf16.mxu0 0
      %2649 = vmatpush1.bf16.msra.mxu0 0
      %2650 = vmatprep.subr.bf16.mxu0 0
      %2651 = vmatpush1.bf16.msra.mxu0 0
      %2652 = vmatprep.subr.bf16.mxu0 0
      %2653 = vmatpush1.bf16.msra.mxu0 0
      %2654 = vmatprep.subr.bf16.mxu0 0
      %2655 = vmatpush1.bf16.msra.mxu0 0
      %2656 = vmatprep.subr.bf16.mxu0 0
      %2657 = vmatpush1.bf16.msra.mxu0 0
      %2658 = vmatprep.subr.bf16.mxu0 0
      %2659 = vmatpush1.bf16.msra.mxu0 0
      %2660 = vmatprep.subr.bf16.mxu0 0
      %2661 = vmatpush1.bf16.msra.mxu0 0
      %2662 = vmatprep.mubr.bf16.mxu0 0
      %2663 = vmatmul.mubr.bf16.gmra.mrb[0].mxu0 %v2619
      %v2664 = vpop.f32.mrb[0].mxu0
      %v2665 = vadd.f32 0.0, %v2664
      %v2666 = vpop.f32.mrb[0].mxu0
      %v2667 = vpop.f32.mrb[0].mxu0
      %v2668 = vadd.f32 0.0, %v2667
      %v2669 = vpop.f32.mrb[0].mxu0
      %2670 = vmatprep.mubr.bf16.mxu0 0
      %2671 = vmatmul.mubr.bf16.gmra.mrb[0].mxu0 %v2622
      %v2672 = vpop.f32.mrb[0].mxu0
      %v2673 = vadd.f32 0.0, %v2672
      %v2674 = vpop.f32.mrb[0].mxu0
      %v2675 = vpop.f32.mrb[0].mxu0
      %v2676 = vadd.f32 0.0, %v2675
      %v2677 = vpop.f32.mrb[0].mxu0
      %2678 = vmatprep.mubr.bf16.mxu0 0
      %2679 = vmatmul.mubr.bf16.gmra.mrb[0].mxu0 %v2625
      %v2680 = vpop.f32.mrb[0].mxu0
      %v2681 = vadd.f32 0.0, %v2680
      %v2682 = vpop.f32.mrb[0].mxu0
      %v2683 = vpop.f32.mrb[0].mxu0
      %v2684 = vadd.f32 0.0, %v2683
      %v2685 = vpop.f32.mrb[0].mxu0
      %2686 = vmatprep.mubr.bf16.mxu0 0
      %2687 = vmatmul.mubr.bf16.gmra.mrb[0].mxu0 %v2628
      %v2688 = vpop.f32.mrb[0].mxu0
      %v2689 = vadd.f32 0.0, %v2688
      %v2690 = vpop.f32.mrb[0].mxu0
      %v2691 = vpop.f32.mrb[0].mxu0
      %v2692 = vadd.f32 0.0, %v2691
      %v2693 = vpop.f32.mrb[0].mxu0
      %2694 = vdwg.mxu0
      %v2695 = vadd.f32 %v2581, %v2665
      %v2696 = vadd.f32 %v2582, %v2668
      %v2697 = vadd.f32 %v2583, %v2673
      %v2698 = vadd.f32 %v2584, %v2676
      %v2699 = vadd.f32 %v2585, %v2681
      %v2700 = vadd.f32 %v2586, %v2684
      %v2701 = vadd.f32 %v2587, %v2689
      %v2702 = vadd.f32 %v2588, %v2692
      %v2703 = vmul.f32 %v2024, %v1595
      %v2704 = vmul.f32 %v2023, %v1600
      %v2705 = vmul.f32 %v2022, %v1605
      %v2706 = vmul.f32 %v2021, %v1610
      %v2707 = vmul.f32 %v2020, %v1615
      %v2708 = vmul.f32 %v2019, %v1620
      %v2709 = vmul.f32 %v2026, %v1625
      %v2710 = vmul.f32 %v2025, %v1630
      %v2711 = vpack.c.bf16 %v2704, %v2703
      %v2712 = vpack.c.bf16 %v2706, %v2705
      %v2713 = vpack.c.bf16 %v2708, %v2707
      %v2714 = vpack.c.bf16 %v2710, %v2709
      %s2715 = scalar_lea.vmem %s5, 128
      %v2716 = vld [vmem:[%s2715] sm:$0xf]
      %v2717 = vld [vmem:[%s2715 + $0x4] sm:$0xf]
      %v2718 = vld [vmem:[%s2715 + $0x8] sm:$0xf]
      %v2719 = vld [vmem:[%s2715 + $0xc] sm:$0xf]
      %v2724 = vunpack.c.l.b16 %v2716
      %v2725 = vunpack.c.l.b16 %v2717
      %v2726 = vunpack.c.l.b16 %v2718
      %v2727 = vunpack.c.l.b16 %v2719
      %v2728 = vpack.c.b16 %v2725, %v2724
      %v2729 = vpack.c.b16 %v2727, %v2726
      %v2733 = vsel %vm478, %v2711, 0
      %v2736 = vsel %vm478, %v2712, 0
      %v2739 = vsel %vm478, %v2713, 0
      %v2742 = vsel %vm478, %v2714, 0
      %2744 = vmatprep.subr.bf16.mxu0 0
      %2745 = vmatpush1.bf16.msra.mxu0 %v2728
      %2746 = vmatprep.subr.bf16.mxu0 0
      %2747 = vmatpush1.bf16.msra.mxu0 %v2729
      %2748 = vmatprep.subr.bf16.mxu0 0
      %2749 = vmatpush1.bf16.msra.mxu0 0
      %2750 = vmatprep.subr.bf16.mxu0 0
      %2751 = vmatpush1.bf16.msra.mxu0 0
      %2752 = vmatprep.subr.bf16.mxu0 0
      %2753 = vmatpush1.bf16.msra.mxu0 0
      %2754 = vmatprep.subr.bf16.mxu0 0
      %2755 = vmatpush1.bf16.msra.mxu0 0
      %2756 = vmatprep.subr.bf16.mxu0 0
      %2757 = vmatpush1.bf16.msra.mxu0 0
      %2758 = vmatprep.subr.bf16.mxu0 0
      %2759 = vmatpush1.bf16.msra.mxu0 0
      %2760 = vmatprep.subr.bf16.mxu0 0
      %2761 = vmatpush1.bf16.msra.mxu0 0
      %2762 = vmatprep.subr.bf16.mxu0 0
      %2763 = vmatpush1.bf16.msra.mxu0 0
      %2764 = vmatprep.subr.bf16.mxu0 0
      %2765 = vmatpush1.bf16.msra.mxu0 0
      %2766 = vmatprep.subr.bf16.mxu0 0
      %2767 = vmatpush1.bf16.msra.mxu0 0
      %2768 = vmatprep.subr.bf16.mxu0 0
      %2769 = vmatpush1.bf16.msra.mxu0 0
      %2770 = vmatprep.subr.bf16.mxu0 0
      %2771 = vmatpush1.bf16.msra.mxu0 0
      %2772 = vmatprep.subr.bf16.mxu0 0
      %2773 = vmatpush1.bf16.msra.mxu0 0
      %2774 = vmatprep.subr.bf16.mxu0 0
      %2775 = vmatpush1.bf16.msra.mxu0 0
      %2776 = vmatprep.mubr.bf16.mxu0 0
      %2777 = vmatmul.mubr.bf16.gmra.mrb[0].mxu0 %v2733
      %v2778 = vpop.f32.mrb[0].mxu0
      %v2779 = vadd.f32 0.0, %v2778
      %v2780 = vpop.f32.mrb[0].mxu0
      %v2781 = vpop.f32.mrb[0].mxu0
      %v2782 = vadd.f32 0.0, %v2781
      %v2783 = vpop.f32.mrb[0].mxu0
      %2784 = vmatprep.mubr.bf16.mxu0 0
      %2785 = vmatmul.mubr.bf16.gmra.mrb[0].mxu0 %v2736
      %v2786 = vpop.f32.mrb[0].mxu0
      %v2787 = vadd.f32 0.0, %v2786
      %v2788 = vpop.f32.mrb[0].mxu0
      %v2789 = vpop.f32.mrb[0].mxu0
      %v2790 = vadd.f32 0.0, %v2789
      %v2791 = vpop.f32.mrb[0].mxu0
      %2792 = vmatprep.mubr.bf16.mxu0 0
      %2793 = vmatmul.mubr.bf16.gmra.mrb[0].mxu0 %v2739
      %v2794 = vpop.f32.mrb[0].mxu0
      %v2795 = vadd.f32 0.0, %v2794
      %v2796 = vpop.f32.mrb[0].mxu0
      %v2797 = vpop.f32.mrb[0].mxu0
      %v2798 = vadd.f32 0.0, %v2797
      %v2799 = vpop.f32.mrb[0].mxu0
      %2800 = vmatprep.mubr.bf16.mxu0 0
      %2801 = vmatmul.mubr.bf16.gmra.mrb[0].mxu0 %v2742
      %v2802 = vpop.f32.mrb[0].mxu0
      %v2803 = vadd.f32 0.0, %v2802
      %v2804 = vpop.f32.mrb[0].mxu0
      %v2805 = vpop.f32.mrb[0].mxu0
      %v2806 = vadd.f32 0.0, %v2805
      %v2807 = vpop.f32.mrb[0].mxu0
      %2808 = vdwg.mxu0
      %v2809 = vadd.f32 %v2695, %v2779
      %v2810 = vadd.f32 %v2696, %v2782
      %v2811 = vadd.f32 %v2697, %v2787
      %v2812 = vadd.f32 %v2698, %v2790
      %v2813 = vadd.f32 %v2699, %v2795
      %v2814 = vadd.f32 %v2700, %v2798
      %v2815 = vadd.f32 %v2701, %v2803
      %v2816 = vadd.f32 %v2702, %v2806
      %v2818 = vlaneseq
      %v2819 = vshrl.u32 %v2818, 7
      %v2820 = vsub.s32 0, %v2819
      %v2821 = vrot.slane %v1782, %v2820
      %v2823 = vmul.f32 %v2809, %v2821
      %v2824 = vmul.f32 %v2810, %v2821
      %v2825 = vmul.f32 %v2811, %v2821
      %v2826 = vmul.f32 %v2812, %v2821
      %v2827 = vmul.f32 %v2813, %v2821
      %v2828 = vmul.f32 %v2814, %v2821
      %v2829 = vmul.f32 %v2815, %v2821
      %v2830 = vmul.f32 %v2816, %v2821
      %v2832 = vlaneseq
      %v2833 = vshrl.u32 %v2832, 7
      %v2834 = vsub.s32 0, %v2833
      %v2835 = vrot.slane %v1783, %v2834
      %v2837 = vadd.f32 %v2823, %v2835
      %v2838 = vadd.f32 %v2824, %v2835
      %v2839 = vadd.f32 %v2825, %v2835
      %v2840 = vadd.f32 %v2826, %v2835
      %v2841 = vadd.f32 %v2827, %v2835
      %v2842 = vadd.f32 %v2828, %v2835
      %v2843 = vadd.f32 %v2829, %v2835
      %v2844 = vadd.f32 %v2830, %v2835
      %2845 = vst [vmem:[%s305] sm:$0xff] %v2837
      %2846 = vst [vmem:[%s305 + $0x8] sm:$0xff] %v2838
      %2847 = vst [vmem:[%s305 + $0x10] sm:$0xff] %v2839
      %2848 = vst [vmem:[%s305 + $0x18] sm:$0xff] %v2840
      %2849 = vst [vmem:[%s305 + $0x20] sm:$0xff] %v2841
      %2850 = vst [vmem:[%s305 + $0x28] sm:$0xff] %v2842
      %2851 = vst [vmem:[%s305 + $0x30] sm:$0xff] %v2843
      %2852 = vst [vmem:[%s305 + $0x38] sm:$0xff] %v2844
      %p2853 = scmp.lt.s32.totalorder %s19, 1
      %s2854 = scalar_select %p2853, %s19, 1
      %s2855 = smul.addr %s2854, 8
      %s2856 = smul.addr %s2855, 8
      %s2857 = scalar_lea.vmem %s8, %s2856
      // Predicated region
      $region53: #{leela_forward.12} parent=51 // pred_check
        %p2858 = pneg %p210
      $region54: #{leela_forward.12} parent=51 // pred_check_branch
        %2860 = sbr.rel (%p2858) target = $region56
      $region55: #{leela_forward.12} parent=51 // pred_region
        _
      $region56: #{leela_forward.12} parent=51 // pred_fallthru
        _
    $region52: #{leela_forward.12} parent=5 // pred_fallthru
      _
    %p2861 = scmp.le.s32.totalorder 2, %s14
    // Predicated region
    $region57: #{leela_forward.12} parent=5 // pred_check
      %p2862 = pneg %p2861
    $region58: #{leela_forward.12} parent=5 // pred_check_branch
      %2864 = sbr.rel (%p2862) target = $region60
    $region59: #{leela_forward.12} parent=5 // pred_region
      %s2865 = ssub.s32 %s14, 2
      // Predicated region
      $region61: #{leela_forward.12} parent=59 // pred_check
        %p2866 = pneg %p216
      $region62: #{leela_forward.12} parent=59 // pred_check_branch
        %2868 = sbr.rel (%p2866) target = $region64
      $region63: #{leela_forward.12} parent=59 // pred_region
        %p2869 = scmp.lt.s32.totalorder %s20, 1
        %s2870 = scalar_select %p2869, %s20, 1
        %s2871 = smul.addr %s2870, 8
        %s2872 = smul.addr %s2871, 8
        %s2873 = scalar_lea.vmem %s8, %s2872
      $region64: #{leela_forward.12} parent=59 // pred_fallthru
        _
    $region60: #{leela_forward.12} parent=5 // pred_fallthru
      _
  $region6: #{leela_forward.12} parent=0 // loop_footer
    %s18 = sadd.s32 1, %s14
  $region7: #{leela_forward.12} parent=0 // loop_footer_branch
    %13 = sbr.rel target = $region3
  $region8: #{leela_forward.12} parent=0 // loop_exit
    _

</llo_original>
